<compile_context>
chip_gen: v5e
topology: v5e:2x2
jax: 0.10.0
libtpu: 0.0.40
codegen_flags: <defaults>
</compile_context>

<pallas_src>
import functools

import jax
import jax.numpy as jnp
from jax.experimental import pallas as pl
from jax.experimental.pallas import tpu as pltpu

BN_EPS = 1e-5
VMEM_LIMIT = 32 * 1024 * 1024  # safe on v5e (16 MiB default) / v6e / v7x


def _ceil_to(x, m):
    return (x + m - 1) // m * m


# ---------------------------------------------------------------------------
# Kernel 1: tiled matmul + bias (+ optional ReLU).  bf16 operands, f32 acc.
# ---------------------------------------------------------------------------
def _mm_kernel(a_ref, b_ref, bias_ref, o_ref, acc_ref, *, act):
    @pl.when(pl.program_id(2) == 0)
    def _():
        acc_ref[...] = jnp.zeros_like(acc_ref)

    acc_ref[...] += jnp.dot(a_ref[...], b_ref[...],
                            preferred_element_type=jnp.float32)

    @pl.when(pl.program_id(2) == pl.num_programs(2) - 1)
    def _():
        r = acc_ref[...] + bias_ref[...]
        if act == "relu":
            r = jnp.maximum(r, 0.0)
        o_ref[...] = r.astype(o_ref.dtype)


def matmul_bias(a, b, bias, *, act="none", out_dtype=jnp.float32,
                tm=128, tn=256, tk=256):
    """(M,K) @ (K,N) + bias with a pipelined, tiled grid."""
    M, K = a.shape
    _, N = b.shape
    tm = min(tm, _ceil_to(M, 8))
    tn = min(tn, _ceil_to(N, 128))
    tk = min(tk, _ceil_to(K, 128))
    Mp, Kp, Np = _ceil_to(M, tm), _ceil_to(K, tk), _ceil_to(N, tn)
    a_p = jnp.pad(a, ((0, Mp - M), (0, Kp - K))) if (Mp, Kp) != (M, K) else a
    b_p = jnp.pad(b, ((0, Kp - K), (0, Np - N))) if (Kp, Np) != (K, N) else b
    bias_p = jnp.pad(bias, (0, Np - N)) if Np != N else bias

    out = pl.pallas_call(
        functools.partial(_mm_kernel, act=act),
        grid=(Mp // tm, Np // tn, Kp // tk),
        in_specs=[
            pl.BlockSpec((tm, tk), lambda i, j, k: (i, k)),
            pl.BlockSpec((tk, tn), lambda i, j, k: (k, j)),
            pl.BlockSpec((1, tn), lambda i, j, k: (0, j)),
        ],
        out_specs=pl.BlockSpec((tm, tn), lambda i, j, k: (i, j)),
        out_shape=jax.ShapeDtypeStruct((Mp, Np), out_dtype),
        scratch_shapes=[pltpu.VMEM((tm, tn), jnp.float32)],
        compiler_params=pltpu.CompilerParams(
            dimension_semantics=("parallel", "parallel", "arbitrary"),
            vmem_limit_bytes=VMEM_LIMIT),
    )(a_p.astype(jnp.bfloat16), b_p.astype(jnp.bfloat16),
      bias_p.reshape(1, Np).astype(jnp.float32))
    return out[:M, :N]


# ---------------------------------------------------------------------------
# Kernel 2: fused spatial attention + global average pool.
#   per batch: 3x3 conv (9 taps sliced from a halo-padded VMEM tile, weights
#   already merged from the 3x3/1x3/3x1 branches) -> relu -> channel-sum ->
#   multiply with x -> mean over H*W.  Only the (B,512) GAP leaves the chip.
# ---------------------------------------------------------------------------
def _sa_gap_kernel(x_ref, y1p_ref, w_ref, b_ref, gap_ref, *, H, W):
    Cmid = w_ref.shape[1]
    Cout = w_ref.shape[2]
    y1p = y1p_ref[0]                                    # (H+2, W+2, Cmid) bf16
    z = jnp.zeros((H * W, Cout), jnp.float32)
    for di in range(3):
        for dj in range(3):
            tap = y1p[di:di + H, dj:dj + W, :].reshape(H * W, Cmid)
            z = z + jnp.dot(tap, w_ref[di * 3 + dj],
                            preferred_element_type=jnp.float32)
    y = jnp.maximum(z + b_ref[...], 0.0)                # relu(sum of branches)
    ysum = jnp.sum(y, axis=-1, keepdims=True)           # sum over 512 channels
    sa = x_ref[0].astype(jnp.float32) * ysum            # x * y  (H*W, 512)
    gap = jnp.sum(sa, axis=0, keepdims=True) * (1.0 / (H * W))
    gap_ref[...] = gap.reshape(1, 1, Cout)


def spatial_attention_gap(x_nhwc, y1_nhwc, wmat, bias):
    B, H, W, C = x_nhwc.shape
    Cmid = y1_nhwc.shape[-1]
    Cout = wmat.shape[-1]
    assert C == Cout
    y1p = jnp.pad(y1_nhwc, ((0, 0), (1, 1), (1, 1), (0, 0)))
    x3 = x_nhwc.reshape(B, H * W, C).astype(jnp.bfloat16)
    gap = pl.pallas_call(
        functools.partial(_sa_gap_kernel, H=H, W=W),
        grid=(B,),
        in_specs=[
            pl.BlockSpec((1, H * W, C), lambda b: (b, 0, 0)),
            pl.BlockSpec((1, H + 2, W + 2, Cmid), lambda b: (b, 0, 0, 0)),
            pl.BlockSpec((9, Cmid, Cout), lambda b: (0, 0, 0)),
            pl.BlockSpec((1, Cout), lambda b: (0, 0)),
        ],
        out_specs=pl.BlockSpec((1, 1, Cout), lambda b: (b, 0, 0)),
        out_shape=jax.ShapeDtypeStruct((B, 1, Cout), jnp.float32),
        compiler_params=pltpu.CompilerParams(
            dimension_semantics=("parallel",),
            vmem_limit_bytes=VMEM_LIMIT),
    )(x3, y1p.astype(jnp.bfloat16), wmat.astype(jnp.bfloat16),
      bias.reshape(1, Cout).astype(jnp.float32))
    return gap.reshape(B, Cout)


# ---------------------------------------------------------------------------
# Kernel 3: channel attention MLP on the pooled (B,512) vector.
#   gap * sigmoid(fc2(relu(bn(fc1(gap)))))  -- hidden padded 32->128.
# ---------------------------------------------------------------------------
def _ca_kernel(gap_ref, w1_ref, b1_ref, w2_ref, b2_ref, o_ref):
    gap = gap_ref[...]                                            # (B,512) f32
    h = jnp.dot(gap.astype(jnp.bfloat16), w1_ref[...],
                preferred_element_type=jnp.float32) + b1_ref[...]
    h = jnp.maximum(h, 0.0)
    y = jnp.dot(h.astype(jnp.bfloat16), w2_ref[...],
                preferred_element_type=jnp.float32) + b2_ref[...]
    o_ref[...] = gap * jax.nn.sigmoid(y)


def channel_attention(gap, w1, b1, w2, b2):
    # Tiny (B,512) problem: single lane-dense block by design.
    B, C = gap.shape
    Hh = w1.shape[1]
    return pl.pallas_call(
        _ca_kernel,
        grid=(1,),
        in_specs=[
            pl.BlockSpec((B, C), lambda i: (0, 0)),
            pl.BlockSpec((C, Hh), lambda i: (0, 0)),
            pl.BlockSpec((1, Hh), lambda i: (0, 0)),
            pl.BlockSpec((Hh, C), lambda i: (0, 0)),
            pl.BlockSpec((1, C), lambda i: (0, 0)),
        ],
        out_specs=pl.BlockSpec((B, C), lambda i: (0, 0)),
        out_shape=jax.ShapeDtypeStruct((B, C), jnp.float32),
        compiler_params=pltpu.CompilerParams(
            dimension_semantics=("arbitrary",),
            vmem_limit_bytes=VMEM_LIMIT),
    )(gap.astype(jnp.float32), w1.astype(jnp.bfloat16),
      b1.reshape(1, Hh).astype(jnp.float32), w2.astype(jnp.bfloat16),
      b2.reshape(1, C).astype(jnp.float32))


# ---------------------------------------------------------------------------
# BN folding + forward
# ---------------------------------------------------------------------------
def fold_bn_conv(w, b, gamma, beta, mean, var):
    """Fold eval-mode BatchNorm2d into conv weight (Cout,Cin,KH,KW) + bias."""
    scale = gamma / jnp.sqrt(var + BN_EPS)
    return w * scale[:, None, None, None], (b - mean) * scale + beta


def cross_attention_head(x_nchw, p):
    x = jnp.transpose(x_nchw, (0, 2, 3, 1)).astype(jnp.float32)   # NHWC
    B, H, W, C = x.shape                                          # C == 512

    # --- SpatialAttention: 1x1 conv + folded BN as a tiled Pallas matmul ---
    w1, b1 = fold_bn_conv(*p["conv1x1"], *p["bn1x1"])             # (256,512,1,1)
    Cmid = w1.shape[0]
    w1m = jnp.transpose(w1.reshape(Cmid, C))                      # (512,256)
    y1 = matmul_bias(x.reshape(B * H * W, C), w1m, b1,
                     out_dtype=jnp.bfloat16)                      # (BHW,256)

    # merge (3x3 + 1x3 + 3x1) branch weights; ReLU is applied after the sum
    # in the reference, so embedding them in one 3x3 kernel is exact.
    w3, b3 = fold_bn_conv(*p["conv3x3"], *p["bn3x3"])
    w13, b13 = fold_bn_conv(*p["conv1x3"], *p["bn1x3"])
    w31, b31 = fold_bn_conv(*p["conv3x1"], *p["bn3x1"])
    wc = w3.at[:, :, 1:2, :].add(w13)       # 1x3 lives in the middle row
    wc = wc.at[:, :, :, 1:2].add(w31)       # 3x1 lives in the middle column
    bc = b3 + b13 + b31
    wmat = jnp.transpose(wc, (2, 3, 1, 0)).reshape(9, Cmid, C)    # (9,256,512)

    # --- fused 3x3 conv + ReLU + channel-sum + x*ysum + global avg pool ---
    gap = spatial_attention_gap(x, y1.reshape(B, H, W, Cmid), wmat, bc)

    # --- ChannelAttention MLP (BN1d folded, hidden 32 zero-padded to 128) ---
    wl1, bl1 = p["ca_fc1"]                   # (32,512), (32,)
    g, bb, m, v = p["ca_bn"]                 # BatchNorm1d(32), eval mode
    scale = g / jnp.sqrt(v + BN_EPS)
    w1f = (wl1 * scale[:, None]).T           # (512,32)
    b1f = (bl1 - m) * scale + bb             # (32,)
    wl2, bl2 = p["ca_fc2"]                   # (512,32), (512,)
    HID = 128                                # lane-dense hidden
    w1p = jnp.zeros((C, HID), jnp.float32).at[:, :32].set(w1f)
    b1p = jnp.zeros((HID,), jnp.float32).at[:32].set(b1f)
    w2p = jnp.zeros((HID, C), jnp.float32).at[:32, :].set(wl2.T)
    return channel_attention(gap, w1p, b1p, w2p, bl2)             # (B,512)


# ---------------------------------------------------------------------------
# Parameters (deterministic, synthetic; matches the module's init_weights)
# ---------------------------------------------------------------------------
def _conv_w(key, cout, cin, kh, kw):
    # kaiming_normal_(mode='fan_out'): std = sqrt(2 / (cout*kh*kw))
    return (jax.random.normal(key, (cout, cin, kh, kw), jnp.float32)
            * jnp.sqrt(2.0 / (cout * kh * kw)))


def _bn(c):
    # (gamma, beta, running_mean, running_var) -- PyTorch defaults
    return (jnp.ones((c,), jnp.float32), jnp.zeros((c,), jnp.float32),
            jnp.zeros((c,), jnp.float32), jnp.ones((c,), jnp.float32))


def make_params(key):
    ks = jax.random.split(key, 6)
    return {
        "conv1x1": (_conv_w(ks[0], 256, 512, 1, 1), jnp.zeros((256,), jnp.float32)),
        "bn1x1": _bn(256),
        "conv3x3": (_conv_w(ks[1], 512, 256, 3, 3), jnp.zeros((512,), jnp.float32)),
        "bn3x3": _bn(512),
        "conv1x3": (_conv_w(ks[2], 512, 256, 1, 3), jnp.zeros((512,), jnp.float32)),
        "bn1x3": _bn(512),
        "conv3x1": (_conv_w(ks[3], 512, 256, 3, 1), jnp.zeros((512,), jnp.float32)),
        "bn3x1": _bn(512),
        "ca_fc1": (jax.random.normal(ks[4], (32, 512), jnp.float32) * 0.001,
                   jnp.zeros((32,), jnp.float32)),
        "ca_bn": _bn(32),
        "ca_fc2": (jax.random.normal(ks[5], (512, 32), jnp.float32) * 0.001,
                   jnp.zeros((512,), jnp.float32)),
    }


if __name__ == "__main__":
    key = jax.random.PRNGKey(0)
    kx, kp = jax.random.split(key)
    B, C, H, W = 2, 512, 8, 8            # CrossAttentionHead expects 512 channels
    x = jax.random.normal(kx, (B, C, H, W), jnp.float32)
    params = make_params(kp)

    fwd = jax.jit(lambda inp: cross_attention_head(inp, params))
    out = fwd(x)
    jax.block_until_ready(out)
    assert out.shape == (B, 512)
    assert bool(jnp.all(jnp.isfinite(out)))
    print("KERNEL_OK")
</pallas_src>

<mosaic_0001>
module attributes {stable_mosaic.version = 11 : i64} {
  func.func @_mm_kernel(%arg0: i32, %arg1: i32, %arg2: i32, %arg3: memref<128x256xbf16, #tpu.memory_space<vmem>>, %arg4: memref<256x256xbf16, #tpu.memory_space<vmem>>, %arg5: memref<1x256xf32, #tpu.memory_space<vmem>>, %arg6: memref<128x256xbf16, #tpu.memory_space<vmem>>, %arg7: memref<128x256xf32, #tpu.memory_space<vmem>>) attributes {dimension_semantics = [#tpu.dimension_semantics<parallel>, #tpu.dimension_semantics<parallel>, #tpu.dimension_semantics<arbitrary>], iteration_bounds = array<i64: 1, 1, 2>, scalar_prefetch = 0 : i64, scratch_operands = 1 : i64, tpu.core_type = #tpu.core_type<tc>, window_params = [{transform_indices = @transform_0, window_bounds = array<i64: 128, 256>}, {transform_indices = @transform_1, window_bounds = array<i64: 256, 256>}, {transform_indices = @transform_2, window_bounds = array<i64: 1, 256>}, {transform_indices = @transform_3, window_bounds = array<i64: 128, 256>}]} {
    %c0_i32 = arith.constant 0 : i32
    %0 = arith.cmpi eq, %arg2, %c0_i32 : i32
    %1 = arith.extui %0 : i1 to i32
    %c0_i32_0 = arith.constant 0 : i32
    %2 = arith.cmpi ne, %1, %c0_i32_0 : i32
    scf.if %2 {
      %cst_9 = arith.constant 0.000000e+00 : f32
      %12 = vector.broadcast %cst_9 : f32 to vector<128x256xf32>
      %c0_10 = arith.constant 0 : index
      %c0_11 = arith.constant 0 : index
      %13 = vector.load %arg7[%c0_10, %c0_11] : memref<128x256xf32, #tpu.memory_space<vmem>>, vector<128x256xf32>
      tpu.vector_store %arg7[%c0_10, %c0_11], %12 {strides = array<i32>} : memref<128x256xf32, #tpu.memory_space<vmem>>, vector<128x256xf32>,
    } else {
    }
    %c0 = arith.constant 0 : index
    %c0_1 = arith.constant 0 : index
    %3 = vector.load %arg7[%c0, %c0_1] : memref<128x256xf32, #tpu.memory_space<vmem>>, vector<128x256xf32>
    %c0_2 = arith.constant 0 : index
    %c0_3 = arith.constant 0 : index
    %4 = vector.load %arg3[%c0_2, %c0_3] : memref<128x256xbf16, #tpu.memory_space<vmem>>, vector<128x256xbf16>
    %c0_4 = arith.constant 0 : index
    %c0_5 = arith.constant 0 : index
    %5 = vector.load %arg4[%c0_4, %c0_5] : memref<256x256xbf16, #tpu.memory_space<vmem>>, vector<256x256xbf16>
    %cst = arith.constant dense<0.000000e+00> : vector<128x256xf32>
    %6 = tpu.matmul %4, %5, %cst {dimension_numbers = #tpu.dot_dimension_numbers<[1], [0], [0], [1], [0, 0, 1, 1], [], []>} : vector<128x256xbf16>, vector<256x256xbf16>, vector<128x256xf32> -> vector<128x256xf32>
    %7 = arith.addf %3, %6 : vector<128x256xf32>
    %c0_6 = arith.constant 0 : index
    %c0_7 = arith.constant 0 : index
    %8 = vector.load %arg7[%c0_6, %c0_7] : memref<128x256xf32, #tpu.memory_space<vmem>>, vector<128x256xf32>
    tpu.vector_store %arg7[%c0_6, %c0_7], %7 {strides = array<i32>} : memref<128x256xf32, #tpu.memory_space<vmem>>, vector<128x256xf32>,
    %c1_i32 = arith.constant 1 : i32
    %9 = arith.cmpi eq, %arg2, %c1_i32 : i32
    %10 = arith.extui %9 : i1 to i32
    %c0_i32_8 = arith.constant 0 : i32
    %11 = arith.cmpi ne, %10, %c0_i32_8 : i32
    scf.if %11 {
      %c0_9 = arith.constant 0 : index
      %c0_10 = arith.constant 0 : index
      %12 = vector.load %arg7[%c0_9, %c0_10] : memref<128x256xf32, #tpu.memory_space<vmem>>, vector<128x256xf32>
      %c0_11 = arith.constant 0 : index
      %c0_12 = arith.constant 0 : index
      %13 = vector.load %arg5[%c0_11, %c0_12] : memref<1x256xf32, #tpu.memory_space<vmem>>, vector<1x256xf32>
      %14 = vector.broadcast %13 : vector<1x256xf32> to vector<128x256xf32>
      %15 = arith.addf %12, %14 : vector<128x256xf32>
      %16 = arith.truncf %15 : vector<128x256xf32> to vector<128x256xbf16>
      %c0_13 = arith.constant 0 : index
      %c0_14 = arith.constant 0 : index
      %17 = vector.load %arg6[%c0_13, %c0_14] : memref<128x256xbf16, #tpu.memory_space<vmem>>, vector<128x256xbf16>
      tpu.vector_store %arg6[%c0_13, %c0_14], %16 {strides = array<i32>} : memref<128x256xbf16, #tpu.memory_space<vmem>>, vector<128x256xbf16>,
    } else {
    }
    return
  }
  func.func @transform_0(%arg0: i32, %arg1: i32, %arg2: i32) -> (i32, i32) {
    %c0_i32 = arith.constant 0 : i32
    return %arg0, %arg2 : i32, i32
  }
  func.func @transform_1(%arg0: i32, %arg1: i32, %arg2: i32) -> (i32, i32) {
    %c0_i32 = arith.constant 0 : i32
    return %arg2, %arg1 : i32, i32
  }
  func.func @transform_2(%arg0: i32, %arg1: i32, %arg2: i32) -> (i32, i32) {
    %c0_i32 = arith.constant 0 : i32
    %c0_i32_0 = arith.constant 0 : i32
    return %c0_i32, %arg1 : i32, i32
  }
  func.func @transform_3(%arg0: i32, %arg1: i32, %arg2: i32) -> (i32, i32) {
    %c0_i32 = arith.constant 0 : i32
    return %arg0, %arg1 : i32, i32
  }
}

module attributes {stable_mosaic.version = 11 : i64} {
  func.func @_sa_gap_kernel(%arg0: i32, %arg1: memref<1x64x512xbf16, #tpu.memory_space<vmem>>, %arg2: memref<1x10x10x256xbf16, #tpu.memory_space<vmem>>, %arg3: memref<9x256x512xbf16, #tpu.memory_space<vmem>>, %arg4: memref<1x512xf32, #tpu.memory_space<vmem>>, %arg5: memref<1x1x512xf32, #tpu.memory_space<vmem>>) attributes {dimension_semantics = [#tpu.dimension_semantics<parallel>], iteration_bounds = array<i64: 2>, scalar_prefetch = 0 : i64, scratch_operands = 0 : i64, tpu.core_type = #tpu.core_type<tc>, window_params = [{transform_indices = @transform_0, window_bounds = array<i64: 1, 64, 512>}, {transform_indices = @transform_1, window_bounds = array<i64: 1, 10, 10, 256>}, {pipeline_mode = #tpu.pipeline_mode<synchronous>, transform_indices = @transform_2, window_bounds = array<i64: 9, 256, 512>}, {pipeline_mode = #tpu.pipeline_mode<synchronous>, transform_indices = @transform_3, window_bounds = array<i64: 1, 512>}, {transform_indices = @transform_4, window_bounds = array<i64: 1, 1, 512>}]} {
    %c0 = arith.constant 0 : index
    %c0_0 = arith.constant 0 : index
    %c0_1 = arith.constant 0 : index
    %c0_2 = arith.constant 0 : index
    %0 = vector.load %arg2[%c0, %c0_0, %c0_1, %c0_2] : memref<1x10x10x256xbf16, #tpu.memory_space<vmem>>, vector<1x10x10x256xbf16>
    %1 = vector.shape_cast %0 : vector<1x10x10x256xbf16> to vector<10x10x256xbf16>
    %cst = arith.constant 0.000000e+00 : f32
    %2 = vector.broadcast %cst : f32 to vector<64x512xf32>
    %3 = vector.extract_strided_slice %1 {offsets = [0, 0, 0], sizes = [8, 8, 256], strides = [1, 1, 1]} : vector<10x10x256xbf16> to vector<8x8x256xbf16>
    %4 = vector.shape_cast %3 : vector<8x8x256xbf16> to vector<64x256xbf16>
    %c0_3 = arith.constant 0 : index
    %c0_4 = arith.constant 0 : index
    %c0_5 = arith.constant 0 : index
    %5 = vector.load %arg3[%c0_3, %c0_4, %c0_5] : memref<9x256x512xbf16, #tpu.memory_space<vmem>>, vector<1x256x512xbf16>
    %6 = vector.shape_cast %5 : vector<1x256x512xbf16> to vector<256x512xbf16>
    %cst_6 = arith.constant dense<0.000000e+00> : vector<64x512xf32>
    %7 = tpu.matmul %4, %6, %cst_6 {dimension_numbers = #tpu.dot_dimension_numbers<[1], [0], [0], [1], [0, 0, 1, 1], [], []>} : vector<64x256xbf16>, vector<256x512xbf16>, vector<64x512xf32> -> vector<64x512xf32>
    %8 = arith.addf %2, %7 : vector<64x512xf32>
    %9 = vector.extract_strided_slice %1 {offsets = [0, 1, 0], sizes = [8, 8, 256], strides = [1, 1, 1]} : vector<10x10x256xbf16> to vector<8x8x256xbf16>
    %10 = vector.shape_cast %9 : vector<8x8x256xbf16> to vector<64x256xbf16>
    %c1 = arith.constant 1 : index
    %c0_7 = arith.constant 0 : index
    %c0_8 = arith.constant 0 : index
    %11 = vector.load %arg3[%c1, %c0_7, %c0_8] : memref<9x256x512xbf16, #tpu.memory_space<vmem>>, vector<1x256x512xbf16>
    %12 = vector.shape_cast %11 : vector<1x256x512xbf16> to vector<256x512xbf16>
    %cst_9 = arith.constant dense<0.000000e+00> : vector<64x512xf32>
    %13 = tpu.matmul %10, %12, %cst_9 {dimension_numbers = #tpu.dot_dimension_numbers<[1], [0], [0], [1], [0, 0, 1, 1], [], []>} : vector<64x256xbf16>, vector<256x512xbf16>, vector<64x512xf32> -> vector<64x512xf32>
    %14 = arith.addf %8, %13 : vector<64x512xf32>
    %15 = vector.extract_strided_slice %1 {offsets = [0, 2, 0], sizes = [8, 8, 256], strides = [1, 1, 1]} : vector<10x10x256xbf16> to vector<8x8x256xbf16>
    %16 = vector.shape_cast %15 : vector<8x8x256xbf16> to vector<64x256xbf16>
    %c2 = arith.constant 2 : index
    %c0_10 = arith.constant 0 : index
    %c0_11 = arith.constant 0 : index
    %17 = vector.load %arg3[%c2, %c0_10, %c0_11] : memref<9x256x512xbf16, #tpu.memory_space<vmem>>, vector<1x256x512xbf16>
    %18 = vector.shape_cast %17 : vector<1x256x512xbf16> to vector<256x512xbf16>
    %cst_12 = arith.constant dense<0.000000e+00> : vector<64x512xf32>
    %19 = tpu.matmul %16, %18, %cst_12 {dimension_numbers = #tpu.dot_dimension_numbers<[1], [0], [0], [1], [0, 0, 1, 1], [], []>} : vector<64x256xbf16>, vector<256x512xbf16>, vector<64x512xf32> -> vector<64x512xf32>
    %20 = arith.addf %14, %19 : vector<64x512xf32>
    %21 = vector.extract_strided_slice %1 {offsets = [1, 0, 0], sizes = [8, 8, 256], strides = [1, 1, 1]} : vector<10x10x256xbf16> to vector<8x8x256xbf16>
    %22 = vector.shape_cast %21 : vector<8x8x256xbf16> to vector<64x256xbf16>
    %c3 = arith.constant 3 : index
    %c0_13 = arith.constant 0 : index
    %c0_14 = arith.constant 0 : index
    %23 = vector.load %arg3[%c3, %c0_13, %c0_14] : memref<9x256x512xbf16, #tpu.memory_space<vmem>>, vector<1x256x512xbf16>
    %24 = vector.shape_cast %23 : vector<1x256x512xbf16> to vector<256x512xbf16>
    %cst_15 = arith.constant dense<0.000000e+00> : vector<64x512xf32>
    %25 = tpu.matmul %22, %24, %cst_15 {dimension_numbers = #tpu.dot_dimension_numbers<[1], [0], [0], [1], [0, 0, 1, 1], [], []>} : vector<64x256xbf16>, vector<256x512xbf16>, vector<64x512xf32> -> vector<64x512xf32>
    %26 = arith.addf %20, %25 : vector<64x512xf32>
    %27 = vector.extract_strided_slice %1 {offsets = [1, 1, 0], sizes = [8, 8, 256], strides = [1, 1, 1]} : vector<10x10x256xbf16> to vector<8x8x256xbf16>
    %28 = vector.shape_cast %27 : vector<8x8x256xbf16> to vector<64x256xbf16>
    %c4 = arith.constant 4 : index
    %c0_16 = arith.constant 0 : index
    %c0_17 = arith.constant 0 : index
    %29 = vector.load %arg3[%c4, %c0_16, %c0_17] : memref<9x256x512xbf16, #tpu.memory_space<vmem>>, vector<1x256x512xbf16>
    %30 = vector.shape_cast %29 : vector<1x256x512xbf16> to vector<256x512xbf16>
    %cst_18 = arith.constant dense<0.000000e+00> : vector<64x512xf32>
    %31 = tpu.matmul %28, %30, %cst_18 {dimension_numbers = #tpu.dot_dimension_numbers<[1], [0], [0], [1], [0, 0, 1, 1], [], []>} : vector<64x256xbf16>, vector<256x512xbf16>, vector<64x512xf32> -> vector<64x512xf32>
    %32 = arith.addf %26, %31 : vector<64x512xf32>
    %33 = vector.extract_strided_slice %1 {offsets = [1, 2, 0], sizes = [8, 8, 256], strides = [1, 1, 1]} : vector<10x10x256xbf16> to vector<8x8x256xbf16>
    %34 = vector.shape_cast %33 : vector<8x8x256xbf16> to vector<64x256xbf16>
    %c5 = arith.constant 5 : index
    %c0_19 = arith.constant 0 : index
    %c0_20 = arith.constant 0 : index
    %35 = vector.load %arg3[%c5, %c0_19, %c0_20] : memref<9x256x512xbf16, #tpu.memory_space<vmem>>, vector<1x256x512xbf16>
    %36 = vector.shape_cast %35 : vector<1x256x512xbf16> to vector<256x512xbf16>
    %cst_21 = arith.constant dense<0.000000e+00> : vector<64x512xf32>
    %37 = tpu.matmul %34, %36, %cst_21 {dimension_numbers = #tpu.dot_dimension_numbers<[1], [0], [0], [1], [0, 0, 1, 1], [], []>} : vector<64x256xbf16>, vector<256x512xbf16>, vector<64x512xf32> -> vector<64x512xf32>
    %38 = arith.addf %32, %37 : vector<64x512xf32>
    %39 = vector.extract_strided_slice %1 {offsets = [2, 0, 0], sizes = [8, 8, 256], strides = [1, 1, 1]} : vector<10x10x256xbf16> to vector<8x8x256xbf16>
    %40 = vector.shape_cast %39 : vector<8x8x256xbf16> to vector<64x256xbf16>
    %c6 = arith.constant 6 : index
    %c0_22 = arith.constant 0 : index
    %c0_23 = arith.constant 0 : index
    %41 = vector.load %arg3[%c6, %c0_22, %c0_23] : memref<9x256x512xbf16, #tpu.memory_space<vmem>>, vector<1x256x512xbf16>
    %42 = vector.shape_cast %41 : vector<1x256x512xbf16> to vector<256x512xbf16>
    %cst_24 = arith.constant dense<0.000000e+00> : vector<64x512xf32>
    %43 = tpu.matmul %40, %42, %cst_24 {dimension_numbers = #tpu.dot_dimension_numbers<[1], [0], [0], [1], [0, 0, 1, 1], [], []>} : vector<64x256xbf16>, vector<256x512xbf16>, vector<64x512xf32> -> vector<64x512xf32>
    %44 = arith.addf %38, %43 : vector<64x512xf32>
    %45 = vector.extract_strided_slice %1 {offsets = [2, 1, 0], sizes = [8, 8, 256], strides = [1, 1, 1]} : vector<10x10x256xbf16> to vector<8x8x256xbf16>
    %46 = vector.shape_cast %45 : vector<8x8x256xbf16> to vector<64x256xbf16>
    %c7 = arith.constant 7 : index
    %c0_25 = arith.constant 0 : index
    %c0_26 = arith.constant 0 : index
    %47 = vector.load %arg3[%c7, %c0_25, %c0_26] : memref<9x256x512xbf16, #tpu.memory_space<vmem>>, vector<1x256x512xbf16>
    %48 = vector.shape_cast %47 : vector<1x256x512xbf16> to vector<256x512xbf16>
    %cst_27 = arith.constant dense<0.000000e+00> : vector<64x512xf32>
    %49 = tpu.matmul %46, %48, %cst_27 {dimension_numbers = #tpu.dot_dimension_numbers<[1], [0], [0], [1], [0, 0, 1, 1], [], []>} : vector<64x256xbf16>, vector<256x512xbf16>, vector<64x512xf32> -> vector<64x512xf32>
    %50 = arith.addf %44, %49 : vector<64x512xf32>
    %51 = vector.extract_strided_slice %1 {offsets = [2, 2, 0], sizes = [8, 8, 256], strides = [1, 1, 1]} : vector<10x10x256xbf16> to vector<8x8x256xbf16>
    %52 = vector.shape_cast %51 : vector<8x8x256xbf16> to vector<64x256xbf16>
    %c8 = arith.constant 8 : index
    %c0_28 = arith.constant 0 : index
    %c0_29 = arith.constant 0 : index
    %53 = vector.load %arg3[%c8, %c0_28, %c0_29] : memref<9x256x512xbf16, #tpu.memory_space<vmem>>, vector<1x256x512xbf16>
    %54 = vector.shape_cast %53 : vector<1x256x512xbf16> to vector<256x512xbf16>
    %cst_30 = arith.constant dense<0.000000e+00> : vector<64x512xf32>
    %55 = tpu.matmul %52, %54, %cst_30 {dimension_numbers = #tpu.dot_dimension_numbers<[1], [0], [0], [1], [0, 0, 1, 1], [], []>} : vector<64x256xbf16>, vector<256x512xbf16>, vector<64x512xf32> -> vector<64x512xf32>
    %56 = arith.addf %50, %55 : vector<64x512xf32>
    %c0_31 = arith.constant 0 : index
    %c0_32 = arith.constant 0 : index
    %57 = vector.load %arg4[%c0_31, %c0_32] : memref<1x512xf32, #tpu.memory_space<vmem>>, vector<1x512xf32>
    %58 = vector.broadcast %57 : vector<1x512xf32> to vector<64x512xf32>
    %59 = arith.addf %56, %58 : vector<64x512xf32>
    %cst_33 = arith.constant 0.000000e+00 : f32
    %60 = vector.broadcast %cst_33 : f32 to vector<64x512xf32>
    %61 = arith.maximumf %59, %60 : vector<64x512xf32>
    %cst_34 = arith.constant dense<0.000000e+00> : vector<64xf32>
    %62 = vector.multi_reduction <add>, %61, %cst_34 [1] : vector<64x512xf32> to vector<64xf32>
    %63 = vector.shape_cast %62 : vector<64xf32> to vector<64x1xf32>
    %c0_35 = arith.constant 0 : index
    %c0_36 = arith.constant 0 : index
    %c0_37 = arith.constant 0 : index
    %64 = vector.load %arg1[%c0_35, %c0_36, %c0_37] : memref<1x64x512xbf16, #tpu.memory_space<vmem>>, vector<1x64x512xbf16>
    %65 = vector.shape_cast %64 : vector<1x64x512xbf16> to vector<64x512xbf16>
    %66 = arith.extf %65 : vector<64x512xbf16> to vector<64x512xf32>
    %67 = vector.broadcast %63 : vector<64x1xf32> to vector<64x512xf32>
    %68 = arith.mulf %66, %67 : vector<64x512xf32>
    %cst_38 = arith.constant dense<0.000000e+00> : vector<512xf32>
    %69 = vector.multi_reduction <add>, %68, %cst_38 [0] : vector<64x512xf32> to vector<512xf32>
    %70 = vector.shape_cast %69 : vector<512xf32> to vector<1x512xf32>
    %cst_39 = arith.constant 1.562500e-02 : f32
    %71 = vector.broadcast %cst_39 : f32 to vector<1x512xf32>
    %72 = arith.mulf %70, %71 : vector<1x512xf32>
    %73 = vector.shape_cast %72 : vector<1x512xf32> to vector<1x1x512xf32>
    %c0_40 = arith.constant 0 : index
    %c0_41 = arith.constant 0 : index
    %c0_42 = arith.constant 0 : index
    %74 = vector.load %arg5[%c0_40, %c0_41, %c0_42] : memref<1x1x512xf32, #tpu.memory_space<vmem>>, vector<1x1x512xf32>
    tpu.vector_store %arg5[%c0_40, %c0_41, %c0_42], %73 {strides = array<i32>} : memref<1x1x512xf32, #tpu.memory_space<vmem>>, vector<1x1x512xf32>,
    return
  }
  func.func @transform_0(%arg0: i32) -> (i32, i32, i32) {
    %c0_i32 = arith.constant 0 : i32
    %c0_i32_0 = arith.constant 0 : i32
    %c0_i32_1 = arith.constant 0 : i32
    return %arg0, %c0_i32, %c0_i32_0 : i32, i32, i32
  }
  func.func @transform_1(%arg0: i32) -> (i32, i32, i32, i32) {
    %c0_i32 = arith.constant 0 : i32
    %c0_i32_0 = arith.constant 0 : i32
    %c0_i32_1 = arith.constant 0 : i32
    %c0_i32_2 = arith.constant 0 : i32
    return %arg0, %c0_i32, %c0_i32_0, %c0_i32_1 : i32, i32, i32, i32
  }
  func.func @transform_2(%arg0: i32) -> (i32, i32, i32) {
    %c0_i32 = arith.constant 0 : i32
    %c0_i32_0 = arith.constant 0 : i32
    %c0_i32_1 = arith.constant 0 : i32
    %c0_i32_2 = arith.constant 0 : i32
    return %c0_i32, %c0_i32_0, %c0_i32_1 : i32, i32, i32
  }
  func.func @transform_3(%arg0: i32) -> (i32, i32) {
    %c0_i32 = arith.constant 0 : i32
    %c0_i32_0 = arith.constant 0 : i32
    %c0_i32_1 = arith.constant 0 : i32
    return %c0_i32, %c0_i32_0 : i32, i32
  }
  func.func @transform_4(%arg0: i32) -> (i32, i32, i32) {
    %c0_i32 = arith.constant 0 : i32
    %c0_i32_0 = arith.constant 0 : i32
    %c0_i32_1 = arith.constant 0 : i32
    return %arg0, %c0_i32, %c0_i32_0 : i32, i32, i32
  }
}

module attributes {stable_mosaic.version = 11 : i64} {
  func.func @_ca_kernel(%arg0: i32, %arg1: memref<2x512xf32, #tpu.memory_space<vmem>>, %arg2: memref<512x128xbf16, #tpu.memory_space<vmem>>, %arg3: memref<1x128xf32, #tpu.memory_space<vmem>>, %arg4: memref<128x512xbf16, #tpu.memory_space<vmem>>, %arg5: memref<1x512xf32, #tpu.memory_space<vmem>>, %arg6: memref<2x512xf32, #tpu.memory_space<vmem>>) attributes {dimension_semantics = [#tpu.dimension_semantics<arbitrary>], iteration_bounds = array<i64: 1>, scalar_prefetch = 0 : i64, scratch_operands = 0 : i64, tpu.core_type = #tpu.core_type<tc>, window_params = [{pipeline_mode = #tpu.pipeline_mode<synchronous>, transform_indices = @transform_0, window_bounds = array<i64: 2, 512>}, {pipeline_mode = #tpu.pipeline_mode<synchronous>, transform_indices = @transform_1, window_bounds = array<i64: 512, 128>}, {pipeline_mode = #tpu.pipeline_mode<synchronous>, transform_indices = @transform_2, window_bounds = array<i64: 1, 128>}, {pipeline_mode = #tpu.pipeline_mode<synchronous>, transform_indices = @transform_3, window_bounds = array<i64: 128, 512>}, {pipeline_mode = #tpu.pipeline_mode<synchronous>, transform_indices = @transform_4, window_bounds = array<i64: 1, 512>}, {pipeline_mode = #tpu.pipeline_mode<synchronous>, transform_indices = @transform_5, window_bounds = array<i64: 2, 512>}]} {
    %c0 = arith.constant 0 : index
    %c0_0 = arith.constant 0 : index
    %0 = vector.load %arg1[%c0, %c0_0] : memref<2x512xf32, #tpu.memory_space<vmem>>, vector<2x512xf32>
    %1 = arith.truncf %0 : vector<2x512xf32> to vector<2x512xbf16>
    %c0_1 = arith.constant 0 : index
    %c0_2 = arith.constant 0 : index
    %2 = vector.load %arg2[%c0_1, %c0_2] : memref<512x128xbf16, #tpu.memory_space<vmem>>, vector<512x128xbf16>
    %cst = arith.constant dense<0.000000e+00> : vector<2x128xf32>
    %3 = tpu.matmul %1, %2, %cst {dimension_numbers = #tpu.dot_dimension_numbers<[1], [0], [0], [1], [0, 0, 1, 1], [], []>} : vector<2x512xbf16>, vector<512x128xbf16>, vector<2x128xf32> -> vector<2x128xf32>
    %c0_3 = arith.constant 0 : index
    %c0_4 = arith.constant 0 : index
    %4 = vector.load %arg3[%c0_3, %c0_4] : memref<1x128xf32, #tpu.memory_space<vmem>>, vector<1x128xf32>
    %5 = vector.broadcast %4 : vector<1x128xf32> to vector<2x128xf32>
    %6 = arith.addf %3, %5 : vector<2x128xf32>
    %cst_5 = arith.constant 0.000000e+00 : f32
    %7 = vector.broadcast %cst_5 : f32 to vector<2x128xf32>
    %8 = arith.maximumf %6, %7 : vector<2x128xf32>
    %9 = arith.truncf %8 : vector<2x128xf32> to vector<2x128xbf16>
    %c0_6 = arith.constant 0 : index
    %c0_7 = arith.constant 0 : index
    %10 = vector.load %arg4[%c0_6, %c0_7] : memref<128x512xbf16, #tpu.memory_space<vmem>>, vector<128x512xbf16>
    %cst_8 = arith.constant dense<0.000000e+00> : vector<2x512xf32>
    %11 = tpu.matmul %9, %10, %cst_8 {dimension_numbers = #tpu.dot_dimension_numbers<[1], [0], [0], [1], [0, 0, 1, 1], [], []>} : vector<2x128xbf16>, vector<128x512xbf16>, vector<2x512xf32> -> vector<2x512xf32>
    %c0_9 = arith.constant 0 : index
    %c0_10 = arith.constant 0 : index
    %12 = vector.load %arg5[%c0_9, %c0_10] : memref<1x512xf32, #tpu.memory_space<vmem>>, vector<1x512xf32>
    %13 = vector.broadcast %12 : vector<1x512xf32> to vector<2x512xf32>
    %14 = arith.addf %11, %13 : vector<2x512xf32>
    %15 = arith.negf %14 : vector<2x512xf32>
    %16 = math.exp %15 : vector<2x512xf32>
    %cst_11 = arith.constant 1.000000e+00 : f32
    %17 = vector.broadcast %cst_11 : f32 to vector<2x512xf32>
    %18 = arith.addf %17, %16 : vector<2x512xf32>
    %19 = arith.divf %17, %18 : vector<2x512xf32>
    %20 = arith.mulf %0, %19 : vector<2x512xf32>
    %c0_12 = arith.constant 0 : index
    %c0_13 = arith.constant 0 : index
    %21 = vector.load %arg6[%c0_12, %c0_13] : memref<2x512xf32, #tpu.memory_space<vmem>>, vector<2x512xf32>
    tpu.vector_store %arg6[%c0_12, %c0_13], %20 {strides = array<i32>} : memref<2x512xf32, #tpu.memory_space<vmem>>, vector<2x512xf32>,
    return
  }
  func.func @transform_0(%arg0: i32) -> (i32, i32) {
    %c0_i32 = arith.constant 0 : i32
    %c0_i32_0 = arith.constant 0 : i32
    %c0_i32_1 = arith.constant 0 : i32
    return %c0_i32, %c0_i32_0 : i32, i32
  }
  func.func @transform_1(%arg0: i32) -> (i32, i32) {
    %c0_i32 = arith.constant 0 : i32
    %c0_i32_0 = arith.constant 0 : i32
    %c0_i32_1 = arith.constant 0 : i32
    return %c0_i32, %c0_i32_0 : i32, i32
  }
  func.func @transform_2(%arg0: i32) -> (i32, i32) {
    %c0_i32 = arith.constant 0 : i32
    %c0_i32_0 = arith.constant 0 : i32
    %c0_i32_1 = arith.constant 0 : i32
    return %c0_i32, %c0_i32_0 : i32, i32
  }
  func.func @transform_3(%arg0: i32) -> (i32, i32) {
    %c0_i32 = arith.constant 0 : i32
    %c0_i32_0 = arith.constant 0 : i32
    %c0_i32_1 = arith.constant 0 : i32
    return %c0_i32, %c0_i32_0 : i32, i32
  }
  func.func @transform_4(%arg0: i32) -> (i32, i32) {
    %c0_i32 = arith.constant 0 : i32
    %c0_i32_0 = arith.constant 0 : i32
    %c0_i32_1 = arith.constant 0 : i32
    return %c0_i32, %c0_i32_0 : i32, i32
  }
  func.func @transform_5(%arg0: i32) -> (i32, i32) {
    %c0_i32 = arith.constant 0 : i32
    %c0_i32_0 = arith.constant 0 : i32
    %c0_i32_1 = arith.constant 0 : i32
    return %c0_i32, %c0_i32_0 : i32, i32
  }
}

</mosaic_0001>

<llo_original>
// kernel: _lambda_.3
$region0: #{_lambda_.3}
  #allocation0 [shape = 'u32[]', space=smem, size = 0x4, offset = 0x4, fixed_abs, tag = 'smem constant byte address 0x4 - core index']
  #allocation1 [shape = 'u32[72,128]{1,0:T(1,128)}', space=vmem, size = 0x9000, scoped, tag = 'internal scratch']
  #allocation2 [shape = 'f32[128,256]{1,0:T(8,128)}', space=vmem, size = 0x20000, scoped, tag = 'scratch operand']
  %s0 = inlined_call_operand.vmem [shape: bf16[128,512], index: 0, kind: input, shape index: {}]
  %s1 = inlined_call_operand.hbm [shape: bf16[512,256], index: 1, kind: input, shape index: {}]
  %s2 = inlined_call_operand.vmem [shape: f32[1,256], index: 2, kind: input, shape index: {}]
  %s3 = inlined_call_operand.vmem [shape: bf16[128,256], index: 3, kind: output, shape index: {}]
  %s4 = sld [smem:[#allocation0]]
  $region95: #{_lambda_.3} parent=0
    _
  %s6 = ssub.s32 1, %s4
  %s7 = scalar_select 0, %s6, %s4
  $region1: #{_lambda_.3} parent=0
    #allocation3 [shape = 'u8[131072]{0}', space=vmem, size = 0x20000, scoped, tag = 'input window, operand 0']
    #allocation4 [shape = 'u8[262144]{0}', space=vmem, size = 0x40000, scoped, tag = 'input window, operand 1']
    #allocation5 [shape = 's32[2]{0}', space=sflag, size = 0x8, scoped, tag = 'scoped memory for _lambda_.3']
    %8 = vsyncpa [#allocation5], 0
    %s9 = scalar_lea.sflag [#allocation5], 1
    %10 = vsyncpa %s9, 0
    loop: start=0, step=1, limit=4
    $region2: #{_lambda_.3} parent=1 // loop_pre_header
      _
    $region3: #{_lambda_.3} parent=1 // loop_header
      %s12 = sphi 0, %s16
      %p13 = scmp.ge.s32.totalorder %s12, 4
      %s19 = sphi 0, %s38
      %s20 = sphi 0, %s34
      %s21 = sphi 0, %s30
      %s22 = sphi 0, %s19
      %s23 = sphi 0, %s20
      %s24 = sphi 0, %s21
      %s25 = sphi 0, %s22
      %s26 = sphi 0, %s23
      %s27 = sphi 0, %s24
      %s43 = sphi 0, %s45
      %s46 = sphi 0, %s43
      %s47 = sphi 0, %s46
      %s63 = sphi 0, %s47
      %s71 = sphi 0, %s73
      %s74 = sphi 0, %s71
      %s75 = sphi 0, %s74
      %s91 = sphi 0, %s75
      %s97 = sphi 0, %s99
      %s100 = sphi 0, %s97
      %s101 = sphi 0, %s100
      %s117 = sphi 0, %s101
      %s125 = sphi 0, %s127
      %s128 = sphi 0, %s125
      %s129 = sphi 0, %s128
      %s145 = sphi 0, %s129
    $region4: #{_lambda_.3} parent=1 // loop_header_branch
      %15 = sbr.rel (%p13) target = $region8
    $region5: #{_lambda_.3} parent=1 // loop_body
      %s17 = ssub.s32 %s12, 1
      %s18 = ssub.s32 %s12, 2
      %s28 = sadd.s32 1, %s21
      %p29 = scmp.ge.s32.totalorder %s28, 2
      %s30 = scalar_select %p29, 0, %s28
      %s31 = sadd.s32 1, %s20
      %s32 = scalar_select %p29, %s31, %s20
      %p33 = scmp.ge.s32.totalorder %s32, 1
      %s34 = scalar_select %p33, 0, %s32
      %s35 = sadd.s32 1, %s19
      %s36 = scalar_select %p33, %s35, %s19
      %p37 = scmp.ge.s32.totalorder %s36, 1
      %s38 = scalar_select %p37, 0, %s36
      %s39 = ssub.s32 %s19, %s38
      %s40 = ssub.s32 %s21, %s30
      %s41 = sor.u32 %s39, %s40
      %p42 = scmp.eq.s32.totalorder %s41, 0
      %s44 = sadd.s32 %s43, 1
      %s45 = scalar_select %p42, %s43, %s44
      %p48 = pneg %p42
      %p49 = scmp.eq.s32.totalorder %s12, 1
      %p50 = por %p48, %p49
      %p51 = scmp.ne.s32.totalorder %s43, %s46
      %p52 = scmp.eq.s32.totalorder %s12, 0
      %p53 = por %p51, %p52
      %p54 = scmp.ne.s32.totalorder %s43, %s46
      %p55 = scmp.eq.s32.totalorder %s17, 1
      %p56 = por %p54, %p55
      %p57 = scmp.ne.s32.totalorder %s46, %s47
      %p58 = scmp.eq.s32.totalorder %s17, 0
      %p59 = por %p57, %p58
      %p60 = scmp.ne.s32.totalorder %s46, %s47
      %p61 = scmp.eq.s32.totalorder %s18, 1
      %p62 = por %p60, %p61
      %p64 = scmp.ne.s32.totalorder %s47, %s63
      %p65 = scmp.eq.s32.totalorder %s18, 0
      %p66 = por %p64, %p65
      %s67 = ssub.s32 %s21, %s30
      %s68 = ssub.s32 %s20, %s34
      %s69 = sor.u32 %s67, %s68
      %p70 = scmp.eq.s32.totalorder %s69, 0
      %s72 = sadd.s32 %s71, 1
      %s73 = scalar_select %p70, %s71, %s72
      %p76 = pneg %p70
      %p77 = scmp.eq.s32.totalorder %s12, 1
      %p78 = por %p76, %p77
      %p79 = scmp.ne.s32.totalorder %s71, %s74
      %p80 = scmp.eq.s32.totalorder %s12, 0
      %p81 = por %p79, %p80
      %p82 = scmp.ne.s32.totalorder %s71, %s74
      %p83 = scmp.eq.s32.totalorder %s17, 1
      %p84 = por %p82, %p83
      %p85 = scmp.ne.s32.totalorder %s74, %s75
      %p86 = scmp.eq.s32.totalorder %s17, 0
      %p87 = por %p85, %p86
      %p88 = scmp.ne.s32.totalorder %s74, %s75
      %p89 = scmp.eq.s32.totalorder %s18, 1
      %p90 = por %p88, %p89
      %p92 = scmp.ne.s32.totalorder %s75, %s91
      %p93 = scmp.eq.s32.totalorder %s18, 0
      %p94 = por %p92, %p93
      %s95 = ssub.s32 %s20, %s34
      %p96 = scmp.eq.s32.totalorder %s95, 0
      %s98 = sadd.s32 %s97, 1
      %s99 = scalar_select %p96, %s97, %s98
      %p102 = pneg %p96
      %p103 = scmp.eq.s32.totalorder %s12, 1
      %p104 = por %p102, %p103
      %p105 = scmp.ne.s32.totalorder %s97, %s100
      %p106 = scmp.eq.s32.totalorder %s12, 0
      %p107 = por %p105, %p106
      %p108 = scmp.ne.s32.totalorder %s97, %s100
      %p109 = scmp.eq.s32.totalorder %s17, 1
      %p110 = por %p108, %p109
      %p111 = scmp.ne.s32.totalorder %s100, %s101
      %p112 = scmp.eq.s32.totalorder %s17, 0
      %p113 = por %p111, %p112
      %p114 = scmp.ne.s32.totalorder %s100, %s101
      %p115 = scmp.eq.s32.totalorder %s18, 1
      %p116 = por %p114, %p115
      %p118 = scmp.ne.s32.totalorder %s101, %s117
      %p119 = scmp.eq.s32.totalorder %s18, 0
      %p120 = por %p118, %p119
      %s121 = ssub.s32 %s19, %s38
      %s122 = ssub.s32 %s20, %s34
      %s123 = sor.u32 %s121, %s122
      %p124 = scmp.eq.s32.totalorder %s123, 0
      %s126 = sadd.s32 %s125, 1
      %s127 = scalar_select %p124, %s125, %s126
      %p130 = pneg %p124
      %p131 = scmp.eq.s32.totalorder %s12, 1
      %p132 = por %p130, %p131
      %p133 = scmp.ne.s32.totalorder %s125, %s128
      %p134 = scmp.eq.s32.totalorder %s12, 0
      %p135 = por %p133, %p134
      %p136 = scmp.ne.s32.totalorder %s125, %s128
      %p137 = scmp.eq.s32.totalorder %s17, 1
      %p138 = por %p136, %p137
      %p139 = scmp.ne.s32.totalorder %s128, %s129
      %p140 = scmp.eq.s32.totalorder %s17, 0
      %p141 = por %p139, %p140
      %p142 = scmp.ne.s32.totalorder %s128, %s129
      %p143 = scmp.eq.s32.totalorder %s18, 1
      %p144 = por %p142, %p143
      %p146 = scmp.ne.s32.totalorder %s129, %s145
      %p147 = scmp.eq.s32.totalorder %s18, 0
      %p148 = por %p146, %p147
      %p149 = scmp.le.s32.totalorder 1, %s12
      %p150 = scmp.lt.s32.totalorder %s12, 3
      %p151 = pnand %p149, %p150
      %p152 = pneg %p151
      // Predicated region
      $region9: #{_lambda_.3} parent=5 // pred_check
        _
      $region10: #{_lambda_.3} parent=5 // pred_check_branch
        %154 = sbr.rel (%p151) target = $region12
      $region11: #{_lambda_.3} parent=5 // pred_region
        %s155 = ssub.s32 %s12, 1
        // Predicated region
        $region13: #{_lambda_.3} parent=11 // pred_check
          %p156 = pneg %p113
        $region14: #{_lambda_.3} parent=11 // pred_check_branch
          %158 = sbr.rel (%p156) target = $region16
        $region15: #{_lambda_.3} parent=11 // pred_region
          %s159 = smul.u32 2, %s23
          %p160 = scmp.lt.s32.totalorder %s159, 1
          %s161 = scalar_select %p160, %s159, 1
          %s162 = scalar_lea.vmem %s2, %s161
          %s163 = smul.u32 2, %s23
        $region16: #{_lambda_.3} parent=11 // pred_fallthru
          _
      $region12: #{_lambda_.3} parent=5 // pred_fallthru
        _
      %p164 = scmp.lt.s32.totalorder %s12, 2
      // Predicated region
      $region17: #{_lambda_.3} parent=5 // pred_check
        %p165 = pneg %p164
      $region18: #{_lambda_.3} parent=5 // pred_check_branch
        %167 = sbr.rel (%p165) target = $region20
      $region19: #{_lambda_.3} parent=5 // pred_region
        // Predicated region
        $region21: #{_lambda_.3} parent=19 // pred_check
          %p168 = pneg %p53
        $region22: #{_lambda_.3} parent=19 // pred_check_branch
          %170 = sbr.rel (%p168) target = $region24
        $region23: #{_lambda_.3} parent=19 // pred_region
          %s171 = sand.u32 %s43, 1
          %s172 = sand.u32 %s43, 1
          %s173 = smul.addr %s172, 128
          %s174 = scalar_lea.vmem [#allocation3], %s173
          %s175 = smul.u32 16, %s19
          %s176 = smul.u32 2, %s21
          %s177 = smul.addr %s175, 4
          %s178 = sadd.s32 %s176, %s177
          %s179 = smul.addr %s178, 4
          %s180 = scalar_lea.vmem %s0, %s179
          // Predicated region
          $region25: #{_lambda_.3} parent=23 // pred_check
            _
          $region26: #{_lambda_.3} parent=23 // pred_check_branch
            %182 = sbr.rel (0) target = $region28
          $region27: #{_lambda_.3} parent=23 // pred_region
            // Predicated region
            $region29: #{_lambda_.3} parent=27 // pred_check
              _
            $region30: #{_lambda_.3} parent=27 // pred_check_branch
              %184 = sbr.rel (0) target = $region32
            $region31: #{_lambda_.3} parent=27 // pred_region
              // Predicated region
              $region44: #{_lambda_.3} parent=31 // pred_check
                _
              $region45: #{_lambda_.3} parent=31 // pred_check_branch
                %230 = sbr.rel (0) target = $region47
              $region46: #{_lambda_.3} parent=31 // pred_region
                loop: start=0, step=1, limit=1
                $region48: #{_lambda_.3} parent=46 // loop_pre_header
                  _
                $region49: #{_lambda_.3} parent=46 // loop_header
                  %s232 = sphi 0, %s236
                  %p233 = scmp.ge.s32.totalorder %s232, 1
                  %s237 = sphi %s180, %s180
                  %s238 = sphi %s174, %s174
                $region50: #{_lambda_.3} parent=46 // loop_header_branch
                  %235 = sbr.rel (%p233) target = $region54
                $region51: #{_lambda_.3} parent=46 // loop_body
                  %v239 = vld [vmem:[%s237] sm:$0xff]
                  %240 = vst [vmem:[%s238] sm:$0xff] %v239
                  %v241 = vld [vmem:[%s237 + $0x10] sm:$0xff]
                  %242 = vst [vmem:[%s238 + $0x8] sm:$0xff] %v241
                  %v243 = vld [vmem:[%s237 + $0x20] sm:$0xff]
                  %244 = vst [vmem:[%s238 + $0x10] sm:$0xff] %v243
                  %v245 = vld [vmem:[%s237 + $0x30] sm:$0xff]
                  %246 = vst [vmem:[%s238 + $0x18] sm:$0xff] %v245
                  %v247 = vld [vmem:[%s237 + $0x40] sm:$0xff]
                  %248 = vst [vmem:[%s238 + $0x20] sm:$0xff] %v247
                  %v249 = vld [vmem:[%s237 + $0x50] sm:$0xff]
                  %250 = vst [vmem:[%s238 + $0x28] sm:$0xff] %v249
                  %v251 = vld [vmem:[%s237 + $0x60] sm:$0xff]
                  %252 = vst [vmem:[%s238 + $0x30] sm:$0xff] %v251
                  %v253 = vld [vmem:[%s237 + $0x70] sm:$0xff]
                  %254 = vst [vmem:[%s238 + $0x38] sm:$0xff] %v253
                  %v255 = vld [vmem:[%s237 + $0x80] sm:$0xff]
                  %256 = vst [vmem:[%s238 + $0x40] sm:$0xff] %v255
                  %v257 = vld [vmem:[%s237 + $0x90] sm:$0xff]
                  %258 = vst [vmem:[%s238 + $0x48] sm:$0xff] %v257
                  %v259 = vld [vmem:[%s237 + $0xa0] sm:$0xff]
                  %260 = vst [vmem:[%s238 + $0x50] sm:$0xff] %v259
                  %v261 = vld [vmem:[%s237 + $0xb0] sm:$0xff]
                  %262 = vst [vmem:[%s238 + $0x58] sm:$0xff] %v261
                  %v263 = vld [vmem:[%s237 + $0xc0] sm:$0xff]
                  %264 = vst [vmem:[%s238 + $0x60] sm:$0xff] %v263
                  %v265 = vld [vmem:[%s237 + $0xd0] sm:$0xff]
                  %266 = vst [vmem:[%s238 + $0x68] sm:$0xff] %v265
                  %v267 = vld [vmem:[%s237 + $0xe0] sm:$0xff]
                  %268 = vst [vmem:[%s238 + $0x70] sm:$0xff] %v267
                  %v269 = vld [vmem:[%s237 + $0xf0] sm:$0xff]
                  %270 = vst [vmem:[%s238 + $0x78] sm:$0xff] %v269
                $region52: #{_lambda_.3} parent=46 // loop_footer
                  %s236 = sadd.s32 1, %s232
                $region53: #{_lambda_.3} parent=46 // loop_footer_branch
                  %231 = sbr.rel target = $region49
                $region54: #{_lambda_.3} parent=46 // loop_exit
                  _
              $region47: #{_lambda_.3} parent=31 // pred_fallthru
                _
              // Predicated region
              $region55: #{_lambda_.3} parent=31 // pred_check
                _
              $region56: #{_lambda_.3} parent=31 // pred_check_branch
                %272 = sbr.rel target = $region58
              $region57: #{_lambda_.3} parent=31 // pred_region
                _
              $region58: #{_lambda_.3} parent=31 // pred_fallthru
                _
            $region32: #{_lambda_.3} parent=27 // pred_fallthru
              _
            // Predicated region
            $region33: #{_lambda_.3} parent=27 // pred_check
              _
            $region34: #{_lambda_.3} parent=27 // pred_check_branch
              %186 = sbr.rel target = $region36
            $region35: #{_lambda_.3} parent=27 // pred_region
              %s188 = ssub.s32 256, 1
              loop: start=0, step=1, limit=1
              $region37: #{_lambda_.3} parent=35 // loop_pre_header
                _
              $region38: #{_lambda_.3} parent=35 // loop_header
                %s190 = sphi 0, %s194
                %p191 = scmp.ge.s32.totalorder %s190, 1
                %s195 = sphi %s180, %s180
                %s196 = sphi %s174, %s174
              $region39: #{_lambda_.3} parent=35 // loop_header_branch
                %193 = sbr.rel (%p191) target = $region43
              $region40: #{_lambda_.3} parent=35 // loop_body
                %v197 = vld [vmem:[%s195] sm:%s188]
                %198 = vst [vmem:[%s196] sm:%s188] %v197
                %v199 = vld [vmem:[%s195 + $0x10] sm:%s188]
                %200 = vst [vmem:[%s196 + $0x8] sm:%s188] %v199
                %v201 = vld [vmem:[%s195 + $0x20] sm:%s188]
                %202 = vst [vmem:[%s196 + $0x10] sm:%s188] %v201
                %v203 = vld [vmem:[%s195 + $0x30] sm:%s188]
                %204 = vst [vmem:[%s196 + $0x18] sm:%s188] %v203
                %v205 = vld [vmem:[%s195 + $0x40] sm:%s188]
                %206 = vst [vmem:[%s196 + $0x20] sm:%s188] %v205
                %v207 = vld [vmem:[%s195 + $0x50] sm:%s188]
                %208 = vst [vmem:[%s196 + $0x28] sm:%s188] %v207
                %v209 = vld [vmem:[%s195 + $0x60] sm:%s188]
                %210 = vst [vmem:[%s196 + $0x30] sm:%s188] %v209
                %v211 = vld [vmem:[%s195 + $0x70] sm:%s188]
                %212 = vst [vmem:[%s196 + $0x38] sm:%s188] %v211
                %v213 = vld [vmem:[%s195 + $0x80] sm:%s188]
                %214 = vst [vmem:[%s196 + $0x40] sm:%s188] %v213
                %v215 = vld [vmem:[%s195 + $0x90] sm:%s188]
                %216 = vst [vmem:[%s196 + $0x48] sm:%s188] %v215
                %v217 = vld [vmem:[%s195 + $0xa0] sm:%s188]
                %218 = vst [vmem:[%s196 + $0x50] sm:%s188] %v217
                %v219 = vld [vmem:[%s195 + $0xb0] sm:%s188]
                %220 = vst [vmem:[%s196 + $0x58] sm:%s188] %v219
                %v221 = vld [vmem:[%s195 + $0xc0] sm:%s188]
                %222 = vst [vmem:[%s196 + $0x60] sm:%s188] %v221
                %v223 = vld [vmem:[%s195 + $0xd0] sm:%s188]
                %224 = vst [vmem:[%s196 + $0x68] sm:%s188] %v223
                %v225 = vld [vmem:[%s195 + $0xe0] sm:%s188]
                %226 = vst [vmem:[%s196 + $0x70] sm:%s188] %v225
                %v227 = vld [vmem:[%s195 + $0xf0] sm:%s188]
                %228 = vst [vmem:[%s196 + $0x78] sm:%s188] %v227
              $region41: #{_lambda_.3} parent=35 // loop_footer
                %s194 = sadd.s32 1, %s190
              $region42: #{_lambda_.3} parent=35 // loop_footer_branch
                %189 = sbr.rel target = $region38
              $region43: #{_lambda_.3} parent=35 // loop_exit
                _
            $region36: #{_lambda_.3} parent=27 // pred_fallthru
              _
          $region28: #{_lambda_.3} parent=23 // pred_fallthru
            _
          %273 = vnop
        $region24: #{_lambda_.3} parent=19 // pred_fallthru
          _
        // Predicated region
        $region59: #{_lambda_.3} parent=19 // pred_check
          %p274 = pneg %p81
        $region60: #{_lambda_.3} parent=19 // pred_check_branch
          %276 = sbr.rel (%p274) target = $region62
        $region61: #{_lambda_.3} parent=19 // pred_region
          %s277 = sand.u32 %s71, 1
          %s278 = scalar_lea.sflag [#allocation5], %s277
          %s279 = sand.u32 %s71, 1
          %s280 = smul.addr %s279, 256
          %s281 = scalar_lea.vmem [#allocation4], %s280
          %s282 = smul.u32 32, %s21
          %s283 = smul.u32 2, %s20
          %285 = vsyncadd %s278, 0
          %s286 = smul.addr %s282, 2
          %s287 = sadd.s32 %s283, %s286
          %s288 = smul.addr %s287, 4
          %s289 = scalar_lea.hbm %s1, %s288
          %s290 = sshll.u32 %s289, 4
          %s291 = int_to_ptr.hbm [resolvable:$true] %s290
          %s292 = sshll.u32 %s281, 4
          %s293 = int_to_ptr.vmem [resolvable:$true] %s292
          %298 = dma.hbm_to_vmem [thread:$0]  %s291, 4096, %s293, %s278, 128, 128, 8
        $region62: #{_lambda_.3} parent=19 // pred_fallthru
          _
      $region20: #{_lambda_.3} parent=5 // pred_fallthru
        _
      %p299 = scmp.le.s32.totalorder 1, %s12
      %p300 = scmp.lt.s32.totalorder %s12, 3
      %p301 = pnand %p299, %p300
      %p302 = pneg %p301
      // Predicated region
      $region63: #{_lambda_.3} parent=5 // pred_check
        _
      $region64: #{_lambda_.3} parent=5 // pred_check_branch
        %304 = sbr.rel (%p301) target = $region66
      $region65: #{_lambda_.3} parent=5 // pred_region
        %s305 = ssub.s32 %s12, 1
        %s306 = sand.u32 %s46, 1
        %s307 = sand.u32 %s46, 1
        %s308 = smul.addr %s307, 128
        %s309 = scalar_lea.vmem [#allocation3], %s308
        // Predicated region
        $region67: #{_lambda_.3} parent=65 // pred_check
          %p310 = pneg %p59
        $region68: #{_lambda_.3} parent=65 // pred_check_branch
          %312 = sbr.rel (%p310) target = $region70
        $region69: #{_lambda_.3} parent=65 // pred_region
          _
        $region70: #{_lambda_.3} parent=65 // pred_fallthru
          _
        %s313 = sand.u32 %s74, 1
        %s314 = scalar_lea.sflag [#allocation5], %s313
        %s315 = sand.u32 %s74, 1
        %s316 = smul.addr %s315, 256
        %s317 = scalar_lea.vmem [#allocation4], %s316
        // Predicated region
        $region71: #{_lambda_.3} parent=65 // pred_check
          %p318 = pneg %p87
        $region72: #{_lambda_.3} parent=65 // pred_check_branch
          %320 = sbr.rel (%p318) target = $region74
        $region73: #{_lambda_.3} parent=65 // pred_region
          %322 = dma.done %s314, 4096
        $region74: #{_lambda_.3} parent=65 // pred_fallthru
          _
        %s323 = sand.u32 %s46, 1
        %s324 = sand.u32 %s46, 1
        %s325 = smul.addr %s324, 128
        %s326 = scalar_lea.vmem [#allocation3], %s325
        %p327 = pneg %p59
        %p328 = pneg %p56
        %s329 = sand.u32 %s74, 1
        %s330 = scalar_lea.sflag [#allocation5], %s329
        %s331 = sand.u32 %s74, 1
        %s332 = smul.addr %s331, 256
        %s333 = scalar_lea.vmem [#allocation4], %s332
        %p334 = pneg %p87
        %p335 = pneg %p84
        %s336 = smul.u32 2, %s23
        %p337 = scmp.lt.s32.totalorder %s336, 1
        %s338 = scalar_select %p337, %s336, 1
        %s339 = scalar_lea.vmem %s2, %s338
        %p340 = pneg %p113
        %p341 = pneg %p110
        %p342 = pneg %p141
        %p343 = pneg %p138
        %s344 = smul.u32 16, %s22
        %s345 = smul.u32 2, %s23
        %p346 = scmp.lt.s32.totalorder %s344, 15
        %s347 = scalar_select %p346, %s344, 15
        %p348 = scmp.lt.s32.totalorder %s345, 1
        %s349 = scalar_select %p348, %s345, 1
        %s350 = smul.addr %s347, 2
        %s351 = sadd.s32 %s349, %s350
        %s352 = smul.addr %s351, 4
        %s353 = scalar_lea.vmem %s3, %s352
        %s354 = smul.u32 16, %s22
        %s355 = smul.u32 2, %s24
        %s356 = smul.u32 32, %s24
        %s357 = smul.u32 2, %s23
        %s358 = smul.u32 2, %s23
        %p359 = scmp.lt.s32.totalorder %s358, 1
        %s360 = scalar_select %p359, %s358, 1
        %s361 = scalar_lea.vmem %s2, %s360
        %s362 = smul.u32 2, %s23
        %s363 = smul.u32 16, %s22
        %s364 = smul.u32 2, %s23
        %p365 = scmp.lt.s32.totalorder %s363, 15
        %s366 = scalar_select %p365, %s363, 15
        %p367 = scmp.lt.s32.totalorder %s364, 1
        %s368 = scalar_select %p367, %s364, 1
        %s369 = smul.addr %s366, 2
        %s370 = sadd.s32 %s368, %s369
        %s371 = smul.addr %s370, 4
        %s372 = scalar_lea.vmem %s3, %s371
        %s373 = smul.u32 16, %s22
        %s374 = smul.u32 2, %s23
        %p375 = scmp.eq.s32.totalorder %s24, 0
        // Predicated region
        $region75: #{_lambda_.3} parent=65 // pred_check
          %p376 = pneg %p375
        $region76: #{_lambda_.3} parent=65 // pred_check_branch
          %378 = sbr.rel (%p376) target = $region78
        $region77: #{_lambda_.3} parent=65 // pred_region
          %379 = vst [vmem:[#allocation2] sm:$0xff] 0.0
          %380 = vst [vmem:[#allocation2 + $0x8] sm:$0xff] 0.0
          %381 = vst [vmem:[#allocation2 + $0x10] sm:$0xff] 0.0
          %382 = vst [vmem:[#allocation2 + $0x18] sm:$0xff] 0.0
          %383 = vst [vmem:[#allocation2 + $0x20] sm:$0xff] 0.0
          %384 = vst [vmem:[#allocation2 + $0x28] sm:$0xff] 0.0
          %385 = vst [vmem:[#allocation2 + $0x30] sm:$0xff] 0.0
          %386 = vst [vmem:[#allocation2 + $0x38] sm:$0xff] 0.0
          %387 = vst [vmem:[#allocation2 + $0x40] sm:$0xff] 0.0
          %388 = vst [vmem:[#allocation2 + $0x48] sm:$0xff] 0.0
          %389 = vst [vmem:[#allocation2 + $0x50] sm:$0xff] 0.0
          %390 = vst [vmem:[#allocation2 + $0x58] sm:$0xff] 0.0
          %391 = vst [vmem:[#allocation2 + $0x60] sm:$0xff] 0.0
          %392 = vst [vmem:[#allocation2 + $0x68] sm:$0xff] 0.0
          %393 = vst [vmem:[#allocation2 + $0x70] sm:$0xff] 0.0
          %394 = vst [vmem:[#allocation2 + $0x78] sm:$0xff] 0.0
          %395 = vst [vmem:[#allocation2 + $0x80] sm:$0xff] 0.0
          %396 = vst [vmem:[#allocation2 + $0x88] sm:$0xff] 0.0
          %397 = vst [vmem:[#allocation2 + $0x90] sm:$0xff] 0.0
          %398 = vst [vmem:[#allocation2 + $0x98] sm:$0xff] 0.0
          %399 = vst [vmem:[#allocation2 + $0xa0] sm:$0xff] 0.0
          %400 = vst [vmem:[#allocation2 + $0xa8] sm:$0xff] 0.0
          %401 = vst [vmem:[#allocation2 + $0xb0] sm:$0xff] 0.0
          %402 = vst [vmem:[#allocation2 + $0xb8] sm:$0xff] 0.0
          %403 = vst [vmem:[#allocation2 + $0xc0] sm:$0xff] 0.0
          %404 = vst [vmem:[#allocation2 + $0xc8] sm:$0xff] 0.0
          %405 = vst [vmem:[#allocation2 + $0xd0] sm:$0xff] 0.0
          %406 = vst [vmem:[#allocation2 + $0xd8] sm:$0xff] 0.0
          %407 = vst [vmem:[#allocation2 + $0xe0] sm:$0xff] 0.0
          %408 = vst [vmem:[#allocation2 + $0xe8] sm:$0xff] 0.0
          %409 = vst [vmem:[#allocation2 + $0xf0] sm:$0xff] 0.0
          %410 = vst [vmem:[#allocation2 + $0xf8] sm:$0xff] 0.0
        $region78: #{_lambda_.3} parent=65 // pred_fallthru
          _
        %v411 = vld [vmem:[#allocation2] sm:$0xff]
        %v412 = vld [vmem:[#allocation2 + $0x8] sm:$0xff]
        %v413 = vld [vmem:[#allocation2 + $0x10] sm:$0xff]
        %v414 = vld [vmem:[#allocation2 + $0x18] sm:$0xff]
        %v415 = vld [vmem:[#allocation2 + $0x20] sm:$0xff]
        %v416 = vld [vmem:[#allocation2 + $0x28] sm:$0xff]
        %v417 = vld [vmem:[#allocation2 + $0x30] sm:$0xff]
        %v418 = vld [vmem:[#allocation2 + $0x38] sm:$0xff]
        %v419 = vld [vmem:[#allocation2 + $0x40] sm:$0xff]
        %v420 = vld [vmem:[#allocation2 + $0x48] sm:$0xff]
        %v421 = vld [vmem:[#allocation2 + $0x50] sm:$0xff]
        %v422 = vld [vmem:[#allocation2 + $0x58] sm:$0xff]
        %v423 = vld [vmem:[#allocation2 + $0x60] sm:$0xff]
        %v424 = vld [vmem:[#allocation2 + $0x68] sm:$0xff]
        %v425 = vld [vmem:[#allocation2 + $0x70] sm:$0xff]
        %v426 = vld [vmem:[#allocation2 + $0x78] sm:$0xff]
        %v427 = vld [vmem:[#allocation2 + $0x80] sm:$0xff]
        %v428 = vld [vmem:[#allocation2 + $0x88] sm:$0xff]
        %v429 = vld [vmem:[#allocation2 + $0x90] sm:$0xff]
        %v430 = vld [vmem:[#allocation2 + $0x98] sm:$0xff]
        %v431 = vld [vmem:[#allocation2 + $0xa0] sm:$0xff]
        %v432 = vld [vmem:[#allocation2 + $0xa8] sm:$0xff]
        %v433 = vld [vmem:[#allocation2 + $0xb0] sm:$0xff]
        %v434 = vld [vmem:[#allocation2 + $0xb8] sm:$0xff]
        %v435 = vld [vmem:[#allocation2 + $0xc0] sm:$0xff]
        %v436 = vld [vmem:[#allocation2 + $0xc8] sm:$0xff]
        %v437 = vld [vmem:[#allocation2 + $0xd0] sm:$0xff]
        %v438 = vld [vmem:[#allocation2 + $0xd8] sm:$0xff]
        %v439 = vld [vmem:[#allocation2 + $0xe0] sm:$0xff]
        %v440 = vld [vmem:[#allocation2 + $0xe8] sm:$0xff]
        %v441 = vld [vmem:[#allocation2 + $0xf0] sm:$0xff]
        %v442 = vld [vmem:[#allocation2 + $0xf8] sm:$0xff]
        %v443 = vld [vmem:[%s309] sm:$0xff]
        %v444 = vld [vmem:[%s309 + $0x8] sm:$0xff]
        %v445 = vld [vmem:[%s309 + $0x10] sm:$0xff]
        %v446 = vld [vmem:[%s309 + $0x18] sm:$0xff]
        %v447 = vld [vmem:[%s309 + $0x20] sm:$0xff]
        %v448 = vld [vmem:[%s309 + $0x28] sm:$0xff]
        %v449 = vld [vmem:[%s309 + $0x30] sm:$0xff]
        %v450 = vld [vmem:[%s309 + $0x38] sm:$0xff]
        %v451 = vld [vmem:[%s309 + $0x40] sm:$0xff]
        %v452 = vld [vmem:[%s309 + $0x48] sm:$0xff]
        %v453 = vld [vmem:[%s309 + $0x50] sm:$0xff]
        %v454 = vld [vmem:[%s309 + $0x58] sm:$0xff]
        %v455 = vld [vmem:[%s309 + $0x60] sm:$0xff]
        %v456 = vld [vmem:[%s309 + $0x68] sm:$0xff]
        %v457 = vld [vmem:[%s309 + $0x70] sm:$0xff]
        %v458 = vld [vmem:[%s309 + $0x78] sm:$0xff]
        %v459 = vld [vmem:[%s317] sm:$0xff]
        %v460 = vld [vmem:[%s317 + $0x8] sm:$0xff]
        %v461 = vld [vmem:[%s317 + $0x10] sm:$0xff]
        %v462 = vld [vmem:[%s317 + $0x18] sm:$0xff]
        %v463 = vld [vmem:[%s317 + $0x20] sm:$0xff]
        %v464 = vld [vmem:[%s317 + $0x28] sm:$0xff]
        %v465 = vld [vmem:[%s317 + $0x30] sm:$0xff]
        %v466 = vld [vmem:[%s317 + $0x38] sm:$0xff]
        %v467 = vld [vmem:[%s317 + $0x40] sm:$0xff]
        %v468 = vld [vmem:[%s317 + $0x48] sm:$0xff]
        %v469 = vld [vmem:[%s317 + $0x50] sm:$0xff]
        %v470 = vld [vmem:[%s317 + $0x58] sm:$0xff]
        %v471 = vld [vmem:[%s317 + $0x60] sm:$0xff]
        %v472 = vld [vmem:[%s317 + $0x68] sm:$0xff]
        %v473 = vld [vmem:[%s317 + $0x70] sm:$0xff]
        %v474 = vld [vmem:[%s317 + $0x78] sm:$0xff]
        %v475 = vld [vmem:[%s317 + $0x80] sm:$0xff]
        %v476 = vld [vmem:[%s317 + $0x88] sm:$0xff]
        %v477 = vld [vmem:[%s317 + $0x90] sm:$0xff]
        %v478 = vld [vmem:[%s317 + $0x98] sm:$0xff]
        %v479 = vld [vmem:[%s317 + $0xa0] sm:$0xff]
        %v480 = vld [vmem:[%s317 + $0xa8] sm:$0xff]
        %v481 = vld [vmem:[%s317 + $0xb0] sm:$0xff]
        %v482 = vld [vmem:[%s317 + $0xb8] sm:$0xff]
        %v483 = vld [vmem:[%s317 + $0xc0] sm:$0xff]
        %v484 = vld [vmem:[%s317 + $0xc8] sm:$0xff]
        %v485 = vld [vmem:[%s317 + $0xd0] sm:$0xff]
        %v486 = vld [vmem:[%s317 + $0xd8] sm:$0xff]
        %v487 = vld [vmem:[%s317 + $0xe0] sm:$0xff]
        %v488 = vld [vmem:[%s317 + $0xe8] sm:$0xff]
        %v489 = vld [vmem:[%s317 + $0xf0] sm:$0xff]
        %v490 = vld [vmem:[%s317 + $0xf8] sm:$0xff]
        %v507 = vunpack.c.l.b16 %v443
        %v508 = vunpack.c.h.b16 %v443
        %v509 = vunpack.c.l.b16 %v444
        %v510 = vunpack.c.h.b16 %v444
        %v511 = vunpack.c.l.b16 %v445
        %v512 = vunpack.c.h.b16 %v445
        %v513 = vunpack.c.l.b16 %v446
        %v514 = vunpack.c.h.b16 %v446
        %v515 = vunpack.c.l.b16 %v447
        %v516 = vunpack.c.h.b16 %v447
        %v517 = vunpack.c.l.b16 %v448
        %v518 = vunpack.c.h.b16 %v448
        %v519 = vunpack.c.l.b16 %v449
        %v520 = vunpack.c.h.b16 %v449
        %v521 = vunpack.c.l.b16 %v450
        %v522 = vunpack.c.h.b16 %v450
        %v523 = vunpack.c.l.b16 %v451
        %v524 = vunpack.c.h.b16 %v451
        %v525 = vunpack.c.l.b16 %v452
        %v526 = vunpack.c.h.b16 %v452
        %v527 = vunpack.c.l.b16 %v453
        %v528 = vunpack.c.h.b16 %v453
        %v529 = vunpack.c.l.b16 %v454
        %v530 = vunpack.c.h.b16 %v454
        %v531 = vunpack.c.l.b16 %v455
        %v532 = vunpack.c.h.b16 %v455
        %v533 = vunpack.c.l.b16 %v456
        %v534 = vunpack.c.h.b16 %v456
        %v535 = vunpack.c.l.b16 %v457
        %v536 = vunpack.c.h.b16 %v457
        %v537 = vunpack.c.l.b16 %v458
        %v538 = vunpack.c.h.b16 %v458
        %v539 = vpack.c.b16 %v509, %v507
        %v540 = vpack.c.b16 %v510, %v508
        %v541 = vpack.c.b16 %v513, %v511
        %v542 = vpack.c.b16 %v514, %v512
        %v543 = vpack.c.b16 %v517, %v515
        %v544 = vpack.c.b16 %v518, %v516
        %v545 = vpack.c.b16 %v521, %v519
        %v546 = vpack.c.b16 %v522, %v520
        %v547 = vpack.c.b16 %v525, %v523
        %v548 = vpack.c.b16 %v526, %v524
        %v549 = vpack.c.b16 %v529, %v527
        %v550 = vpack.c.b16 %v530, %v528
        %v551 = vpack.c.b16 %v533, %v531
        %v552 = vpack.c.b16 %v534, %v532
        %v553 = vpack.c.b16 %v537, %v535
        %v554 = vpack.c.b16 %v538, %v536
        %v603 = vunpack.c.l.b16 %v459
        %v604 = vunpack.c.h.b16 %v459
        %v605 = vunpack.c.l.b16 %v460
        %v606 = vunpack.c.h.b16 %v460
        %v607 = vunpack.c.l.b16 %v461
        %v608 = vunpack.c.h.b16 %v461
        %v609 = vunpack.c.l.b16 %v462
        %v610 = vunpack.c.h.b16 %v462
        %v611 = vunpack.c.l.b16 %v463
        %v612 = vunpack.c.h.b16 %v463
        %v613 = vunpack.c.l.b16 %v464
        %v614 = vunpack.c.h.b16 %v464
        %v615 = vunpack.c.l.b16 %v465
        %v616 = vunpack.c.h.b16 %v465
        %v617 = vunpack.c.l.b16 %v466
        %v618 = vunpack.c.h.b16 %v466
        %v619 = vunpack.c.l.b16 %v467
        %v620 = vunpack.c.h.b16 %v467
        %v621 = vunpack.c.l.b16 %v468
        %v622 = vunpack.c.h.b16 %v468
        %v623 = vunpack.c.l.b16 %v469
        %v624 = vunpack.c.h.b16 %v469
        %v625 = vunpack.c.l.b16 %v470
        %v626 = vunpack.c.h.b16 %v470
        %v627 = vunpack.c.l.b16 %v471
        %v628 = vunpack.c.h.b16 %v471
        %v629 = vunpack.c.l.b16 %v472
        %v630 = vunpack.c.h.b16 %v472
        %v631 = vunpack.c.l.b16 %v473
        %v632 = vunpack.c.h.b16 %v473
        %v633 = vunpack.c.l.b16 %v474
        %v634 = vunpack.c.h.b16 %v474
        %v635 = vunpack.c.l.b16 %v475
        %v636 = vunpack.c.h.b16 %v475
        %v637 = vunpack.c.l.b16 %v476
        %v638 = vunpack.c.h.b16 %v476
        %v639 = vunpack.c.l.b16 %v477
        %v640 = vunpack.c.h.b16 %v477
        %v641 = vunpack.c.l.b16 %v478
        %v642 = vunpack.c.h.b16 %v478
        %v643 = vunpack.c.l.b16 %v479
        %v644 = vunpack.c.h.b16 %v479
        %v645 = vunpack.c.l.b16 %v480
        %v646 = vunpack.c.h.b16 %v480
        %v647 = vunpack.c.l.b16 %v481
        %v648 = vunpack.c.h.b16 %v481
        %v649 = vunpack.c.l.b16 %v482
        %v650 = vunpack.c.h.b16 %v482
        %v651 = vunpack.c.l.b16 %v483
        %v652 = vunpack.c.h.b16 %v483
        %v653 = vunpack.c.l.b16 %v484
        %v654 = vunpack.c.h.b16 %v484
        %v655 = vunpack.c.l.b16 %v485
        %v656 = vunpack.c.h.b16 %v485
        %v657 = vunpack.c.l.b16 %v486
        %v658 = vunpack.c.h.b16 %v486
        %v659 = vunpack.c.l.b16 %v487
        %v660 = vunpack.c.h.b16 %v487
        %v661 = vunpack.c.l.b16 %v488
        %v662 = vunpack.c.h.b16 %v488
        %v663 = vunpack.c.l.b16 %v489
        %v664 = vunpack.c.h.b16 %v489
        %v665 = vunpack.c.l.b16 %v490
        %v666 = vunpack.c.h.b16 %v490
        %v667 = vpack.c.b16 %v605, %v603
        %v668 = vpack.c.b16 %v606, %v604
        %v669 = vpack.c.b16 %v609, %v607
        %v670 = vpack.c.b16 %v610, %v608
        %v671 = vpack.c.b16 %v613, %v611
        %v672 = vpack.c.b16 %v614, %v612
        %v673 = vpack.c.b16 %v617, %v615
        %v674 = vpack.c.b16 %v618, %v616
        %v675 = vpack.c.b16 %v621, %v619
        %v676 = vpack.c.b16 %v622, %v620
        %v677 = vpack.c.b16 %v625, %v623
        %v678 = vpack.c.b16 %v626, %v624
        %v679 = vpack.c.b16 %v629, %v627
        %v680 = vpack.c.b16 %v630, %v628
        %v681 = vpack.c.b16 %v633, %v631
        %v682 = vpack.c.b16 %v634, %v632
        %v683 = vpack.c.b16 %v637, %v635
        %v684 = vpack.c.b16 %v638, %v636
        %v685 = vpack.c.b16 %v641, %v639
        %v686 = vpack.c.b16 %v642, %v640
        %v687 = vpack.c.b16 %v645, %v643
        %v688 = vpack.c.b16 %v646, %v644
        %v689 = vpack.c.b16 %v649, %v647
        %v690 = vpack.c.b16 %v650, %v648
        %v691 = vpack.c.b16 %v653, %v651
        %v692 = vpack.c.b16 %v654, %v652
        %v693 = vpack.c.b16 %v657, %v655
        %v694 = vpack.c.b16 %v658, %v656
        %v695 = vpack.c.b16 %v661, %v659
        %v696 = vpack.c.b16 %v662, %v660
        %v697 = vpack.c.b16 %v665, %v663
        %v698 = vpack.c.b16 %v666, %v664
        %731 = vmatpush.bf16.msra.mxu0 %v681
        %732 = vmatpush.bf16.msra.mxu0 %v679
        %733 = vmatpush.bf16.msra.mxu0 %v677
        %734 = vmatpush.bf16.msra.mxu0 %v675
        %735 = vmatpush.bf16.msra.mxu0 %v673
        %736 = vmatpush.bf16.msra.mxu0 %v671
        %737 = vmatpush.bf16.msra.mxu0 %v669
        %738 = vmatpush.bf16.msra.mxu0 %v667
        %739 = vmatmul.bf16.gmra.mxu0 %v539
        %v740 = vpop.f32.mrf.mxu0
        %v741 = vadd.f32 0.0, %v740
        %v742 = vpop.f32.mrf.mxu0
        %v743 = vadd.f32 0.0, %v742
        %744 = vmatmul.bf16.gmra.mxu0 %v541
        %v745 = vpop.f32.mrf.mxu0
        %v746 = vadd.f32 0.0, %v745
        %v747 = vpop.f32.mrf.mxu0
        %v748 = vadd.f32 0.0, %v747
        %749 = vmatmul.bf16.gmra.mxu0 %v543
        %v750 = vpop.f32.mrf.mxu0
        %v751 = vadd.f32 0.0, %v750
        %v752 = vpop.f32.mrf.mxu0
        %v753 = vadd.f32 0.0, %v752
        %754 = vmatmul.bf16.gmra.mxu0 %v545
        %v755 = vpop.f32.mrf.mxu0
        %v756 = vadd.f32 0.0, %v755
        %v757 = vpop.f32.mrf.mxu0
        %v758 = vadd.f32 0.0, %v757
        %759 = vmatmul.bf16.gmra.mxu0 %v547
        %v760 = vpop.f32.mrf.mxu0
        %v761 = vadd.f32 0.0, %v760
        %v762 = vpop.f32.mrf.mxu0
        %v763 = vadd.f32 0.0, %v762
        %764 = vmatmul.bf16.gmra.mxu0 %v549
        %v765 = vpop.f32.mrf.mxu0
        %v766 = vadd.f32 0.0, %v765
        %v767 = vpop.f32.mrf.mxu0
        %v768 = vadd.f32 0.0, %v767
        %769 = vmatmul.bf16.gmra.mxu0 %v551
        %v770 = vpop.f32.mrf.mxu0
        %v771 = vadd.f32 0.0, %v770
        %v772 = vpop.f32.mrf.mxu0
        %v773 = vadd.f32 0.0, %v772
        %774 = vmatmul.bf16.gmra.mxu0 %v553
        %v775 = vpop.f32.mrf.mxu0
        %v776 = vadd.f32 0.0, %v775
        %v777 = vpop.f32.mrf.mxu0
        %v778 = vadd.f32 0.0, %v777
        %779 = vdwg.mxu0
        %780 = vmatpush.bf16.msra.mxu0 %v697
        %781 = vmatpush.bf16.msra.mxu0 %v695
        %782 = vmatpush.bf16.msra.mxu0 %v693
        %783 = vmatpush.bf16.msra.mxu0 %v691
        %784 = vmatpush.bf16.msra.mxu0 %v689
        %785 = vmatpush.bf16.msra.mxu0 %v687
        %786 = vmatpush.bf16.msra.mxu0 %v685
        %787 = vmatpush.bf16.msra.mxu0 %v683
        %788 = vmatmul.bf16.gmra.mxu0 %v540
        %v789 = vpop.f32.mrf.mxu0
        %v790 = vadd.f32 %v741, %v789
        %v791 = vpop.f32.mrf.mxu0
        %v792 = vadd.f32 %v743, %v791
        %793 = vmatmul.bf16.gmra.mxu0 %v542
        %v794 = vpop.f32.mrf.mxu0
        %v795 = vadd.f32 %v746, %v794
        %v796 = vpop.f32.mrf.mxu0
        %v797 = vadd.f32 %v748, %v796
        %798 = vmatmul.bf16.gmra.mxu0 %v544
        %v799 = vpop.f32.mrf.mxu0
        %v800 = vadd.f32 %v751, %v799
        %v801 = vpop.f32.mrf.mxu0
        %v802 = vadd.f32 %v753, %v801
        %803 = vmatmul.bf16.gmra.mxu0 %v546
        %v804 = vpop.f32.mrf.mxu0
        %v805 = vadd.f32 %v756, %v804
        %v806 = vpop.f32.mrf.mxu0
        %v807 = vadd.f32 %v758, %v806
        %808 = vmatmul.bf16.gmra.mxu0 %v548
        %v809 = vpop.f32.mrf.mxu0
        %v810 = vadd.f32 %v761, %v809
        %v811 = vpop.f32.mrf.mxu0
        %v812 = vadd.f32 %v763, %v811
        %813 = vmatmul.bf16.gmra.mxu0 %v550
        %v814 = vpop.f32.mrf.mxu0
        %v815 = vadd.f32 %v766, %v814
        %v816 = vpop.f32.mrf.mxu0
        %v817 = vadd.f32 %v768, %v816
        %818 = vmatmul.bf16.gmra.mxu0 %v552
        %v819 = vpop.f32.mrf.mxu0
        %v820 = vadd.f32 %v771, %v819
        %v821 = vpop.f32.mrf.mxu0
        %v822 = vadd.f32 %v773, %v821
        %823 = vmatmul.bf16.gmra.mxu0 %v554
        %v824 = vpop.f32.mrf.mxu0
        %v825 = vadd.f32 %v776, %v824
        %v826 = vpop.f32.mrf.mxu0
        %v827 = vadd.f32 %v778, %v826
        %828 = vdwg.mxu0
        %829 = vmatpush.bf16.msra.mxu0 %v682
        %830 = vmatpush.bf16.msra.mxu0 %v680
        %831 = vmatpush.bf16.msra.mxu0 %v678
        %832 = vmatpush.bf16.msra.mxu0 %v676
        %833 = vmatpush.bf16.msra.mxu0 %v674
        %834 = vmatpush.bf16.msra.mxu0 %v672
        %835 = vmatpush.bf16.msra.mxu0 %v670
        %836 = vmatpush.bf16.msra.mxu0 %v668
        %837 = vmatmul.bf16.gmra.mxu0 %v539
        %v838 = vpop.f32.mrf.mxu0
        %v839 = vadd.f32 0.0, %v838
        %v840 = vpop.f32.mrf.mxu0
        %v841 = vadd.f32 0.0, %v840
        %842 = vmatmul.bf16.gmra.mxu0 %v541
        %v843 = vpop.f32.mrf.mxu0
        %v844 = vadd.f32 0.0, %v843
        %v845 = vpop.f32.mrf.mxu0
        %v846 = vadd.f32 0.0, %v845
        %847 = vmatmul.bf16.gmra.mxu0 %v543
        %v848 = vpop.f32.mrf.mxu0
        %v849 = vadd.f32 0.0, %v848
        %v850 = vpop.f32.mrf.mxu0
        %v851 = vadd.f32 0.0, %v850
        %852 = vmatmul.bf16.gmra.mxu0 %v545
        %v853 = vpop.f32.mrf.mxu0
        %v854 = vadd.f32 0.0, %v853
        %v855 = vpop.f32.mrf.mxu0
        %v856 = vadd.f32 0.0, %v855
        %857 = vmatmul.bf16.gmra.mxu0 %v547
        %v858 = vpop.f32.mrf.mxu0
        %v859 = vadd.f32 0.0, %v858
        %v860 = vpop.f32.mrf.mxu0
        %v861 = vadd.f32 0.0, %v860
        %862 = vmatmul.bf16.gmra.mxu0 %v549
        %v863 = vpop.f32.mrf.mxu0
        %v864 = vadd.f32 0.0, %v863
        %v865 = vpop.f32.mrf.mxu0
        %v866 = vadd.f32 0.0, %v865
        %867 = vmatmul.bf16.gmra.mxu0 %v551
        %v868 = vpop.f32.mrf.mxu0
        %v869 = vadd.f32 0.0, %v868
        %v870 = vpop.f32.mrf.mxu0
        %v871 = vadd.f32 0.0, %v870
        %872 = vmatmul.bf16.gmra.mxu0 %v553
        %v873 = vpop.f32.mrf.mxu0
        %v874 = vadd.f32 0.0, %v873
        %v875 = vpop.f32.mrf.mxu0
        %v876 = vadd.f32 0.0, %v875
        %877 = vdwg.mxu0
        %878 = vmatpush.bf16.msra.mxu0 %v698
        %879 = vmatpush.bf16.msra.mxu0 %v696
        %880 = vmatpush.bf16.msra.mxu0 %v694
        %881 = vmatpush.bf16.msra.mxu0 %v692
        %882 = vmatpush.bf16.msra.mxu0 %v690
        %883 = vmatpush.bf16.msra.mxu0 %v688
        %884 = vmatpush.bf16.msra.mxu0 %v686
        %885 = vmatpush.bf16.msra.mxu0 %v684
        %886 = vmatmul.bf16.gmra.mxu0 %v540
        %v887 = vpop.f32.mrf.mxu0
        %v888 = vadd.f32 %v839, %v887
        %v889 = vpop.f32.mrf.mxu0
        %v890 = vadd.f32 %v841, %v889
        %891 = vmatmul.bf16.gmra.mxu0 %v542
        %v892 = vpop.f32.mrf.mxu0
        %v893 = vadd.f32 %v844, %v892
        %v894 = vpop.f32.mrf.mxu0
        %v895 = vadd.f32 %v846, %v894
        %896 = vmatmul.bf16.gmra.mxu0 %v544
        %v897 = vpop.f32.mrf.mxu0
        %v898 = vadd.f32 %v849, %v897
        %v899 = vpop.f32.mrf.mxu0
        %v900 = vadd.f32 %v851, %v899
        %901 = vmatmul.bf16.gmra.mxu0 %v546
        %v902 = vpop.f32.mrf.mxu0
        %v903 = vadd.f32 %v854, %v902
        %v904 = vpop.f32.mrf.mxu0
        %v905 = vadd.f32 %v856, %v904
        %906 = vmatmul.bf16.gmra.mxu0 %v548
        %v907 = vpop.f32.mrf.mxu0
        %v908 = vadd.f32 %v859, %v907
        %v909 = vpop.f32.mrf.mxu0
        %v910 = vadd.f32 %v861, %v909
        %911 = vmatmul.bf16.gmra.mxu0 %v550
        %v912 = vpop.f32.mrf.mxu0
        %v913 = vadd.f32 %v864, %v912
        %v914 = vpop.f32.mrf.mxu0
        %v915 = vadd.f32 %v866, %v914
        %916 = vmatmul.bf16.gmra.mxu0 %v552
        %v917 = vpop.f32.mrf.mxu0
        %v918 = vadd.f32 %v869, %v917
        %v919 = vpop.f32.mrf.mxu0
        %v920 = vadd.f32 %v871, %v919
        %921 = vmatmul.bf16.gmra.mxu0 %v554
        %v922 = vpop.f32.mrf.mxu0
        %v923 = vadd.f32 %v874, %v922
        %v924 = vpop.f32.mrf.mxu0
        %v925 = vadd.f32 %v876, %v924
        %926 = vdwg.mxu0
        %v927 = vadd.f32 %v411, %v790
        %v928 = vadd.f32 %v412, %v888
        %v929 = vadd.f32 %v413, %v792
        %v930 = vadd.f32 %v414, %v890
        %v931 = vadd.f32 %v415, %v795
        %v932 = vadd.f32 %v416, %v893
        %v933 = vadd.f32 %v417, %v797
        %v934 = vadd.f32 %v418, %v895
        %v935 = vadd.f32 %v419, %v800
        %v936 = vadd.f32 %v420, %v898
        %v937 = vadd.f32 %v421, %v802
        %v938 = vadd.f32 %v422, %v900
        %v939 = vadd.f32 %v423, %v805
        %v940 = vadd.f32 %v424, %v903
        %v941 = vadd.f32 %v425, %v807
        %v942 = vadd.f32 %v426, %v905
        %v943 = vadd.f32 %v427, %v810
        %v944 = vadd.f32 %v428, %v908
        %v945 = vadd.f32 %v429, %v812
        %v946 = vadd.f32 %v430, %v910
        %v947 = vadd.f32 %v431, %v815
        %v948 = vadd.f32 %v432, %v913
        %v949 = vadd.f32 %v433, %v817
        %v950 = vadd.f32 %v434, %v915
        %v951 = vadd.f32 %v435, %v820
        %v952 = vadd.f32 %v436, %v918
        %v953 = vadd.f32 %v437, %v822
        %v954 = vadd.f32 %v438, %v920
        %v955 = vadd.f32 %v439, %v825
        %v956 = vadd.f32 %v440, %v923
        %v957 = vadd.f32 %v441, %v827
        %v958 = vadd.f32 %v442, %v925
        %959 = vst [vmem:[#allocation2] sm:$0xff] %v927
        %960 = vst [vmem:[#allocation2 + $0x8] sm:$0xff] %v928
        %961 = vst [vmem:[#allocation2 + $0x10] sm:$0xff] %v929
        %962 = vst [vmem:[#allocation2 + $0x18] sm:$0xff] %v930
        %963 = vst [vmem:[#allocation2 + $0x20] sm:$0xff] %v931
        %964 = vst [vmem:[#allocation2 + $0x28] sm:$0xff] %v932
        %965 = vst [vmem:[#allocation2 + $0x30] sm:$0xff] %v933
        %966 = vst [vmem:[#allocation2 + $0x38] sm:$0xff] %v934
        %967 = vst [vmem:[#allocation2 + $0x40] sm:$0xff] %v935
        %968 = vst [vmem:[#allocation2 + $0x48] sm:$0xff] %v936
        %969 = vst [vmem:[#allocation2 + $0x50] sm:$0xff] %v937
        %970 = vst [vmem:[#allocation2 + $0x58] sm:$0xff] %v938
        %971 = vst [vmem:[#allocation2 + $0x60] sm:$0xff] %v939
        %972 = vst [vmem:[#allocation2 + $0x68] sm:$0xff] %v940
        %973 = vst [vmem:[#allocation2 + $0x70] sm:$0xff] %v941
        %974 = vst [vmem:[#allocation2 + $0x78] sm:$0xff] %v942
        %975 = vst [vmem:[#allocation2 + $0x80] sm:$0xff] %v943
        %976 = vst [vmem:[#allocation2 + $0x88] sm:$0xff] %v944
        %977 = vst [vmem:[#allocation2 + $0x90] sm:$0xff] %v945
        %978 = vst [vmem:[#allocation2 + $0x98] sm:$0xff] %v946
        %979 = vst [vmem:[#allocation2 + $0xa0] sm:$0xff] %v947
        %980 = vst [vmem:[#allocation2 + $0xa8] sm:$0xff] %v948
        %981 = vst [vmem:[#allocation2 + $0xb0] sm:$0xff] %v949
        %982 = vst [vmem:[#allocation2 + $0xb8] sm:$0xff] %v950
        %983 = vst [vmem:[#allocation2 + $0xc0] sm:$0xff] %v951
        %984 = vst [vmem:[#allocation2 + $0xc8] sm:$0xff] %v952
        %985 = vst [vmem:[#allocation2 + $0xd0] sm:$0xff] %v953
        %986 = vst [vmem:[#allocation2 + $0xd8] sm:$0xff] %v954
        %987 = vst [vmem:[#allocation2 + $0xe0] sm:$0xff] %v955
        %988 = vst [vmem:[#allocation2 + $0xe8] sm:$0xff] %v956
        %989 = vst [vmem:[#allocation2 + $0xf0] sm:$0xff] %v957
        %990 = vst [vmem:[#allocation2 + $0xf8] sm:$0xff] %v958
        %p991 = scmp.eq.s32.totalorder %s24, 1
        // Predicated region
        $region79: #{_lambda_.3} parent=65 // pred_check
          %p992 = pneg %p991
        $region80: #{_lambda_.3} parent=65 // pred_check_branch
          %994 = sbr.rel (%p992) target = $region82
        $region81: #{_lambda_.3} parent=65 // pred_region
          %v995 = vld [vmem:[#allocation2] sm:$0xff]
          %v996 = vld [vmem:[#allocation2 + $0x8] sm:$0xff]
          %v997 = vld [vmem:[#allocation2 + $0x10] sm:$0xff]
          %v998 = vld [vmem:[#allocation2 + $0x18] sm:$0xff]
          %v999 = vld [vmem:[#allocation2 + $0x20] sm:$0xff]
          %v1000 = vld [vmem:[#allocation2 + $0x28] sm:$0xff]
          %v1001 = vld [vmem:[#allocation2 + $0x30] sm:$0xff]
          %v1002 = vld [vmem:[#allocation2 + $0x38] sm:$0xff]
          %v1003 = vld [vmem:[#allocation2 + $0x40] sm:$0xff]
          %v1004 = vld [vmem:[#allocation2 + $0x48] sm:$0xff]
          %v1005 = vld [vmem:[#allocation2 + $0x50] sm:$0xff]
          %v1006 = vld [vmem:[#allocation2 + $0x58] sm:$0xff]
          %v1007 = vld [vmem:[#allocation2 + $0x60] sm:$0xff]
          %v1008 = vld [vmem:[#allocation2 + $0x68] sm:$0xff]
          %v1009 = vld [vmem:[#allocation2 + $0x70] sm:$0xff]
          %v1010 = vld [vmem:[#allocation2 + $0x78] sm:$0xff]
          %v1011 = vld [vmem:[#allocation2 + $0x80] sm:$0xff]
          %v1012 = vld [vmem:[#allocation2 + $0x88] sm:$0xff]
          %v1013 = vld [vmem:[#allocation2 + $0x90] sm:$0xff]
          %v1014 = vld [vmem:[#allocation2 + $0x98] sm:$0xff]
          %v1015 = vld [vmem:[#allocation2 + $0xa0] sm:$0xff]
          %v1016 = vld [vmem:[#allocation2 + $0xa8] sm:$0xff]
          %v1017 = vld [vmem:[#allocation2 + $0xb0] sm:$0xff]
          %v1018 = vld [vmem:[#allocation2 + $0xb8] sm:$0xff]
          %v1019 = vld [vmem:[#allocation2 + $0xc0] sm:$0xff]
          %v1020 = vld [vmem:[#allocation2 + $0xc8] sm:$0xff]
          %v1021 = vld [vmem:[#allocation2 + $0xd0] sm:$0xff]
          %v1022 = vld [vmem:[#allocation2 + $0xd8] sm:$0xff]
          %v1023 = vld [vmem:[#allocation2 + $0xe0] sm:$0xff]
          %v1024 = vld [vmem:[#allocation2 + $0xe8] sm:$0xff]
          %v1025 = vld [vmem:[#allocation2 + $0xf0] sm:$0xff]
          %v1026 = vld [vmem:[#allocation2 + $0xf8] sm:$0xff]
          %v1027 = vld [vmem:[%s361] sm:$0x3]
          %v1029 = vperm.slane %v1027, 0
          %v1030 = vperm.slane %v1027, 1
          %v1033 = vadd.f32 %v995, %v1029
          %v1034 = vadd.f32 %v996, %v1030
          %v1035 = vadd.f32 %v997, %v1029
          %v1036 = vadd.f32 %v998, %v1030
          %v1037 = vadd.f32 %v999, %v1029
          %v1038 = vadd.f32 %v1000, %v1030
          %v1039 = vadd.f32 %v1001, %v1029
          %v1040 = vadd.f32 %v1002, %v1030
          %v1041 = vadd.f32 %v1003, %v1029
          %v1042 = vadd.f32 %v1004, %v1030
          %v1043 = vadd.f32 %v1005, %v1029
          %v1044 = vadd.f32 %v1006, %v1030
          %v1045 = vadd.f32 %v1007, %v1029
          %v1046 = vadd.f32 %v1008, %v1030
          %v1047 = vadd.f32 %v1009, %v1029
          %v1048 = vadd.f32 %v1010, %v1030
          %v1049 = vadd.f32 %v1011, %v1029
          %v1050 = vadd.f32 %v1012, %v1030
          %v1051 = vadd.f32 %v1013, %v1029
          %v1052 = vadd.f32 %v1014, %v1030
          %v1053 = vadd.f32 %v1015, %v1029
          %v1054 = vadd.f32 %v1016, %v1030
          %v1055 = vadd.f32 %v1017, %v1029
          %v1056 = vadd.f32 %v1018, %v1030
          %v1057 = vadd.f32 %v1019, %v1029
          %v1058 = vadd.f32 %v1020, %v1030
          %v1059 = vadd.f32 %v1021, %v1029
          %v1060 = vadd.f32 %v1022, %v1030
          %v1061 = vadd.f32 %v1023, %v1029
          %v1062 = vadd.f32 %v1024, %v1030
          %v1063 = vadd.f32 %v1025, %v1029
          %v1064 = vadd.f32 %v1026, %v1030
          %v1065 = vpack.c.bf16 %v1034, %v1033
          %v1066 = vpack.c.bf16 %v1036, %v1035
          %v1067 = vpack.c.bf16 %v1038, %v1037
          %v1068 = vpack.c.bf16 %v1040, %v1039
          %v1069 = vpack.c.bf16 %v1042, %v1041
          %v1070 = vpack.c.bf16 %v1044, %v1043
          %v1071 = vpack.c.bf16 %v1046, %v1045
          %v1072 = vpack.c.bf16 %v1048, %v1047
          %v1073 = vpack.c.bf16 %v1050, %v1049
          %v1074 = vpack.c.bf16 %v1052, %v1051
          %v1075 = vpack.c.bf16 %v1054, %v1053
          %v1076 = vpack.c.bf16 %v1056, %v1055
          %v1077 = vpack.c.bf16 %v1058, %v1057
          %v1078 = vpack.c.bf16 %v1060, %v1059
          %v1079 = vpack.c.bf16 %v1062, %v1061
          %v1080 = vpack.c.bf16 %v1064, %v1063
          %1081 = vst [vmem:[%s372] sm:$0xff] %v1065
          %1082 = vst [vmem:[%s372 + $0x8] sm:$0xff] %v1066
          %1083 = vst [vmem:[%s372 + $0x10] sm:$0xff] %v1067
          %1084 = vst [vmem:[%s372 + $0x18] sm:$0xff] %v1068
          %1085 = vst [vmem:[%s372 + $0x20] sm:$0xff] %v1069
          %1086 = vst [vmem:[%s372 + $0x28] sm:$0xff] %v1070
          %1087 = vst [vmem:[%s372 + $0x30] sm:$0xff] %v1071
          %1088 = vst [vmem:[%s372 + $0x38] sm:$0xff] %v1072
          %1089 = vst [vmem:[%s372 + $0x40] sm:$0xff] %v1073
          %1090 = vst [vmem:[%s372 + $0x48] sm:$0xff] %v1074
          %1091 = vst [vmem:[%s372 + $0x50] sm:$0xff] %v1075
          %1092 = vst [vmem:[%s372 + $0x58] sm:$0xff] %v1076
          %1093 = vst [vmem:[%s372 + $0x60] sm:$0xff] %v1077
          %1094 = vst [vmem:[%s372 + $0x68] sm:$0xff] %v1078
          %1095 = vst [vmem:[%s372 + $0x70] sm:$0xff] %v1079
          %1096 = vst [vmem:[%s372 + $0x78] sm:$0xff] %v1080
        $region82: #{_lambda_.3} parent=65 // pred_fallthru
          _
        %s1097 = smul.u32 16, %s22
        %s1098 = smul.u32 2, %s23
        %p1099 = scmp.lt.s32.totalorder %s1097, 15
        %s1100 = scalar_select %p1099, %s1097, 15
        %p1101 = scmp.lt.s32.totalorder %s1098, 1
        %s1102 = scalar_select %p1101, %s1098, 1
        %s1103 = smul.addr %s1100, 2
        %s1104 = sadd.s32 %s1102, %s1103
        %s1105 = smul.addr %s1104, 4
        %s1106 = scalar_lea.vmem %s3, %s1105
        // Predicated region
        $region83: #{_lambda_.3} parent=65 // pred_check
          %p1107 = pneg %p138
        $region84: #{_lambda_.3} parent=65 // pred_check_branch
          %1109 = sbr.rel (%p1107) target = $region86
        $region85: #{_lambda_.3} parent=65 // pred_region
          %s1110 = smul.u32 16, %s22
          %s1111 = smul.u32 2, %s23
        $region86: #{_lambda_.3} parent=65 // pred_fallthru
          _
        // Predicated region
        $region87: #{_lambda_.3} parent=65 // pred_check
          %p1112 = pneg %p138
        $region88: #{_lambda_.3} parent=65 // pred_check_branch
          %1114 = sbr.rel (%p1112) target = $region90
        $region89: #{_lambda_.3} parent=65 // pred_region
          %s1115 = smul.u32 16, %s22
          %s1116 = smul.u32 2, %s23
          %p1117 = scmp.lt.s32.totalorder %s1115, 15
          %s1118 = scalar_select %p1117, %s1115, 15
          %p1119 = scmp.lt.s32.totalorder %s1116, 1
          %s1120 = scalar_select %p1119, %s1116, 1
          %s1121 = smul.addr %s1118, 2
          %s1122 = sadd.s32 %s1120, %s1121
          %s1123 = smul.addr %s1122, 4
          %s1124 = scalar_lea.vmem %s3, %s1123
        $region90: #{_lambda_.3} parent=65 // pred_fallthru
          _
      $region66: #{_lambda_.3} parent=5 // pred_fallthru
        _
      %p1125 = scmp.le.s32.totalorder 2, %s12
      // Predicated region
      $region91: #{_lambda_.3} parent=5 // pred_check
        %p1126 = pneg %p1125
      $region92: #{_lambda_.3} parent=5 // pred_check_branch
        %1128 = sbr.rel (%p1126) target = $region94
      $region93: #{_lambda_.3} parent=5 // pred_region
        %s1129 = ssub.s32 %s12, 2
      $region94: #{_lambda_.3} parent=5 // pred_fallthru
        _
    $region6: #{_lambda_.3} parent=1 // loop_footer
      %s16 = sadd.s32 1, %s12
    $region7: #{_lambda_.3} parent=1 // loop_footer_branch
      %11 = sbr.rel target = $region3
    $region8: #{_lambda_.3} parent=1 // loop_exit
      _
    %1130 = vsyncpa [#allocation5], 1
    %s1131 = scalar_lea.sflag [#allocation5], 1
    %1132 = vsyncpa %s1131, 1

// kernel: _lambda_.5
$region0: #{_lambda_.5}
  #allocation0 [shape = 'u32[]', space=smem, size = 0x4, offset = 0x4, fixed_abs, tag = 'smem constant byte address 0x4 - core index']
  #allocation1 [shape = 'u32[72,128]{1,0:T(1,128)}', space=vmem, size = 0x9000, scoped, tag = 'internal scratch']
  %s0 = inlined_call_operand.vmem [shape: f32[2,512], index: 0, kind: input, shape index: {}]
  %s1 = inlined_call_operand.vmem [shape: bf16[512,128], index: 1, kind: input, shape index: {}]
  %s2 = inlined_call_operand.vmem [shape: f32[1,128], index: 2, kind: input, shape index: {}]
  %s3 = inlined_call_operand.hbm [shape: bf16[128,512], index: 3, kind: input, shape index: {}]
  %s4 = inlined_call_operand.vmem [shape: f32[1,512], index: 4, kind: input, shape index: {}]
  %s5 = inlined_call_operand.hbm [shape: f32[2,512], index: 5, kind: output, shape index: {}]
  %s6 = sld [smem:[#allocation0]]
  $region34: #{_lambda_.5} parent=0
    _
  %s8 = ssub.s32 1, %s6
  %s9 = scalar_select 0, %s8, %s6
  $region1: #{_lambda_.5} parent=0
    #allocation2 [shape = 'u8[131072]{0}', space=vmem, size = 0x20000, scoped, tag = 'input window, operand 3, single buffered']
    #allocation3 [shape = 's32[1]{0}', space=sflag, size = 0x4, scoped, tag = 'scoped memory for _lambda_.5']
    #allocation4 [shape = 's32[1]{0}', space=sflag, size = 0x4, scoped, tag = 'scoped memory for _lambda_.5']
    #allocation5 [shape = 'u8[4096]{0}', space=vmem, size = 0x1000, scoped, tag = 'output window, operand 0, single buffered']
    %10 = vsyncpa [#allocation3], 0
    %11 = vsyncpa [#allocation4], 0
    // Predicated region
    $region2: #{_lambda_.5} parent=1 // pred_check
      _
    $region3: #{_lambda_.5} parent=1 // pred_check_branch
      %13 = sbr.rel (0) target = $region5
    $region4: #{_lambda_.5} parent=1 // pred_region
      _
    $region5: #{_lambda_.5} parent=1 // pred_fallthru
      _
    // Predicated region
    $region6: #{_lambda_.5} parent=1 // pred_check
      _
    $region7: #{_lambda_.5} parent=1 // pred_check_branch
      %15 = sbr.rel (0) target = $region9
    $region8: #{_lambda_.5} parent=1 // pred_region
      _
    $region9: #{_lambda_.5} parent=1 // pred_fallthru
      _
    // Predicated region
    $region10: #{_lambda_.5} parent=1 // pred_check
      _
    $region11: #{_lambda_.5} parent=1 // pred_check_branch
      %17 = sbr.rel (0) target = $region13
    $region12: #{_lambda_.5} parent=1 // pred_region
      _
    $region13: #{_lambda_.5} parent=1 // pred_fallthru
      _
    // Predicated region
    $region14: #{_lambda_.5} parent=1 // pred_check
      _
    $region15: #{_lambda_.5} parent=1 // pred_check_branch
      %19 = sbr.rel (0) target = $region17
    $region16: #{_lambda_.5} parent=1 // pred_region
      %21 = vsyncadd [#allocation3], 0
      %s22 = sshll.u32 %s3, 4
      %s23 = int_to_ptr.hbm [resolvable:$true] %s22
      %s24 = sshll.u32 [#allocation2], 4
      %s25 = int_to_ptr.vmem [resolvable:$true] %s24
      %30 = dma.hbm_to_vmem [thread:$0]  %s23, 4096, %s25, [#allocation3], 256, 256, 16
    $region17: #{_lambda_.5} parent=1 // pred_fallthru
      _
    // Predicated region
    $region18: #{_lambda_.5} parent=1 // pred_check
      _
    $region19: #{_lambda_.5} parent=1 // pred_check_branch
      %32 = sbr.rel (0) target = $region21
    $region20: #{_lambda_.5} parent=1 // pred_region
      _
    $region21: #{_lambda_.5} parent=1 // pred_fallthru
      _
    // Predicated region
    $region22: #{_lambda_.5} parent=1 // pred_check
      _
    $region23: #{_lambda_.5} parent=1 // pred_check_branch
      %34 = sbr.rel (0) target = $region25
    $region24: #{_lambda_.5} parent=1 // pred_region
      %36 = dma.done [#allocation3], 4096
    $region25: #{_lambda_.5} parent=1 // pred_fallthru
      _
    %v37 = vld [vmem:[%s0] sm:$0xff]
    %39 = vst [vmem:[#allocation1] ss:$4 sm:$0xff] %v37
    %v40 = vld.sshfl [vmem:[#allocation1] sm:$0xff pattern:$0x73625140]
    %v41 = vld.sshfl [vmem:[#allocation1 + $0x8] sm:$0xff pattern:$0x73625140]
    %v42 = vld.sshfl [vmem:[#allocation1 + $0x10] sm:$0xff pattern:$0x73625140]
    %v43 = vld.sshfl [vmem:[#allocation1 + $0x18] sm:$0xff pattern:$0x73625140]
    %v48 = vpack.c.bf16 %v40, %v40
    %v49 = vpack.c.bf16 %v41, %v41
    %v50 = vpack.c.bf16 %v42, %v42
    %v51 = vpack.c.bf16 %v43, %v43
    %v52 = vld [vmem:[%s1] sm:$0xf]
    %v53 = vld [vmem:[%s1 + $0x4] sm:$0xf]
    %v54 = vld [vmem:[%s1 + $0x8] sm:$0xf]
    %v55 = vld [vmem:[%s1 + $0xc] sm:$0xf]
    %v56 = vld [vmem:[%s1 + $0x10] sm:$0xf]
    %v57 = vld [vmem:[%s1 + $0x14] sm:$0xf]
    %v58 = vld [vmem:[%s1 + $0x18] sm:$0xf]
    %v59 = vld [vmem:[%s1 + $0x1c] sm:$0xf]
    %v60 = vld [vmem:[%s1 + $0x20] sm:$0xf]
    %v61 = vld [vmem:[%s1 + $0x24] sm:$0xf]
    %v62 = vld [vmem:[%s1 + $0x28] sm:$0xf]
    %v63 = vld [vmem:[%s1 + $0x2c] sm:$0xf]
    %v64 = vld [vmem:[%s1 + $0x30] sm:$0xf]
    %v65 = vld [vmem:[%s1 + $0x34] sm:$0xf]
    %v66 = vld [vmem:[%s1 + $0x38] sm:$0xf]
    %v67 = vld [vmem:[%s1 + $0x3c] sm:$0xf]
    %v68 = vld [vmem:[%s1 + $0x40] sm:$0xf]
    %v69 = vld [vmem:[%s1 + $0x44] sm:$0xf]
    %v70 = vld [vmem:[%s1 + $0x48] sm:$0xf]
    %v71 = vld [vmem:[%s1 + $0x4c] sm:$0xf]
    %v72 = vld [vmem:[%s1 + $0x50] sm:$0xf]
    %v73 = vld [vmem:[%s1 + $0x54] sm:$0xf]
    %v74 = vld [vmem:[%s1 + $0x58] sm:$0xf]
    %v75 = vld [vmem:[%s1 + $0x5c] sm:$0xf]
    %v76 = vld [vmem:[%s1 + $0x60] sm:$0xf]
    %v77 = vld [vmem:[%s1 + $0x64] sm:$0xf]
    %v78 = vld [vmem:[%s1 + $0x68] sm:$0xf]
    %v79 = vld [vmem:[%s1 + $0x6c] sm:$0xf]
    %v80 = vld [vmem:[%s1 + $0x70] sm:$0xf]
    %v81 = vld [vmem:[%s1 + $0x74] sm:$0xf]
    %v82 = vld [vmem:[%s1 + $0x78] sm:$0xf]
    %v83 = vld [vmem:[%s1 + $0x7c] sm:$0xf]
    %v84 = vld [vmem:[%s1 + $0x80] sm:$0xf]
    %v85 = vld [vmem:[%s1 + $0x84] sm:$0xf]
    %v86 = vld [vmem:[%s1 + $0x88] sm:$0xf]
    %v87 = vld [vmem:[%s1 + $0x8c] sm:$0xf]
    %v88 = vld [vmem:[%s1 + $0x90] sm:$0xf]
    %v89 = vld [vmem:[%s1 + $0x94] sm:$0xf]
    %v90 = vld [vmem:[%s1 + $0x98] sm:$0xf]
    %v91 = vld [vmem:[%s1 + $0x9c] sm:$0xf]
    %v92 = vld [vmem:[%s1 + $0xa0] sm:$0xf]
    %v93 = vld [vmem:[%s1 + $0xa4] sm:$0xf]
    %v94 = vld [vmem:[%s1 + $0xa8] sm:$0xf]
    %v95 = vld [vmem:[%s1 + $0xac] sm:$0xf]
    %v96 = vld [vmem:[%s1 + $0xb0] sm:$0xf]
    %v97 = vld [vmem:[%s1 + $0xb4] sm:$0xf]
    %v98 = vld [vmem:[%s1 + $0xb8] sm:$0xf]
    %v99 = vld [vmem:[%s1 + $0xbc] sm:$0xf]
    %v100 = vld [vmem:[%s1 + $0xc0] sm:$0xf]
    %v101 = vld [vmem:[%s1 + $0xc4] sm:$0xf]
    %v102 = vld [vmem:[%s1 + $0xc8] sm:$0xf]
    %v103 = vld [vmem:[%s1 + $0xcc] sm:$0xf]
    %v104 = vld [vmem:[%s1 + $0xd0] sm:$0xf]
    %v105 = vld [vmem:[%s1 + $0xd4] sm:$0xf]
    %v106 = vld [vmem:[%s1 + $0xd8] sm:$0xf]
    %v107 = vld [vmem:[%s1 + $0xdc] sm:$0xf]
    %v108 = vld [vmem:[%s1 + $0xe0] sm:$0xf]
    %v109 = vld [vmem:[%s1 + $0xe4] sm:$0xf]
    %v110 = vld [vmem:[%s1 + $0xe8] sm:$0xf]
    %v111 = vld [vmem:[%s1 + $0xec] sm:$0xf]
    %v112 = vld [vmem:[%s1 + $0xf0] sm:$0xf]
    %v113 = vld [vmem:[%s1 + $0xf4] sm:$0xf]
    %v114 = vld [vmem:[%s1 + $0xf8] sm:$0xf]
    %v115 = vld [vmem:[%s1 + $0xfc] sm:$0xf]
    %v116 = vld [vmem:[%s2] sm:$0x1]
    %v118 = vperm.slane %v116, 0
    %v184 = vunpack.c.l.b16 %v52
    %v185 = vunpack.c.l.b16 %v53
    %v186 = vunpack.c.l.b16 %v54
    %v187 = vunpack.c.l.b16 %v55
    %v188 = vunpack.c.l.b16 %v56
    %v189 = vunpack.c.l.b16 %v57
    %v190 = vunpack.c.l.b16 %v58
    %v191 = vunpack.c.l.b16 %v59
    %v192 = vunpack.c.l.b16 %v60
    %v193 = vunpack.c.l.b16 %v61
    %v194 = vunpack.c.l.b16 %v62
    %v195 = vunpack.c.l.b16 %v63
    %v196 = vunpack.c.l.b16 %v64
    %v197 = vunpack.c.l.b16 %v65
    %v198 = vunpack.c.l.b16 %v66
    %v199 = vunpack.c.l.b16 %v67
    %v200 = vunpack.c.l.b16 %v68
    %v201 = vunpack.c.l.b16 %v69
    %v202 = vunpack.c.l.b16 %v70
    %v203 = vunpack.c.l.b16 %v71
    %v204 = vunpack.c.l.b16 %v72
    %v205 = vunpack.c.l.b16 %v73
    %v206 = vunpack.c.l.b16 %v74
    %v207 = vunpack.c.l.b16 %v75
    %v208 = vunpack.c.l.b16 %v76
    %v209 = vunpack.c.l.b16 %v77
    %v210 = vunpack.c.l.b16 %v78
    %v211 = vunpack.c.l.b16 %v79
    %v212 = vunpack.c.l.b16 %v80
    %v213 = vunpack.c.l.b16 %v81
    %v214 = vunpack.c.l.b16 %v82
    %v215 = vunpack.c.l.b16 %v83
    %v216 = vunpack.c.l.b16 %v84
    %v217 = vunpack.c.l.b16 %v85
    %v218 = vunpack.c.l.b16 %v86
    %v219 = vunpack.c.l.b16 %v87
    %v220 = vunpack.c.l.b16 %v88
    %v221 = vunpack.c.l.b16 %v89
    %v222 = vunpack.c.l.b16 %v90
    %v223 = vunpack.c.l.b16 %v91
    %v224 = vunpack.c.l.b16 %v92
    %v225 = vunpack.c.l.b16 %v93
    %v226 = vunpack.c.l.b16 %v94
    %v227 = vunpack.c.l.b16 %v95
    %v228 = vunpack.c.l.b16 %v96
    %v229 = vunpack.c.l.b16 %v97
    %v230 = vunpack.c.l.b16 %v98
    %v231 = vunpack.c.l.b16 %v99
    %v232 = vunpack.c.l.b16 %v100
    %v233 = vunpack.c.l.b16 %v101
    %v234 = vunpack.c.l.b16 %v102
    %v235 = vunpack.c.l.b16 %v103
    %v236 = vunpack.c.l.b16 %v104
    %v237 = vunpack.c.l.b16 %v105
    %v238 = vunpack.c.l.b16 %v106
    %v239 = vunpack.c.l.b16 %v107
    %v240 = vunpack.c.l.b16 %v108
    %v241 = vunpack.c.l.b16 %v109
    %v242 = vunpack.c.l.b16 %v110
    %v243 = vunpack.c.l.b16 %v111
    %v244 = vunpack.c.l.b16 %v112
    %v245 = vunpack.c.l.b16 %v113
    %v246 = vunpack.c.l.b16 %v114
    %v247 = vunpack.c.l.b16 %v115
    %v248 = vpack.c.b16 %v185, %v184
    %v249 = vpack.c.b16 %v187, %v186
    %v250 = vpack.c.b16 %v189, %v188
    %v251 = vpack.c.b16 %v191, %v190
    %v252 = vpack.c.b16 %v193, %v192
    %v253 = vpack.c.b16 %v195, %v194
    %v254 = vpack.c.b16 %v197, %v196
    %v255 = vpack.c.b16 %v199, %v198
    %v256 = vpack.c.b16 %v201, %v200
    %v257 = vpack.c.b16 %v203, %v202
    %v258 = vpack.c.b16 %v205, %v204
    %v259 = vpack.c.b16 %v207, %v206
    %v260 = vpack.c.b16 %v209, %v208
    %v261 = vpack.c.b16 %v211, %v210
    %v262 = vpack.c.b16 %v213, %v212
    %v263 = vpack.c.b16 %v215, %v214
    %v264 = vpack.c.b16 %v217, %v216
    %v265 = vpack.c.b16 %v219, %v218
    %v266 = vpack.c.b16 %v221, %v220
    %v267 = vpack.c.b16 %v223, %v222
    %v268 = vpack.c.b16 %v225, %v224
    %v269 = vpack.c.b16 %v227, %v226
    %v270 = vpack.c.b16 %v229, %v228
    %v271 = vpack.c.b16 %v231, %v230
    %v272 = vpack.c.b16 %v233, %v232
    %v273 = vpack.c.b16 %v235, %v234
    %v274 = vpack.c.b16 %v237, %v236
    %v275 = vpack.c.b16 %v239, %v238
    %v276 = vpack.c.b16 %v241, %v240
    %v277 = vpack.c.b16 %v243, %v242
    %v278 = vpack.c.b16 %v245, %v244
    %v279 = vpack.c.b16 %v247, %v246
    %312 = vmatpush.bf16.msra.mxu0 %v255
    %313 = vmatpush.bf16.msra.mxu0 %v254
    %314 = vmatpush.bf16.msra.mxu0 %v253
    %315 = vmatpush.bf16.msra.mxu0 %v252
    %316 = vmatpush.bf16.msra.mxu0 %v251
    %317 = vmatpush.bf16.msra.mxu0 %v250
    %318 = vmatpush.bf16.msra.mxu0 %v249
    %319 = vmatpush.bf16.msra.mxu0 %v248
    %320 = vmatmul.bf16.gmra.mxu0 %v48
    %v321 = vpop.f32.mrf.mxu0
    %v322 = vadd.f32 %v118, %v321
    %v323 = vpop.f32.mrf.mxu0
    %324 = vdwg.mxu0
    %325 = vmatpush.bf16.msra.mxu0 %v263
    %326 = vmatpush.bf16.msra.mxu0 %v262
    %327 = vmatpush.bf16.msra.mxu0 %v261
    %328 = vmatpush.bf16.msra.mxu0 %v260
    %329 = vmatpush.bf16.msra.mxu0 %v259
    %330 = vmatpush.bf16.msra.mxu0 %v258
    %331 = vmatpush.bf16.msra.mxu0 %v257
    %332 = vmatpush.bf16.msra.mxu0 %v256
    %333 = vmatmul.bf16.gmra.mxu0 %v49
    %v334 = vpop.f32.mrf.mxu0
    %v335 = vadd.f32 %v322, %v334
    %v336 = vpop.f32.mrf.mxu0
    %337 = vdwg.mxu0
    %338 = vmatpush.bf16.msra.mxu0 %v271
    %339 = vmatpush.bf16.msra.mxu0 %v270
    %340 = vmatpush.bf16.msra.mxu0 %v269
    %341 = vmatpush.bf16.msra.mxu0 %v268
    %342 = vmatpush.bf16.msra.mxu0 %v267
    %343 = vmatpush.bf16.msra.mxu0 %v266
    %344 = vmatpush.bf16.msra.mxu0 %v265
    %345 = vmatpush.bf16.msra.mxu0 %v264
    %346 = vmatmul.bf16.gmra.mxu0 %v50
    %v347 = vpop.f32.mrf.mxu0
    %v348 = vadd.f32 %v335, %v347
    %v349 = vpop.f32.mrf.mxu0
    %350 = vdwg.mxu0
    %351 = vmatpush.bf16.msra.mxu0 %v279
    %352 = vmatpush.bf16.msra.mxu0 %v278
    %353 = vmatpush.bf16.msra.mxu0 %v277
    %354 = vmatpush.bf16.msra.mxu0 %v276
    %355 = vmatpush.bf16.msra.mxu0 %v275
    %356 = vmatpush.bf16.msra.mxu0 %v274
    %357 = vmatpush.bf16.msra.mxu0 %v273
    %358 = vmatpush.bf16.msra.mxu0 %v272
    %359 = vmatmul.bf16.gmra.mxu0 %v51
    %v360 = vpop.f32.mrf.mxu0
    %v361 = vadd.f32 %v348, %v360
    %v362 = vpop.f32.mrf.mxu0
    %363 = vdwg.mxu0
    %v364 = vmax.f32 %v361, 0.0
    %v365 = vpack.c.bf16 %v364, %v364
    %v366 = vld [vmem:[#allocation2] sm:$0xff]
    %v367 = vld [vmem:[#allocation2 + $0x8] sm:$0xff]
    %v368 = vld [vmem:[#allocation2 + $0x10] sm:$0xff]
    %v369 = vld [vmem:[#allocation2 + $0x18] sm:$0xff]
    %v370 = vld [vmem:[#allocation2 + $0x20] sm:$0xff]
    %v371 = vld [vmem:[#allocation2 + $0x28] sm:$0xff]
    %v372 = vld [vmem:[#allocation2 + $0x30] sm:$0xff]
    %v373 = vld [vmem:[#allocation2 + $0x38] sm:$0xff]
    %v374 = vld [vmem:[#allocation2 + $0x40] sm:$0xff]
    %v375 = vld [vmem:[#allocation2 + $0x48] sm:$0xff]
    %v376 = vld [vmem:[#allocation2 + $0x50] sm:$0xff]
    %v377 = vld [vmem:[#allocation2 + $0x58] sm:$0xff]
    %v378 = vld [vmem:[#allocation2 + $0x60] sm:$0xff]
    %v379 = vld [vmem:[#allocation2 + $0x68] sm:$0xff]
    %v380 = vld [vmem:[#allocation2 + $0x70] sm:$0xff]
    %v381 = vld [vmem:[#allocation2 + $0x78] sm:$0xff]
    %v382 = vld [vmem:[#allocation2 + $0x80] sm:$0xff]
    %v383 = vld [vmem:[#allocation2 + $0x88] sm:$0xff]
    %v384 = vld [vmem:[#allocation2 + $0x90] sm:$0xff]
    %v385 = vld [vmem:[#allocation2 + $0x98] sm:$0xff]
    %v386 = vld [vmem:[#allocation2 + $0xa0] sm:$0xff]
    %v387 = vld [vmem:[#allocation2 + $0xa8] sm:$0xff]
    %v388 = vld [vmem:[#allocation2 + $0xb0] sm:$0xff]
    %v389 = vld [vmem:[#allocation2 + $0xb8] sm:$0xff]
    %v390 = vld [vmem:[#allocation2 + $0xc0] sm:$0xff]
    %v391 = vld [vmem:[#allocation2 + $0xc8] sm:$0xff]
    %v392 = vld [vmem:[#allocation2 + $0xd0] sm:$0xff]
    %v393 = vld [vmem:[#allocation2 + $0xd8] sm:$0xff]
    %v394 = vld [vmem:[#allocation2 + $0xe0] sm:$0xff]
    %v395 = vld [vmem:[#allocation2 + $0xe8] sm:$0xff]
    %v396 = vld [vmem:[#allocation2 + $0xf0] sm:$0xff]
    %v397 = vld [vmem:[#allocation2 + $0xf8] sm:$0xff]
    %v398 = vld [vmem:[%s4] sm:$0xf]
    %v400 = vperm.slane %v398, 0
    %v401 = vperm.slane %v398, 1
    %v402 = vperm.slane %v398, 2
    %v403 = vperm.slane %v398, 3
    %v440 = vunpack.c.l.b16 %v366
    %v441 = vunpack.c.h.b16 %v366
    %v442 = vunpack.c.l.b16 %v367
    %v443 = vunpack.c.h.b16 %v367
    %v444 = vunpack.c.l.b16 %v368
    %v445 = vunpack.c.h.b16 %v368
    %v446 = vunpack.c.l.b16 %v369
    %v447 = vunpack.c.h.b16 %v369
    %v448 = vunpack.c.l.b16 %v370
    %v449 = vunpack.c.h.b16 %v370
    %v450 = vunpack.c.l.b16 %v371
    %v451 = vunpack.c.h.b16 %v371
    %v452 = vunpack.c.l.b16 %v372
    %v453 = vunpack.c.h.b16 %v372
    %v454 = vunpack.c.l.b16 %v373
    %v455 = vunpack.c.h.b16 %v373
    %v456 = vunpack.c.l.b16 %v374
    %v457 = vunpack.c.h.b16 %v374
    %v458 = vunpack.c.l.b16 %v375
    %v459 = vunpack.c.h.b16 %v375
    %v460 = vunpack.c.l.b16 %v376
    %v461 = vunpack.c.h.b16 %v376
    %v462 = vunpack.c.l.b16 %v377
    %v463 = vunpack.c.h.b16 %v377
    %v464 = vunpack.c.l.b16 %v378
    %v465 = vunpack.c.h.b16 %v378
    %v466 = vunpack.c.l.b16 %v379
    %v467 = vunpack.c.h.b16 %v379
    %v468 = vunpack.c.l.b16 %v380
    %v469 = vunpack.c.h.b16 %v380
    %v470 = vunpack.c.l.b16 %v381
    %v471 = vunpack.c.h.b16 %v381
    %v472 = vunpack.c.l.b16 %v382
    %v473 = vunpack.c.h.b16 %v382
    %v474 = vunpack.c.l.b16 %v383
    %v475 = vunpack.c.h.b16 %v383
    %v476 = vunpack.c.l.b16 %v384
    %v477 = vunpack.c.h.b16 %v384
    %v478 = vunpack.c.l.b16 %v385
    %v479 = vunpack.c.h.b16 %v385
    %v480 = vunpack.c.l.b16 %v386
    %v481 = vunpack.c.h.b16 %v386
    %v482 = vunpack.c.l.b16 %v387
    %v483 = vunpack.c.h.b16 %v387
    %v484 = vunpack.c.l.b16 %v388
    %v485 = vunpack.c.h.b16 %v388
    %v486 = vunpack.c.l.b16 %v389
    %v487 = vunpack.c.h.b16 %v389
    %v488 = vunpack.c.l.b16 %v390
    %v489 = vunpack.c.h.b16 %v390
    %v490 = vunpack.c.l.b16 %v391
    %v491 = vunpack.c.h.b16 %v391
    %v492 = vunpack.c.l.b16 %v392
    %v493 = vunpack.c.h.b16 %v392
    %v494 = vunpack.c.l.b16 %v393
    %v495 = vunpack.c.h.b16 %v393
    %v496 = vunpack.c.l.b16 %v394
    %v497 = vunpack.c.h.b16 %v394
    %v498 = vunpack.c.l.b16 %v395
    %v499 = vunpack.c.h.b16 %v395
    %v500 = vunpack.c.l.b16 %v396
    %v501 = vunpack.c.h.b16 %v396
    %v502 = vunpack.c.l.b16 %v397
    %v503 = vunpack.c.h.b16 %v397
    %v504 = vpack.c.b16 %v444, %v440
    %v505 = vpack.c.b16 %v445, %v441
    %v506 = vpack.c.b16 %v446, %v442
    %v507 = vpack.c.b16 %v447, %v443
    %v508 = vpack.c.b16 %v452, %v448
    %v509 = vpack.c.b16 %v453, %v449
    %v510 = vpack.c.b16 %v454, %v450
    %v511 = vpack.c.b16 %v455, %v451
    %v512 = vpack.c.b16 %v460, %v456
    %v513 = vpack.c.b16 %v461, %v457
    %v514 = vpack.c.b16 %v462, %v458
    %v515 = vpack.c.b16 %v463, %v459
    %v516 = vpack.c.b16 %v468, %v464
    %v517 = vpack.c.b16 %v469, %v465
    %v518 = vpack.c.b16 %v470, %v466
    %v519 = vpack.c.b16 %v471, %v467
    %v520 = vpack.c.b16 %v476, %v472
    %v521 = vpack.c.b16 %v477, %v473
    %v522 = vpack.c.b16 %v478, %v474
    %v523 = vpack.c.b16 %v479, %v475
    %v524 = vpack.c.b16 %v484, %v480
    %v525 = vpack.c.b16 %v485, %v481
    %v526 = vpack.c.b16 %v486, %v482
    %v527 = vpack.c.b16 %v487, %v483
    %v528 = vpack.c.b16 %v492, %v488
    %v529 = vpack.c.b16 %v493, %v489
    %v530 = vpack.c.b16 %v494, %v490
    %v531 = vpack.c.b16 %v495, %v491
    %v532 = vpack.c.b16 %v500, %v496
    %v533 = vpack.c.b16 %v501, %v497
    %v534 = vpack.c.b16 %v502, %v498
    %v535 = vpack.c.b16 %v503, %v499
    %568 = vmatpush.bf16.msra.mxu0 %v532
    %569 = vmatpush.bf16.msra.mxu0 %v528
    %570 = vmatpush.bf16.msra.mxu0 %v524
    %571 = vmatpush.bf16.msra.mxu0 %v520
    %572 = vmatpush.bf16.msra.mxu0 %v516
    %573 = vmatpush.bf16.msra.mxu0 %v512
    %574 = vmatpush.bf16.msra.mxu0 %v508
    %575 = vmatpush.bf16.msra.mxu0 %v504
    %576 = vmatmul.bf16.gmra.mxu0 %v365
    %v577 = vpop.f32.mrf.mxu0
    %v578 = vadd.f32 %v400, %v577
    %v579 = vpop.f32.mrf.mxu0
    %580 = vdwg.mxu0
    %581 = vmatpush.bf16.msra.mxu0 %v533
    %582 = vmatpush.bf16.msra.mxu0 %v529
    %583 = vmatpush.bf16.msra.mxu0 %v525
    %584 = vmatpush.bf16.msra.mxu0 %v521
    %585 = vmatpush.bf16.msra.mxu0 %v517
    %586 = vmatpush.bf16.msra.mxu0 %v513
    %587 = vmatpush.bf16.msra.mxu0 %v509
    %588 = vmatpush.bf16.msra.mxu0 %v505
    %589 = vmatmul.bf16.gmra.mxu0 %v365
    %v590 = vpop.f32.mrf.mxu0
    %v591 = vadd.f32 %v401, %v590
    %v592 = vpop.f32.mrf.mxu0
    %593 = vdwg.mxu0
    %594 = vmatpush.bf16.msra.mxu0 %v534
    %595 = vmatpush.bf16.msra.mxu0 %v530
    %596 = vmatpush.bf16.msra.mxu0 %v526
    %597 = vmatpush.bf16.msra.mxu0 %v522
    %598 = vmatpush.bf16.msra.mxu0 %v518
    %599 = vmatpush.bf16.msra.mxu0 %v514
    %600 = vmatpush.bf16.msra.mxu0 %v510
    %601 = vmatpush.bf16.msra.mxu0 %v506
    %602 = vmatmul.bf16.gmra.mxu0 %v365
    %v603 = vpop.f32.mrf.mxu0
    %v604 = vadd.f32 %v402, %v603
    %v605 = vpop.f32.mrf.mxu0
    %606 = vdwg.mxu0
    %607 = vmatpush.bf16.msra.mxu0 %v535
    %608 = vmatpush.bf16.msra.mxu0 %v531
    %609 = vmatpush.bf16.msra.mxu0 %v527
    %610 = vmatpush.bf16.msra.mxu0 %v523
    %611 = vmatpush.bf16.msra.mxu0 %v519
    %612 = vmatpush.bf16.msra.mxu0 %v515
    %613 = vmatpush.bf16.msra.mxu0 %v511
    %614 = vmatpush.bf16.msra.mxu0 %v507
    %615 = vmatmul.bf16.gmra.mxu0 %v365
    %v616 = vpop.f32.mrf.mxu0
    %v617 = vadd.f32 %v403, %v616
    %v618 = vpop.f32.mrf.mxu0
    %619 = vdwg.mxu0
    %v620 = vxor.u32 %v578, 2147483648
    %v621 = vxor.u32 %v591, 2147483648
    %v622 = vxor.u32 %v604, 2147483648
    %v623 = vxor.u32 %v617, 2147483648
    %v624 = vmul.f32 %v620, 1.442695
    %v625 = vpow.pop %v624
    %v626 = vmul.f32 %v621, 1.442695
    %v627 = vpow.pop %v626
    %v628 = vmul.f32 %v622, 1.442695
    %v629 = vpow.pop %v628
    %v630 = vmul.f32 %v623, 1.442695
    %v631 = vpow.pop %v630
    %v632 = vadd.f32 %v625, 1.0
    %v633 = vadd.f32 %v627, 1.0
    %v634 = vadd.f32 %v629, 1.0
    %v635 = vadd.f32 %v631, 1.0
    %v636 = vrcp.pop %v632
    %v637 = vmul.f32 %v632, %v636
    %v638 = vsub.f32 1.0, %v637
    %v639 = vmul.f32 %v636, %v638
    %v640 = vadd.f32 %v636, %v639
    %vm641 = vweird.f32 %v632
    %vm642 = vweird.f32 %v636
    %vm643 = vmor %vm641, %vm642
    %v644 = vsel %vm643, %v636, %v640
    %v645 = vand.u32 2147483647, %v632
    %vm646 = vcmp.eq.f32.partialorder %v645, 8.507059e+37
    %v647 = vand.u32 %v632, 2147483648
    %v648 = vor.u32 1.1754944e-38, %v647
    %v649 = vsel %vm646, %v648, %v644
    %v650 = vmul.f32 1.0, %v649
    %v651 = vrcp.pop %v633
    %v652 = vmul.f32 %v633, %v651
    %v653 = vsub.f32 1.0, %v652
    %v654 = vmul.f32 %v651, %v653
    %v655 = vadd.f32 %v651, %v654
    %vm656 = vweird.f32 %v633
    %vm657 = vweird.f32 %v651
    %vm658 = vmor %vm656, %vm657
    %v659 = vsel %vm658, %v651, %v655
    %v660 = vand.u32 2147483647, %v633
    %vm661 = vcmp.eq.f32.partialorder %v660, 8.507059e+37
    %v662 = vand.u32 %v633, 2147483648
    %v663 = vor.u32 1.1754944e-38, %v662
    %v664 = vsel %vm661, %v663, %v659
    %v665 = vmul.f32 1.0, %v664
    %v666 = vrcp.pop %v634
    %v667 = vmul.f32 %v634, %v666
    %v668 = vsub.f32 1.0, %v667
    %v669 = vmul.f32 %v666, %v668
    %v670 = vadd.f32 %v666, %v669
    %vm671 = vweird.f32 %v634
    %vm672 = vweird.f32 %v666
    %vm673 = vmor %vm671, %vm672
    %v674 = vsel %vm673, %v666, %v670
    %v675 = vand.u32 2147483647, %v634
    %vm676 = vcmp.eq.f32.partialorder %v675, 8.507059e+37
    %v677 = vand.u32 %v634, 2147483648
    %v678 = vor.u32 1.1754944e-38, %v677
    %v679 = vsel %vm676, %v678, %v674
    %v680 = vmul.f32 1.0, %v679
    %v681 = vrcp.pop %v635
    %v682 = vmul.f32 %v635, %v681
    %v683 = vsub.f32 1.0, %v682
    %v684 = vmul.f32 %v681, %v683
    %v685 = vadd.f32 %v681, %v684
    %vm686 = vweird.f32 %v635
    %vm687 = vweird.f32 %v681
    %vm688 = vmor %vm686, %vm687
    %v689 = vsel %vm688, %v681, %v685
    %v690 = vand.u32 2147483647, %v635
    %vm691 = vcmp.eq.f32.partialorder %v690, 8.507059e+37
    %v692 = vand.u32 %v635, 2147483648
    %v693 = vor.u32 1.1754944e-38, %v692
    %v694 = vsel %vm691, %v693, %v689
    %v695 = vmul.f32 1.0, %v694
    %v700 = vrot.slane %v665, 6
    %v701 = vrot.slane %v680, 4
    %v702 = vrot.slane %v695, 2
    %vm703 = vcmask 1041408
    %v704 = vsel %vm703, %v650, %v700
    %vm705 = vcmask 1045508
    %v706 = vsel %vm705, %v701, %v702
    %vm707 = vcmask 1043456
    %v708 = vsel %vm707, %v704, %v706
    %v710 = vmul.f32 %v37, %v708
    %711 = vst [vmem:[#allocation5] sm:$0xff] %v710
    // Predicated region
    $region26: #{_lambda_.5} parent=1 // pred_check
      _
    $region27: #{_lambda_.5} parent=1 // pred_check_branch
      %713 = sbr.rel (0) target = $region29
    $region28: #{_lambda_.5} parent=1 // pred_region
      %715 = vsyncadd [#allocation4], 0
      %s717 = sshll.u32 [#allocation5], 4
      %s718 = int_to_ptr.vmem [resolvable:$true] %s717
      %s719 = sshll.u32 %s5, 4
      %s720 = int_to_ptr.hbm [resolvable:$true] %s719
      %722 = dma.vmem_to_hbm [thread:$0]  %s718, 128, %s720, [#allocation4]
    $region29: #{_lambda_.5} parent=1 // pred_fallthru
      _
    // Predicated region
    $region30: #{_lambda_.5} parent=1 // pred_check
      _
    $region31: #{_lambda_.5} parent=1 // pred_check_branch
      %724 = sbr.rel (0) target = $region33
    $region32: #{_lambda_.5} parent=1 // pred_region
      %726 = dma.done [#allocation4], 128
    $region33: #{_lambda_.5} parent=1 // pred_fallthru
      _
    %727 = vsyncpa [#allocation3], 1
    %728 = vsyncpa [#allocation4], 1

// kernel: _lambda_.4
$region0: #{_lambda_.4}
  #allocation0 [shape = 'u32[]', space=smem, size = 0x4, offset = 0x4, fixed_abs, tag = 'smem constant byte address 0x4 - core index']
  #allocation1 [shape = 'u32[72,128]{1,0:T(1,128)}', space=vmem, size = 0x9000, scoped, tag = 'internal scratch']
  %s0 = inlined_call_operand.vmem [shape: bf16[2,64,512], index: 0, kind: input, shape index: {}]
  %s1 = inlined_call_operand.vmem [shape: bf16[2,10,10,256], index: 1, kind: input, shape index: {}]
  %s2 = inlined_call_operand.hbm [shape: bf16[9,256,512], index: 2, kind: input, shape index: {}]
  %s3 = inlined_call_operand.vmem [shape: f32[1,512], index: 3, kind: input, shape index: {}]
  %s4 = inlined_call_operand.vmem [shape: f32[2,1,512], index: 4, kind: output, shape index: {}]
  %s5 = sld [smem:[#allocation0]]
  $region53: #{_lambda_.4} parent=0
    _
  %s7 = ssub.s32 1, %s5
  %s8 = scalar_select 0, %s7, %s5
  $region1: #{_lambda_.4} parent=0
    #allocation2 [shape = 'u8[2359296]{0}', space=vmem, size = 0x240000, scoped, tag = 'input window, operand 2, single buffered']
    #allocation3 [shape = 's32[2]{0}', space=sflag, size = 0x8, scoped, tag = 'scoped memory for _lambda_.4']
    %9 = vsyncpa [#allocation3], 0
    loop: start=0, step=1, limit=4
    $region2: #{_lambda_.4} parent=1 // loop_pre_header
      _
    $region3: #{_lambda_.4} parent=1 // loop_header
      %s11 = sphi 0, %s15
      %p12 = scmp.ge.s32.totalorder %s11, 4
      %s21 = sphi 0, %s23
      %s24 = sphi 0, %s21
      %s25 = sphi 0, %s24
      %s41 = sphi 0, %s25
      %s47 = sphi 0, %s49
      %s50 = sphi 0, %s47
      %s51 = sphi 0, %s50
      %s67 = sphi 0, %s51
      %s71 = sphi 0, %s71
      %s73 = sphi 0, %s71
      %s74 = sphi 0, %s73
      %s88 = sphi 0, %s74
      %s92 = sphi 0, %s92
      %s94 = sphi 0, %s92
      %s95 = sphi 0, %s94
      %s109 = sphi 0, %s95
      %s115 = sphi 0, %s117
      %s118 = sphi 0, %s115
      %s119 = sphi 0, %s118
      %s135 = sphi 0, %s119
    $region4: #{_lambda_.4} parent=1 // loop_header_branch
      %14 = sbr.rel (%p12) target = $region8
    $region5: #{_lambda_.4} parent=1 // loop_body
      %s16 = ssub.s32 %s11, 1
      %s17 = ssub.s32 %s11, 2
      %s18 = sadd.s32 %s11, 1
      %s19 = ssub.s32 %s11, %s18
      %p20 = scmp.eq.s32.totalorder %s19, 0
      %s22 = sadd.s32 %s21, 1
      %s23 = scalar_select %p20, %s21, %s22
      %p26 = pneg %p20
      %p27 = scmp.eq.s32.totalorder %s11, 1
      %p28 = por %p26, %p27
      %p29 = scmp.ne.s32.totalorder %s21, %s24
      %p30 = scmp.eq.s32.totalorder %s11, 0
      %p31 = por %p29, %p30
      %p32 = scmp.ne.s32.totalorder %s21, %s24
      %p33 = scmp.eq.s32.totalorder %s16, 1
      %p34 = por %p32, %p33
      %p35 = scmp.ne.s32.totalorder %s24, %s25
      %p36 = scmp.eq.s32.totalorder %s16, 0
      %p37 = por %p35, %p36
      %p38 = scmp.ne.s32.totalorder %s24, %s25
      %p39 = scmp.eq.s32.totalorder %s17, 1
      %p40 = por %p38, %p39
      %p42 = scmp.ne.s32.totalorder %s25, %s41
      %p43 = scmp.eq.s32.totalorder %s17, 0
      %p44 = por %p42, %p43
      %s45 = ssub.s32 %s11, %s18
      %p46 = scmp.eq.s32.totalorder %s45, 0
      %s48 = sadd.s32 %s47, 1
      %s49 = scalar_select %p46, %s47, %s48
      %p52 = pneg %p46
      %p53 = scmp.eq.s32.totalorder %s11, 1
      %p54 = por %p52, %p53
      %p55 = scmp.ne.s32.totalorder %s47, %s50
      %p56 = scmp.eq.s32.totalorder %s11, 0
      %p57 = por %p55, %p56
      %p58 = scmp.ne.s32.totalorder %s47, %s50
      %p59 = scmp.eq.s32.totalorder %s16, 1
      %p60 = por %p58, %p59
      %p61 = scmp.ne.s32.totalorder %s50, %s51
      %p62 = scmp.eq.s32.totalorder %s16, 0
      %p63 = por %p61, %p62
      %p64 = scmp.ne.s32.totalorder %s50, %s51
      %p65 = scmp.eq.s32.totalorder %s17, 1
      %p66 = por %p64, %p65
      %p68 = scmp.ne.s32.totalorder %s51, %s67
      %p69 = scmp.eq.s32.totalorder %s17, 0
      %p70 = por %p68, %p69
      %s72 = sadd.s32 %s71, 1
      %p75 = scmp.eq.s32.totalorder %s11, 1
      %p76 = scmp.ne.s32.totalorder %s71, %s73
      %p77 = scmp.eq.s32.totalorder %s11, 0
      %p78 = por %p76, %p77
      %p79 = scmp.ne.s32.totalorder %s71, %s73
      %p80 = scmp.eq.s32.totalorder %s16, 1
      %p81 = por %p79, %p80
      %p82 = scmp.ne.s32.totalorder %s73, %s74
      %p83 = scmp.eq.s32.totalorder %s16, 0
      %p84 = por %p82, %p83
      %p85 = scmp.ne.s32.totalorder %s73, %s74
      %p86 = scmp.eq.s32.totalorder %s17, 1
      %p87 = por %p85, %p86
      %p89 = scmp.ne.s32.totalorder %s74, %s88
      %p90 = scmp.eq.s32.totalorder %s17, 0
      %p91 = por %p89, %p90
      %s93 = sadd.s32 %s92, 1
      %p96 = scmp.eq.s32.totalorder %s11, 1
      %p97 = scmp.ne.s32.totalorder %s92, %s94
      %p98 = scmp.eq.s32.totalorder %s11, 0
      %p99 = por %p97, %p98
      %p100 = scmp.ne.s32.totalorder %s92, %s94
      %p101 = scmp.eq.s32.totalorder %s16, 1
      %p102 = por %p100, %p101
      %p103 = scmp.ne.s32.totalorder %s94, %s95
      %p104 = scmp.eq.s32.totalorder %s16, 0
      %p105 = por %p103, %p104
      %p106 = scmp.ne.s32.totalorder %s94, %s95
      %p107 = scmp.eq.s32.totalorder %s17, 1
      %p108 = por %p106, %p107
      %p110 = scmp.ne.s32.totalorder %s95, %s109
      %p111 = scmp.eq.s32.totalorder %s17, 0
      %p112 = por %p110, %p111
      %s113 = ssub.s32 %s11, %s18
      %p114 = scmp.eq.s32.totalorder %s113, 0
      %s116 = sadd.s32 %s115, 1
      %s117 = scalar_select %p114, %s115, %s116
      %p120 = pneg %p114
      %p121 = scmp.eq.s32.totalorder %s11, 1
      %p122 = por %p120, %p121
      %p123 = scmp.ne.s32.totalorder %s115, %s118
      %p124 = scmp.eq.s32.totalorder %s11, 0
      %p125 = por %p123, %p124
      %p126 = scmp.ne.s32.totalorder %s115, %s118
      %p127 = scmp.eq.s32.totalorder %s16, 1
      %p128 = por %p126, %p127
      %p129 = scmp.ne.s32.totalorder %s118, %s119
      %p130 = scmp.eq.s32.totalorder %s16, 0
      %p131 = por %p129, %p130
      %p132 = scmp.ne.s32.totalorder %s118, %s119
      %p133 = scmp.eq.s32.totalorder %s17, 1
      %p134 = por %p132, %p133
      %p136 = scmp.ne.s32.totalorder %s119, %s135
      %p137 = scmp.eq.s32.totalorder %s17, 0
      %p138 = por %p136, %p137
      %p139 = scmp.le.s32.totalorder 1, %s11
      %p140 = scmp.lt.s32.totalorder %s11, 3
      %p141 = pnand %p139, %p140
      %p142 = pneg %p141
      // Predicated region
      $region9: #{_lambda_.4} parent=5 // pred_check
        _
      $region10: #{_lambda_.4} parent=5 // pred_check_branch
        %144 = sbr.rel (%p141) target = $region12
      $region11: #{_lambda_.4} parent=5 // pred_region
        %s145 = ssub.s32 %s11, 1
        // Predicated region
        $region13: #{_lambda_.4} parent=11 // pred_check
          %p146 = pneg %p84
        $region14: #{_lambda_.4} parent=11 // pred_check_branch
          %148 = sbr.rel (%p146) target = $region16
        $region15: #{_lambda_.4} parent=11 // pred_region
          %150 = vsyncadd [#allocation3], 0
          %s151 = sshll.u32 %s2, 4
          %s152 = int_to_ptr.hbm [resolvable:$true] %s151
          %s153 = sshll.u32 [#allocation2], 4
          %s154 = int_to_ptr.vmem [resolvable:$true] %s153
          %159 = dma.hbm_to_vmem [thread:$0]  %s152, 73728, %s154, [#allocation3], 256, 256, 16
        $region16: #{_lambda_.4} parent=11 // pred_fallthru
          _
        // Predicated region
        $region17: #{_lambda_.4} parent=11 // pred_check
          %p160 = pneg %p105
        $region18: #{_lambda_.4} parent=11 // pred_check_branch
          %162 = sbr.rel (%p160) target = $region20
        $region19: #{_lambda_.4} parent=11 // pred_region
          _
        $region20: #{_lambda_.4} parent=11 // pred_fallthru
          _
      $region12: #{_lambda_.4} parent=5 // pred_fallthru
        _
      %p163 = scmp.lt.s32.totalorder %s11, 2
      // Predicated region
      $region21: #{_lambda_.4} parent=5 // pred_check
        %p164 = pneg %p163
      $region22: #{_lambda_.4} parent=5 // pred_check_branch
        %166 = sbr.rel (%p164) target = $region24
      $region23: #{_lambda_.4} parent=5 // pred_region
        // Predicated region
        $region25: #{_lambda_.4} parent=23 // pred_check
          %p167 = pneg %p31
        $region26: #{_lambda_.4} parent=23 // pred_check_branch
          %169 = sbr.rel (%p167) target = $region28
        $region27: #{_lambda_.4} parent=23 // pred_region
          %p170 = scmp.lt.s32.totalorder %s11, 1
          %s171 = scalar_select %p170, %s11, 1
          %s172 = smul.addr %s171, 32
          %s173 = smul.addr %s172, 4
          %s174 = scalar_lea.vmem %s0, %s173
        $region28: #{_lambda_.4} parent=23 // pred_fallthru
          _
        // Predicated region
        $region29: #{_lambda_.4} parent=23 // pred_check
          %p175 = pneg %p57
        $region30: #{_lambda_.4} parent=23 // pred_check_branch
          %177 = sbr.rel (%p175) target = $region32
        $region31: #{_lambda_.4} parent=23 // pred_region
          %p178 = scmp.lt.s32.totalorder %s11, 1
          %s179 = scalar_select %p178, %s11, 1
          %s180 = smul.addr %s179, 40
          %s181 = smul.addr %s180, 4
          %s182 = scalar_lea.vmem %s1, %s181
        $region32: #{_lambda_.4} parent=23 // pred_fallthru
          _
      $region24: #{_lambda_.4} parent=5 // pred_fallthru
        _
      %p183 = scmp.le.s32.totalorder 1, %s11
      %p184 = scmp.lt.s32.totalorder %s11, 3
      %p185 = pnand %p183, %p184
      %p186 = pneg %p185
      // Predicated region
      $region33: #{_lambda_.4} parent=5 // pred_check
        _
      $region34: #{_lambda_.4} parent=5 // pred_check_branch
        %188 = sbr.rel (%p185) target = $region36
      $region35: #{_lambda_.4} parent=5 // pred_region
        %s189 = ssub.s32 %s11, 1
        // Predicated region
        $region37: #{_lambda_.4} parent=35 // pred_check
          %p190 = pneg %p84
        $region38: #{_lambda_.4} parent=35 // pred_check_branch
          %192 = sbr.rel (%p190) target = $region40
        $region39: #{_lambda_.4} parent=35 // pred_region
          %194 = dma.done [#allocation3], 73728
        $region40: #{_lambda_.4} parent=35 // pred_fallthru
          _
        %p195 = scmp.lt.s32.totalorder %s16, 1
        %s196 = scalar_select %p195, %s16, 1
        %s197 = smul.addr %s196, 32
        %s198 = smul.addr %s197, 4
        %s199 = scalar_lea.vmem %s0, %s198
        %p200 = pneg %p37
        %p201 = pneg %p34
        %p202 = scmp.lt.s32.totalorder %s16, 1
        %s203 = scalar_select %p202, %s16, 1
        %s204 = smul.addr %s203, 40
        %s205 = smul.addr %s204, 4
        %s206 = scalar_lea.vmem %s1, %s205
        %p207 = pneg %p63
        %p208 = pneg %p60
        %p209 = pneg %p84
        %p210 = pneg %p81
        %p211 = pneg %p105
        %p212 = pneg %p102
        %p213 = pneg %p131
        %p214 = pneg %p128
        %p215 = scmp.lt.s32.totalorder %s16, 1
        %s216 = scalar_select %p215, %s16, 1
        %s217 = smul.addr %s216, 4
        %s218 = scalar_lea.vmem %s4, %s217
        %p219 = scmp.lt.s32.totalorder %s16, 1
        %s220 = scalar_select %p219, %s16, 1
        %s221 = smul.addr %s220, 32
        %s222 = smul.addr %s221, 4
        %s223 = scalar_lea.vmem %s0, %s222
        %p224 = scmp.lt.s32.totalorder %s16, 1
        %s225 = scalar_select %p224, %s16, 1
        %s226 = smul.addr %s225, 40
        %s227 = smul.addr %s226, 4
        %s228 = scalar_lea.vmem %s1, %s227
        %p229 = scmp.lt.s32.totalorder %s16, 1
        %s230 = scalar_select %p229, %s16, 1
        %s231 = smul.addr %s230, 4
        %s232 = scalar_lea.vmem %s4, %s231
        %v233 = vld [vmem:[%s228] sm:$0xff]
        %v234 = vld [vmem:[%s228 + $0x8] sm:$0x11]
        %v235 = vld [vmem:[%s228 + $0x10] sm:$0xff]
        %v236 = vld [vmem:[%s228 + $0x18] sm:$0x11]
        %v237 = vld [vmem:[%s228 + $0x20] sm:$0xff]
        %v238 = vld [vmem:[%s228 + $0x28] sm:$0x11]
        %v239 = vld [vmem:[%s228 + $0x30] sm:$0xff]
        %v240 = vld [vmem:[%s228 + $0x38] sm:$0x11]
        %v241 = vld [vmem:[%s228 + $0x40] sm:$0xff]
        %v242 = vld [vmem:[%s228 + $0x48] sm:$0x11]
        %v243 = vld [vmem:[%s228 + $0x50] sm:$0xff]
        %v244 = vld [vmem:[%s228 + $0x58] sm:$0x11]
        %v245 = vld [vmem:[%s228 + $0x60] sm:$0xff]
        %v246 = vld [vmem:[%s228 + $0x68] sm:$0x11]
        %v247 = vld [vmem:[%s228 + $0x70] sm:$0xff]
        %v248 = vld [vmem:[%s228 + $0x78] sm:$0x11]
        %v249 = vld [vmem:[%s228 + $0x80] sm:$0xff]
        %v250 = vld [vmem:[%s228 + $0x88] sm:$0x11]
        %v251 = vld [vmem:[%s228 + $0x90] sm:$0xff]
        %v252 = vld [vmem:[%s228 + $0x98] sm:$0x11]
        %v253 = vld [vmem:[#allocation2] sm:$0xff]
        %v254 = vld [vmem:[#allocation2 + $0x8] sm:$0xff]
        %v255 = vld [vmem:[#allocation2 + $0x10] sm:$0xff]
        %v256 = vld [vmem:[#allocation2 + $0x18] sm:$0xff]
        %v257 = vld [vmem:[#allocation2 + $0x20] sm:$0xff]
        %v258 = vld [vmem:[#allocation2 + $0x28] sm:$0xff]
        %v259 = vld [vmem:[#allocation2 + $0x30] sm:$0xff]
        %v260 = vld [vmem:[#allocation2 + $0x38] sm:$0xff]
        %v261 = vld [vmem:[#allocation2 + $0x40] sm:$0xff]
        %v262 = vld [vmem:[#allocation2 + $0x48] sm:$0xff]
        %v263 = vld [vmem:[#allocation2 + $0x50] sm:$0xff]
        %v264 = vld [vmem:[#allocation2 + $0x58] sm:$0xff]
        %v265 = vld [vmem:[#allocation2 + $0x60] sm:$0xff]
        %v266 = vld [vmem:[#allocation2 + $0x68] sm:$0xff]
        %v267 = vld [vmem:[#allocation2 + $0x70] sm:$0xff]
        %v268 = vld [vmem:[#allocation2 + $0x78] sm:$0xff]
        %v269 = vld [vmem:[#allocation2 + $0x80] sm:$0xff]
        %v270 = vld [vmem:[#allocation2 + $0x88] sm:$0xff]
        %v271 = vld [vmem:[#allocation2 + $0x90] sm:$0xff]
        %v272 = vld [vmem:[#allocation2 + $0x98] sm:$0xff]
        %v273 = vld [vmem:[#allocation2 + $0xa0] sm:$0xff]
        %v274 = vld [vmem:[#allocation2 + $0xa8] sm:$0xff]
        %v275 = vld [vmem:[#allocation2 + $0xb0] sm:$0xff]
        %v276 = vld [vmem:[#allocation2 + $0xb8] sm:$0xff]
        %v277 = vld [vmem:[#allocation2 + $0xc0] sm:$0xff]
        %v278 = vld [vmem:[#allocation2 + $0xc8] sm:$0xff]
        %v279 = vld [vmem:[#allocation2 + $0xd0] sm:$0xff]
        %v280 = vld [vmem:[#allocation2 + $0xd8] sm:$0xff]
        %v281 = vld [vmem:[#allocation2 + $0xe0] sm:$0xff]
        %v282 = vld [vmem:[#allocation2 + $0xe8] sm:$0xff]
        %v283 = vld [vmem:[#allocation2 + $0xf0] sm:$0xff]
        %v284 = vld [vmem:[#allocation2 + $0xf8] sm:$0xff]
        %v285 = vld [vmem:[#allocation2 + $0x100] sm:$0xff]
        %v286 = vld [vmem:[#allocation2 + $0x108] sm:$0xff]
        %v287 = vld [vmem:[#allocation2 + $0x110] sm:$0xff]
        %v288 = vld [vmem:[#allocation2 + $0x118] sm:$0xff]
        %v289 = vld [vmem:[#allocation2 + $0x120] sm:$0xff]
        %v290 = vld [vmem:[#allocation2 + $0x128] sm:$0xff]
        %v291 = vld [vmem:[#allocation2 + $0x130] sm:$0xff]
        %v292 = vld [vmem:[#allocation2 + $0x138] sm:$0xff]
        %v293 = vld [vmem:[#allocation2 + $0x140] sm:$0xff]
        %v294 = vld [vmem:[#allocation2 + $0x148] sm:$0xff]
        %v295 = vld [vmem:[#allocation2 + $0x150] sm:$0xff]
        %v296 = vld [vmem:[#allocation2 + $0x158] sm:$0xff]
        %v297 = vld [vmem:[#allocation2 + $0x160] sm:$0xff]
        %v298 = vld [vmem:[#allocation2 + $0x168] sm:$0xff]
        %v299 = vld [vmem:[#allocation2 + $0x170] sm:$0xff]
        %v300 = vld [vmem:[#allocation2 + $0x178] sm:$0xff]
        %v301 = vld [vmem:[#allocation2 + $0x180] sm:$0xff]
        %v302 = vld [vmem:[#allocation2 + $0x188] sm:$0xff]
        %v303 = vld [vmem:[#allocation2 + $0x190] sm:$0xff]
        %v304 = vld [vmem:[#allocation2 + $0x198] sm:$0xff]
        %v305 = vld [vmem:[#allocation2 + $0x1a0] sm:$0xff]
        %v306 = vld [vmem:[#allocation2 + $0x1a8] sm:$0xff]
        %v307 = vld [vmem:[#allocation2 + $0x1b0] sm:$0xff]
        %v308 = vld [vmem:[#allocation2 + $0x1b8] sm:$0xff]
        %v309 = vld [vmem:[#allocation2 + $0x1c0] sm:$0xff]
        %v310 = vld [vmem:[#allocation2 + $0x1c8] sm:$0xff]
        %v311 = vld [vmem:[#allocation2 + $0x1d0] sm:$0xff]
        %v312 = vld [vmem:[#allocation2 + $0x1d8] sm:$0xff]
        %v313 = vld [vmem:[#allocation2 + $0x1e0] sm:$0xff]
        %v314 = vld [vmem:[#allocation2 + $0x1e8] sm:$0xff]
        %v315 = vld [vmem:[#allocation2 + $0x1f0] sm:$0xff]
        %v316 = vld [vmem:[#allocation2 + $0x1f8] sm:$0xff]
        %vm317 = vsmask.f32 3328
        %vm318 = vsmask.f32 7440
        %vm319 = vmor %vm317, %vm318
        %v321 = vshrl.u32 %v233, 16
        %v323 = vrot.slane %v321, 4
        %v324 = vshll.u32 %v233, 16
        %v326 = vrot.slane %v324, 5
        %v327 = vor.u32 %v323, %v326
        %v328 = vrot.slane %v327, 4
        %v330 = vshll.u32 %v234, 16
        %v332 = vrot.slane %v330, 5
        %v333 = vsel %vm319, %v328, %v332
        %v335 = vshrl.u32 %v235, 16
        %v337 = vrot.slane %v335, 4
        %v338 = vshll.u32 %v235, 16
        %v340 = vrot.slane %v338, 5
        %v341 = vor.u32 %v337, %v340
        %v342 = vrot.slane %v341, 4
        %v344 = vshll.u32 %v236, 16
        %v346 = vrot.slane %v344, 5
        %v347 = vsel %vm319, %v342, %v346
        %v349 = vshrl.u32 %v237, 16
        %v351 = vrot.slane %v349, 4
        %v352 = vshll.u32 %v237, 16
        %v354 = vrot.slane %v352, 5
        %v355 = vor.u32 %v351, %v354
        %v356 = vrot.slane %v355, 4
        %v358 = vshll.u32 %v238, 16
        %v360 = vrot.slane %v358, 5
        %v361 = vsel %vm319, %v356, %v360
        %v363 = vshrl.u32 %v239, 16
        %v365 = vrot.slane %v363, 4
        %v366 = vshll.u32 %v239, 16
        %v368 = vrot.slane %v366, 5
        %v369 = vor.u32 %v365, %v368
        %v370 = vrot.slane %v369, 4
        %v372 = vshll.u32 %v240, 16
        %v374 = vrot.slane %v372, 5
        %v375 = vsel %vm319, %v370, %v374
        %v377 = vshrl.u32 %v241, 16
        %v379 = vrot.slane %v377, 4
        %v380 = vshll.u32 %v241, 16
        %v382 = vrot.slane %v380, 5
        %v383 = vor.u32 %v379, %v382
        %v384 = vrot.slane %v383, 4
        %v386 = vshll.u32 %v242, 16
        %v388 = vrot.slane %v386, 5
        %v389 = vsel %vm319, %v384, %v388
        %v391 = vshrl.u32 %v243, 16
        %v393 = vrot.slane %v391, 4
        %v394 = vshll.u32 %v243, 16
        %v396 = vrot.slane %v394, 5
        %v397 = vor.u32 %v393, %v396
        %v398 = vrot.slane %v397, 4
        %v400 = vshll.u32 %v244, 16
        %v402 = vrot.slane %v400, 5
        %v403 = vsel %vm319, %v398, %v402
        %v405 = vshrl.u32 %v245, 16
        %v407 = vrot.slane %v405, 4
        %v408 = vshll.u32 %v245, 16
        %v410 = vrot.slane %v408, 5
        %v411 = vor.u32 %v407, %v410
        %v412 = vrot.slane %v411, 4
        %v414 = vshll.u32 %v246, 16
        %v416 = vrot.slane %v414, 5
        %v417 = vsel %vm319, %v412, %v416
        %v419 = vshrl.u32 %v247, 16
        %v421 = vrot.slane %v419, 4
        %v422 = vshll.u32 %v247, 16
        %v424 = vrot.slane %v422, 5
        %v425 = vor.u32 %v421, %v424
        %v426 = vrot.slane %v425, 4
        %v428 = vshll.u32 %v248, 16
        %v430 = vrot.slane %v428, 5
        %v431 = vsel %vm319, %v426, %v430
        %s432 = scalar_lea.vmem [#allocation2], 512
        %v433 = vld [vmem:[%s432] sm:$0xff]
        %v434 = vld [vmem:[%s432 + $0x8] sm:$0xff]
        %v435 = vld [vmem:[%s432 + $0x10] sm:$0xff]
        %v436 = vld [vmem:[%s432 + $0x18] sm:$0xff]
        %v437 = vld [vmem:[%s432 + $0x20] sm:$0xff]
        %v438 = vld [vmem:[%s432 + $0x28] sm:$0xff]
        %v439 = vld [vmem:[%s432 + $0x30] sm:$0xff]
        %v440 = vld [vmem:[%s432 + $0x38] sm:$0xff]
        %v441 = vld [vmem:[%s432 + $0x40] sm:$0xff]
        %v442 = vld [vmem:[%s432 + $0x48] sm:$0xff]
        %v443 = vld [vmem:[%s432 + $0x50] sm:$0xff]
        %v444 = vld [vmem:[%s432 + $0x58] sm:$0xff]
        %v445 = vld [vmem:[%s432 + $0x60] sm:$0xff]
        %v446 = vld [vmem:[%s432 + $0x68] sm:$0xff]
        %v447 = vld [vmem:[%s432 + $0x70] sm:$0xff]
        %v448 = vld [vmem:[%s432 + $0x78] sm:$0xff]
        %v449 = vld [vmem:[%s432 + $0x80] sm:$0xff]
        %v450 = vld [vmem:[%s432 + $0x88] sm:$0xff]
        %v451 = vld [vmem:[%s432 + $0x90] sm:$0xff]
        %v452 = vld [vmem:[%s432 + $0x98] sm:$0xff]
        %v453 = vld [vmem:[%s432 + $0xa0] sm:$0xff]
        %v454 = vld [vmem:[%s432 + $0xa8] sm:$0xff]
        %v455 = vld [vmem:[%s432 + $0xb0] sm:$0xff]
        %v456 = vld [vmem:[%s432 + $0xb8] sm:$0xff]
        %v457 = vld [vmem:[%s432 + $0xc0] sm:$0xff]
        %v458 = vld [vmem:[%s432 + $0xc8] sm:$0xff]
        %v459 = vld [vmem:[%s432 + $0xd0] sm:$0xff]
        %v460 = vld [vmem:[%s432 + $0xd8] sm:$0xff]
        %v461 = vld [vmem:[%s432 + $0xe0] sm:$0xff]
        %v462 = vld [vmem:[%s432 + $0xe8] sm:$0xff]
        %v463 = vld [vmem:[%s432 + $0xf0] sm:$0xff]
        %v464 = vld [vmem:[%s432 + $0xf8] sm:$0xff]
        %v465 = vld [vmem:[%s432 + $0x100] sm:$0xff]
        %v466 = vld [vmem:[%s432 + $0x108] sm:$0xff]
        %v467 = vld [vmem:[%s432 + $0x110] sm:$0xff]
        %v468 = vld [vmem:[%s432 + $0x118] sm:$0xff]
        %v469 = vld [vmem:[%s432 + $0x120] sm:$0xff]
        %v470 = vld [vmem:[%s432 + $0x128] sm:$0xff]
        %v471 = vld [vmem:[%s432 + $0x130] sm:$0xff]
        %v472 = vld [vmem:[%s432 + $0x138] sm:$0xff]
        %v473 = vld [vmem:[%s432 + $0x140] sm:$0xff]
        %v474 = vld [vmem:[%s432 + $0x148] sm:$0xff]
        %v475 = vld [vmem:[%s432 + $0x150] sm:$0xff]
        %v476 = vld [vmem:[%s432 + $0x158] sm:$0xff]
        %v477 = vld [vmem:[%s432 + $0x160] sm:$0xff]
        %v478 = vld [vmem:[%s432 + $0x168] sm:$0xff]
        %v479 = vld [vmem:[%s432 + $0x170] sm:$0xff]
        %v480 = vld [vmem:[%s432 + $0x178] sm:$0xff]
        %v481 = vld [vmem:[%s432 + $0x180] sm:$0xff]
        %v482 = vld [vmem:[%s432 + $0x188] sm:$0xff]
        %v483 = vld [vmem:[%s432 + $0x190] sm:$0xff]
        %v484 = vld [vmem:[%s432 + $0x198] sm:$0xff]
        %v485 = vld [vmem:[%s432 + $0x1a0] sm:$0xff]
        %v486 = vld [vmem:[%s432 + $0x1a8] sm:$0xff]
        %v487 = vld [vmem:[%s432 + $0x1b0] sm:$0xff]
        %v488 = vld [vmem:[%s432 + $0x1b8] sm:$0xff]
        %v489 = vld [vmem:[%s432 + $0x1c0] sm:$0xff]
        %v490 = vld [vmem:[%s432 + $0x1c8] sm:$0xff]
        %v491 = vld [vmem:[%s432 + $0x1d0] sm:$0xff]
        %v492 = vld [vmem:[%s432 + $0x1d8] sm:$0xff]
        %v493 = vld [vmem:[%s432 + $0x1e0] sm:$0xff]
        %v494 = vld [vmem:[%s432 + $0x1e8] sm:$0xff]
        %v495 = vld [vmem:[%s432 + $0x1f0] sm:$0xff]
        %v496 = vld [vmem:[%s432 + $0x1f8] sm:$0xff]
        %v497 = vunpack.c.l.b16 %v333
        %v498 = vunpack.c.h.b16 %v333
        %v499 = vunpack.c.l.b16 %v347
        %v500 = vunpack.c.h.b16 %v347
        %v501 = vunpack.c.l.b16 %v361
        %v502 = vunpack.c.h.b16 %v361
        %v503 = vunpack.c.l.b16 %v375
        %v504 = vunpack.c.h.b16 %v375
        %v505 = vunpack.c.l.b16 %v389
        %v506 = vunpack.c.h.b16 %v389
        %v507 = vunpack.c.l.b16 %v403
        %v508 = vunpack.c.h.b16 %v403
        %v509 = vunpack.c.l.b16 %v417
        %v510 = vunpack.c.h.b16 %v417
        %v511 = vunpack.c.l.b16 %v431
        %v512 = vunpack.c.h.b16 %v431
        %v513 = vpack.c.b16 %v499, %v497
        %v514 = vpack.c.b16 %v500, %v498
        %v515 = vpack.c.b16 %v503, %v501
        %v516 = vpack.c.b16 %v504, %v502
        %v517 = vpack.c.b16 %v507, %v505
        %v518 = vpack.c.b16 %v508, %v506
        %v519 = vpack.c.b16 %v511, %v509
        %v520 = vpack.c.b16 %v512, %v510
        %v593 = vunpack.c.l.b16 %v433
        %v594 = vunpack.c.h.b16 %v433
        %v595 = vunpack.c.l.b16 %v434
        %v596 = vunpack.c.h.b16 %v434
        %v597 = vunpack.c.l.b16 %v435
        %v598 = vunpack.c.h.b16 %v435
        %v599 = vunpack.c.l.b16 %v436
        %v600 = vunpack.c.h.b16 %v436
        %v601 = vunpack.c.l.b16 %v437
        %v602 = vunpack.c.h.b16 %v437
        %v603 = vunpack.c.l.b16 %v438
        %v604 = vunpack.c.h.b16 %v438
        %v605 = vunpack.c.l.b16 %v439
        %v606 = vunpack.c.h.b16 %v439
        %v607 = vunpack.c.l.b16 %v440
        %v608 = vunpack.c.h.b16 %v440
        %v609 = vunpack.c.l.b16 %v441
        %v610 = vunpack.c.h.b16 %v441
        %v611 = vunpack.c.l.b16 %v442
        %v612 = vunpack.c.h.b16 %v442
        %v613 = vunpack.c.l.b16 %v443
        %v614 = vunpack.c.h.b16 %v443
        %v615 = vunpack.c.l.b16 %v444
        %v616 = vunpack.c.h.b16 %v444
        %v617 = vunpack.c.l.b16 %v445
        %v618 = vunpack.c.h.b16 %v445
        %v619 = vunpack.c.l.b16 %v446
        %v620 = vunpack.c.h.b16 %v446
        %v621 = vunpack.c.l.b16 %v447
        %v622 = vunpack.c.h.b16 %v447
        %v623 = vunpack.c.l.b16 %v448
        %v624 = vunpack.c.h.b16 %v448
        %v625 = vunpack.c.l.b16 %v449
        %v626 = vunpack.c.h.b16 %v449
        %v627 = vunpack.c.l.b16 %v450
        %v628 = vunpack.c.h.b16 %v450
        %v629 = vunpack.c.l.b16 %v451
        %v630 = vunpack.c.h.b16 %v451
        %v631 = vunpack.c.l.b16 %v452
        %v632 = vunpack.c.h.b16 %v452
        %v633 = vunpack.c.l.b16 %v453
        %v634 = vunpack.c.h.b16 %v453
        %v635 = vunpack.c.l.b16 %v454
        %v636 = vunpack.c.h.b16 %v454
        %v637 = vunpack.c.l.b16 %v455
        %v638 = vunpack.c.h.b16 %v455
        %v639 = vunpack.c.l.b16 %v456
        %v640 = vunpack.c.h.b16 %v456
        %v641 = vunpack.c.l.b16 %v457
        %v642 = vunpack.c.h.b16 %v457
        %v643 = vunpack.c.l.b16 %v458
        %v644 = vunpack.c.h.b16 %v458
        %v645 = vunpack.c.l.b16 %v459
        %v646 = vunpack.c.h.b16 %v459
        %v647 = vunpack.c.l.b16 %v460
        %v648 = vunpack.c.h.b16 %v460
        %v649 = vunpack.c.l.b16 %v461
        %v650 = vunpack.c.h.b16 %v461
        %v651 = vunpack.c.l.b16 %v462
        %v652 = vunpack.c.h.b16 %v462
        %v653 = vunpack.c.l.b16 %v463
        %v654 = vunpack.c.h.b16 %v463
        %v655 = vunpack.c.l.b16 %v464
        %v656 = vunpack.c.h.b16 %v464
        %v657 = vunpack.c.l.b16 %v465
        %v658 = vunpack.c.h.b16 %v465
        %v659 = vunpack.c.l.b16 %v466
        %v660 = vunpack.c.h.b16 %v466
        %v661 = vunpack.c.l.b16 %v467
        %v662 = vunpack.c.h.b16 %v467
        %v663 = vunpack.c.l.b16 %v468
        %v664 = vunpack.c.h.b16 %v468
        %v665 = vunpack.c.l.b16 %v469
        %v666 = vunpack.c.h.b16 %v469
        %v667 = vunpack.c.l.b16 %v470
        %v668 = vunpack.c.h.b16 %v470
        %v669 = vunpack.c.l.b16 %v471
        %v670 = vunpack.c.h.b16 %v471
        %v671 = vunpack.c.l.b16 %v472
        %v672 = vunpack.c.h.b16 %v472
        %v673 = vunpack.c.l.b16 %v473
        %v674 = vunpack.c.h.b16 %v473
        %v675 = vunpack.c.l.b16 %v474
        %v676 = vunpack.c.h.b16 %v474
        %v677 = vunpack.c.l.b16 %v475
        %v678 = vunpack.c.h.b16 %v475
        %v679 = vunpack.c.l.b16 %v476
        %v680 = vunpack.c.h.b16 %v476
        %v681 = vunpack.c.l.b16 %v477
        %v682 = vunpack.c.h.b16 %v477
        %v683 = vunpack.c.l.b16 %v478
        %v684 = vunpack.c.h.b16 %v478
        %v685 = vunpack.c.l.b16 %v479
        %v686 = vunpack.c.h.b16 %v479
        %v687 = vunpack.c.l.b16 %v480
        %v688 = vunpack.c.h.b16 %v480
        %v689 = vunpack.c.l.b16 %v481
        %v690 = vunpack.c.h.b16 %v481
        %v691 = vunpack.c.l.b16 %v482
        %v692 = vunpack.c.h.b16 %v482
        %v693 = vunpack.c.l.b16 %v483
        %v694 = vunpack.c.h.b16 %v483
        %v695 = vunpack.c.l.b16 %v484
        %v696 = vunpack.c.h.b16 %v484
        %v697 = vunpack.c.l.b16 %v485
        %v698 = vunpack.c.h.b16 %v485
        %v699 = vunpack.c.l.b16 %v486
        %v700 = vunpack.c.h.b16 %v486
        %v701 = vunpack.c.l.b16 %v487
        %v702 = vunpack.c.h.b16 %v487
        %v703 = vunpack.c.l.b16 %v488
        %v704 = vunpack.c.h.b16 %v488
        %v705 = vunpack.c.l.b16 %v489
        %v706 = vunpack.c.h.b16 %v489
        %v707 = vunpack.c.l.b16 %v490
        %v708 = vunpack.c.h.b16 %v490
        %v709 = vunpack.c.l.b16 %v491
        %v710 = vunpack.c.h.b16 %v491
        %v711 = vunpack.c.l.b16 %v492
        %v712 = vunpack.c.h.b16 %v492
        %v713 = vunpack.c.l.b16 %v493
        %v714 = vunpack.c.h.b16 %v493
        %v715 = vunpack.c.l.b16 %v494
        %v716 = vunpack.c.h.b16 %v494
        %v717 = vunpack.c.l.b16 %v495
        %v718 = vunpack.c.h.b16 %v495
        %v719 = vunpack.c.l.b16 %v496
        %v720 = vunpack.c.h.b16 %v496
        %v721 = vpack.c.b16 %v597, %v593
        %v722 = vpack.c.b16 %v598, %v594
        %v723 = vpack.c.b16 %v599, %v595
        %v724 = vpack.c.b16 %v600, %v596
        %v725 = vpack.c.b16 %v605, %v601
        %v726 = vpack.c.b16 %v606, %v602
        %v727 = vpack.c.b16 %v607, %v603
        %v728 = vpack.c.b16 %v608, %v604
        %v729 = vpack.c.b16 %v613, %v609
        %v730 = vpack.c.b16 %v614, %v610
        %v731 = vpack.c.b16 %v615, %v611
        %v732 = vpack.c.b16 %v616, %v612
        %v733 = vpack.c.b16 %v621, %v617
        %v734 = vpack.c.b16 %v622, %v618
        %v735 = vpack.c.b16 %v623, %v619
        %v736 = vpack.c.b16 %v624, %v620
        %v737 = vpack.c.b16 %v629, %v625
        %v738 = vpack.c.b16 %v630, %v626
        %v739 = vpack.c.b16 %v631, %v627
        %v740 = vpack.c.b16 %v632, %v628
        %v741 = vpack.c.b16 %v637, %v633
        %v742 = vpack.c.b16 %v638, %v634
        %v743 = vpack.c.b16 %v639, %v635
        %v744 = vpack.c.b16 %v640, %v636
        %v745 = vpack.c.b16 %v645, %v641
        %v746 = vpack.c.b16 %v646, %v642
        %v747 = vpack.c.b16 %v647, %v643
        %v748 = vpack.c.b16 %v648, %v644
        %v749 = vpack.c.b16 %v653, %v649
        %v750 = vpack.c.b16 %v654, %v650
        %v751 = vpack.c.b16 %v655, %v651
        %v752 = vpack.c.b16 %v656, %v652
        %v753 = vpack.c.b16 %v661, %v657
        %v754 = vpack.c.b16 %v662, %v658
        %v755 = vpack.c.b16 %v663, %v659
        %v756 = vpack.c.b16 %v664, %v660
        %v757 = vpack.c.b16 %v669, %v665
        %v758 = vpack.c.b16 %v670, %v666
        %v759 = vpack.c.b16 %v671, %v667
        %v760 = vpack.c.b16 %v672, %v668
        %v761 = vpack.c.b16 %v677, %v673
        %v762 = vpack.c.b16 %v678, %v674
        %v763 = vpack.c.b16 %v679, %v675
        %v764 = vpack.c.b16 %v680, %v676
        %v765 = vpack.c.b16 %v685, %v681
        %v766 = vpack.c.b16 %v686, %v682
        %v767 = vpack.c.b16 %v687, %v683
        %v768 = vpack.c.b16 %v688, %v684
        %v769 = vpack.c.b16 %v693, %v689
        %v770 = vpack.c.b16 %v694, %v690
        %v771 = vpack.c.b16 %v695, %v691
        %v772 = vpack.c.b16 %v696, %v692
        %v773 = vpack.c.b16 %v701, %v697
        %v774 = vpack.c.b16 %v702, %v698
        %v775 = vpack.c.b16 %v703, %v699
        %v776 = vpack.c.b16 %v704, %v700
        %v777 = vpack.c.b16 %v709, %v705
        %v778 = vpack.c.b16 %v710, %v706
        %v779 = vpack.c.b16 %v711, %v707
        %v780 = vpack.c.b16 %v712, %v708
        %v781 = vpack.c.b16 %v717, %v713
        %v782 = vpack.c.b16 %v718, %v714
        %v783 = vpack.c.b16 %v719, %v715
        %v784 = vpack.c.b16 %v720, %v716
        %849 = vmatpush.bf16.msra.mxu0 %v749
        %850 = vmatpush.bf16.msra.mxu0 %v745
        %851 = vmatpush.bf16.msra.mxu0 %v741
        %852 = vmatpush.bf16.msra.mxu0 %v737
        %853 = vmatpush.bf16.msra.mxu0 %v733
        %854 = vmatpush.bf16.msra.mxu0 %v729
        %855 = vmatpush.bf16.msra.mxu0 %v725
        %856 = vmatpush.bf16.msra.mxu0 %v721
        %857 = vmatmul.bf16.gmra.mxu0 %v513
        %v858 = vpop.f32.mrf.mxu0
        %v859 = vadd.f32 0.0, %v858
        %v860 = vpop.f32.mrf.mxu0
        %v861 = vadd.f32 0.0, %v860
        %862 = vmatmul.bf16.gmra.mxu0 %v515
        %v863 = vpop.f32.mrf.mxu0
        %v864 = vadd.f32 0.0, %v863
        %v865 = vpop.f32.mrf.mxu0
        %v866 = vadd.f32 0.0, %v865
        %867 = vmatmul.bf16.gmra.mxu0 %v517
        %v868 = vpop.f32.mrf.mxu0
        %v869 = vadd.f32 0.0, %v868
        %v870 = vpop.f32.mrf.mxu0
        %v871 = vadd.f32 0.0, %v870
        %872 = vmatmul.bf16.gmra.mxu0 %v519
        %v873 = vpop.f32.mrf.mxu0
        %v874 = vadd.f32 0.0, %v873
        %v875 = vpop.f32.mrf.mxu0
        %v876 = vadd.f32 0.0, %v875
        %877 = vdwg.mxu0
        %878 = vmatpush.bf16.msra.mxu0 %v781
        %879 = vmatpush.bf16.msra.mxu0 %v777
        %880 = vmatpush.bf16.msra.mxu0 %v773
        %881 = vmatpush.bf16.msra.mxu0 %v769
        %882 = vmatpush.bf16.msra.mxu0 %v765
        %883 = vmatpush.bf16.msra.mxu0 %v761
        %884 = vmatpush.bf16.msra.mxu0 %v757
        %885 = vmatpush.bf16.msra.mxu0 %v753
        %886 = vmatmul.bf16.gmra.mxu0 %v514
        %v887 = vpop.f32.mrf.mxu0
        %v888 = vadd.f32 %v859, %v887
        %v889 = vpop.f32.mrf.mxu0
        %v890 = vadd.f32 %v861, %v889
        %891 = vmatmul.bf16.gmra.mxu0 %v516
        %v892 = vpop.f32.mrf.mxu0
        %v893 = vadd.f32 %v864, %v892
        %v894 = vpop.f32.mrf.mxu0
        %v895 = vadd.f32 %v866, %v894
        %896 = vmatmul.bf16.gmra.mxu0 %v518
        %v897 = vpop.f32.mrf.mxu0
        %v898 = vadd.f32 %v869, %v897
        %v899 = vpop.f32.mrf.mxu0
        %v900 = vadd.f32 %v871, %v899
        %901 = vmatmul.bf16.gmra.mxu0 %v520
        %v902 = vpop.f32.mrf.mxu0
        %v903 = vadd.f32 %v874, %v902
        %v904 = vpop.f32.mrf.mxu0
        %v905 = vadd.f32 %v876, %v904
        %906 = vdwg.mxu0
        %907 = vmatpush.bf16.msra.mxu0 %v750
        %908 = vmatpush.bf16.msra.mxu0 %v746
        %909 = vmatpush.bf16.msra.mxu0 %v742
        %910 = vmatpush.bf16.msra.mxu0 %v738
        %911 = vmatpush.bf16.msra.mxu0 %v734
        %912 = vmatpush.bf16.msra.mxu0 %v730
        %913 = vmatpush.bf16.msra.mxu0 %v726
        %914 = vmatpush.bf16.msra.mxu0 %v722
        %915 = vmatmul.bf16.gmra.mxu0 %v513
        %v916 = vpop.f32.mrf.mxu0
        %v917 = vadd.f32 0.0, %v916
        %v918 = vpop.f32.mrf.mxu0
        %v919 = vadd.f32 0.0, %v918
        %920 = vmatmul.bf16.gmra.mxu0 %v515
        %v921 = vpop.f32.mrf.mxu0
        %v922 = vadd.f32 0.0, %v921
        %v923 = vpop.f32.mrf.mxu0
        %v924 = vadd.f32 0.0, %v923
        %925 = vmatmul.bf16.gmra.mxu0 %v517
        %v926 = vpop.f32.mrf.mxu0
        %v927 = vadd.f32 0.0, %v926
        %v928 = vpop.f32.mrf.mxu0
        %v929 = vadd.f32 0.0, %v928
        %930 = vmatmul.bf16.gmra.mxu0 %v519
        %v931 = vpop.f32.mrf.mxu0
        %v932 = vadd.f32 0.0, %v931
        %v933 = vpop.f32.mrf.mxu0
        %v934 = vadd.f32 0.0, %v933
        %935 = vdwg.mxu0
        %936 = vmatpush.bf16.msra.mxu0 %v782
        %937 = vmatpush.bf16.msra.mxu0 %v778
        %938 = vmatpush.bf16.msra.mxu0 %v774
        %939 = vmatpush.bf16.msra.mxu0 %v770
        %940 = vmatpush.bf16.msra.mxu0 %v766
        %941 = vmatpush.bf16.msra.mxu0 %v762
        %942 = vmatpush.bf16.msra.mxu0 %v758
        %943 = vmatpush.bf16.msra.mxu0 %v754
        %944 = vmatmul.bf16.gmra.mxu0 %v514
        %v945 = vpop.f32.mrf.mxu0
        %v946 = vadd.f32 %v917, %v945
        %v947 = vpop.f32.mrf.mxu0
        %v948 = vadd.f32 %v919, %v947
        %949 = vmatmul.bf16.gmra.mxu0 %v516
        %v950 = vpop.f32.mrf.mxu0
        %v951 = vadd.f32 %v922, %v950
        %v952 = vpop.f32.mrf.mxu0
        %v953 = vadd.f32 %v924, %v952
        %954 = vmatmul.bf16.gmra.mxu0 %v518
        %v955 = vpop.f32.mrf.mxu0
        %v956 = vadd.f32 %v927, %v955
        %v957 = vpop.f32.mrf.mxu0
        %v958 = vadd.f32 %v929, %v957
        %959 = vmatmul.bf16.gmra.mxu0 %v520
        %v960 = vpop.f32.mrf.mxu0
        %v961 = vadd.f32 %v932, %v960
        %v962 = vpop.f32.mrf.mxu0
        %v963 = vadd.f32 %v934, %v962
        %964 = vdwg.mxu0
        %965 = vmatpush.bf16.msra.mxu0 %v751
        %966 = vmatpush.bf16.msra.mxu0 %v747
        %967 = vmatpush.bf16.msra.mxu0 %v743
        %968 = vmatpush.bf16.msra.mxu0 %v739
        %969 = vmatpush.bf16.msra.mxu0 %v735
        %970 = vmatpush.bf16.msra.mxu0 %v731
        %971 = vmatpush.bf16.msra.mxu0 %v727
        %972 = vmatpush.bf16.msra.mxu0 %v723
        %973 = vmatmul.bf16.gmra.mxu0 %v513
        %v974 = vpop.f32.mrf.mxu0
        %v975 = vadd.f32 0.0, %v974
        %v976 = vpop.f32.mrf.mxu0
        %v977 = vadd.f32 0.0, %v976
        %978 = vmatmul.bf16.gmra.mxu0 %v515
        %v979 = vpop.f32.mrf.mxu0
        %v980 = vadd.f32 0.0, %v979
        %v981 = vpop.f32.mrf.mxu0
        %v982 = vadd.f32 0.0, %v981
        %983 = vmatmul.bf16.gmra.mxu0 %v517
        %v984 = vpop.f32.mrf.mxu0
        %v985 = vadd.f32 0.0, %v984
        %v986 = vpop.f32.mrf.mxu0
        %v987 = vadd.f32 0.0, %v986
        %988 = vmatmul.bf16.gmra.mxu0 %v519
        %v989 = vpop.f32.mrf.mxu0
        %v990 = vadd.f32 0.0, %v989
        %v991 = vpop.f32.mrf.mxu0
        %v992 = vadd.f32 0.0, %v991
        %993 = vdwg.mxu0
        %994 = vmatpush.bf16.msra.mxu0 %v783
        %995 = vmatpush.bf16.msra.mxu0 %v779
        %996 = vmatpush.bf16.msra.mxu0 %v775
        %997 = vmatpush.bf16.msra.mxu0 %v771
        %998 = vmatpush.bf16.msra.mxu0 %v767
        %999 = vmatpush.bf16.msra.mxu0 %v763
        %1000 = vmatpush.bf16.msra.mxu0 %v759
        %1001 = vmatpush.bf16.msra.mxu0 %v755
        %1002 = vmatmul.bf16.gmra.mxu0 %v514
        %v1003 = vpop.f32.mrf.mxu0
        %v1004 = vadd.f32 %v975, %v1003
        %v1005 = vpop.f32.mrf.mxu0
        %v1006 = vadd.f32 %v977, %v1005
        %1007 = vmatmul.bf16.gmra.mxu0 %v516
        %v1008 = vpop.f32.mrf.mxu0
        %v1009 = vadd.f32 %v980, %v1008
        %v1010 = vpop.f32.mrf.mxu0
        %v1011 = vadd.f32 %v982, %v1010
        %1012 = vmatmul.bf16.gmra.mxu0 %v518
        %v1013 = vpop.f32.mrf.mxu0
        %v1014 = vadd.f32 %v985, %v1013
        %v1015 = vpop.f32.mrf.mxu0
        %v1016 = vadd.f32 %v987, %v1015
        %1017 = vmatmul.bf16.gmra.mxu0 %v520
        %v1018 = vpop.f32.mrf.mxu0
        %v1019 = vadd.f32 %v990, %v1018
        %v1020 = vpop.f32.mrf.mxu0
        %v1021 = vadd.f32 %v992, %v1020
        %1022 = vdwg.mxu0
        %1023 = vmatpush.bf16.msra.mxu0 %v752
        %1024 = vmatpush.bf16.msra.mxu0 %v748
        %1025 = vmatpush.bf16.msra.mxu0 %v744
        %1026 = vmatpush.bf16.msra.mxu0 %v740
        %1027 = vmatpush.bf16.msra.mxu0 %v736
        %1028 = vmatpush.bf16.msra.mxu0 %v732
        %1029 = vmatpush.bf16.msra.mxu0 %v728
        %1030 = vmatpush.bf16.msra.mxu0 %v724
        %1031 = vmatmul.bf16.gmra.mxu0 %v513
        %v1032 = vpop.f32.mrf.mxu0
        %v1033 = vadd.f32 0.0, %v1032
        %v1034 = vpop.f32.mrf.mxu0
        %v1035 = vadd.f32 0.0, %v1034
        %1036 = vmatmul.bf16.gmra.mxu0 %v515
        %v1037 = vpop.f32.mrf.mxu0
        %v1038 = vadd.f32 0.0, %v1037
        %v1039 = vpop.f32.mrf.mxu0
        %v1040 = vadd.f32 0.0, %v1039
        %1041 = vmatmul.bf16.gmra.mxu0 %v517
        %v1042 = vpop.f32.mrf.mxu0
        %v1043 = vadd.f32 0.0, %v1042
        %v1044 = vpop.f32.mrf.mxu0
        %v1045 = vadd.f32 0.0, %v1044
        %1046 = vmatmul.bf16.gmra.mxu0 %v519
        %v1047 = vpop.f32.mrf.mxu0
        %v1048 = vadd.f32 0.0, %v1047
        %v1049 = vpop.f32.mrf.mxu0
        %v1050 = vadd.f32 0.0, %v1049
        %1051 = vdwg.mxu0
        %1052 = vmatpush.bf16.msra.mxu0 %v784
        %1053 = vmatpush.bf16.msra.mxu0 %v780
        %1054 = vmatpush.bf16.msra.mxu0 %v776
        %1055 = vmatpush.bf16.msra.mxu0 %v772
        %1056 = vmatpush.bf16.msra.mxu0 %v768
        %1057 = vmatpush.bf16.msra.mxu0 %v764
        %1058 = vmatpush.bf16.msra.mxu0 %v760
        %1059 = vmatpush.bf16.msra.mxu0 %v756
        %1060 = vmatmul.bf16.gmra.mxu0 %v514
        %v1061 = vpop.f32.mrf.mxu0
        %v1062 = vadd.f32 %v1033, %v1061
        %v1063 = vpop.f32.mrf.mxu0
        %v1064 = vadd.f32 %v1035, %v1063
        %1065 = vmatmul.bf16.gmra.mxu0 %v516
        %v1066 = vpop.f32.mrf.mxu0
        %v1067 = vadd.f32 %v1038, %v1066
        %v1068 = vpop.f32.mrf.mxu0
        %v1069 = vadd.f32 %v1040, %v1068
        %1070 = vmatmul.bf16.gmra.mxu0 %v518
        %v1071 = vpop.f32.mrf.mxu0
        %v1072 = vadd.f32 %v1043, %v1071
        %v1073 = vpop.f32.mrf.mxu0
        %v1074 = vadd.f32 %v1045, %v1073
        %1075 = vmatmul.bf16.gmra.mxu0 %v520
        %v1076 = vpop.f32.mrf.mxu0
        %v1077 = vadd.f32 %v1048, %v1076
        %v1078 = vpop.f32.mrf.mxu0
        %v1079 = vadd.f32 %v1050, %v1078
        %1080 = vdwg.mxu0
        %v1089 = vunpack.c.l.b16 %v233
        %v1090 = vunpack.c.h.b16 %v233
        %v1091 = vunpack.c.l.b16 %v235
        %v1092 = vunpack.c.h.b16 %v235
        %v1093 = vunpack.c.l.b16 %v237
        %v1094 = vunpack.c.h.b16 %v237
        %v1095 = vunpack.c.l.b16 %v239
        %v1096 = vunpack.c.h.b16 %v239
        %v1097 = vunpack.c.l.b16 %v241
        %v1098 = vunpack.c.h.b16 %v241
        %v1099 = vunpack.c.l.b16 %v243
        %v1100 = vunpack.c.h.b16 %v243
        %v1101 = vunpack.c.l.b16 %v245
        %v1102 = vunpack.c.h.b16 %v245
        %v1103 = vunpack.c.l.b16 %v247
        %v1104 = vunpack.c.h.b16 %v247
        %v1105 = vpack.c.b16 %v1091, %v1089
        %v1106 = vpack.c.b16 %v1092, %v1090
        %v1107 = vpack.c.b16 %v1095, %v1093
        %v1108 = vpack.c.b16 %v1096, %v1094
        %v1109 = vpack.c.b16 %v1099, %v1097
        %v1110 = vpack.c.b16 %v1100, %v1098
        %v1111 = vpack.c.b16 %v1103, %v1101
        %v1112 = vpack.c.b16 %v1104, %v1102
        %v1185 = vunpack.c.l.b16 %v253
        %v1186 = vunpack.c.h.b16 %v253
        %v1187 = vunpack.c.l.b16 %v254
        %v1188 = vunpack.c.h.b16 %v254
        %v1189 = vunpack.c.l.b16 %v255
        %v1190 = vunpack.c.h.b16 %v255
        %v1191 = vunpack.c.l.b16 %v256
        %v1192 = vunpack.c.h.b16 %v256
        %v1193 = vunpack.c.l.b16 %v257
        %v1194 = vunpack.c.h.b16 %v257
        %v1195 = vunpack.c.l.b16 %v258
        %v1196 = vunpack.c.h.b16 %v258
        %v1197 = vunpack.c.l.b16 %v259
        %v1198 = vunpack.c.h.b16 %v259
        %v1199 = vunpack.c.l.b16 %v260
        %v1200 = vunpack.c.h.b16 %v260
        %v1201 = vunpack.c.l.b16 %v261
        %v1202 = vunpack.c.h.b16 %v261
        %v1203 = vunpack.c.l.b16 %v262
        %v1204 = vunpack.c.h.b16 %v262
        %v1205 = vunpack.c.l.b16 %v263
        %v1206 = vunpack.c.h.b16 %v263
        %v1207 = vunpack.c.l.b16 %v264
        %v1208 = vunpack.c.h.b16 %v264
        %v1209 = vunpack.c.l.b16 %v265
        %v1210 = vunpack.c.h.b16 %v265
        %v1211 = vunpack.c.l.b16 %v266
        %v1212 = vunpack.c.h.b16 %v266
        %v1213 = vunpack.c.l.b16 %v267
        %v1214 = vunpack.c.h.b16 %v267
        %v1215 = vunpack.c.l.b16 %v268
        %v1216 = vunpack.c.h.b16 %v268
        %v1217 = vunpack.c.l.b16 %v269
        %v1218 = vunpack.c.h.b16 %v269
        %v1219 = vunpack.c.l.b16 %v270
        %v1220 = vunpack.c.h.b16 %v270
        %v1221 = vunpack.c.l.b16 %v271
        %v1222 = vunpack.c.h.b16 %v271
        %v1223 = vunpack.c.l.b16 %v272
        %v1224 = vunpack.c.h.b16 %v272
        %v1225 = vunpack.c.l.b16 %v273
        %v1226 = vunpack.c.h.b16 %v273
        %v1227 = vunpack.c.l.b16 %v274
        %v1228 = vunpack.c.h.b16 %v274
        %v1229 = vunpack.c.l.b16 %v275
        %v1230 = vunpack.c.h.b16 %v275
        %v1231 = vunpack.c.l.b16 %v276
        %v1232 = vunpack.c.h.b16 %v276
        %v1233 = vunpack.c.l.b16 %v277
        %v1234 = vunpack.c.h.b16 %v277
        %v1235 = vunpack.c.l.b16 %v278
        %v1236 = vunpack.c.h.b16 %v278
        %v1237 = vunpack.c.l.b16 %v279
        %v1238 = vunpack.c.h.b16 %v279
        %v1239 = vunpack.c.l.b16 %v280
        %v1240 = vunpack.c.h.b16 %v280
        %v1241 = vunpack.c.l.b16 %v281
        %v1242 = vunpack.c.h.b16 %v281
        %v1243 = vunpack.c.l.b16 %v282
        %v1244 = vunpack.c.h.b16 %v282
        %v1245 = vunpack.c.l.b16 %v283
        %v1246 = vunpack.c.h.b16 %v283
        %v1247 = vunpack.c.l.b16 %v284
        %v1248 = vunpack.c.h.b16 %v284
        %v1249 = vunpack.c.l.b16 %v285
        %v1250 = vunpack.c.h.b16 %v285
        %v1251 = vunpack.c.l.b16 %v286
        %v1252 = vunpack.c.h.b16 %v286
        %v1253 = vunpack.c.l.b16 %v287
        %v1254 = vunpack.c.h.b16 %v287
        %v1255 = vunpack.c.l.b16 %v288
        %v1256 = vunpack.c.h.b16 %v288
        %v1257 = vunpack.c.l.b16 %v289
        %v1258 = vunpack.c.h.b16 %v289
        %v1259 = vunpack.c.l.b16 %v290
        %v1260 = vunpack.c.h.b16 %v290
        %v1261 = vunpack.c.l.b16 %v291
        %v1262 = vunpack.c.h.b16 %v291
        %v1263 = vunpack.c.l.b16 %v292
        %v1264 = vunpack.c.h.b16 %v292
        %v1265 = vunpack.c.l.b16 %v293
        %v1266 = vunpack.c.h.b16 %v293
        %v1267 = vunpack.c.l.b16 %v294
        %v1268 = vunpack.c.h.b16 %v294
        %v1269 = vunpack.c.l.b16 %v295
        %v1270 = vunpack.c.h.b16 %v295
        %v1271 = vunpack.c.l.b16 %v296
        %v1272 = vunpack.c.h.b16 %v296
        %v1273 = vunpack.c.l.b16 %v297
        %v1274 = vunpack.c.h.b16 %v297
        %v1275 = vunpack.c.l.b16 %v298
        %v1276 = vunpack.c.h.b16 %v298
        %v1277 = vunpack.c.l.b16 %v299
        %v1278 = vunpack.c.h.b16 %v299
        %v1279 = vunpack.c.l.b16 %v300
        %v1280 = vunpack.c.h.b16 %v300
        %v1281 = vunpack.c.l.b16 %v301
        %v1282 = vunpack.c.h.b16 %v301
        %v1283 = vunpack.c.l.b16 %v302
        %v1284 = vunpack.c.h.b16 %v302
        %v1285 = vunpack.c.l.b16 %v303
        %v1286 = vunpack.c.h.b16 %v303
        %v1287 = vunpack.c.l.b16 %v304
        %v1288 = vunpack.c.h.b16 %v304
        %v1289 = vunpack.c.l.b16 %v305
        %v1290 = vunpack.c.h.b16 %v305
        %v1291 = vunpack.c.l.b16 %v306
        %v1292 = vunpack.c.h.b16 %v306
        %v1293 = vunpack.c.l.b16 %v307
        %v1294 = vunpack.c.h.b16 %v307
        %v1295 = vunpack.c.l.b16 %v308
        %v1296 = vunpack.c.h.b16 %v308
        %v1297 = vunpack.c.l.b16 %v309
        %v1298 = vunpack.c.h.b16 %v309
        %v1299 = vunpack.c.l.b16 %v310
        %v1300 = vunpack.c.h.b16 %v310
        %v1301 = vunpack.c.l.b16 %v311
        %v1302 = vunpack.c.h.b16 %v311
        %v1303 = vunpack.c.l.b16 %v312
        %v1304 = vunpack.c.h.b16 %v312
        %v1305 = vunpack.c.l.b16 %v313
        %v1306 = vunpack.c.h.b16 %v313
        %v1307 = vunpack.c.l.b16 %v314
        %v1308 = vunpack.c.h.b16 %v314
        %v1309 = vunpack.c.l.b16 %v315
        %v1310 = vunpack.c.h.b16 %v315
        %v1311 = vunpack.c.l.b16 %v316
        %v1312 = vunpack.c.h.b16 %v316
        %v1313 = vpack.c.b16 %v1189, %v1185
        %v1314 = vpack.c.b16 %v1190, %v1186
        %v1315 = vpack.c.b16 %v1191, %v1187
        %v1316 = vpack.c.b16 %v1192, %v1188
        %v1317 = vpack.c.b16 %v1197, %v1193
        %v1318 = vpack.c.b16 %v1198, %v1194
        %v1319 = vpack.c.b16 %v1199, %v1195
        %v1320 = vpack.c.b16 %v1200, %v1196
        %v1321 = vpack.c.b16 %v1205, %v1201
        %v1322 = vpack.c.b16 %v1206, %v1202
        %v1323 = vpack.c.b16 %v1207, %v1203
        %v1324 = vpack.c.b16 %v1208, %v1204
        %v1325 = vpack.c.b16 %v1213, %v1209
        %v1326 = vpack.c.b16 %v1214, %v1210
        %v1327 = vpack.c.b16 %v1215, %v1211
        %v1328 = vpack.c.b16 %v1216, %v1212
        %v1329 = vpack.c.b16 %v1221, %v1217
        %v1330 = vpack.c.b16 %v1222, %v1218
        %v1331 = vpack.c.b16 %v1223, %v1219
        %v1332 = vpack.c.b16 %v1224, %v1220
        %v1333 = vpack.c.b16 %v1229, %v1225
        %v1334 = vpack.c.b16 %v1230, %v1226
        %v1335 = vpack.c.b16 %v1231, %v1227
        %v1336 = vpack.c.b16 %v1232, %v1228
        %v1337 = vpack.c.b16 %v1237, %v1233
        %v1338 = vpack.c.b16 %v1238, %v1234
        %v1339 = vpack.c.b16 %v1239, %v1235
        %v1340 = vpack.c.b16 %v1240, %v1236
        %v1341 = vpack.c.b16 %v1245, %v1241
        %v1342 = vpack.c.b16 %v1246, %v1242
        %v1343 = vpack.c.b16 %v1247, %v1243
        %v1344 = vpack.c.b16 %v1248, %v1244
        %v1345 = vpack.c.b16 %v1253, %v1249
        %v1346 = vpack.c.b16 %v1254, %v1250
        %v1347 = vpack.c.b16 %v1255, %v1251
        %v1348 = vpack.c.b16 %v1256, %v1252
        %v1349 = vpack.c.b16 %v1261, %v1257
        %v1350 = vpack.c.b16 %v1262, %v1258
        %v1351 = vpack.c.b16 %v1263, %v1259
        %v1352 = vpack.c.b16 %v1264, %v1260
        %v1353 = vpack.c.b16 %v1269, %v1265
        %v1354 = vpack.c.b16 %v1270, %v1266
        %v1355 = vpack.c.b16 %v1271, %v1267
        %v1356 = vpack.c.b16 %v1272, %v1268
        %v1357 = vpack.c.b16 %v1277, %v1273
        %v1358 = vpack.c.b16 %v1278, %v1274
        %v1359 = vpack.c.b16 %v1279, %v1275
        %v1360 = vpack.c.b16 %v1280, %v1276
        %v1361 = vpack.c.b16 %v1285, %v1281
        %v1362 = vpack.c.b16 %v1286, %v1282
        %v1363 = vpack.c.b16 %v1287, %v1283
        %v1364 = vpack.c.b16 %v1288, %v1284
        %v1365 = vpack.c.b16 %v1293, %v1289
        %v1366 = vpack.c.b16 %v1294, %v1290
        %v1367 = vpack.c.b16 %v1295, %v1291
        %v1368 = vpack.c.b16 %v1296, %v1292
        %v1369 = vpack.c.b16 %v1301, %v1297
        %v1370 = vpack.c.b16 %v1302, %v1298
        %v1371 = vpack.c.b16 %v1303, %v1299
        %v1372 = vpack.c.b16 %v1304, %v1300
        %v1373 = vpack.c.b16 %v1309, %v1305
        %v1374 = vpack.c.b16 %v1310, %v1306
        %v1375 = vpack.c.b16 %v1311, %v1307
        %v1376 = vpack.c.b16 %v1312, %v1308
        %1441 = vmatpush.bf16.msra.mxu0 %v1341
        %1442 = vmatpush.bf16.msra.mxu0 %v1337
        %1443 = vmatpush.bf16.msra.mxu0 %v1333
        %1444 = vmatpush.bf16.msra.mxu0 %v1329
        %1445 = vmatpush.bf16.msra.mxu0 %v1325
        %1446 = vmatpush.bf16.msra.mxu0 %v1321
        %1447 = vmatpush.bf16.msra.mxu0 %v1317
        %1448 = vmatpush.bf16.msra.mxu0 %v1313
        %1449 = vmatmul.bf16.gmra.mxu0 %v1105
        %v1450 = vpop.f32.mrf.mxu0
        %v1451 = vadd.f32 %v888, %v1450
        %v1452 = vpop.f32.mrf.mxu0
        %v1453 = vadd.f32 %v890, %v1452
        %1454 = vmatmul.bf16.gmra.mxu0 %v1107
        %v1455 = vpop.f32.mrf.mxu0
        %v1456 = vadd.f32 %v893, %v1455
        %v1457 = vpop.f32.mrf.mxu0
        %v1458 = vadd.f32 %v895, %v1457
        %1459 = vmatmul.bf16.gmra.mxu0 %v1109
        %v1460 = vpop.f32.mrf.mxu0
        %v1461 = vadd.f32 %v898, %v1460
        %v1462 = vpop.f32.mrf.mxu0
        %v1463 = vadd.f32 %v900, %v1462
        %1464 = vmatmul.bf16.gmra.mxu0 %v1111
        %v1465 = vpop.f32.mrf.mxu0
        %v1466 = vadd.f32 %v903, %v1465
        %v1467 = vpop.f32.mrf.mxu0
        %v1468 = vadd.f32 %v905, %v1467
        %1469 = vdwg.mxu0
        %1470 = vmatpush.bf16.msra.mxu0 %v1373
        %1471 = vmatpush.bf16.msra.mxu0 %v1369
        %1472 = vmatpush.bf16.msra.mxu0 %v1365
        %1473 = vmatpush.bf16.msra.mxu0 %v1361
        %1474 = vmatpush.bf16.msra.mxu0 %v1357
        %1475 = vmatpush.bf16.msra.mxu0 %v1353
        %1476 = vmatpush.bf16.msra.mxu0 %v1349
        %1477 = vmatpush.bf16.msra.mxu0 %v1345
        %1478 = vmatmul.bf16.gmra.mxu0 %v1106
        %v1479 = vpop.f32.mrf.mxu0
        %v1480 = vadd.f32 %v1451, %v1479
        %v1481 = vpop.f32.mrf.mxu0
        %v1482 = vadd.f32 %v1453, %v1481
        %1483 = vmatmul.bf16.gmra.mxu0 %v1108
        %v1484 = vpop.f32.mrf.mxu0
        %v1485 = vadd.f32 %v1456, %v1484
        %v1486 = vpop.f32.mrf.mxu0
        %v1487 = vadd.f32 %v1458, %v1486
        %1488 = vmatmul.bf16.gmra.mxu0 %v1110
        %v1489 = vpop.f32.mrf.mxu0
        %v1490 = vadd.f32 %v1461, %v1489
        %v1491 = vpop.f32.mrf.mxu0
        %v1492 = vadd.f32 %v1463, %v1491
        %1493 = vmatmul.bf16.gmra.mxu0 %v1112
        %v1494 = vpop.f32.mrf.mxu0
        %v1495 = vadd.f32 %v1466, %v1494
        %v1496 = vpop.f32.mrf.mxu0
        %v1497 = vadd.f32 %v1468, %v1496
        %1498 = vdwg.mxu0
        %1499 = vmatpush.bf16.msra.mxu0 %v1342
        %1500 = vmatpush.bf16.msra.mxu0 %v1338
        %1501 = vmatpush.bf16.msra.mxu0 %v1334
        %1502 = vmatpush.bf16.msra.mxu0 %v1330
        %1503 = vmatpush.bf16.msra.mxu0 %v1326
        %1504 = vmatpush.bf16.msra.mxu0 %v1322
        %1505 = vmatpush.bf16.msra.mxu0 %v1318
        %1506 = vmatpush.bf16.msra.mxu0 %v1314
        %1507 = vmatmul.bf16.gmra.mxu0 %v1105
        %v1508 = vpop.f32.mrf.mxu0
        %v1509 = vadd.f32 %v946, %v1508
        %v1510 = vpop.f32.mrf.mxu0
        %v1511 = vadd.f32 %v948, %v1510
        %1512 = vmatmul.bf16.gmra.mxu0 %v1107
        %v1513 = vpop.f32.mrf.mxu0
        %v1514 = vadd.f32 %v951, %v1513
        %v1515 = vpop.f32.mrf.mxu0
        %v1516 = vadd.f32 %v953, %v1515
        %1517 = vmatmul.bf16.gmra.mxu0 %v1109
        %v1518 = vpop.f32.mrf.mxu0
        %v1519 = vadd.f32 %v956, %v1518
        %v1520 = vpop.f32.mrf.mxu0
        %v1521 = vadd.f32 %v958, %v1520
        %1522 = vmatmul.bf16.gmra.mxu0 %v1111
        %v1523 = vpop.f32.mrf.mxu0
        %v1524 = vadd.f32 %v961, %v1523
        %v1525 = vpop.f32.mrf.mxu0
        %v1526 = vadd.f32 %v963, %v1525
        %1527 = vdwg.mxu0
        %1528 = vmatpush.bf16.msra.mxu0 %v1374
        %1529 = vmatpush.bf16.msra.mxu0 %v1370
        %1530 = vmatpush.bf16.msra.mxu0 %v1366
        %1531 = vmatpush.bf16.msra.mxu0 %v1362
        %1532 = vmatpush.bf16.msra.mxu0 %v1358
        %1533 = vmatpush.bf16.msra.mxu0 %v1354
        %1534 = vmatpush.bf16.msra.mxu0 %v1350
        %1535 = vmatpush.bf16.msra.mxu0 %v1346
        %1536 = vmatmul.bf16.gmra.mxu0 %v1106
        %v1537 = vpop.f32.mrf.mxu0
        %v1538 = vadd.f32 %v1509, %v1537
        %v1539 = vpop.f32.mrf.mxu0
        %v1540 = vadd.f32 %v1511, %v1539
        %1541 = vmatmul.bf16.gmra.mxu0 %v1108
        %v1542 = vpop.f32.mrf.mxu0
        %v1543 = vadd.f32 %v1514, %v1542
        %v1544 = vpop.f32.mrf.mxu0
        %v1545 = vadd.f32 %v1516, %v1544
        %1546 = vmatmul.bf16.gmra.mxu0 %v1110
        %v1547 = vpop.f32.mrf.mxu0
        %v1548 = vadd.f32 %v1519, %v1547
        %v1549 = vpop.f32.mrf.mxu0
        %v1550 = vadd.f32 %v1521, %v1549
        %1551 = vmatmul.bf16.gmra.mxu0 %v1112
        %v1552 = vpop.f32.mrf.mxu0
        %v1553 = vadd.f32 %v1524, %v1552
        %v1554 = vpop.f32.mrf.mxu0
        %v1555 = vadd.f32 %v1526, %v1554
        %1556 = vdwg.mxu0
        %1557 = vmatpush.bf16.msra.mxu0 %v1343
        %1558 = vmatpush.bf16.msra.mxu0 %v1339
        %1559 = vmatpush.bf16.msra.mxu0 %v1335
        %1560 = vmatpush.bf16.msra.mxu0 %v1331
        %1561 = vmatpush.bf16.msra.mxu0 %v1327
        %1562 = vmatpush.bf16.msra.mxu0 %v1323
        %1563 = vmatpush.bf16.msra.mxu0 %v1319
        %1564 = vmatpush.bf16.msra.mxu0 %v1315
        %1565 = vmatmul.bf16.gmra.mxu0 %v1105
        %v1566 = vpop.f32.mrf.mxu0
        %v1567 = vadd.f32 %v1004, %v1566
        %v1568 = vpop.f32.mrf.mxu0
        %v1569 = vadd.f32 %v1006, %v1568
        %1570 = vmatmul.bf16.gmra.mxu0 %v1107
        %v1571 = vpop.f32.mrf.mxu0
        %v1572 = vadd.f32 %v1009, %v1571
        %v1573 = vpop.f32.mrf.mxu0
        %v1574 = vadd.f32 %v1011, %v1573
        %1575 = vmatmul.bf16.gmra.mxu0 %v1109
        %v1576 = vpop.f32.mrf.mxu0
        %v1577 = vadd.f32 %v1014, %v1576
        %v1578 = vpop.f32.mrf.mxu0
        %v1579 = vadd.f32 %v1016, %v1578
        %1580 = vmatmul.bf16.gmra.mxu0 %v1111
        %v1581 = vpop.f32.mrf.mxu0
        %v1582 = vadd.f32 %v1019, %v1581
        %v1583 = vpop.f32.mrf.mxu0
        %v1584 = vadd.f32 %v1021, %v1583
        %1585 = vdwg.mxu0
        %1586 = vmatpush.bf16.msra.mxu0 %v1375
        %1587 = vmatpush.bf16.msra.mxu0 %v1371
        %1588 = vmatpush.bf16.msra.mxu0 %v1367
        %1589 = vmatpush.bf16.msra.mxu0 %v1363
        %1590 = vmatpush.bf16.msra.mxu0 %v1359
        %1591 = vmatpush.bf16.msra.mxu0 %v1355
        %1592 = vmatpush.bf16.msra.mxu0 %v1351
        %1593 = vmatpush.bf16.msra.mxu0 %v1347
        %1594 = vmatmul.bf16.gmra.mxu0 %v1106
        %v1595 = vpop.f32.mrf.mxu0
        %v1596 = vadd.f32 %v1567, %v1595
        %v1597 = vpop.f32.mrf.mxu0
        %v1598 = vadd.f32 %v1569, %v1597
        %1599 = vmatmul.bf16.gmra.mxu0 %v1108
        %v1600 = vpop.f32.mrf.mxu0
        %v1601 = vadd.f32 %v1572, %v1600
        %v1602 = vpop.f32.mrf.mxu0
        %v1603 = vadd.f32 %v1574, %v1602
        %1604 = vmatmul.bf16.gmra.mxu0 %v1110
        %v1605 = vpop.f32.mrf.mxu0
        %v1606 = vadd.f32 %v1577, %v1605
        %v1607 = vpop.f32.mrf.mxu0
        %v1608 = vadd.f32 %v1579, %v1607
        %1609 = vmatmul.bf16.gmra.mxu0 %v1112
        %v1610 = vpop.f32.mrf.mxu0
        %v1611 = vadd.f32 %v1582, %v1610
        %v1612 = vpop.f32.mrf.mxu0
        %v1613 = vadd.f32 %v1584, %v1612
        %1614 = vdwg.mxu0
        %1615 = vmatpush.bf16.msra.mxu0 %v1344
        %1616 = vmatpush.bf16.msra.mxu0 %v1340
        %1617 = vmatpush.bf16.msra.mxu0 %v1336
        %1618 = vmatpush.bf16.msra.mxu0 %v1332
        %1619 = vmatpush.bf16.msra.mxu0 %v1328
        %1620 = vmatpush.bf16.msra.mxu0 %v1324
        %1621 = vmatpush.bf16.msra.mxu0 %v1320
        %1622 = vmatpush.bf16.msra.mxu0 %v1316
        %1623 = vmatmul.bf16.gmra.mxu0 %v1105
        %v1624 = vpop.f32.mrf.mxu0
        %v1625 = vadd.f32 %v1062, %v1624
        %v1626 = vpop.f32.mrf.mxu0
        %v1627 = vadd.f32 %v1064, %v1626
        %1628 = vmatmul.bf16.gmra.mxu0 %v1107
        %v1629 = vpop.f32.mrf.mxu0
        %v1630 = vadd.f32 %v1067, %v1629
        %v1631 = vpop.f32.mrf.mxu0
        %v1632 = vadd.f32 %v1069, %v1631
        %1633 = vmatmul.bf16.gmra.mxu0 %v1109
        %v1634 = vpop.f32.mrf.mxu0
        %v1635 = vadd.f32 %v1072, %v1634
        %v1636 = vpop.f32.mrf.mxu0
        %v1637 = vadd.f32 %v1074, %v1636
        %1638 = vmatmul.bf16.gmra.mxu0 %v1111
        %v1639 = vpop.f32.mrf.mxu0
        %v1640 = vadd.f32 %v1077, %v1639
        %v1641 = vpop.f32.mrf.mxu0
        %v1642 = vadd.f32 %v1079, %v1641
        %1643 = vdwg.mxu0
        %1644 = vmatpush.bf16.msra.mxu0 %v1376
        %1645 = vmatpush.bf16.msra.mxu0 %v1372
        %1646 = vmatpush.bf16.msra.mxu0 %v1368
        %1647 = vmatpush.bf16.msra.mxu0 %v1364
        %1648 = vmatpush.bf16.msra.mxu0 %v1360
        %1649 = vmatpush.bf16.msra.mxu0 %v1356
        %1650 = vmatpush.bf16.msra.mxu0 %v1352
        %1651 = vmatpush.bf16.msra.mxu0 %v1348
        %1652 = vmatmul.bf16.gmra.mxu0 %v1106
        %v1653 = vpop.f32.mrf.mxu0
        %v1654 = vadd.f32 %v1625, %v1653
        %v1655 = vpop.f32.mrf.mxu0
        %v1656 = vadd.f32 %v1627, %v1655
        %1657 = vmatmul.bf16.gmra.mxu0 %v1108
        %v1658 = vpop.f32.mrf.mxu0
        %v1659 = vadd.f32 %v1630, %v1658
        %v1660 = vpop.f32.mrf.mxu0
        %v1661 = vadd.f32 %v1632, %v1660
        %1662 = vmatmul.bf16.gmra.mxu0 %v1110
        %v1663 = vpop.f32.mrf.mxu0
        %v1664 = vadd.f32 %v1635, %v1663
        %v1665 = vpop.f32.mrf.mxu0
        %v1666 = vadd.f32 %v1637, %v1665
        %1667 = vmatmul.bf16.gmra.mxu0 %v1112
        %v1668 = vpop.f32.mrf.mxu0
        %v1669 = vadd.f32 %v1640, %v1668
        %v1670 = vpop.f32.mrf.mxu0
        %v1671 = vadd.f32 %v1642, %v1670
        %1672 = vdwg.mxu0
        %vm1681 = vcmask 1042432
        %vm1682 = vcmask 1046532
        %vm1683 = vmor %vm1681, %vm1682
        %v1684 = vrot.slane %v233, 5
        %v1685 = vrot.slane %v1684, 4
        %v1686 = vrot.slane %v234, 5
        %v1687 = vsel %vm1683, %v1685, %v1686
        %v1688 = vrot.slane %v235, 5
        %v1689 = vrot.slane %v1688, 4
        %v1690 = vrot.slane %v236, 5
        %v1691 = vsel %vm1683, %v1689, %v1690
        %v1692 = vrot.slane %v237, 5
        %v1693 = vrot.slane %v1692, 4
        %v1694 = vrot.slane %v238, 5
        %v1695 = vsel %vm1683, %v1693, %v1694
        %v1696 = vrot.slane %v239, 5
        %v1697 = vrot.slane %v1696, 4
        %v1698 = vrot.slane %v240, 5
        %v1699 = vsel %vm1683, %v1697, %v1698
        %v1700 = vrot.slane %v241, 5
        %v1701 = vrot.slane %v1700, 4
        %v1702 = vrot.slane %v242, 5
        %v1703 = vsel %vm1683, %v1701, %v1702
        %v1704 = vrot.slane %v243, 5
        %v1705 = vrot.slane %v1704, 4
        %v1706 = vrot.slane %v244, 5
        %v1707 = vsel %vm1683, %v1705, %v1706
        %v1708 = vrot.slane %v245, 5
        %v1709 = vrot.slane %v1708, 4
        %v1710 = vrot.slane %v246, 5
        %v1711 = vsel %vm1683, %v1709, %v1710
        %v1712 = vrot.slane %v247, 5
        %v1713 = vrot.slane %v1712, 4
        %v1714 = vrot.slane %v248, 5
        %v1715 = vsel %vm1683, %v1713, %v1714
        %s1716 = scalar_lea.vmem [#allocation2], 1024
        %v1717 = vld [vmem:[%s1716] sm:$0xff]
        %v1718 = vld [vmem:[%s1716 + $0x8] sm:$0xff]
        %v1719 = vld [vmem:[%s1716 + $0x10] sm:$0xff]
        %v1720 = vld [vmem:[%s1716 + $0x18] sm:$0xff]
        %v1721 = vld [vmem:[%s1716 + $0x20] sm:$0xff]
        %v1722 = vld [vmem:[%s1716 + $0x28] sm:$0xff]
        %v1723 = vld [vmem:[%s1716 + $0x30] sm:$0xff]
        %v1724 = vld [vmem:[%s1716 + $0x38] sm:$0xff]
        %v1725 = vld [vmem:[%s1716 + $0x40] sm:$0xff]
        %v1726 = vld [vmem:[%s1716 + $0x48] sm:$0xff]
        %v1727 = vld [vmem:[%s1716 + $0x50] sm:$0xff]
        %v1728 = vld [vmem:[%s1716 + $0x58] sm:$0xff]
        %v1729 = vld [vmem:[%s1716 + $0x60] sm:$0xff]
        %v1730 = vld [vmem:[%s1716 + $0x68] sm:$0xff]
        %v1731 = vld [vmem:[%s1716 + $0x70] sm:$0xff]
        %v1732 = vld [vmem:[%s1716 + $0x78] sm:$0xff]
        %v1733 = vld [vmem:[%s1716 + $0x80] sm:$0xff]
        %v1734 = vld [vmem:[%s1716 + $0x88] sm:$0xff]
        %v1735 = vld [vmem:[%s1716 + $0x90] sm:$0xff]
        %v1736 = vld [vmem:[%s1716 + $0x98] sm:$0xff]
        %v1737 = vld [vmem:[%s1716 + $0xa0] sm:$0xff]
        %v1738 = vld [vmem:[%s1716 + $0xa8] sm:$0xff]
        %v1739 = vld [vmem:[%s1716 + $0xb0] sm:$0xff]
        %v1740 = vld [vmem:[%s1716 + $0xb8] sm:$0xff]
        %v1741 = vld [vmem:[%s1716 + $0xc0] sm:$0xff]
        %v1742 = vld [vmem:[%s1716 + $0xc8] sm:$0xff]
        %v1743 = vld [vmem:[%s1716 + $0xd0] sm:$0xff]
        %v1744 = vld [vmem:[%s1716 + $0xd8] sm:$0xff]
        %v1745 = vld [vmem:[%s1716 + $0xe0] sm:$0xff]
        %v1746 = vld [vmem:[%s1716 + $0xe8] sm:$0xff]
        %v1747 = vld [vmem:[%s1716 + $0xf0] sm:$0xff]
        %v1748 = vld [vmem:[%s1716 + $0xf8] sm:$0xff]
        %v1749 = vld [vmem:[%s1716 + $0x100] sm:$0xff]
        %v1750 = vld [vmem:[%s1716 + $0x108] sm:$0xff]
        %v1751 = vld [vmem:[%s1716 + $0x110] sm:$0xff]
        %v1752 = vld [vmem:[%s1716 + $0x118] sm:$0xff]
        %v1753 = vld [vmem:[%s1716 + $0x120] sm:$0xff]
        %v1754 = vld [vmem:[%s1716 + $0x128] sm:$0xff]
        %v1755 = vld [vmem:[%s1716 + $0x130] sm:$0xff]
        %v1756 = vld [vmem:[%s1716 + $0x138] sm:$0xff]
        %v1757 = vld [vmem:[%s1716 + $0x140] sm:$0xff]
        %v1758 = vld [vmem:[%s1716 + $0x148] sm:$0xff]
        %v1759 = vld [vmem:[%s1716 + $0x150] sm:$0xff]
        %v1760 = vld [vmem:[%s1716 + $0x158] sm:$0xff]
        %v1761 = vld [vmem:[%s1716 + $0x160] sm:$0xff]
        %v1762 = vld [vmem:[%s1716 + $0x168] sm:$0xff]
        %v1763 = vld [vmem:[%s1716 + $0x170] sm:$0xff]
        %v1764 = vld [vmem:[%s1716 + $0x178] sm:$0xff]
        %v1765 = vld [vmem:[%s1716 + $0x180] sm:$0xff]
        %v1766 = vld [vmem:[%s1716 + $0x188] sm:$0xff]
        %v1767 = vld [vmem:[%s1716 + $0x190] sm:$0xff]
        %v1768 = vld [vmem:[%s1716 + $0x198] sm:$0xff]
        %v1769 = vld [vmem:[%s1716 + $0x1a0] sm:$0xff]
        %v1770 = vld [vmem:[%s1716 + $0x1a8] sm:$0xff]
        %v1771 = vld [vmem:[%s1716 + $0x1b0] sm:$0xff]
        %v1772 = vld [vmem:[%s1716 + $0x1b8] sm:$0xff]
        %v1773 = vld [vmem:[%s1716 + $0x1c0] sm:$0xff]
        %v1774 = vld [vmem:[%s1716 + $0x1c8] sm:$0xff]
        %v1775 = vld [vmem:[%s1716 + $0x1d0] sm:$0xff]
        %v1776 = vld [vmem:[%s1716 + $0x1d8] sm:$0xff]
        %v1777 = vld [vmem:[%s1716 + $0x1e0] sm:$0xff]
        %v1778 = vld [vmem:[%s1716 + $0x1e8] sm:$0xff]
        %v1779 = vld [vmem:[%s1716 + $0x1f0] sm:$0xff]
        %v1780 = vld [vmem:[%s1716 + $0x1f8] sm:$0xff]
        %v1781 = vunpack.c.l.b16 %v1687
        %v1782 = vunpack.c.h.b16 %v1687
        %v1783 = vunpack.c.l.b16 %v1691
        %v1784 = vunpack.c.h.b16 %v1691
        %v1785 = vunpack.c.l.b16 %v1695
        %v1786 = vunpack.c.h.b16 %v1695
        %v1787 = vunpack.c.l.b16 %v1699
        %v1788 = vunpack.c.h.b16 %v1699
        %v1789 = vunpack.c.l.b16 %v1703
        %v1790 = vunpack.c.h.b16 %v1703
        %v1791 = vunpack.c.l.b16 %v1707
        %v1792 = vunpack.c.h.b16 %v1707
        %v1793 = vunpack.c.l.b16 %v1711
        %v1794 = vunpack.c.h.b16 %v1711
        %v1795 = vunpack.c.l.b16 %v1715
        %v1796 = vunpack.c.h.b16 %v1715
        %v1797 = vpack.c.b16 %v1783, %v1781
        %v1798 = vpack.c.b16 %v1784, %v1782
        %v1799 = vpack.c.b16 %v1787, %v1785
        %v1800 = vpack.c.b16 %v1788, %v1786
        %v1801 = vpack.c.b16 %v1791, %v1789
        %v1802 = vpack.c.b16 %v1792, %v1790
        %v1803 = vpack.c.b16 %v1795, %v1793
        %v1804 = vpack.c.b16 %v1796, %v1794
        %v1877 = vunpack.c.l.b16 %v1717
        %v1878 = vunpack.c.h.b16 %v1717
        %v1879 = vunpack.c.l.b16 %v1718
        %v1880 = vunpack.c.h.b16 %v1718
        %v1881 = vunpack.c.l.b16 %v1719
        %v1882 = vunpack.c.h.b16 %v1719
        %v1883 = vunpack.c.l.b16 %v1720
        %v1884 = vunpack.c.h.b16 %v1720
        %v1885 = vunpack.c.l.b16 %v1721
        %v1886 = vunpack.c.h.b16 %v1721
        %v1887 = vunpack.c.l.b16 %v1722
        %v1888 = vunpack.c.h.b16 %v1722
        %v1889 = vunpack.c.l.b16 %v1723
        %v1890 = vunpack.c.h.b16 %v1723
        %v1891 = vunpack.c.l.b16 %v1724
        %v1892 = vunpack.c.h.b16 %v1724
        %v1893 = vunpack.c.l.b16 %v1725
        %v1894 = vunpack.c.h.b16 %v1725
        %v1895 = vunpack.c.l.b16 %v1726
        %v1896 = vunpack.c.h.b16 %v1726
        %v1897 = vunpack.c.l.b16 %v1727
        %v1898 = vunpack.c.h.b16 %v1727
        %v1899 = vunpack.c.l.b16 %v1728
        %v1900 = vunpack.c.h.b16 %v1728
        %v1901 = vunpack.c.l.b16 %v1729
        %v1902 = vunpack.c.h.b16 %v1729
        %v1903 = vunpack.c.l.b16 %v1730
        %v1904 = vunpack.c.h.b16 %v1730
        %v1905 = vunpack.c.l.b16 %v1731
        %v1906 = vunpack.c.h.b16 %v1731
        %v1907 = vunpack.c.l.b16 %v1732
        %v1908 = vunpack.c.h.b16 %v1732
        %v1909 = vunpack.c.l.b16 %v1733
        %v1910 = vunpack.c.h.b16 %v1733
        %v1911 = vunpack.c.l.b16 %v1734
        %v1912 = vunpack.c.h.b16 %v1734
        %v1913 = vunpack.c.l.b16 %v1735
        %v1914 = vunpack.c.h.b16 %v1735
        %v1915 = vunpack.c.l.b16 %v1736
        %v1916 = vunpack.c.h.b16 %v1736
        %v1917 = vunpack.c.l.b16 %v1737
        %v1918 = vunpack.c.h.b16 %v1737
        %v1919 = vunpack.c.l.b16 %v1738
        %v1920 = vunpack.c.h.b16 %v1738
        %v1921 = vunpack.c.l.b16 %v1739
        %v1922 = vunpack.c.h.b16 %v1739
        %v1923 = vunpack.c.l.b16 %v1740
        %v1924 = vunpack.c.h.b16 %v1740
        %v1925 = vunpack.c.l.b16 %v1741
        %v1926 = vunpack.c.h.b16 %v1741
        %v1927 = vunpack.c.l.b16 %v1742
        %v1928 = vunpack.c.h.b16 %v1742
        %v1929 = vunpack.c.l.b16 %v1743
        %v1930 = vunpack.c.h.b16 %v1743
        %v1931 = vunpack.c.l.b16 %v1744
        %v1932 = vunpack.c.h.b16 %v1744
        %v1933 = vunpack.c.l.b16 %v1745
        %v1934 = vunpack.c.h.b16 %v1745
        %v1935 = vunpack.c.l.b16 %v1746
        %v1936 = vunpack.c.h.b16 %v1746
        %v1937 = vunpack.c.l.b16 %v1747
        %v1938 = vunpack.c.h.b16 %v1747
        %v1939 = vunpack.c.l.b16 %v1748
        %v1940 = vunpack.c.h.b16 %v1748
        %v1941 = vunpack.c.l.b16 %v1749
        %v1942 = vunpack.c.h.b16 %v1749
        %v1943 = vunpack.c.l.b16 %v1750
        %v1944 = vunpack.c.h.b16 %v1750
        %v1945 = vunpack.c.l.b16 %v1751
        %v1946 = vunpack.c.h.b16 %v1751
        %v1947 = vunpack.c.l.b16 %v1752
        %v1948 = vunpack.c.h.b16 %v1752
        %v1949 = vunpack.c.l.b16 %v1753
        %v1950 = vunpack.c.h.b16 %v1753
        %v1951 = vunpack.c.l.b16 %v1754
        %v1952 = vunpack.c.h.b16 %v1754
        %v1953 = vunpack.c.l.b16 %v1755
        %v1954 = vunpack.c.h.b16 %v1755
        %v1955 = vunpack.c.l.b16 %v1756
        %v1956 = vunpack.c.h.b16 %v1756
        %v1957 = vunpack.c.l.b16 %v1757
        %v1958 = vunpack.c.h.b16 %v1757
        %v1959 = vunpack.c.l.b16 %v1758
        %v1960 = vunpack.c.h.b16 %v1758
        %v1961 = vunpack.c.l.b16 %v1759
        %v1962 = vunpack.c.h.b16 %v1759
        %v1963 = vunpack.c.l.b16 %v1760
        %v1964 = vunpack.c.h.b16 %v1760
        %v1965 = vunpack.c.l.b16 %v1761
        %v1966 = vunpack.c.h.b16 %v1761
        %v1967 = vunpack.c.l.b16 %v1762
        %v1968 = vunpack.c.h.b16 %v1762
        %v1969 = vunpack.c.l.b16 %v1763
        %v1970 = vunpack.c.h.b16 %v1763
        %v1971 = vunpack.c.l.b16 %v1764
        %v1972 = vunpack.c.h.b16 %v1764
        %v1973 = vunpack.c.l.b16 %v1765
        %v1974 = vunpack.c.h.b16 %v1765
        %v1975 = vunpack.c.l.b16 %v1766
        %v1976 = vunpack.c.h.b16 %v1766
        %v1977 = vunpack.c.l.b16 %v1767
        %v1978 = vunpack.c.h.b16 %v1767
        %v1979 = vunpack.c.l.b16 %v1768
        %v1980 = vunpack.c.h.b16 %v1768
        %v1981 = vunpack.c.l.b16 %v1769
        %v1982 = vunpack.c.h.b16 %v1769
        %v1983 = vunpack.c.l.b16 %v1770
        %v1984 = vunpack.c.h.b16 %v1770
        %v1985 = vunpack.c.l.b16 %v1771
        %v1986 = vunpack.c.h.b16 %v1771
        %v1987 = vunpack.c.l.b16 %v1772
        %v1988 = vunpack.c.h.b16 %v1772
        %v1989 = vunpack.c.l.b16 %v1773
        %v1990 = vunpack.c.h.b16 %v1773
        %v1991 = vunpack.c.l.b16 %v1774
        %v1992 = vunpack.c.h.b16 %v1774
        %v1993 = vunpack.c.l.b16 %v1775
        %v1994 = vunpack.c.h.b16 %v1775
        %v1995 = vunpack.c.l.b16 %v1776
        %v1996 = vunpack.c.h.b16 %v1776
        %v1997 = vunpack.c.l.b16 %v1777
        %v1998 = vunpack.c.h.b16 %v1777
        %v1999 = vunpack.c.l.b16 %v1778
        %v2000 = vunpack.c.h.b16 %v1778
        %v2001 = vunpack.c.l.b16 %v1779
        %v2002 = vunpack.c.h.b16 %v1779
        %v2003 = vunpack.c.l.b16 %v1780
        %v2004 = vunpack.c.h.b16 %v1780
        %v2005 = vpack.c.b16 %v1881, %v1877
        %v2006 = vpack.c.b16 %v1882, %v1878
        %v2007 = vpack.c.b16 %v1883, %v1879
        %v2008 = vpack.c.b16 %v1884, %v1880
        %v2009 = vpack.c.b16 %v1889, %v1885
        %v2010 = vpack.c.b16 %v1890, %v1886
        %v2011 = vpack.c.b16 %v1891, %v1887
        %v2012 = vpack.c.b16 %v1892, %v1888
        %v2013 = vpack.c.b16 %v1897, %v1893
        %v2014 = vpack.c.b16 %v1898, %v1894
        %v2015 = vpack.c.b16 %v1899, %v1895
        %v2016 = vpack.c.b16 %v1900, %v1896
        %v2017 = vpack.c.b16 %v1905, %v1901
        %v2018 = vpack.c.b16 %v1906, %v1902
        %v2019 = vpack.c.b16 %v1907, %v1903
        %v2020 = vpack.c.b16 %v1908, %v1904
        %v2021 = vpack.c.b16 %v1913, %v1909
        %v2022 = vpack.c.b16 %v1914, %v1910
        %v2023 = vpack.c.b16 %v1915, %v1911
        %v2024 = vpack.c.b16 %v1916, %v1912
        %v2025 = vpack.c.b16 %v1921, %v1917
        %v2026 = vpack.c.b16 %v1922, %v1918
        %v2027 = vpack.c.b16 %v1923, %v1919
        %v2028 = vpack.c.b16 %v1924, %v1920
        %v2029 = vpack.c.b16 %v1929, %v1925
        %v2030 = vpack.c.b16 %v1930, %v1926
        %v2031 = vpack.c.b16 %v1931, %v1927
        %v2032 = vpack.c.b16 %v1932, %v1928
        %v2033 = vpack.c.b16 %v1937, %v1933
        %v2034 = vpack.c.b16 %v1938, %v1934
        %v2035 = vpack.c.b16 %v1939, %v1935
        %v2036 = vpack.c.b16 %v1940, %v1936
        %v2037 = vpack.c.b16 %v1945, %v1941
        %v2038 = vpack.c.b16 %v1946, %v1942
        %v2039 = vpack.c.b16 %v1947, %v1943
        %v2040 = vpack.c.b16 %v1948, %v1944
        %v2041 = vpack.c.b16 %v1953, %v1949
        %v2042 = vpack.c.b16 %v1954, %v1950
        %v2043 = vpack.c.b16 %v1955, %v1951
        %v2044 = vpack.c.b16 %v1956, %v1952
        %v2045 = vpack.c.b16 %v1961, %v1957
        %v2046 = vpack.c.b16 %v1962, %v1958
        %v2047 = vpack.c.b16 %v1963, %v1959
        %v2048 = vpack.c.b16 %v1964, %v1960
        %v2049 = vpack.c.b16 %v1969, %v1965
        %v2050 = vpack.c.b16 %v1970, %v1966
        %v2051 = vpack.c.b16 %v1971, %v1967
        %v2052 = vpack.c.b16 %v1972, %v1968
        %v2053 = vpack.c.b16 %v1977, %v1973
        %v2054 = vpack.c.b16 %v1978, %v1974
        %v2055 = vpack.c.b16 %v1979, %v1975
        %v2056 = vpack.c.b16 %v1980, %v1976
        %v2057 = vpack.c.b16 %v1985, %v1981
        %v2058 = vpack.c.b16 %v1986, %v1982
        %v2059 = vpack.c.b16 %v1987, %v1983
        %v2060 = vpack.c.b16 %v1988, %v1984
        %v2061 = vpack.c.b16 %v1993, %v1989
        %v2062 = vpack.c.b16 %v1994, %v1990
        %v2063 = vpack.c.b16 %v1995, %v1991
        %v2064 = vpack.c.b16 %v1996, %v1992
        %v2065 = vpack.c.b16 %v2001, %v1997
        %v2066 = vpack.c.b16 %v2002, %v1998
        %v2067 = vpack.c.b16 %v2003, %v1999
        %v2068 = vpack.c.b16 %v2004, %v2000
        %2133 = vmatpush.bf16.msra.mxu0 %v2033
        %2134 = vmatpush.bf16.msra.mxu0 %v2029
        %2135 = vmatpush.bf16.msra.mxu0 %v2025
        %2136 = vmatpush.bf16.msra.mxu0 %v2021
        %2137 = vmatpush.bf16.msra.mxu0 %v2017
        %2138 = vmatpush.bf16.msra.mxu0 %v2013
        %2139 = vmatpush.bf16.msra.mxu0 %v2009
        %2140 = vmatpush.bf16.msra.mxu0 %v2005
        %2141 = vmatmul.bf16.gmra.mxu0 %v1797
        %v2142 = vpop.f32.mrf.mxu0
        %v2143 = vadd.f32 0.0, %v2142
        %v2144 = vpop.f32.mrf.mxu0
        %v2145 = vadd.f32 0.0, %v2144
        %2146 = vmatmul.bf16.gmra.mxu0 %v1799
        %v2147 = vpop.f32.mrf.mxu0
        %v2148 = vadd.f32 0.0, %v2147
        %v2149 = vpop.f32.mrf.mxu0
        %v2150 = vadd.f32 0.0, %v2149
        %2151 = vmatmul.bf16.gmra.mxu0 %v1801
        %v2152 = vpop.f32.mrf.mxu0
        %v2153 = vadd.f32 0.0, %v2152
        %v2154 = vpop.f32.mrf.mxu0
        %v2155 = vadd.f32 0.0, %v2154
        %2156 = vmatmul.bf16.gmra.mxu0 %v1803
        %v2157 = vpop.f32.mrf.mxu0
        %v2158 = vadd.f32 0.0, %v2157
        %v2159 = vpop.f32.mrf.mxu0
        %v2160 = vadd.f32 0.0, %v2159
        %2161 = vdwg.mxu0
        %2162 = vmatpush.bf16.msra.mxu0 %v2065
        %2163 = vmatpush.bf16.msra.mxu0 %v2061
        %2164 = vmatpush.bf16.msra.mxu0 %v2057
        %2165 = vmatpush.bf16.msra.mxu0 %v2053
        %2166 = vmatpush.bf16.msra.mxu0 %v2049
        %2167 = vmatpush.bf16.msra.mxu0 %v2045
        %2168 = vmatpush.bf16.msra.mxu0 %v2041
        %2169 = vmatpush.bf16.msra.mxu0 %v2037
        %2170 = vmatmul.bf16.gmra.mxu0 %v1798
        %v2171 = vpop.f32.mrf.mxu0
        %v2172 = vadd.f32 %v2143, %v2171
        %v2173 = vpop.f32.mrf.mxu0
        %v2174 = vadd.f32 %v2145, %v2173
        %2175 = vmatmul.bf16.gmra.mxu0 %v1800
        %v2176 = vpop.f32.mrf.mxu0
        %v2177 = vadd.f32 %v2148, %v2176
        %v2178 = vpop.f32.mrf.mxu0
        %v2179 = vadd.f32 %v2150, %v2178
        %2180 = vmatmul.bf16.gmra.mxu0 %v1802
        %v2181 = vpop.f32.mrf.mxu0
        %v2182 = vadd.f32 %v2153, %v2181
        %v2183 = vpop.f32.mrf.mxu0
        %v2184 = vadd.f32 %v2155, %v2183
        %2185 = vmatmul.bf16.gmra.mxu0 %v1804
        %v2186 = vpop.f32.mrf.mxu0
        %v2187 = vadd.f32 %v2158, %v2186
        %v2188 = vpop.f32.mrf.mxu0
        %v2189 = vadd.f32 %v2160, %v2188
        %2190 = vdwg.mxu0
        %2191 = vmatpush.bf16.msra.mxu0 %v2034
        %2192 = vmatpush.bf16.msra.mxu0 %v2030
        %2193 = vmatpush.bf16.msra.mxu0 %v2026
        %2194 = vmatpush.bf16.msra.mxu0 %v2022
        %2195 = vmatpush.bf16.msra.mxu0 %v2018
        %2196 = vmatpush.bf16.msra.mxu0 %v2014
        %2197 = vmatpush.bf16.msra.mxu0 %v2010
        %2198 = vmatpush.bf16.msra.mxu0 %v2006
        %2199 = vmatmul.bf16.gmra.mxu0 %v1797
        %v2200 = vpop.f32.mrf.mxu0
        %v2201 = vadd.f32 0.0, %v2200
        %v2202 = vpop.f32.mrf.mxu0
        %v2203 = vadd.f32 0.0, %v2202
        %2204 = vmatmul.bf16.gmra.mxu0 %v1799
        %v2205 = vpop.f32.mrf.mxu0
        %v2206 = vadd.f32 0.0, %v2205
        %v2207 = vpop.f32.mrf.mxu0
        %v2208 = vadd.f32 0.0, %v2207
        %2209 = vmatmul.bf16.gmra.mxu0 %v1801
        %v2210 = vpop.f32.mrf.mxu0
        %v2211 = vadd.f32 0.0, %v2210
        %v2212 = vpop.f32.mrf.mxu0
        %v2213 = vadd.f32 0.0, %v2212
        %2214 = vmatmul.bf16.gmra.mxu0 %v1803
        %v2215 = vpop.f32.mrf.mxu0
        %v2216 = vadd.f32 0.0, %v2215
        %v2217 = vpop.f32.mrf.mxu0
        %v2218 = vadd.f32 0.0, %v2217
        %2219 = vdwg.mxu0
        %2220 = vmatpush.bf16.msra.mxu0 %v2066
        %2221 = vmatpush.bf16.msra.mxu0 %v2062
        %2222 = vmatpush.bf16.msra.mxu0 %v2058
        %2223 = vmatpush.bf16.msra.mxu0 %v2054
        %2224 = vmatpush.bf16.msra.mxu0 %v2050
        %2225 = vmatpush.bf16.msra.mxu0 %v2046
        %2226 = vmatpush.bf16.msra.mxu0 %v2042
        %2227 = vmatpush.bf16.msra.mxu0 %v2038
        %2228 = vmatmul.bf16.gmra.mxu0 %v1798
        %v2229 = vpop.f32.mrf.mxu0
        %v2230 = vadd.f32 %v2201, %v2229
        %v2231 = vpop.f32.mrf.mxu0
        %v2232 = vadd.f32 %v2203, %v2231
        %2233 = vmatmul.bf16.gmra.mxu0 %v1800
        %v2234 = vpop.f32.mrf.mxu0
        %v2235 = vadd.f32 %v2206, %v2234
        %v2236 = vpop.f32.mrf.mxu0
        %v2237 = vadd.f32 %v2208, %v2236
        %2238 = vmatmul.bf16.gmra.mxu0 %v1802
        %v2239 = vpop.f32.mrf.mxu0
        %v2240 = vadd.f32 %v2211, %v2239
        %v2241 = vpop.f32.mrf.mxu0
        %v2242 = vadd.f32 %v2213, %v2241
        %2243 = vmatmul.bf16.gmra.mxu0 %v1804
        %v2244 = vpop.f32.mrf.mxu0
        %v2245 = vadd.f32 %v2216, %v2244
        %v2246 = vpop.f32.mrf.mxu0
        %v2247 = vadd.f32 %v2218, %v2246
        %2248 = vdwg.mxu0
        %2249 = vmatpush.bf16.msra.mxu0 %v2035
        %2250 = vmatpush.bf16.msra.mxu0 %v2031
        %2251 = vmatpush.bf16.msra.mxu0 %v2027
        %2252 = vmatpush.bf16.msra.mxu0 %v2023
        %2253 = vmatpush.bf16.msra.mxu0 %v2019
        %2254 = vmatpush.bf16.msra.mxu0 %v2015
        %2255 = vmatpush.bf16.msra.mxu0 %v2011
        %2256 = vmatpush.bf16.msra.mxu0 %v2007
        %2257 = vmatmul.bf16.gmra.mxu0 %v1797
        %v2258 = vpop.f32.mrf.mxu0
        %v2259 = vadd.f32 0.0, %v2258
        %v2260 = vpop.f32.mrf.mxu0
        %v2261 = vadd.f32 0.0, %v2260
        %2262 = vmatmul.bf16.gmra.mxu0 %v1799
        %v2263 = vpop.f32.mrf.mxu0
        %v2264 = vadd.f32 0.0, %v2263
        %v2265 = vpop.f32.mrf.mxu0
        %v2266 = vadd.f32 0.0, %v2265
        %2267 = vmatmul.bf16.gmra.mxu0 %v1801
        %v2268 = vpop.f32.mrf.mxu0
        %v2269 = vadd.f32 0.0, %v2268
        %v2270 = vpop.f32.mrf.mxu0
        %v2271 = vadd.f32 0.0, %v2270
        %2272 = vmatmul.bf16.gmra.mxu0 %v1803
        %v2273 = vpop.f32.mrf.mxu0
        %v2274 = vadd.f32 0.0, %v2273
        %v2275 = vpop.f32.mrf.mxu0
        %v2276 = vadd.f32 0.0, %v2275
        %2277 = vdwg.mxu0
        %2278 = vmatpush.bf16.msra.mxu0 %v2067
        %2279 = vmatpush.bf16.msra.mxu0 %v2063
        %2280 = vmatpush.bf16.msra.mxu0 %v2059
        %2281 = vmatpush.bf16.msra.mxu0 %v2055
        %2282 = vmatpush.bf16.msra.mxu0 %v2051
        %2283 = vmatpush.bf16.msra.mxu0 %v2047
        %2284 = vmatpush.bf16.msra.mxu0 %v2043
        %2285 = vmatpush.bf16.msra.mxu0 %v2039
        %2286 = vmatmul.bf16.gmra.mxu0 %v1798
        %v2287 = vpop.f32.mrf.mxu0
        %v2288 = vadd.f32 %v2259, %v2287
        %v2289 = vpop.f32.mrf.mxu0
        %v2290 = vadd.f32 %v2261, %v2289
        %2291 = vmatmul.bf16.gmra.mxu0 %v1800
        %v2292 = vpop.f32.mrf.mxu0
        %v2293 = vadd.f32 %v2264, %v2292
        %v2294 = vpop.f32.mrf.mxu0
        %v2295 = vadd.f32 %v2266, %v2294
        %2296 = vmatmul.bf16.gmra.mxu0 %v1802
        %v2297 = vpop.f32.mrf.mxu0
        %v2298 = vadd.f32 %v2269, %v2297
        %v2299 = vpop.f32.mrf.mxu0
        %v2300 = vadd.f32 %v2271, %v2299
        %2301 = vmatmul.bf16.gmra.mxu0 %v1804
        %v2302 = vpop.f32.mrf.mxu0
        %v2303 = vadd.f32 %v2274, %v2302
        %v2304 = vpop.f32.mrf.mxu0
        %v2305 = vadd.f32 %v2276, %v2304
        %2306 = vdwg.mxu0
        %2307 = vmatpush.bf16.msra.mxu0 %v2036
        %2308 = vmatpush.bf16.msra.mxu0 %v2032
        %2309 = vmatpush.bf16.msra.mxu0 %v2028
        %2310 = vmatpush.bf16.msra.mxu0 %v2024
        %2311 = vmatpush.bf16.msra.mxu0 %v2020
        %2312 = vmatpush.bf16.msra.mxu0 %v2016
        %2313 = vmatpush.bf16.msra.mxu0 %v2012
        %2314 = vmatpush.bf16.msra.mxu0 %v2008
        %2315 = vmatmul.bf16.gmra.mxu0 %v1797
        %v2316 = vpop.f32.mrf.mxu0
        %v2317 = vadd.f32 0.0, %v2316
        %v2318 = vpop.f32.mrf.mxu0
        %v2319 = vadd.f32 0.0, %v2318
        %2320 = vmatmul.bf16.gmra.mxu0 %v1799
        %v2321 = vpop.f32.mrf.mxu0
        %v2322 = vadd.f32 0.0, %v2321
        %v2323 = vpop.f32.mrf.mxu0
        %v2324 = vadd.f32 0.0, %v2323
        %2325 = vmatmul.bf16.gmra.mxu0 %v1801
        %v2326 = vpop.f32.mrf.mxu0
        %v2327 = vadd.f32 0.0, %v2326
        %v2328 = vpop.f32.mrf.mxu0
        %v2329 = vadd.f32 0.0, %v2328
        %2330 = vmatmul.bf16.gmra.mxu0 %v1803
        %v2331 = vpop.f32.mrf.mxu0
        %v2332 = vadd.f32 0.0, %v2331
        %v2333 = vpop.f32.mrf.mxu0
        %v2334 = vadd.f32 0.0, %v2333
        %2335 = vdwg.mxu0
        %2336 = vmatpush.bf16.msra.mxu0 %v2068
        %2337 = vmatpush.bf16.msra.mxu0 %v2064
        %2338 = vmatpush.bf16.msra.mxu0 %v2060
        %2339 = vmatpush.bf16.msra.mxu0 %v2056
        %2340 = vmatpush.bf16.msra.mxu0 %v2052
        %2341 = vmatpush.bf16.msra.mxu0 %v2048
        %2342 = vmatpush.bf16.msra.mxu0 %v2044
        %2343 = vmatpush.bf16.msra.mxu0 %v2040
        %2344 = vmatmul.bf16.gmra.mxu0 %v1798
        %v2345 = vpop.f32.mrf.mxu0
        %v2346 = vadd.f32 %v2317, %v2345
        %v2347 = vpop.f32.mrf.mxu0
        %v2348 = vadd.f32 %v2319, %v2347
        %2349 = vmatmul.bf16.gmra.mxu0 %v1800
        %v2350 = vpop.f32.mrf.mxu0
        %v2351 = vadd.f32 %v2322, %v2350
        %v2352 = vpop.f32.mrf.mxu0
        %v2353 = vadd.f32 %v2324, %v2352
        %2354 = vmatmul.bf16.gmra.mxu0 %v1802
        %v2355 = vpop.f32.mrf.mxu0
        %v2356 = vadd.f32 %v2327, %v2355
        %v2357 = vpop.f32.mrf.mxu0
        %v2358 = vadd.f32 %v2329, %v2357
        %2359 = vmatmul.bf16.gmra.mxu0 %v1804
        %v2360 = vpop.f32.mrf.mxu0
        %v2361 = vadd.f32 %v2332, %v2360
        %v2362 = vpop.f32.mrf.mxu0
        %v2363 = vadd.f32 %v2334, %v2362
        %2364 = vdwg.mxu0
        %v2365 = vadd.f32 %v1480, %v2172
        %v2366 = vadd.f32 %v1538, %v2230
        %v2367 = vadd.f32 %v1596, %v2288
        %v2368 = vadd.f32 %v1654, %v2346
        %v2369 = vadd.f32 %v1482, %v2174
        %v2370 = vadd.f32 %v1540, %v2232
        %v2371 = vadd.f32 %v1598, %v2290
        %v2372 = vadd.f32 %v1656, %v2348
        %v2373 = vadd.f32 %v1485, %v2177
        %v2374 = vadd.f32 %v1543, %v2235
        %v2375 = vadd.f32 %v1601, %v2293
        %v2376 = vadd.f32 %v1659, %v2351
        %v2377 = vadd.f32 %v1487, %v2179
        %v2378 = vadd.f32 %v1545, %v2237
        %v2379 = vadd.f32 %v1603, %v2295
        %v2380 = vadd.f32 %v1661, %v2353
        %v2381 = vadd.f32 %v1490, %v2182
        %v2382 = vadd.f32 %v1548, %v2240
        %v2383 = vadd.f32 %v1606, %v2298
        %v2384 = vadd.f32 %v1664, %v2356
        %v2385 = vadd.f32 %v1492, %v2184
        %v2386 = vadd.f32 %v1550, %v2242
        %v2387 = vadd.f32 %v1608, %v2300
        %v2388 = vadd.f32 %v1666, %v2358
        %v2389 = vadd.f32 %v1495, %v2187
        %v2390 = vadd.f32 %v1553, %v2245
        %v2391 = vadd.f32 %v1611, %v2303
        %v2392 = vadd.f32 %v1669, %v2361
        %v2393 = vadd.f32 %v1497, %v2189
        %v2394 = vadd.f32 %v1555, %v2247
        %v2395 = vadd.f32 %v1613, %v2305
        %v2396 = vadd.f32 %v1671, %v2363
        %s2397 = scalar_lea.vmem [#allocation2], 1536
        %v2398 = vld [vmem:[%s2397] sm:$0xff]
        %v2399 = vld [vmem:[%s2397 + $0x8] sm:$0xff]
        %v2400 = vld [vmem:[%s2397 + $0x10] sm:$0xff]
        %v2401 = vld [vmem:[%s2397 + $0x18] sm:$0xff]
        %v2402 = vld [vmem:[%s2397 + $0x20] sm:$0xff]
        %v2403 = vld [vmem:[%s2397 + $0x28] sm:$0xff]
        %v2404 = vld [vmem:[%s2397 + $0x30] sm:$0xff]
        %v2405 = vld [vmem:[%s2397 + $0x38] sm:$0xff]
        %v2406 = vld [vmem:[%s2397 + $0x40] sm:$0xff]
        %v2407 = vld [vmem:[%s2397 + $0x48] sm:$0xff]
        %v2408 = vld [vmem:[%s2397 + $0x50] sm:$0xff]
        %v2409 = vld [vmem:[%s2397 + $0x58] sm:$0xff]
        %v2410 = vld [vmem:[%s2397 + $0x60] sm:$0xff]
        %v2411 = vld [vmem:[%s2397 + $0x68] sm:$0xff]
        %v2412 = vld [vmem:[%s2397 + $0x70] sm:$0xff]
        %v2413 = vld [vmem:[%s2397 + $0x78] sm:$0xff]
        %v2414 = vld [vmem:[%s2397 + $0x80] sm:$0xff]
        %v2415 = vld [vmem:[%s2397 + $0x88] sm:$0xff]
        %v2416 = vld [vmem:[%s2397 + $0x90] sm:$0xff]
        %v2417 = vld [vmem:[%s2397 + $0x98] sm:$0xff]
        %v2418 = vld [vmem:[%s2397 + $0xa0] sm:$0xff]
        %v2419 = vld [vmem:[%s2397 + $0xa8] sm:$0xff]
        %v2420 = vld [vmem:[%s2397 + $0xb0] sm:$0xff]
        %v2421 = vld [vmem:[%s2397 + $0xb8] sm:$0xff]
        %v2422 = vld [vmem:[%s2397 + $0xc0] sm:$0xff]
        %v2423 = vld [vmem:[%s2397 + $0xc8] sm:$0xff]
        %v2424 = vld [vmem:[%s2397 + $0xd0] sm:$0xff]
        %v2425 = vld [vmem:[%s2397 + $0xd8] sm:$0xff]
        %v2426 = vld [vmem:[%s2397 + $0xe0] sm:$0xff]
        %v2427 = vld [vmem:[%s2397 + $0xe8] sm:$0xff]
        %v2428 = vld [vmem:[%s2397 + $0xf0] sm:$0xff]
        %v2429 = vld [vmem:[%s2397 + $0xf8] sm:$0xff]
        %v2430 = vld [vmem:[%s2397 + $0x100] sm:$0xff]
        %v2431 = vld [vmem:[%s2397 + $0x108] sm:$0xff]
        %v2432 = vld [vmem:[%s2397 + $0x110] sm:$0xff]
        %v2433 = vld [vmem:[%s2397 + $0x118] sm:$0xff]
        %v2434 = vld [vmem:[%s2397 + $0x120] sm:$0xff]
        %v2435 = vld [vmem:[%s2397 + $0x128] sm:$0xff]
        %v2436 = vld [vmem:[%s2397 + $0x130] sm:$0xff]
        %v2437 = vld [vmem:[%s2397 + $0x138] sm:$0xff]
        %v2438 = vld [vmem:[%s2397 + $0x140] sm:$0xff]
        %v2439 = vld [vmem:[%s2397 + $0x148] sm:$0xff]
        %v2440 = vld [vmem:[%s2397 + $0x150] sm:$0xff]
        %v2441 = vld [vmem:[%s2397 + $0x158] sm:$0xff]
        %v2442 = vld [vmem:[%s2397 + $0x160] sm:$0xff]
        %v2443 = vld [vmem:[%s2397 + $0x168] sm:$0xff]
        %v2444 = vld [vmem:[%s2397 + $0x170] sm:$0xff]
        %v2445 = vld [vmem:[%s2397 + $0x178] sm:$0xff]
        %v2446 = vld [vmem:[%s2397 + $0x180] sm:$0xff]
        %v2447 = vld [vmem:[%s2397 + $0x188] sm:$0xff]
        %v2448 = vld [vmem:[%s2397 + $0x190] sm:$0xff]
        %v2449 = vld [vmem:[%s2397 + $0x198] sm:$0xff]
        %v2450 = vld [vmem:[%s2397 + $0x1a0] sm:$0xff]
        %v2451 = vld [vmem:[%s2397 + $0x1a8] sm:$0xff]
        %v2452 = vld [vmem:[%s2397 + $0x1b0] sm:$0xff]
        %v2453 = vld [vmem:[%s2397 + $0x1b8] sm:$0xff]
        %v2454 = vld [vmem:[%s2397 + $0x1c0] sm:$0xff]
        %v2455 = vld [vmem:[%s2397 + $0x1c8] sm:$0xff]
        %v2456 = vld [vmem:[%s2397 + $0x1d0] sm:$0xff]
        %v2457 = vld [vmem:[%s2397 + $0x1d8] sm:$0xff]
        %v2458 = vld [vmem:[%s2397 + $0x1e0] sm:$0xff]
        %v2459 = vld [vmem:[%s2397 + $0x1e8] sm:$0xff]
        %v2460 = vld [vmem:[%s2397 + $0x1f0] sm:$0xff]
        %v2461 = vld [vmem:[%s2397 + $0x1f8] sm:$0xff]
        %v2463 = vunpack.c.l.b16 %v249
        %v2464 = vunpack.c.h.b16 %v249
        %v2465 = vpack.c.b16 %v1093, %v1091
        %v2466 = vpack.c.b16 %v1094, %v1092
        %v2467 = vpack.c.b16 %v1097, %v1095
        %v2468 = vpack.c.b16 %v1098, %v1096
        %v2469 = vpack.c.b16 %v1101, %v1099
        %v2470 = vpack.c.b16 %v1102, %v1100
        %v2471 = vpack.c.b16 %v2463, %v1103
        %v2472 = vpack.c.b16 %v2464, %v1104
        %v2545 = vunpack.c.l.b16 %v2398
        %v2546 = vunpack.c.h.b16 %v2398
        %v2547 = vunpack.c.l.b16 %v2399
        %v2548 = vunpack.c.h.b16 %v2399
        %v2549 = vunpack.c.l.b16 %v2400
        %v2550 = vunpack.c.h.b16 %v2400
        %v2551 = vunpack.c.l.b16 %v2401
        %v2552 = vunpack.c.h.b16 %v2401
        %v2553 = vunpack.c.l.b16 %v2402
        %v2554 = vunpack.c.h.b16 %v2402
        %v2555 = vunpack.c.l.b16 %v2403
        %v2556 = vunpack.c.h.b16 %v2403
        %v2557 = vunpack.c.l.b16 %v2404
        %v2558 = vunpack.c.h.b16 %v2404
        %v2559 = vunpack.c.l.b16 %v2405
        %v2560 = vunpack.c.h.b16 %v2405
        %v2561 = vunpack.c.l.b16 %v2406
        %v2562 = vunpack.c.h.b16 %v2406
        %v2563 = vunpack.c.l.b16 %v2407
        %v2564 = vunpack.c.h.b16 %v2407
        %v2565 = vunpack.c.l.b16 %v2408
        %v2566 = vunpack.c.h.b16 %v2408
        %v2567 = vunpack.c.l.b16 %v2409
        %v2568 = vunpack.c.h.b16 %v2409
        %v2569 = vunpack.c.l.b16 %v2410
        %v2570 = vunpack.c.h.b16 %v2410
        %v2571 = vunpack.c.l.b16 %v2411
        %v2572 = vunpack.c.h.b16 %v2411
        %v2573 = vunpack.c.l.b16 %v2412
        %v2574 = vunpack.c.h.b16 %v2412
        %v2575 = vunpack.c.l.b16 %v2413
        %v2576 = vunpack.c.h.b16 %v2413
        %v2577 = vunpack.c.l.b16 %v2414
        %v2578 = vunpack.c.h.b16 %v2414
        %v2579 = vunpack.c.l.b16 %v2415
        %v2580 = vunpack.c.h.b16 %v2415
        %v2581 = vunpack.c.l.b16 %v2416
        %v2582 = vunpack.c.h.b16 %v2416
        %v2583 = vunpack.c.l.b16 %v2417
        %v2584 = vunpack.c.h.b16 %v2417
        %v2585 = vunpack.c.l.b16 %v2418
        %v2586 = vunpack.c.h.b16 %v2418
        %v2587 = vunpack.c.l.b16 %v2419
        %v2588 = vunpack.c.h.b16 %v2419
        %v2589 = vunpack.c.l.b16 %v2420
        %v2590 = vunpack.c.h.b16 %v2420
        %v2591 = vunpack.c.l.b16 %v2421
        %v2592 = vunpack.c.h.b16 %v2421
        %v2593 = vunpack.c.l.b16 %v2422
        %v2594 = vunpack.c.h.b16 %v2422
        %v2595 = vunpack.c.l.b16 %v2423
        %v2596 = vunpack.c.h.b16 %v2423
        %v2597 = vunpack.c.l.b16 %v2424
        %v2598 = vunpack.c.h.b16 %v2424
        %v2599 = vunpack.c.l.b16 %v2425
        %v2600 = vunpack.c.h.b16 %v2425
        %v2601 = vunpack.c.l.b16 %v2426
        %v2602 = vunpack.c.h.b16 %v2426
        %v2603 = vunpack.c.l.b16 %v2427
        %v2604 = vunpack.c.h.b16 %v2427
        %v2605 = vunpack.c.l.b16 %v2428
        %v2606 = vunpack.c.h.b16 %v2428
        %v2607 = vunpack.c.l.b16 %v2429
        %v2608 = vunpack.c.h.b16 %v2429
        %v2609 = vunpack.c.l.b16 %v2430
        %v2610 = vunpack.c.h.b16 %v2430
        %v2611 = vunpack.c.l.b16 %v2431
        %v2612 = vunpack.c.h.b16 %v2431
        %v2613 = vunpack.c.l.b16 %v2432
        %v2614 = vunpack.c.h.b16 %v2432
        %v2615 = vunpack.c.l.b16 %v2433
        %v2616 = vunpack.c.h.b16 %v2433
        %v2617 = vunpack.c.l.b16 %v2434
        %v2618 = vunpack.c.h.b16 %v2434
        %v2619 = vunpack.c.l.b16 %v2435
        %v2620 = vunpack.c.h.b16 %v2435
        %v2621 = vunpack.c.l.b16 %v2436
        %v2622 = vunpack.c.h.b16 %v2436
        %v2623 = vunpack.c.l.b16 %v2437
        %v2624 = vunpack.c.h.b16 %v2437
        %v2625 = vunpack.c.l.b16 %v2438
        %v2626 = vunpack.c.h.b16 %v2438
        %v2627 = vunpack.c.l.b16 %v2439
        %v2628 = vunpack.c.h.b16 %v2439
        %v2629 = vunpack.c.l.b16 %v2440
        %v2630 = vunpack.c.h.b16 %v2440
        %v2631 = vunpack.c.l.b16 %v2441
        %v2632 = vunpack.c.h.b16 %v2441
        %v2633 = vunpack.c.l.b16 %v2442
        %v2634 = vunpack.c.h.b16 %v2442
        %v2635 = vunpack.c.l.b16 %v2443
        %v2636 = vunpack.c.h.b16 %v2443
        %v2637 = vunpack.c.l.b16 %v2444
        %v2638 = vunpack.c.h.b16 %v2444
        %v2639 = vunpack.c.l.b16 %v2445
        %v2640 = vunpack.c.h.b16 %v2445
        %v2641 = vunpack.c.l.b16 %v2446
        %v2642 = vunpack.c.h.b16 %v2446
        %v2643 = vunpack.c.l.b16 %v2447
        %v2644 = vunpack.c.h.b16 %v2447
        %v2645 = vunpack.c.l.b16 %v2448
        %v2646 = vunpack.c.h.b16 %v2448
        %v2647 = vunpack.c.l.b16 %v2449
        %v2648 = vunpack.c.h.b16 %v2449
        %v2649 = vunpack.c.l.b16 %v2450
        %v2650 = vunpack.c.h.b16 %v2450
        %v2651 = vunpack.c.l.b16 %v2451
        %v2652 = vunpack.c.h.b16 %v2451
        %v2653 = vunpack.c.l.b16 %v2452
        %v2654 = vunpack.c.h.b16 %v2452
        %v2655 = vunpack.c.l.b16 %v2453
        %v2656 = vunpack.c.h.b16 %v2453
        %v2657 = vunpack.c.l.b16 %v2454
        %v2658 = vunpack.c.h.b16 %v2454
        %v2659 = vunpack.c.l.b16 %v2455
        %v2660 = vunpack.c.h.b16 %v2455
        %v2661 = vunpack.c.l.b16 %v2456
        %v2662 = vunpack.c.h.b16 %v2456
        %v2663 = vunpack.c.l.b16 %v2457
        %v2664 = vunpack.c.h.b16 %v2457
        %v2665 = vunpack.c.l.b16 %v2458
        %v2666 = vunpack.c.h.b16 %v2458
        %v2667 = vunpack.c.l.b16 %v2459
        %v2668 = vunpack.c.h.b16 %v2459
        %v2669 = vunpack.c.l.b16 %v2460
        %v2670 = vunpack.c.h.b16 %v2460
        %v2671 = vunpack.c.l.b16 %v2461
        %v2672 = vunpack.c.h.b16 %v2461
        %v2673 = vpack.c.b16 %v2549, %v2545
        %v2674 = vpack.c.b16 %v2550, %v2546
        %v2675 = vpack.c.b16 %v2551, %v2547
        %v2676 = vpack.c.b16 %v2552, %v2548
        %v2677 = vpack.c.b16 %v2557, %v2553
        %v2678 = vpack.c.b16 %v2558, %v2554
        %v2679 = vpack.c.b16 %v2559, %v2555
        %v2680 = vpack.c.b16 %v2560, %v2556
        %v2681 = vpack.c.b16 %v2565, %v2561
        %v2682 = vpack.c.b16 %v2566, %v2562
        %v2683 = vpack.c.b16 %v2567, %v2563
        %v2684 = vpack.c.b16 %v2568, %v2564
        %v2685 = vpack.c.b16 %v2573, %v2569
        %v2686 = vpack.c.b16 %v2574, %v2570
        %v2687 = vpack.c.b16 %v2575, %v2571
        %v2688 = vpack.c.b16 %v2576, %v2572
        %v2689 = vpack.c.b16 %v2581, %v2577
        %v2690 = vpack.c.b16 %v2582, %v2578
        %v2691 = vpack.c.b16 %v2583, %v2579
        %v2692 = vpack.c.b16 %v2584, %v2580
        %v2693 = vpack.c.b16 %v2589, %v2585
        %v2694 = vpack.c.b16 %v2590, %v2586
        %v2695 = vpack.c.b16 %v2591, %v2587
        %v2696 = vpack.c.b16 %v2592, %v2588
        %v2697 = vpack.c.b16 %v2597, %v2593
        %v2698 = vpack.c.b16 %v2598, %v2594
        %v2699 = vpack.c.b16 %v2599, %v2595
        %v2700 = vpack.c.b16 %v2600, %v2596
        %v2701 = vpack.c.b16 %v2605, %v2601
        %v2702 = vpack.c.b16 %v2606, %v2602
        %v2703 = vpack.c.b16 %v2607, %v2603
        %v2704 = vpack.c.b16 %v2608, %v2604
        %v2705 = vpack.c.b16 %v2613, %v2609
        %v2706 = vpack.c.b16 %v2614, %v2610
        %v2707 = vpack.c.b16 %v2615, %v2611
        %v2708 = vpack.c.b16 %v2616, %v2612
        %v2709 = vpack.c.b16 %v2621, %v2617
        %v2710 = vpack.c.b16 %v2622, %v2618
        %v2711 = vpack.c.b16 %v2623, %v2619
        %v2712 = vpack.c.b16 %v2624, %v2620
        %v2713 = vpack.c.b16 %v2629, %v2625
        %v2714 = vpack.c.b16 %v2630, %v2626
        %v2715 = vpack.c.b16 %v2631, %v2627
        %v2716 = vpack.c.b16 %v2632, %v2628
        %v2717 = vpack.c.b16 %v2637, %v2633
        %v2718 = vpack.c.b16 %v2638, %v2634
        %v2719 = vpack.c.b16 %v2639, %v2635
        %v2720 = vpack.c.b16 %v2640, %v2636
        %v2721 = vpack.c.b16 %v2645, %v2641
        %v2722 = vpack.c.b16 %v2646, %v2642
        %v2723 = vpack.c.b16 %v2647, %v2643
        %v2724 = vpack.c.b16 %v2648, %v2644
        %v2725 = vpack.c.b16 %v2653, %v2649
        %v2726 = vpack.c.b16 %v2654, %v2650
        %v2727 = vpack.c.b16 %v2655, %v2651
        %v2728 = vpack.c.b16 %v2656, %v2652
        %v2729 = vpack.c.b16 %v2661, %v2657
        %v2730 = vpack.c.b16 %v2662, %v2658
        %v2731 = vpack.c.b16 %v2663, %v2659
        %v2732 = vpack.c.b16 %v2664, %v2660
        %v2733 = vpack.c.b16 %v2669, %v2665
        %v2734 = vpack.c.b16 %v2670, %v2666
        %v2735 = vpack.c.b16 %v2671, %v2667
        %v2736 = vpack.c.b16 %v2672, %v2668
        %2801 = vmatpush.bf16.msra.mxu0 %v2701
        %2802 = vmatpush.bf16.msra.mxu0 %v2697
        %2803 = vmatpush.bf16.msra.mxu0 %v2693
        %2804 = vmatpush.bf16.msra.mxu0 %v2689
        %2805 = vmatpush.bf16.msra.mxu0 %v2685
        %2806 = vmatpush.bf16.msra.mxu0 %v2681
        %2807 = vmatpush.bf16.msra.mxu0 %v2677
        %2808 = vmatpush.bf16.msra.mxu0 %v2673
        %2809 = vmatmul.bf16.gmra.mxu0 %v2465
        %v2810 = vpop.f32.mrf.mxu0
        %v2811 = vadd.f32 0.0, %v2810
        %v2812 = vpop.f32.mrf.mxu0
        %v2813 = vadd.f32 0.0, %v2812
        %2814 = vmatmul.bf16.gmra.mxu0 %v2467
        %v2815 = vpop.f32.mrf.mxu0
        %v2816 = vadd.f32 0.0, %v2815
        %v2817 = vpop.f32.mrf.mxu0
        %v2818 = vadd.f32 0.0, %v2817
        %2819 = vmatmul.bf16.gmra.mxu0 %v2469
        %v2820 = vpop.f32.mrf.mxu0
        %v2821 = vadd.f32 0.0, %v2820
        %v2822 = vpop.f32.mrf.mxu0
        %v2823 = vadd.f32 0.0, %v2822
        %2824 = vmatmul.bf16.gmra.mxu0 %v2471
        %v2825 = vpop.f32.mrf.mxu0
        %v2826 = vadd.f32 0.0, %v2825
        %v2827 = vpop.f32.mrf.mxu0
        %v2828 = vadd.f32 0.0, %v2827
        %2829 = vdwg.mxu0
        %2830 = vmatpush.bf16.msra.mxu0 %v2733
        %2831 = vmatpush.bf16.msra.mxu0 %v2729
        %2832 = vmatpush.bf16.msra.mxu0 %v2725
        %2833 = vmatpush.bf16.msra.mxu0 %v2721
        %2834 = vmatpush.bf16.msra.mxu0 %v2717
        %2835 = vmatpush.bf16.msra.mxu0 %v2713
        %2836 = vmatpush.bf16.msra.mxu0 %v2709
        %2837 = vmatpush.bf16.msra.mxu0 %v2705
        %2838 = vmatmul.bf16.gmra.mxu0 %v2466
        %v2839 = vpop.f32.mrf.mxu0
        %v2840 = vadd.f32 %v2811, %v2839
        %v2841 = vpop.f32.mrf.mxu0
        %v2842 = vadd.f32 %v2813, %v2841
        %2843 = vmatmul.bf16.gmra.mxu0 %v2468
        %v2844 = vpop.f32.mrf.mxu0
        %v2845 = vadd.f32 %v2816, %v2844
        %v2846 = vpop.f32.mrf.mxu0
        %v2847 = vadd.f32 %v2818, %v2846
        %2848 = vmatmul.bf16.gmra.mxu0 %v2470
        %v2849 = vpop.f32.mrf.mxu0
        %v2850 = vadd.f32 %v2821, %v2849
        %v2851 = vpop.f32.mrf.mxu0
        %v2852 = vadd.f32 %v2823, %v2851
        %2853 = vmatmul.bf16.gmra.mxu0 %v2472
        %v2854 = vpop.f32.mrf.mxu0
        %v2855 = vadd.f32 %v2826, %v2854
        %v2856 = vpop.f32.mrf.mxu0
        %v2857 = vadd.f32 %v2828, %v2856
        %2858 = vdwg.mxu0
        %2859 = vmatpush.bf16.msra.mxu0 %v2702
        %2860 = vmatpush.bf16.msra.mxu0 %v2698
        %2861 = vmatpush.bf16.msra.mxu0 %v2694
        %2862 = vmatpush.bf16.msra.mxu0 %v2690
        %2863 = vmatpush.bf16.msra.mxu0 %v2686
        %2864 = vmatpush.bf16.msra.mxu0 %v2682
        %2865 = vmatpush.bf16.msra.mxu0 %v2678
        %2866 = vmatpush.bf16.msra.mxu0 %v2674
        %2867 = vmatmul.bf16.gmra.mxu0 %v2465
        %v2868 = vpop.f32.mrf.mxu0
        %v2869 = vadd.f32 0.0, %v2868
        %v2870 = vpop.f32.mrf.mxu0
        %v2871 = vadd.f32 0.0, %v2870
        %2872 = vmatmul.bf16.gmra.mxu0 %v2467
        %v2873 = vpop.f32.mrf.mxu0
        %v2874 = vadd.f32 0.0, %v2873
        %v2875 = vpop.f32.mrf.mxu0
        %v2876 = vadd.f32 0.0, %v2875
        %2877 = vmatmul.bf16.gmra.mxu0 %v2469
        %v2878 = vpop.f32.mrf.mxu0
        %v2879 = vadd.f32 0.0, %v2878
        %v2880 = vpop.f32.mrf.mxu0
        %v2881 = vadd.f32 0.0, %v2880
        %2882 = vmatmul.bf16.gmra.mxu0 %v2471
        %v2883 = vpop.f32.mrf.mxu0
        %v2884 = vadd.f32 0.0, %v2883
        %v2885 = vpop.f32.mrf.mxu0
        %v2886 = vadd.f32 0.0, %v2885
        %2887 = vdwg.mxu0
        %2888 = vmatpush.bf16.msra.mxu0 %v2734
        %2889 = vmatpush.bf16.msra.mxu0 %v2730
        %2890 = vmatpush.bf16.msra.mxu0 %v2726
        %2891 = vmatpush.bf16.msra.mxu0 %v2722
        %2892 = vmatpush.bf16.msra.mxu0 %v2718
        %2893 = vmatpush.bf16.msra.mxu0 %v2714
        %2894 = vmatpush.bf16.msra.mxu0 %v2710
        %2895 = vmatpush.bf16.msra.mxu0 %v2706
        %2896 = vmatmul.bf16.gmra.mxu0 %v2466
        %v2897 = vpop.f32.mrf.mxu0
        %v2898 = vadd.f32 %v2869, %v2897
        %v2899 = vpop.f32.mrf.mxu0
        %v2900 = vadd.f32 %v2871, %v2899
        %2901 = vmatmul.bf16.gmra.mxu0 %v2468
        %v2902 = vpop.f32.mrf.mxu0
        %v2903 = vadd.f32 %v2874, %v2902
        %v2904 = vpop.f32.mrf.mxu0
        %v2905 = vadd.f32 %v2876, %v2904
        %2906 = vmatmul.bf16.gmra.mxu0 %v2470
        %v2907 = vpop.f32.mrf.mxu0
        %v2908 = vadd.f32 %v2879, %v2907
        %v2909 = vpop.f32.mrf.mxu0
        %v2910 = vadd.f32 %v2881, %v2909
        %2911 = vmatmul.bf16.gmra.mxu0 %v2472
        %v2912 = vpop.f32.mrf.mxu0
        %v2913 = vadd.f32 %v2884, %v2912
        %v2914 = vpop.f32.mrf.mxu0
        %v2915 = vadd.f32 %v2886, %v2914
        %2916 = vdwg.mxu0
        %2917 = vmatpush.bf16.msra.mxu0 %v2703
        %2918 = vmatpush.bf16.msra.mxu0 %v2699
        %2919 = vmatpush.bf16.msra.mxu0 %v2695
        %2920 = vmatpush.bf16.msra.mxu0 %v2691
        %2921 = vmatpush.bf16.msra.mxu0 %v2687
        %2922 = vmatpush.bf16.msra.mxu0 %v2683
        %2923 = vmatpush.bf16.msra.mxu0 %v2679
        %2924 = vmatpush.bf16.msra.mxu0 %v2675
        %2925 = vmatmul.bf16.gmra.mxu0 %v2465
        %v2926 = vpop.f32.mrf.mxu0
        %v2927 = vadd.f32 0.0, %v2926
        %v2928 = vpop.f32.mrf.mxu0
        %v2929 = vadd.f32 0.0, %v2928
        %2930 = vmatmul.bf16.gmra.mxu0 %v2467
        %v2931 = vpop.f32.mrf.mxu0
        %v2932 = vadd.f32 0.0, %v2931
        %v2933 = vpop.f32.mrf.mxu0
        %v2934 = vadd.f32 0.0, %v2933
        %2935 = vmatmul.bf16.gmra.mxu0 %v2469
        %v2936 = vpop.f32.mrf.mxu0
        %v2937 = vadd.f32 0.0, %v2936
        %v2938 = vpop.f32.mrf.mxu0
        %v2939 = vadd.f32 0.0, %v2938
        %2940 = vmatmul.bf16.gmra.mxu0 %v2471
        %v2941 = vpop.f32.mrf.mxu0
        %v2942 = vadd.f32 0.0, %v2941
        %v2943 = vpop.f32.mrf.mxu0
        %v2944 = vadd.f32 0.0, %v2943
        %2945 = vdwg.mxu0
        %2946 = vmatpush.bf16.msra.mxu0 %v2735
        %2947 = vmatpush.bf16.msra.mxu0 %v2731
        %2948 = vmatpush.bf16.msra.mxu0 %v2727
        %2949 = vmatpush.bf16.msra.mxu0 %v2723
        %2950 = vmatpush.bf16.msra.mxu0 %v2719
        %2951 = vmatpush.bf16.msra.mxu0 %v2715
        %2952 = vmatpush.bf16.msra.mxu0 %v2711
        %2953 = vmatpush.bf16.msra.mxu0 %v2707
        %2954 = vmatmul.bf16.gmra.mxu0 %v2466
        %v2955 = vpop.f32.mrf.mxu0
        %v2956 = vadd.f32 %v2927, %v2955
        %v2957 = vpop.f32.mrf.mxu0
        %v2958 = vadd.f32 %v2929, %v2957
        %2959 = vmatmul.bf16.gmra.mxu0 %v2468
        %v2960 = vpop.f32.mrf.mxu0
        %v2961 = vadd.f32 %v2932, %v2960
        %v2962 = vpop.f32.mrf.mxu0
        %v2963 = vadd.f32 %v2934, %v2962
        %2964 = vmatmul.bf16.gmra.mxu0 %v2470
        %v2965 = vpop.f32.mrf.mxu0
        %v2966 = vadd.f32 %v2937, %v2965
        %v2967 = vpop.f32.mrf.mxu0
        %v2968 = vadd.f32 %v2939, %v2967
        %2969 = vmatmul.bf16.gmra.mxu0 %v2472
        %v2970 = vpop.f32.mrf.mxu0
        %v2971 = vadd.f32 %v2942, %v2970
        %v2972 = vpop.f32.mrf.mxu0
        %v2973 = vadd.f32 %v2944, %v2972
        %2974 = vdwg.mxu0
        %2975 = vmatpush.bf16.msra.mxu0 %v2704
        %2976 = vmatpush.bf16.msra.mxu0 %v2700
        %2977 = vmatpush.bf16.msra.mxu0 %v2696
        %2978 = vmatpush.bf16.msra.mxu0 %v2692
        %2979 = vmatpush.bf16.msra.mxu0 %v2688
        %2980 = vmatpush.bf16.msra.mxu0 %v2684
        %2981 = vmatpush.bf16.msra.mxu0 %v2680
        %2982 = vmatpush.bf16.msra.mxu0 %v2676
        %2983 = vmatmul.bf16.gmra.mxu0 %v2465
        %v2984 = vpop.f32.mrf.mxu0
        %v2985 = vadd.f32 0.0, %v2984
        %v2986 = vpop.f32.mrf.mxu0
        %v2987 = vadd.f32 0.0, %v2986
        %2988 = vmatmul.bf16.gmra.mxu0 %v2467
        %v2989 = vpop.f32.mrf.mxu0
        %v2990 = vadd.f32 0.0, %v2989
        %v2991 = vpop.f32.mrf.mxu0
        %v2992 = vadd.f32 0.0, %v2991
        %2993 = vmatmul.bf16.gmra.mxu0 %v2469
        %v2994 = vpop.f32.mrf.mxu0
        %v2995 = vadd.f32 0.0, %v2994
        %v2996 = vpop.f32.mrf.mxu0
        %v2997 = vadd.f32 0.0, %v2996
        %2998 = vmatmul.bf16.gmra.mxu0 %v2471
        %v2999 = vpop.f32.mrf.mxu0
        %v3000 = vadd.f32 0.0, %v2999
        %v3001 = vpop.f32.mrf.mxu0
        %v3002 = vadd.f32 0.0, %v3001
        %3003 = vdwg.mxu0
        %3004 = vmatpush.bf16.msra.mxu0 %v2736
        %3005 = vmatpush.bf16.msra.mxu0 %v2732
        %3006 = vmatpush.bf16.msra.mxu0 %v2728
        %3007 = vmatpush.bf16.msra.mxu0 %v2724
        %3008 = vmatpush.bf16.msra.mxu0 %v2720
        %3009 = vmatpush.bf16.msra.mxu0 %v2716
        %3010 = vmatpush.bf16.msra.mxu0 %v2712
        %3011 = vmatpush.bf16.msra.mxu0 %v2708
        %3012 = vmatmul.bf16.gmra.mxu0 %v2466
        %v3013 = vpop.f32.mrf.mxu0
        %v3014 = vadd.f32 %v2985, %v3013
        %v3015 = vpop.f32.mrf.mxu0
        %v3016 = vadd.f32 %v2987, %v3015
        %3017 = vmatmul.bf16.gmra.mxu0 %v2468
        %v3018 = vpop.f32.mrf.mxu0
        %v3019 = vadd.f32 %v2990, %v3018
        %v3020 = vpop.f32.mrf.mxu0
        %v3021 = vadd.f32 %v2992, %v3020
        %3022 = vmatmul.bf16.gmra.mxu0 %v2470
        %v3023 = vpop.f32.mrf.mxu0
        %v3024 = vadd.f32 %v2995, %v3023
        %v3025 = vpop.f32.mrf.mxu0
        %v3026 = vadd.f32 %v2997, %v3025
        %3027 = vmatmul.bf16.gmra.mxu0 %v2472
        %v3028 = vpop.f32.mrf.mxu0
        %v3029 = vadd.f32 %v3000, %v3028
        %v3030 = vpop.f32.mrf.mxu0
        %v3031 = vadd.f32 %v3002, %v3030
        %3032 = vdwg.mxu0
        %v3033 = vadd.f32 %v2365, %v2840
        %v3034 = vadd.f32 %v2366, %v2898
        %v3035 = vadd.f32 %v2367, %v2956
        %v3036 = vadd.f32 %v2368, %v3014
        %v3037 = vadd.f32 %v2369, %v2842
        %v3038 = vadd.f32 %v2370, %v2900
        %v3039 = vadd.f32 %v2371, %v2958
        %v3040 = vadd.f32 %v2372, %v3016
        %v3041 = vadd.f32 %v2373, %v2845
        %v3042 = vadd.f32 %v2374, %v2903
        %v3043 = vadd.f32 %v2375, %v2961
        %v3044 = vadd.f32 %v2376, %v3019
        %v3045 = vadd.f32 %v2377, %v2847
        %v3046 = vadd.f32 %v2378, %v2905
        %v3047 = vadd.f32 %v2379, %v2963
        %v3048 = vadd.f32 %v2380, %v3021
        %v3049 = vadd.f32 %v2381, %v2850
        %v3050 = vadd.f32 %v2382, %v2908
        %v3051 = vadd.f32 %v2383, %v2966
        %v3052 = vadd.f32 %v2384, %v3024
        %v3053 = vadd.f32 %v2385, %v2852
        %v3054 = vadd.f32 %v2386, %v2910
        %v3055 = vadd.f32 %v2387, %v2968
        %v3056 = vadd.f32 %v2388, %v3026
        %v3057 = vadd.f32 %v2389, %v2855
        %v3058 = vadd.f32 %v2390, %v2913
        %v3059 = vadd.f32 %v2391, %v2971
        %v3060 = vadd.f32 %v2392, %v3029
        %v3061 = vadd.f32 %v2393, %v2857
        %v3062 = vadd.f32 %v2394, %v2915
        %v3063 = vadd.f32 %v2395, %v2973
        %v3064 = vadd.f32 %v2396, %v3031
        %v3066 = vshrl.u32 %v249, 16
        %v3068 = vrot.slane %v3066, 4
        %v3069 = vshll.u32 %v249, 16
        %v3071 = vrot.slane %v3069, 5
        %v3072 = vor.u32 %v3068, %v3071
        %v3073 = vrot.slane %v3072, 4
        %v3075 = vshll.u32 %v250, 16
        %v3077 = vrot.slane %v3075, 5
        %v3078 = vsel %vm319, %v3073, %v3077
        %s3079 = scalar_lea.vmem [#allocation2], 2048
        %v3080 = vld [vmem:[%s3079] sm:$0xff]
        %v3081 = vld [vmem:[%s3079 + $0x8] sm:$0xff]
        %v3082 = vld [vmem:[%s3079 + $0x10] sm:$0xff]
        %v3083 = vld [vmem:[%s3079 + $0x18] sm:$0xff]
        %v3084 = vld [vmem:[%s3079 + $0x20] sm:$0xff]
        %v3085 = vld [vmem:[%s3079 + $0x28] sm:$0xff]
        %v3086 = vld [vmem:[%s3079 + $0x30] sm:$0xff]
        %v3087 = vld [vmem:[%s3079 + $0x38] sm:$0xff]
        %v3088 = vld [vmem:[%s3079 + $0x40] sm:$0xff]
        %v3089 = vld [vmem:[%s3079 + $0x48] sm:$0xff]
        %v3090 = vld [vmem:[%s3079 + $0x50] sm:$0xff]
        %v3091 = vld [vmem:[%s3079 + $0x58] sm:$0xff]
        %v3092 = vld [vmem:[%s3079 + $0x60] sm:$0xff]
        %v3093 = vld [vmem:[%s3079 + $0x68] sm:$0xff]
        %v3094 = vld [vmem:[%s3079 + $0x70] sm:$0xff]
        %v3095 = vld [vmem:[%s3079 + $0x78] sm:$0xff]
        %v3096 = vld [vmem:[%s3079 + $0x80] sm:$0xff]
        %v3097 = vld [vmem:[%s3079 + $0x88] sm:$0xff]
        %v3098 = vld [vmem:[%s3079 + $0x90] sm:$0xff]
        %v3099 = vld [vmem:[%s3079 + $0x98] sm:$0xff]
        %v3100 = vld [vmem:[%s3079 + $0xa0] sm:$0xff]
        %v3101 = vld [vmem:[%s3079 + $0xa8] sm:$0xff]
        %v3102 = vld [vmem:[%s3079 + $0xb0] sm:$0xff]
        %v3103 = vld [vmem:[%s3079 + $0xb8] sm:$0xff]
        %v3104 = vld [vmem:[%s3079 + $0xc0] sm:$0xff]
        %v3105 = vld [vmem:[%s3079 + $0xc8] sm:$0xff]
        %v3106 = vld [vmem:[%s3079 + $0xd0] sm:$0xff]
        %v3107 = vld [vmem:[%s3079 + $0xd8] sm:$0xff]
        %v3108 = vld [vmem:[%s3079 + $0xe0] sm:$0xff]
        %v3109 = vld [vmem:[%s3079 + $0xe8] sm:$0xff]
        %v3110 = vld [vmem:[%s3079 + $0xf0] sm:$0xff]
        %v3111 = vld [vmem:[%s3079 + $0xf8] sm:$0xff]
        %v3112 = vld [vmem:[%s3079 + $0x100] sm:$0xff]
        %v3113 = vld [vmem:[%s3079 + $0x108] sm:$0xff]
        %v3114 = vld [vmem:[%s3079 + $0x110] sm:$0xff]
        %v3115 = vld [vmem:[%s3079 + $0x118] sm:$0xff]
        %v3116 = vld [vmem:[%s3079 + $0x120] sm:$0xff]
        %v3117 = vld [vmem:[%s3079 + $0x128] sm:$0xff]
        %v3118 = vld [vmem:[%s3079 + $0x130] sm:$0xff]
        %v3119 = vld [vmem:[%s3079 + $0x138] sm:$0xff]
        %v3120 = vld [vmem:[%s3079 + $0x140] sm:$0xff]
        %v3121 = vld [vmem:[%s3079 + $0x148] sm:$0xff]
        %v3122 = vld [vmem:[%s3079 + $0x150] sm:$0xff]
        %v3123 = vld [vmem:[%s3079 + $0x158] sm:$0xff]
        %v3124 = vld [vmem:[%s3079 + $0x160] sm:$0xff]
        %v3125 = vld [vmem:[%s3079 + $0x168] sm:$0xff]
        %v3126 = vld [vmem:[%s3079 + $0x170] sm:$0xff]
        %v3127 = vld [vmem:[%s3079 + $0x178] sm:$0xff]
        %v3128 = vld [vmem:[%s3079 + $0x180] sm:$0xff]
        %v3129 = vld [vmem:[%s3079 + $0x188] sm:$0xff]
        %v3130 = vld [vmem:[%s3079 + $0x190] sm:$0xff]
        %v3131 = vld [vmem:[%s3079 + $0x198] sm:$0xff]
        %v3132 = vld [vmem:[%s3079 + $0x1a0] sm:$0xff]
        %v3133 = vld [vmem:[%s3079 + $0x1a8] sm:$0xff]
        %v3134 = vld [vmem:[%s3079 + $0x1b0] sm:$0xff]
        %v3135 = vld [vmem:[%s3079 + $0x1b8] sm:$0xff]
        %v3136 = vld [vmem:[%s3079 + $0x1c0] sm:$0xff]
        %v3137 = vld [vmem:[%s3079 + $0x1c8] sm:$0xff]
        %v3138 = vld [vmem:[%s3079 + $0x1d0] sm:$0xff]
        %v3139 = vld [vmem:[%s3079 + $0x1d8] sm:$0xff]
        %v3140 = vld [vmem:[%s3079 + $0x1e0] sm:$0xff]
        %v3141 = vld [vmem:[%s3079 + $0x1e8] sm:$0xff]
        %v3142 = vld [vmem:[%s3079 + $0x1f0] sm:$0xff]
        %v3143 = vld [vmem:[%s3079 + $0x1f8] sm:$0xff]
        %v3144 = vunpack.c.l.b16 %v3078
        %v3145 = vunpack.c.h.b16 %v3078
        %v3146 = vpack.c.b16 %v501, %v499
        %v3147 = vpack.c.b16 %v502, %v500
        %v3148 = vpack.c.b16 %v505, %v503
        %v3149 = vpack.c.b16 %v506, %v504
        %v3150 = vpack.c.b16 %v509, %v507
        %v3151 = vpack.c.b16 %v510, %v508
        %v3152 = vpack.c.b16 %v3144, %v511
        %v3153 = vpack.c.b16 %v3145, %v512
        %v3226 = vunpack.c.l.b16 %v3080
        %v3227 = vunpack.c.h.b16 %v3080
        %v3228 = vunpack.c.l.b16 %v3081
        %v3229 = vunpack.c.h.b16 %v3081
        %v3230 = vunpack.c.l.b16 %v3082
        %v3231 = vunpack.c.h.b16 %v3082
        %v3232 = vunpack.c.l.b16 %v3083
        %v3233 = vunpack.c.h.b16 %v3083
        %v3234 = vunpack.c.l.b16 %v3084
        %v3235 = vunpack.c.h.b16 %v3084
        %v3236 = vunpack.c.l.b16 %v3085
        %v3237 = vunpack.c.h.b16 %v3085
        %v3238 = vunpack.c.l.b16 %v3086
        %v3239 = vunpack.c.h.b16 %v3086
        %v3240 = vunpack.c.l.b16 %v3087
        %v3241 = vunpack.c.h.b16 %v3087
        %v3242 = vunpack.c.l.b16 %v3088
        %v3243 = vunpack.c.h.b16 %v3088
        %v3244 = vunpack.c.l.b16 %v3089
        %v3245 = vunpack.c.h.b16 %v3089
        %v3246 = vunpack.c.l.b16 %v3090
        %v3247 = vunpack.c.h.b16 %v3090
        %v3248 = vunpack.c.l.b16 %v3091
        %v3249 = vunpack.c.h.b16 %v3091
        %v3250 = vunpack.c.l.b16 %v3092
        %v3251 = vunpack.c.h.b16 %v3092
        %v3252 = vunpack.c.l.b16 %v3093
        %v3253 = vunpack.c.h.b16 %v3093
        %v3254 = vunpack.c.l.b16 %v3094
        %v3255 = vunpack.c.h.b16 %v3094
        %v3256 = vunpack.c.l.b16 %v3095
        %v3257 = vunpack.c.h.b16 %v3095
        %v3258 = vunpack.c.l.b16 %v3096
        %v3259 = vunpack.c.h.b16 %v3096
        %v3260 = vunpack.c.l.b16 %v3097
        %v3261 = vunpack.c.h.b16 %v3097
        %v3262 = vunpack.c.l.b16 %v3098
        %v3263 = vunpack.c.h.b16 %v3098
        %v3264 = vunpack.c.l.b16 %v3099
        %v3265 = vunpack.c.h.b16 %v3099
        %v3266 = vunpack.c.l.b16 %v3100
        %v3267 = vunpack.c.h.b16 %v3100
        %v3268 = vunpack.c.l.b16 %v3101
        %v3269 = vunpack.c.h.b16 %v3101
        %v3270 = vunpack.c.l.b16 %v3102
        %v3271 = vunpack.c.h.b16 %v3102
        %v3272 = vunpack.c.l.b16 %v3103
        %v3273 = vunpack.c.h.b16 %v3103
        %v3274 = vunpack.c.l.b16 %v3104
        %v3275 = vunpack.c.h.b16 %v3104
        %v3276 = vunpack.c.l.b16 %v3105
        %v3277 = vunpack.c.h.b16 %v3105
        %v3278 = vunpack.c.l.b16 %v3106
        %v3279 = vunpack.c.h.b16 %v3106
        %v3280 = vunpack.c.l.b16 %v3107
        %v3281 = vunpack.c.h.b16 %v3107
        %v3282 = vunpack.c.l.b16 %v3108
        %v3283 = vunpack.c.h.b16 %v3108
        %v3284 = vunpack.c.l.b16 %v3109
        %v3285 = vunpack.c.h.b16 %v3109
        %v3286 = vunpack.c.l.b16 %v3110
        %v3287 = vunpack.c.h.b16 %v3110
        %v3288 = vunpack.c.l.b16 %v3111
        %v3289 = vunpack.c.h.b16 %v3111
        %v3290 = vunpack.c.l.b16 %v3112
        %v3291 = vunpack.c.h.b16 %v3112
        %v3292 = vunpack.c.l.b16 %v3113
        %v3293 = vunpack.c.h.b16 %v3113
        %v3294 = vunpack.c.l.b16 %v3114
        %v3295 = vunpack.c.h.b16 %v3114
        %v3296 = vunpack.c.l.b16 %v3115
        %v3297 = vunpack.c.h.b16 %v3115
        %v3298 = vunpack.c.l.b16 %v3116
        %v3299 = vunpack.c.h.b16 %v3116
        %v3300 = vunpack.c.l.b16 %v3117
        %v3301 = vunpack.c.h.b16 %v3117
        %v3302 = vunpack.c.l.b16 %v3118
        %v3303 = vunpack.c.h.b16 %v3118
        %v3304 = vunpack.c.l.b16 %v3119
        %v3305 = vunpack.c.h.b16 %v3119
        %v3306 = vunpack.c.l.b16 %v3120
        %v3307 = vunpack.c.h.b16 %v3120
        %v3308 = vunpack.c.l.b16 %v3121
        %v3309 = vunpack.c.h.b16 %v3121
        %v3310 = vunpack.c.l.b16 %v3122
        %v3311 = vunpack.c.h.b16 %v3122
        %v3312 = vunpack.c.l.b16 %v3123
        %v3313 = vunpack.c.h.b16 %v3123
        %v3314 = vunpack.c.l.b16 %v3124
        %v3315 = vunpack.c.h.b16 %v3124
        %v3316 = vunpack.c.l.b16 %v3125
        %v3317 = vunpack.c.h.b16 %v3125
        %v3318 = vunpack.c.l.b16 %v3126
        %v3319 = vunpack.c.h.b16 %v3126
        %v3320 = vunpack.c.l.b16 %v3127
        %v3321 = vunpack.c.h.b16 %v3127
        %v3322 = vunpack.c.l.b16 %v3128
        %v3323 = vunpack.c.h.b16 %v3128
        %v3324 = vunpack.c.l.b16 %v3129
        %v3325 = vunpack.c.h.b16 %v3129
        %v3326 = vunpack.c.l.b16 %v3130
        %v3327 = vunpack.c.h.b16 %v3130
        %v3328 = vunpack.c.l.b16 %v3131
        %v3329 = vunpack.c.h.b16 %v3131
        %v3330 = vunpack.c.l.b16 %v3132
        %v3331 = vunpack.c.h.b16 %v3132
        %v3332 = vunpack.c.l.b16 %v3133
        %v3333 = vunpack.c.h.b16 %v3133
        %v3334 = vunpack.c.l.b16 %v3134
        %v3335 = vunpack.c.h.b16 %v3134
        %v3336 = vunpack.c.l.b16 %v3135
        %v3337 = vunpack.c.h.b16 %v3135
        %v3338 = vunpack.c.l.b16 %v3136
        %v3339 = vunpack.c.h.b16 %v3136
        %v3340 = vunpack.c.l.b16 %v3137
        %v3341 = vunpack.c.h.b16 %v3137
        %v3342 = vunpack.c.l.b16 %v3138
        %v3343 = vunpack.c.h.b16 %v3138
        %v3344 = vunpack.c.l.b16 %v3139
        %v3345 = vunpack.c.h.b16 %v3139
        %v3346 = vunpack.c.l.b16 %v3140
        %v3347 = vunpack.c.h.b16 %v3140
        %v3348 = vunpack.c.l.b16 %v3141
        %v3349 = vunpack.c.h.b16 %v3141
        %v3350 = vunpack.c.l.b16 %v3142
        %v3351 = vunpack.c.h.b16 %v3142
        %v3352 = vunpack.c.l.b16 %v3143
        %v3353 = vunpack.c.h.b16 %v3143
        %v3354 = vpack.c.b16 %v3230, %v3226
        %v3355 = vpack.c.b16 %v3231, %v3227
        %v3356 = vpack.c.b16 %v3232, %v3228
        %v3357 = vpack.c.b16 %v3233, %v3229
        %v3358 = vpack.c.b16 %v3238, %v3234
        %v3359 = vpack.c.b16 %v3239, %v3235
        %v3360 = vpack.c.b16 %v3240, %v3236
        %v3361 = vpack.c.b16 %v3241, %v3237
        %v3362 = vpack.c.b16 %v3246, %v3242
        %v3363 = vpack.c.b16 %v3247, %v3243
        %v3364 = vpack.c.b16 %v3248, %v3244
        %v3365 = vpack.c.b16 %v3249, %v3245
        %v3366 = vpack.c.b16 %v3254, %v3250
        %v3367 = vpack.c.b16 %v3255, %v3251
        %v3368 = vpack.c.b16 %v3256, %v3252
        %v3369 = vpack.c.b16 %v3257, %v3253
        %v3370 = vpack.c.b16 %v3262, %v3258
        %v3371 = vpack.c.b16 %v3263, %v3259
        %v3372 = vpack.c.b16 %v3264, %v3260
        %v3373 = vpack.c.b16 %v3265, %v3261
        %v3374 = vpack.c.b16 %v3270, %v3266
        %v3375 = vpack.c.b16 %v3271, %v3267
        %v3376 = vpack.c.b16 %v3272, %v3268
        %v3377 = vpack.c.b16 %v3273, %v3269
        %v3378 = vpack.c.b16 %v3278, %v3274
        %v3379 = vpack.c.b16 %v3279, %v3275
        %v3380 = vpack.c.b16 %v3280, %v3276
        %v3381 = vpack.c.b16 %v3281, %v3277
        %v3382 = vpack.c.b16 %v3286, %v3282
        %v3383 = vpack.c.b16 %v3287, %v3283
        %v3384 = vpack.c.b16 %v3288, %v3284
        %v3385 = vpack.c.b16 %v3289, %v3285
        %v3386 = vpack.c.b16 %v3294, %v3290
        %v3387 = vpack.c.b16 %v3295, %v3291
        %v3388 = vpack.c.b16 %v3296, %v3292
        %v3389 = vpack.c.b16 %v3297, %v3293
        %v3390 = vpack.c.b16 %v3302, %v3298
        %v3391 = vpack.c.b16 %v3303, %v3299
        %v3392 = vpack.c.b16 %v3304, %v3300
        %v3393 = vpack.c.b16 %v3305, %v3301
        %v3394 = vpack.c.b16 %v3310, %v3306
        %v3395 = vpack.c.b16 %v3311, %v3307
        %v3396 = vpack.c.b16 %v3312, %v3308
        %v3397 = vpack.c.b16 %v3313, %v3309
        %v3398 = vpack.c.b16 %v3318, %v3314
        %v3399 = vpack.c.b16 %v3319, %v3315
        %v3400 = vpack.c.b16 %v3320, %v3316
        %v3401 = vpack.c.b16 %v3321, %v3317
        %v3402 = vpack.c.b16 %v3326, %v3322
        %v3403 = vpack.c.b16 %v3327, %v3323
        %v3404 = vpack.c.b16 %v3328, %v3324
        %v3405 = vpack.c.b16 %v3329, %v3325
        %v3406 = vpack.c.b16 %v3334, %v3330
        %v3407 = vpack.c.b16 %v3335, %v3331
        %v3408 = vpack.c.b16 %v3336, %v3332
        %v3409 = vpack.c.b16 %v3337, %v3333
        %v3410 = vpack.c.b16 %v3342, %v3338
        %v3411 = vpack.c.b16 %v3343, %v3339
        %v3412 = vpack.c.b16 %v3344, %v3340
        %v3413 = vpack.c.b16 %v3345, %v3341
        %v3414 = vpack.c.b16 %v3350, %v3346
        %v3415 = vpack.c.b16 %v3351, %v3347
        %v3416 = vpack.c.b16 %v3352, %v3348
        %v3417 = vpack.c.b16 %v3353, %v3349
        %3482 = vmatpush.bf16.msra.mxu0 %v3382
        %3483 = vmatpush.bf16.msra.mxu0 %v3378
        %3484 = vmatpush.bf16.msra.mxu0 %v3374
        %3485 = vmatpush.bf16.msra.mxu0 %v3370
        %3486 = vmatpush.bf16.msra.mxu0 %v3366
        %3487 = vmatpush.bf16.msra.mxu0 %v3362
        %3488 = vmatpush.bf16.msra.mxu0 %v3358
        %3489 = vmatpush.bf16.msra.mxu0 %v3354
        %3490 = vmatmul.bf16.gmra.mxu0 %v3146
        %v3491 = vpop.f32.mrf.mxu0
        %v3492 = vadd.f32 0.0, %v3491
        %v3493 = vpop.f32.mrf.mxu0
        %v3494 = vadd.f32 0.0, %v3493
        %3495 = vmatmul.bf16.gmra.mxu0 %v3148
        %v3496 = vpop.f32.mrf.mxu0
        %v3497 = vadd.f32 0.0, %v3496
        %v3498 = vpop.f32.mrf.mxu0
        %v3499 = vadd.f32 0.0, %v3498
        %3500 = vmatmul.bf16.gmra.mxu0 %v3150
        %v3501 = vpop.f32.mrf.mxu0
        %v3502 = vadd.f32 0.0, %v3501
        %v3503 = vpop.f32.mrf.mxu0
        %v3504 = vadd.f32 0.0, %v3503
        %3505 = vmatmul.bf16.gmra.mxu0 %v3152
        %v3506 = vpop.f32.mrf.mxu0
        %v3507 = vadd.f32 0.0, %v3506
        %v3508 = vpop.f32.mrf.mxu0
        %v3509 = vadd.f32 0.0, %v3508
        %3510 = vdwg.mxu0
        %3511 = vmatpush.bf16.msra.mxu0 %v3414
        %3512 = vmatpush.bf16.msra.mxu0 %v3410
        %3513 = vmatpush.bf16.msra.mxu0 %v3406
        %3514 = vmatpush.bf16.msra.mxu0 %v3402
        %3515 = vmatpush.bf16.msra.mxu0 %v3398
        %3516 = vmatpush.bf16.msra.mxu0 %v3394
        %3517 = vmatpush.bf16.msra.mxu0 %v3390
        %3518 = vmatpush.bf16.msra.mxu0 %v3386
        %3519 = vmatmul.bf16.gmra.mxu0 %v3147
        %v3520 = vpop.f32.mrf.mxu0
        %v3521 = vadd.f32 %v3492, %v3520
        %v3522 = vpop.f32.mrf.mxu0
        %v3523 = vadd.f32 %v3494, %v3522
        %3524 = vmatmul.bf16.gmra.mxu0 %v3149
        %v3525 = vpop.f32.mrf.mxu0
        %v3526 = vadd.f32 %v3497, %v3525
        %v3527 = vpop.f32.mrf.mxu0
        %v3528 = vadd.f32 %v3499, %v3527
        %3529 = vmatmul.bf16.gmra.mxu0 %v3151
        %v3530 = vpop.f32.mrf.mxu0
        %v3531 = vadd.f32 %v3502, %v3530
        %v3532 = vpop.f32.mrf.mxu0
        %v3533 = vadd.f32 %v3504, %v3532
        %3534 = vmatmul.bf16.gmra.mxu0 %v3153
        %v3535 = vpop.f32.mrf.mxu0
        %v3536 = vadd.f32 %v3507, %v3535
        %v3537 = vpop.f32.mrf.mxu0
        %v3538 = vadd.f32 %v3509, %v3537
        %3539 = vdwg.mxu0
        %3540 = vmatpush.bf16.msra.mxu0 %v3383
        %3541 = vmatpush.bf16.msra.mxu0 %v3379
        %3542 = vmatpush.bf16.msra.mxu0 %v3375
        %3543 = vmatpush.bf16.msra.mxu0 %v3371
        %3544 = vmatpush.bf16.msra.mxu0 %v3367
        %3545 = vmatpush.bf16.msra.mxu0 %v3363
        %3546 = vmatpush.bf16.msra.mxu0 %v3359
        %3547 = vmatpush.bf16.msra.mxu0 %v3355
        %3548 = vmatmul.bf16.gmra.mxu0 %v3146
        %v3549 = vpop.f32.mrf.mxu0
        %v3550 = vadd.f32 0.0, %v3549
        %v3551 = vpop.f32.mrf.mxu0
        %v3552 = vadd.f32 0.0, %v3551
        %3553 = vmatmul.bf16.gmra.mxu0 %v3148
        %v3554 = vpop.f32.mrf.mxu0
        %v3555 = vadd.f32 0.0, %v3554
        %v3556 = vpop.f32.mrf.mxu0
        %v3557 = vadd.f32 0.0, %v3556
        %3558 = vmatmul.bf16.gmra.mxu0 %v3150
        %v3559 = vpop.f32.mrf.mxu0
        %v3560 = vadd.f32 0.0, %v3559
        %v3561 = vpop.f32.mrf.mxu0
        %v3562 = vadd.f32 0.0, %v3561
        %3563 = vmatmul.bf16.gmra.mxu0 %v3152
        %v3564 = vpop.f32.mrf.mxu0
        %v3565 = vadd.f32 0.0, %v3564
        %v3566 = vpop.f32.mrf.mxu0
        %v3567 = vadd.f32 0.0, %v3566
        %3568 = vdwg.mxu0
        %3569 = vmatpush.bf16.msra.mxu0 %v3415
        %3570 = vmatpush.bf16.msra.mxu0 %v3411
        %3571 = vmatpush.bf16.msra.mxu0 %v3407
        %3572 = vmatpush.bf16.msra.mxu0 %v3403
        %3573 = vmatpush.bf16.msra.mxu0 %v3399
        %3574 = vmatpush.bf16.msra.mxu0 %v3395
        %3575 = vmatpush.bf16.msra.mxu0 %v3391
        %3576 = vmatpush.bf16.msra.mxu0 %v3387
        %3577 = vmatmul.bf16.gmra.mxu0 %v3147
        %v3578 = vpop.f32.mrf.mxu0
        %v3579 = vadd.f32 %v3550, %v3578
        %v3580 = vpop.f32.mrf.mxu0
        %v3581 = vadd.f32 %v3552, %v3580
        %3582 = vmatmul.bf16.gmra.mxu0 %v3149
        %v3583 = vpop.f32.mrf.mxu0
        %v3584 = vadd.f32 %v3555, %v3583
        %v3585 = vpop.f32.mrf.mxu0
        %v3586 = vadd.f32 %v3557, %v3585
        %3587 = vmatmul.bf16.gmra.mxu0 %v3151
        %v3588 = vpop.f32.mrf.mxu0
        %v3589 = vadd.f32 %v3560, %v3588
        %v3590 = vpop.f32.mrf.mxu0
        %v3591 = vadd.f32 %v3562, %v3590
        %3592 = vmatmul.bf16.gmra.mxu0 %v3153
        %v3593 = vpop.f32.mrf.mxu0
        %v3594 = vadd.f32 %v3565, %v3593
        %v3595 = vpop.f32.mrf.mxu0
        %v3596 = vadd.f32 %v3567, %v3595
        %3597 = vdwg.mxu0
        %3598 = vmatpush.bf16.msra.mxu0 %v3384
        %3599 = vmatpush.bf16.msra.mxu0 %v3380
        %3600 = vmatpush.bf16.msra.mxu0 %v3376
        %3601 = vmatpush.bf16.msra.mxu0 %v3372
        %3602 = vmatpush.bf16.msra.mxu0 %v3368
        %3603 = vmatpush.bf16.msra.mxu0 %v3364
        %3604 = vmatpush.bf16.msra.mxu0 %v3360
        %3605 = vmatpush.bf16.msra.mxu0 %v3356
        %3606 = vmatmul.bf16.gmra.mxu0 %v3146
        %v3607 = vpop.f32.mrf.mxu0
        %v3608 = vadd.f32 0.0, %v3607
        %v3609 = vpop.f32.mrf.mxu0
        %v3610 = vadd.f32 0.0, %v3609
        %3611 = vmatmul.bf16.gmra.mxu0 %v3148
        %v3612 = vpop.f32.mrf.mxu0
        %v3613 = vadd.f32 0.0, %v3612
        %v3614 = vpop.f32.mrf.mxu0
        %v3615 = vadd.f32 0.0, %v3614
        %3616 = vmatmul.bf16.gmra.mxu0 %v3150
        %v3617 = vpop.f32.mrf.mxu0
        %v3618 = vadd.f32 0.0, %v3617
        %v3619 = vpop.f32.mrf.mxu0
        %v3620 = vadd.f32 0.0, %v3619
        %3621 = vmatmul.bf16.gmra.mxu0 %v3152
        %v3622 = vpop.f32.mrf.mxu0
        %v3623 = vadd.f32 0.0, %v3622
        %v3624 = vpop.f32.mrf.mxu0
        %v3625 = vadd.f32 0.0, %v3624
        %3626 = vdwg.mxu0
        %3627 = vmatpush.bf16.msra.mxu0 %v3416
        %3628 = vmatpush.bf16.msra.mxu0 %v3412
        %3629 = vmatpush.bf16.msra.mxu0 %v3408
        %3630 = vmatpush.bf16.msra.mxu0 %v3404
        %3631 = vmatpush.bf16.msra.mxu0 %v3400
        %3632 = vmatpush.bf16.msra.mxu0 %v3396
        %3633 = vmatpush.bf16.msra.mxu0 %v3392
        %3634 = vmatpush.bf16.msra.mxu0 %v3388
        %3635 = vmatmul.bf16.gmra.mxu0 %v3147
        %v3636 = vpop.f32.mrf.mxu0
        %v3637 = vadd.f32 %v3608, %v3636
        %v3638 = vpop.f32.mrf.mxu0
        %v3639 = vadd.f32 %v3610, %v3638
        %3640 = vmatmul.bf16.gmra.mxu0 %v3149
        %v3641 = vpop.f32.mrf.mxu0
        %v3642 = vadd.f32 %v3613, %v3641
        %v3643 = vpop.f32.mrf.mxu0
        %v3644 = vadd.f32 %v3615, %v3643
        %3645 = vmatmul.bf16.gmra.mxu0 %v3151
        %v3646 = vpop.f32.mrf.mxu0
        %v3647 = vadd.f32 %v3618, %v3646
        %v3648 = vpop.f32.mrf.mxu0
        %v3649 = vadd.f32 %v3620, %v3648
        %3650 = vmatmul.bf16.gmra.mxu0 %v3153
        %v3651 = vpop.f32.mrf.mxu0
        %v3652 = vadd.f32 %v3623, %v3651
        %v3653 = vpop.f32.mrf.mxu0
        %v3654 = vadd.f32 %v3625, %v3653
        %3655 = vdwg.mxu0
        %3656 = vmatpush.bf16.msra.mxu0 %v3385
        %3657 = vmatpush.bf16.msra.mxu0 %v3381
        %3658 = vmatpush.bf16.msra.mxu0 %v3377
        %3659 = vmatpush.bf16.msra.mxu0 %v3373
        %3660 = vmatpush.bf16.msra.mxu0 %v3369
        %3661 = vmatpush.bf16.msra.mxu0 %v3365
        %3662 = vmatpush.bf16.msra.mxu0 %v3361
        %3663 = vmatpush.bf16.msra.mxu0 %v3357
        %3664 = vmatmul.bf16.gmra.mxu0 %v3146
        %v3665 = vpop.f32.mrf.mxu0
        %v3666 = vadd.f32 0.0, %v3665
        %v3667 = vpop.f32.mrf.mxu0
        %v3668 = vadd.f32 0.0, %v3667
        %3669 = vmatmul.bf16.gmra.mxu0 %v3148
        %v3670 = vpop.f32.mrf.mxu0
        %v3671 = vadd.f32 0.0, %v3670
        %v3672 = vpop.f32.mrf.mxu0
        %v3673 = vadd.f32 0.0, %v3672
        %3674 = vmatmul.bf16.gmra.mxu0 %v3150
        %v3675 = vpop.f32.mrf.mxu0
        %v3676 = vadd.f32 0.0, %v3675
        %v3677 = vpop.f32.mrf.mxu0
        %v3678 = vadd.f32 0.0, %v3677
        %3679 = vmatmul.bf16.gmra.mxu0 %v3152
        %v3680 = vpop.f32.mrf.mxu0
        %v3681 = vadd.f32 0.0, %v3680
        %v3682 = vpop.f32.mrf.mxu0
        %v3683 = vadd.f32 0.0, %v3682
        %3684 = vdwg.mxu0
        %3685 = vmatpush.bf16.msra.mxu0 %v3417
        %3686 = vmatpush.bf16.msra.mxu0 %v3413
        %3687 = vmatpush.bf16.msra.mxu0 %v3409
        %3688 = vmatpush.bf16.msra.mxu0 %v3405
        %3689 = vmatpush.bf16.msra.mxu0 %v3401
        %3690 = vmatpush.bf16.msra.mxu0 %v3397
        %3691 = vmatpush.bf16.msra.mxu0 %v3393
        %3692 = vmatpush.bf16.msra.mxu0 %v3389
        %3693 = vmatmul.bf16.gmra.mxu0 %v3147
        %v3694 = vpop.f32.mrf.mxu0
        %v3695 = vadd.f32 %v3666, %v3694
        %v3696 = vpop.f32.mrf.mxu0
        %v3697 = vadd.f32 %v3668, %v3696
        %3698 = vmatmul.bf16.gmra.mxu0 %v3149
        %v3699 = vpop.f32.mrf.mxu0
        %v3700 = vadd.f32 %v3671, %v3699
        %v3701 = vpop.f32.mrf.mxu0
        %v3702 = vadd.f32 %v3673, %v3701
        %3703 = vmatmul.bf16.gmra.mxu0 %v3151
        %v3704 = vpop.f32.mrf.mxu0
        %v3705 = vadd.f32 %v3676, %v3704
        %v3706 = vpop.f32.mrf.mxu0
        %v3707 = vadd.f32 %v3678, %v3706
        %3708 = vmatmul.bf16.gmra.mxu0 %v3153
        %v3709 = vpop.f32.mrf.mxu0
        %v3710 = vadd.f32 %v3681, %v3709
        %v3711 = vpop.f32.mrf.mxu0
        %v3712 = vadd.f32 %v3683, %v3711
        %3713 = vdwg.mxu0
        %v3714 = vadd.f32 %v3033, %v3521
        %v3715 = vadd.f32 %v3034, %v3579
        %v3716 = vadd.f32 %v3035, %v3637
        %v3717 = vadd.f32 %v3036, %v3695
        %v3718 = vadd.f32 %v3037, %v3523
        %v3719 = vadd.f32 %v3038, %v3581
        %v3720 = vadd.f32 %v3039, %v3639
        %v3721 = vadd.f32 %v3040, %v3697
        %v3722 = vadd.f32 %v3041, %v3526
        %v3723 = vadd.f32 %v3042, %v3584
        %v3724 = vadd.f32 %v3043, %v3642
        %v3725 = vadd.f32 %v3044, %v3700
        %v3726 = vadd.f32 %v3045, %v3528
        %v3727 = vadd.f32 %v3046, %v3586
        %v3728 = vadd.f32 %v3047, %v3644
        %v3729 = vadd.f32 %v3048, %v3702
        %v3730 = vadd.f32 %v3049, %v3531
        %v3731 = vadd.f32 %v3050, %v3589
        %v3732 = vadd.f32 %v3051, %v3647
        %v3733 = vadd.f32 %v3052, %v3705
        %v3734 = vadd.f32 %v3053, %v3533
        %v3735 = vadd.f32 %v3054, %v3591
        %v3736 = vadd.f32 %v3055, %v3649
        %v3737 = vadd.f32 %v3056, %v3707
        %v3738 = vadd.f32 %v3057, %v3536
        %v3739 = vadd.f32 %v3058, %v3594
        %v3740 = vadd.f32 %v3059, %v3652
        %v3741 = vadd.f32 %v3060, %v3710
        %v3742 = vadd.f32 %v3061, %v3538
        %v3743 = vadd.f32 %v3062, %v3596
        %v3744 = vadd.f32 %v3063, %v3654
        %v3745 = vadd.f32 %v3064, %v3712
        %v3747 = vrot.slane %v249, 5
        %v3748 = vrot.slane %v3747, 4
        %v3749 = vrot.slane %v250, 5
        %v3750 = vsel %vm1683, %v3748, %v3749
        %s3751 = scalar_lea.vmem [#allocation2], 2560
        %v3752 = vld [vmem:[%s3751] sm:$0xff]
        %v3753 = vld [vmem:[%s3751 + $0x8] sm:$0xff]
        %v3754 = vld [vmem:[%s3751 + $0x10] sm:$0xff]
        %v3755 = vld [vmem:[%s3751 + $0x18] sm:$0xff]
        %v3756 = vld [vmem:[%s3751 + $0x20] sm:$0xff]
        %v3757 = vld [vmem:[%s3751 + $0x28] sm:$0xff]
        %v3758 = vld [vmem:[%s3751 + $0x30] sm:$0xff]
        %v3759 = vld [vmem:[%s3751 + $0x38] sm:$0xff]
        %v3760 = vld [vmem:[%s3751 + $0x40] sm:$0xff]
        %v3761 = vld [vmem:[%s3751 + $0x48] sm:$0xff]
        %v3762 = vld [vmem:[%s3751 + $0x50] sm:$0xff]
        %v3763 = vld [vmem:[%s3751 + $0x58] sm:$0xff]
        %v3764 = vld [vmem:[%s3751 + $0x60] sm:$0xff]
        %v3765 = vld [vmem:[%s3751 + $0x68] sm:$0xff]
        %v3766 = vld [vmem:[%s3751 + $0x70] sm:$0xff]
        %v3767 = vld [vmem:[%s3751 + $0x78] sm:$0xff]
        %v3768 = vld [vmem:[%s3751 + $0x80] sm:$0xff]
        %v3769 = vld [vmem:[%s3751 + $0x88] sm:$0xff]
        %v3770 = vld [vmem:[%s3751 + $0x90] sm:$0xff]
        %v3771 = vld [vmem:[%s3751 + $0x98] sm:$0xff]
        %v3772 = vld [vmem:[%s3751 + $0xa0] sm:$0xff]
        %v3773 = vld [vmem:[%s3751 + $0xa8] sm:$0xff]
        %v3774 = vld [vmem:[%s3751 + $0xb0] sm:$0xff]
        %v3775 = vld [vmem:[%s3751 + $0xb8] sm:$0xff]
        %v3776 = vld [vmem:[%s3751 + $0xc0] sm:$0xff]
        %v3777 = vld [vmem:[%s3751 + $0xc8] sm:$0xff]
        %v3778 = vld [vmem:[%s3751 + $0xd0] sm:$0xff]
        %v3779 = vld [vmem:[%s3751 + $0xd8] sm:$0xff]
        %v3780 = vld [vmem:[%s3751 + $0xe0] sm:$0xff]
        %v3781 = vld [vmem:[%s3751 + $0xe8] sm:$0xff]
        %v3782 = vld [vmem:[%s3751 + $0xf0] sm:$0xff]
        %v3783 = vld [vmem:[%s3751 + $0xf8] sm:$0xff]
        %v3784 = vld [vmem:[%s3751 + $0x100] sm:$0xff]
        %v3785 = vld [vmem:[%s3751 + $0x108] sm:$0xff]
        %v3786 = vld [vmem:[%s3751 + $0x110] sm:$0xff]
        %v3787 = vld [vmem:[%s3751 + $0x118] sm:$0xff]
        %v3788 = vld [vmem:[%s3751 + $0x120] sm:$0xff]
        %v3789 = vld [vmem:[%s3751 + $0x128] sm:$0xff]
        %v3790 = vld [vmem:[%s3751 + $0x130] sm:$0xff]
        %v3791 = vld [vmem:[%s3751 + $0x138] sm:$0xff]
        %v3792 = vld [vmem:[%s3751 + $0x140] sm:$0xff]
        %v3793 = vld [vmem:[%s3751 + $0x148] sm:$0xff]
        %v3794 = vld [vmem:[%s3751 + $0x150] sm:$0xff]
        %v3795 = vld [vmem:[%s3751 + $0x158] sm:$0xff]
        %v3796 = vld [vmem:[%s3751 + $0x160] sm:$0xff]
        %v3797 = vld [vmem:[%s3751 + $0x168] sm:$0xff]
        %v3798 = vld [vmem:[%s3751 + $0x170] sm:$0xff]
        %v3799 = vld [vmem:[%s3751 + $0x178] sm:$0xff]
        %v3800 = vld [vmem:[%s3751 + $0x180] sm:$0xff]
        %v3801 = vld [vmem:[%s3751 + $0x188] sm:$0xff]
        %v3802 = vld [vmem:[%s3751 + $0x190] sm:$0xff]
        %v3803 = vld [vmem:[%s3751 + $0x198] sm:$0xff]
        %v3804 = vld [vmem:[%s3751 + $0x1a0] sm:$0xff]
        %v3805 = vld [vmem:[%s3751 + $0x1a8] sm:$0xff]
        %v3806 = vld [vmem:[%s3751 + $0x1b0] sm:$0xff]
        %v3807 = vld [vmem:[%s3751 + $0x1b8] sm:$0xff]
        %v3808 = vld [vmem:[%s3751 + $0x1c0] sm:$0xff]
        %v3809 = vld [vmem:[%s3751 + $0x1c8] sm:$0xff]
        %v3810 = vld [vmem:[%s3751 + $0x1d0] sm:$0xff]
        %v3811 = vld [vmem:[%s3751 + $0x1d8] sm:$0xff]
        %v3812 = vld [vmem:[%s3751 + $0x1e0] sm:$0xff]
        %v3813 = vld [vmem:[%s3751 + $0x1e8] sm:$0xff]
        %v3814 = vld [vmem:[%s3751 + $0x1f0] sm:$0xff]
        %v3815 = vld [vmem:[%s3751 + $0x1f8] sm:$0xff]
        %v3816 = vunpack.c.l.b16 %v3750
        %v3817 = vunpack.c.h.b16 %v3750
        %v3818 = vpack.c.b16 %v1785, %v1783
        %v3819 = vpack.c.b16 %v1786, %v1784
        %v3820 = vpack.c.b16 %v1789, %v1787
        %v3821 = vpack.c.b16 %v1790, %v1788
        %v3822 = vpack.c.b16 %v1793, %v1791
        %v3823 = vpack.c.b16 %v1794, %v1792
        %v3824 = vpack.c.b16 %v3816, %v1795
        %v3825 = vpack.c.b16 %v3817, %v1796
        %v3898 = vunpack.c.l.b16 %v3752
        %v3899 = vunpack.c.h.b16 %v3752
        %v3900 = vunpack.c.l.b16 %v3753
        %v3901 = vunpack.c.h.b16 %v3753
        %v3902 = vunpack.c.l.b16 %v3754
        %v3903 = vunpack.c.h.b16 %v3754
        %v3904 = vunpack.c.l.b16 %v3755
        %v3905 = vunpack.c.h.b16 %v3755
        %v3906 = vunpack.c.l.b16 %v3756
        %v3907 = vunpack.c.h.b16 %v3756
        %v3908 = vunpack.c.l.b16 %v3757
        %v3909 = vunpack.c.h.b16 %v3757
        %v3910 = vunpack.c.l.b16 %v3758
        %v3911 = vunpack.c.h.b16 %v3758
        %v3912 = vunpack.c.l.b16 %v3759
        %v3913 = vunpack.c.h.b16 %v3759
        %v3914 = vunpack.c.l.b16 %v3760
        %v3915 = vunpack.c.h.b16 %v3760
        %v3916 = vunpack.c.l.b16 %v3761
        %v3917 = vunpack.c.h.b16 %v3761
        %v3918 = vunpack.c.l.b16 %v3762
        %v3919 = vunpack.c.h.b16 %v3762
        %v3920 = vunpack.c.l.b16 %v3763
        %v3921 = vunpack.c.h.b16 %v3763
        %v3922 = vunpack.c.l.b16 %v3764
        %v3923 = vunpack.c.h.b16 %v3764
        %v3924 = vunpack.c.l.b16 %v3765
        %v3925 = vunpack.c.h.b16 %v3765
        %v3926 = vunpack.c.l.b16 %v3766
        %v3927 = vunpack.c.h.b16 %v3766
        %v3928 = vunpack.c.l.b16 %v3767
        %v3929 = vunpack.c.h.b16 %v3767
        %v3930 = vunpack.c.l.b16 %v3768
        %v3931 = vunpack.c.h.b16 %v3768
        %v3932 = vunpack.c.l.b16 %v3769
        %v3933 = vunpack.c.h.b16 %v3769
        %v3934 = vunpack.c.l.b16 %v3770
        %v3935 = vunpack.c.h.b16 %v3770
        %v3936 = vunpack.c.l.b16 %v3771
        %v3937 = vunpack.c.h.b16 %v3771
        %v3938 = vunpack.c.l.b16 %v3772
        %v3939 = vunpack.c.h.b16 %v3772
        %v3940 = vunpack.c.l.b16 %v3773
        %v3941 = vunpack.c.h.b16 %v3773
        %v3942 = vunpack.c.l.b16 %v3774
        %v3943 = vunpack.c.h.b16 %v3774
        %v3944 = vunpack.c.l.b16 %v3775
        %v3945 = vunpack.c.h.b16 %v3775
        %v3946 = vunpack.c.l.b16 %v3776
        %v3947 = vunpack.c.h.b16 %v3776
        %v3948 = vunpack.c.l.b16 %v3777
        %v3949 = vunpack.c.h.b16 %v3777
        %v3950 = vunpack.c.l.b16 %v3778
        %v3951 = vunpack.c.h.b16 %v3778
        %v3952 = vunpack.c.l.b16 %v3779
        %v3953 = vunpack.c.h.b16 %v3779
        %v3954 = vunpack.c.l.b16 %v3780
        %v3955 = vunpack.c.h.b16 %v3780
        %v3956 = vunpack.c.l.b16 %v3781
        %v3957 = vunpack.c.h.b16 %v3781
        %v3958 = vunpack.c.l.b16 %v3782
        %v3959 = vunpack.c.h.b16 %v3782
        %v3960 = vunpack.c.l.b16 %v3783
        %v3961 = vunpack.c.h.b16 %v3783
        %v3962 = vunpack.c.l.b16 %v3784
        %v3963 = vunpack.c.h.b16 %v3784
        %v3964 = vunpack.c.l.b16 %v3785
        %v3965 = vunpack.c.h.b16 %v3785
        %v3966 = vunpack.c.l.b16 %v3786
        %v3967 = vunpack.c.h.b16 %v3786
        %v3968 = vunpack.c.l.b16 %v3787
        %v3969 = vunpack.c.h.b16 %v3787
        %v3970 = vunpack.c.l.b16 %v3788
        %v3971 = vunpack.c.h.b16 %v3788
        %v3972 = vunpack.c.l.b16 %v3789
        %v3973 = vunpack.c.h.b16 %v3789
        %v3974 = vunpack.c.l.b16 %v3790
        %v3975 = vunpack.c.h.b16 %v3790
        %v3976 = vunpack.c.l.b16 %v3791
        %v3977 = vunpack.c.h.b16 %v3791
        %v3978 = vunpack.c.l.b16 %v3792
        %v3979 = vunpack.c.h.b16 %v3792
        %v3980 = vunpack.c.l.b16 %v3793
        %v3981 = vunpack.c.h.b16 %v3793
        %v3982 = vunpack.c.l.b16 %v3794
        %v3983 = vunpack.c.h.b16 %v3794
        %v3984 = vunpack.c.l.b16 %v3795
        %v3985 = vunpack.c.h.b16 %v3795
        %v3986 = vunpack.c.l.b16 %v3796
        %v3987 = vunpack.c.h.b16 %v3796
        %v3988 = vunpack.c.l.b16 %v3797
        %v3989 = vunpack.c.h.b16 %v3797
        %v3990 = vunpack.c.l.b16 %v3798
        %v3991 = vunpack.c.h.b16 %v3798
        %v3992 = vunpack.c.l.b16 %v3799
        %v3993 = vunpack.c.h.b16 %v3799
        %v3994 = vunpack.c.l.b16 %v3800
        %v3995 = vunpack.c.h.b16 %v3800
        %v3996 = vunpack.c.l.b16 %v3801
        %v3997 = vunpack.c.h.b16 %v3801
        %v3998 = vunpack.c.l.b16 %v3802
        %v3999 = vunpack.c.h.b16 %v3802
        %v4000 = vunpack.c.l.b16 %v3803
        %v4001 = vunpack.c.h.b16 %v3803
        %v4002 = vunpack.c.l.b16 %v3804
        %v4003 = vunpack.c.h.b16 %v3804
        %v4004 = vunpack.c.l.b16 %v3805
        %v4005 = vunpack.c.h.b16 %v3805
        %v4006 = vunpack.c.l.b16 %v3806
        %v4007 = vunpack.c.h.b16 %v3806
        %v4008 = vunpack.c.l.b16 %v3807
        %v4009 = vunpack.c.h.b16 %v3807
        %v4010 = vunpack.c.l.b16 %v3808
        %v4011 = vunpack.c.h.b16 %v3808
        %v4012 = vunpack.c.l.b16 %v3809
        %v4013 = vunpack.c.h.b16 %v3809
        %v4014 = vunpack.c.l.b16 %v3810
        %v4015 = vunpack.c.h.b16 %v3810
        %v4016 = vunpack.c.l.b16 %v3811
        %v4017 = vunpack.c.h.b16 %v3811
        %v4018 = vunpack.c.l.b16 %v3812
        %v4019 = vunpack.c.h.b16 %v3812
        %v4020 = vunpack.c.l.b16 %v3813
        %v4021 = vunpack.c.h.b16 %v3813
        %v4022 = vunpack.c.l.b16 %v3814
        %v4023 = vunpack.c.h.b16 %v3814
        %v4024 = vunpack.c.l.b16 %v3815
        %v4025 = vunpack.c.h.b16 %v3815
        %v4026 = vpack.c.b16 %v3902, %v3898
        %v4027 = vpack.c.b16 %v3903, %v3899
        %v4028 = vpack.c.b16 %v3904, %v3900
        %v4029 = vpack.c.b16 %v3905, %v3901
        %v4030 = vpack.c.b16 %v3910, %v3906
        %v4031 = vpack.c.b16 %v3911, %v3907
        %v4032 = vpack.c.b16 %v3912, %v3908
        %v4033 = vpack.c.b16 %v3913, %v3909
        %v4034 = vpack.c.b16 %v3918, %v3914
        %v4035 = vpack.c.b16 %v3919, %v3915
        %v4036 = vpack.c.b16 %v3920, %v3916
        %v4037 = vpack.c.b16 %v3921, %v3917
        %v4038 = vpack.c.b16 %v3926, %v3922
        %v4039 = vpack.c.b16 %v3927, %v3923
        %v4040 = vpack.c.b16 %v3928, %v3924
        %v4041 = vpack.c.b16 %v3929, %v3925
        %v4042 = vpack.c.b16 %v3934, %v3930
        %v4043 = vpack.c.b16 %v3935, %v3931
        %v4044 = vpack.c.b16 %v3936, %v3932
        %v4045 = vpack.c.b16 %v3937, %v3933
        %v4046 = vpack.c.b16 %v3942, %v3938
        %v4047 = vpack.c.b16 %v3943, %v3939
        %v4048 = vpack.c.b16 %v3944, %v3940
        %v4049 = vpack.c.b16 %v3945, %v3941
        %v4050 = vpack.c.b16 %v3950, %v3946
        %v4051 = vpack.c.b16 %v3951, %v3947
        %v4052 = vpack.c.b16 %v3952, %v3948
        %v4053 = vpack.c.b16 %v3953, %v3949
        %v4054 = vpack.c.b16 %v3958, %v3954
        %v4055 = vpack.c.b16 %v3959, %v3955
        %v4056 = vpack.c.b16 %v3960, %v3956
        %v4057 = vpack.c.b16 %v3961, %v3957
        %v4058 = vpack.c.b16 %v3966, %v3962
        %v4059 = vpack.c.b16 %v3967, %v3963
        %v4060 = vpack.c.b16 %v3968, %v3964
        %v4061 = vpack.c.b16 %v3969, %v3965
        %v4062 = vpack.c.b16 %v3974, %v3970
        %v4063 = vpack.c.b16 %v3975, %v3971
        %v4064 = vpack.c.b16 %v3976, %v3972
        %v4065 = vpack.c.b16 %v3977, %v3973
        %v4066 = vpack.c.b16 %v3982, %v3978
        %v4067 = vpack.c.b16 %v3983, %v3979
        %v4068 = vpack.c.b16 %v3984, %v3980
        %v4069 = vpack.c.b16 %v3985, %v3981
        %v4070 = vpack.c.b16 %v3990, %v3986
        %v4071 = vpack.c.b16 %v3991, %v3987
        %v4072 = vpack.c.b16 %v3992, %v3988
        %v4073 = vpack.c.b16 %v3993, %v3989
        %v4074 = vpack.c.b16 %v3998, %v3994
        %v4075 = vpack.c.b16 %v3999, %v3995
        %v4076 = vpack.c.b16 %v4000, %v3996
        %v4077 = vpack.c.b16 %v4001, %v3997
        %v4078 = vpack.c.b16 %v4006, %v4002
        %v4079 = vpack.c.b16 %v4007, %v4003
        %v4080 = vpack.c.b16 %v4008, %v4004
        %v4081 = vpack.c.b16 %v4009, %v4005
        %v4082 = vpack.c.b16 %v4014, %v4010
        %v4083 = vpack.c.b16 %v4015, %v4011
        %v4084 = vpack.c.b16 %v4016, %v4012
        %v4085 = vpack.c.b16 %v4017, %v4013
        %v4086 = vpack.c.b16 %v4022, %v4018
        %v4087 = vpack.c.b16 %v4023, %v4019
        %v4088 = vpack.c.b16 %v4024, %v4020
        %v4089 = vpack.c.b16 %v4025, %v4021
        %4154 = vmatpush.bf16.msra.mxu0 %v4054
        %4155 = vmatpush.bf16.msra.mxu0 %v4050
        %4156 = vmatpush.bf16.msra.mxu0 %v4046
        %4157 = vmatpush.bf16.msra.mxu0 %v4042
        %4158 = vmatpush.bf16.msra.mxu0 %v4038
        %4159 = vmatpush.bf16.msra.mxu0 %v4034
        %4160 = vmatpush.bf16.msra.mxu0 %v4030
        %4161 = vmatpush.bf16.msra.mxu0 %v4026
        %4162 = vmatmul.bf16.gmra.mxu0 %v3818
        %v4163 = vpop.f32.mrf.mxu0
        %v4164 = vadd.f32 0.0, %v4163
        %v4165 = vpop.f32.mrf.mxu0
        %v4166 = vadd.f32 0.0, %v4165
        %4167 = vmatmul.bf16.gmra.mxu0 %v3820
        %v4168 = vpop.f32.mrf.mxu0
        %v4169 = vadd.f32 0.0, %v4168
        %v4170 = vpop.f32.mrf.mxu0
        %v4171 = vadd.f32 0.0, %v4170
        %4172 = vmatmul.bf16.gmra.mxu0 %v3822
        %v4173 = vpop.f32.mrf.mxu0
        %v4174 = vadd.f32 0.0, %v4173
        %v4175 = vpop.f32.mrf.mxu0
        %v4176 = vadd.f32 0.0, %v4175
        %4177 = vmatmul.bf16.gmra.mxu0 %v3824
        %v4178 = vpop.f32.mrf.mxu0
        %v4179 = vadd.f32 0.0, %v4178
        %v4180 = vpop.f32.mrf.mxu0
        %v4181 = vadd.f32 0.0, %v4180
        %4182 = vdwg.mxu0
        %4183 = vmatpush.bf16.msra.mxu0 %v4086
        %4184 = vmatpush.bf16.msra.mxu0 %v4082
        %4185 = vmatpush.bf16.msra.mxu0 %v4078
        %4186 = vmatpush.bf16.msra.mxu0 %v4074
        %4187 = vmatpush.bf16.msra.mxu0 %v4070
        %4188 = vmatpush.bf16.msra.mxu0 %v4066
        %4189 = vmatpush.bf16.msra.mxu0 %v4062
        %4190 = vmatpush.bf16.msra.mxu0 %v4058
        %4191 = vmatmul.bf16.gmra.mxu0 %v3819
        %v4192 = vpop.f32.mrf.mxu0
        %v4193 = vadd.f32 %v4164, %v4192
        %v4194 = vpop.f32.mrf.mxu0
        %v4195 = vadd.f32 %v4166, %v4194
        %4196 = vmatmul.bf16.gmra.mxu0 %v3821
        %v4197 = vpop.f32.mrf.mxu0
        %v4198 = vadd.f32 %v4169, %v4197
        %v4199 = vpop.f32.mrf.mxu0
        %v4200 = vadd.f32 %v4171, %v4199
        %4201 = vmatmul.bf16.gmra.mxu0 %v3823
        %v4202 = vpop.f32.mrf.mxu0
        %v4203 = vadd.f32 %v4174, %v4202
        %v4204 = vpop.f32.mrf.mxu0
        %v4205 = vadd.f32 %v4176, %v4204
        %4206 = vmatmul.bf16.gmra.mxu0 %v3825
        %v4207 = vpop.f32.mrf.mxu0
        %v4208 = vadd.f32 %v4179, %v4207
        %v4209 = vpop.f32.mrf.mxu0
        %v4210 = vadd.f32 %v4181, %v4209
        %4211 = vdwg.mxu0
        %4212 = vmatpush.bf16.msra.mxu0 %v4055
        %4213 = vmatpush.bf16.msra.mxu0 %v4051
        %4214 = vmatpush.bf16.msra.mxu0 %v4047
        %4215 = vmatpush.bf16.msra.mxu0 %v4043
        %4216 = vmatpush.bf16.msra.mxu0 %v4039
        %4217 = vmatpush.bf16.msra.mxu0 %v4035
        %4218 = vmatpush.bf16.msra.mxu0 %v4031
        %4219 = vmatpush.bf16.msra.mxu0 %v4027
        %4220 = vmatmul.bf16.gmra.mxu0 %v3818
        %v4221 = vpop.f32.mrf.mxu0
        %v4222 = vadd.f32 0.0, %v4221
        %v4223 = vpop.f32.mrf.mxu0
        %v4224 = vadd.f32 0.0, %v4223
        %4225 = vmatmul.bf16.gmra.mxu0 %v3820
        %v4226 = vpop.f32.mrf.mxu0
        %v4227 = vadd.f32 0.0, %v4226
        %v4228 = vpop.f32.mrf.mxu0
        %v4229 = vadd.f32 0.0, %v4228
        %4230 = vmatmul.bf16.gmra.mxu0 %v3822
        %v4231 = vpop.f32.mrf.mxu0
        %v4232 = vadd.f32 0.0, %v4231
        %v4233 = vpop.f32.mrf.mxu0
        %v4234 = vadd.f32 0.0, %v4233
        %4235 = vmatmul.bf16.gmra.mxu0 %v3824
        %v4236 = vpop.f32.mrf.mxu0
        %v4237 = vadd.f32 0.0, %v4236
        %v4238 = vpop.f32.mrf.mxu0
        %v4239 = vadd.f32 0.0, %v4238
        %4240 = vdwg.mxu0
        %4241 = vmatpush.bf16.msra.mxu0 %v4087
        %4242 = vmatpush.bf16.msra.mxu0 %v4083
        %4243 = vmatpush.bf16.msra.mxu0 %v4079
        %4244 = vmatpush.bf16.msra.mxu0 %v4075
        %4245 = vmatpush.bf16.msra.mxu0 %v4071
        %4246 = vmatpush.bf16.msra.mxu0 %v4067
        %4247 = vmatpush.bf16.msra.mxu0 %v4063
        %4248 = vmatpush.bf16.msra.mxu0 %v4059
        %4249 = vmatmul.bf16.gmra.mxu0 %v3819
        %v4250 = vpop.f32.mrf.mxu0
        %v4251 = vadd.f32 %v4222, %v4250
        %v4252 = vpop.f32.mrf.mxu0
        %v4253 = vadd.f32 %v4224, %v4252
        %4254 = vmatmul.bf16.gmra.mxu0 %v3821
        %v4255 = vpop.f32.mrf.mxu0
        %v4256 = vadd.f32 %v4227, %v4255
        %v4257 = vpop.f32.mrf.mxu0
        %v4258 = vadd.f32 %v4229, %v4257
        %4259 = vmatmul.bf16.gmra.mxu0 %v3823
        %v4260 = vpop.f32.mrf.mxu0
        %v4261 = vadd.f32 %v4232, %v4260
        %v4262 = vpop.f32.mrf.mxu0
        %v4263 = vadd.f32 %v4234, %v4262
        %4264 = vmatmul.bf16.gmra.mxu0 %v3825
        %v4265 = vpop.f32.mrf.mxu0
        %v4266 = vadd.f32 %v4237, %v4265
        %v4267 = vpop.f32.mrf.mxu0
        %v4268 = vadd.f32 %v4239, %v4267
        %4269 = vdwg.mxu0
        %4270 = vmatpush.bf16.msra.mxu0 %v4056
        %4271 = vmatpush.bf16.msra.mxu0 %v4052
        %4272 = vmatpush.bf16.msra.mxu0 %v4048
        %4273 = vmatpush.bf16.msra.mxu0 %v4044
        %4274 = vmatpush.bf16.msra.mxu0 %v4040
        %4275 = vmatpush.bf16.msra.mxu0 %v4036
        %4276 = vmatpush.bf16.msra.mxu0 %v4032
        %4277 = vmatpush.bf16.msra.mxu0 %v4028
        %4278 = vmatmul.bf16.gmra.mxu0 %v3818
        %v4279 = vpop.f32.mrf.mxu0
        %v4280 = vadd.f32 0.0, %v4279
        %v4281 = vpop.f32.mrf.mxu0
        %v4282 = vadd.f32 0.0, %v4281
        %4283 = vmatmul.bf16.gmra.mxu0 %v3820
        %v4284 = vpop.f32.mrf.mxu0
        %v4285 = vadd.f32 0.0, %v4284
        %v4286 = vpop.f32.mrf.mxu0
        %v4287 = vadd.f32 0.0, %v4286
        %4288 = vmatmul.bf16.gmra.mxu0 %v3822
        %v4289 = vpop.f32.mrf.mxu0
        %v4290 = vadd.f32 0.0, %v4289
        %v4291 = vpop.f32.mrf.mxu0
        %v4292 = vadd.f32 0.0, %v4291
        %4293 = vmatmul.bf16.gmra.mxu0 %v3824
        %v4294 = vpop.f32.mrf.mxu0
        %v4295 = vadd.f32 0.0, %v4294
        %v4296 = vpop.f32.mrf.mxu0
        %v4297 = vadd.f32 0.0, %v4296
        %4298 = vdwg.mxu0
        %4299 = vmatpush.bf16.msra.mxu0 %v4088
        %4300 = vmatpush.bf16.msra.mxu0 %v4084
        %4301 = vmatpush.bf16.msra.mxu0 %v4080
        %4302 = vmatpush.bf16.msra.mxu0 %v4076
        %4303 = vmatpush.bf16.msra.mxu0 %v4072
        %4304 = vmatpush.bf16.msra.mxu0 %v4068
        %4305 = vmatpush.bf16.msra.mxu0 %v4064
        %4306 = vmatpush.bf16.msra.mxu0 %v4060
        %4307 = vmatmul.bf16.gmra.mxu0 %v3819
        %v4308 = vpop.f32.mrf.mxu0
        %v4309 = vadd.f32 %v4280, %v4308
        %v4310 = vpop.f32.mrf.mxu0
        %v4311 = vadd.f32 %v4282, %v4310
        %4312 = vmatmul.bf16.gmra.mxu0 %v3821
        %v4313 = vpop.f32.mrf.mxu0
        %v4314 = vadd.f32 %v4285, %v4313
        %v4315 = vpop.f32.mrf.mxu0
        %v4316 = vadd.f32 %v4287, %v4315
        %4317 = vmatmul.bf16.gmra.mxu0 %v3823
        %v4318 = vpop.f32.mrf.mxu0
        %v4319 = vadd.f32 %v4290, %v4318
        %v4320 = vpop.f32.mrf.mxu0
        %v4321 = vadd.f32 %v4292, %v4320
        %4322 = vmatmul.bf16.gmra.mxu0 %v3825
        %v4323 = vpop.f32.mrf.mxu0
        %v4324 = vadd.f32 %v4295, %v4323
        %v4325 = vpop.f32.mrf.mxu0
        %v4326 = vadd.f32 %v4297, %v4325
        %4327 = vdwg.mxu0
        %4328 = vmatpush.bf16.msra.mxu0 %v4057
        %4329 = vmatpush.bf16.msra.mxu0 %v4053
        %4330 = vmatpush.bf16.msra.mxu0 %v4049
        %4331 = vmatpush.bf16.msra.mxu0 %v4045
        %4332 = vmatpush.bf16.msra.mxu0 %v4041
        %4333 = vmatpush.bf16.msra.mxu0 %v4037
        %4334 = vmatpush.bf16.msra.mxu0 %v4033
        %4335 = vmatpush.bf16.msra.mxu0 %v4029
        %4336 = vmatmul.bf16.gmra.mxu0 %v3818
        %v4337 = vpop.f32.mrf.mxu0
        %v4338 = vadd.f32 0.0, %v4337
        %v4339 = vpop.f32.mrf.mxu0
        %v4340 = vadd.f32 0.0, %v4339
        %4341 = vmatmul.bf16.gmra.mxu0 %v3820
        %v4342 = vpop.f32.mrf.mxu0
        %v4343 = vadd.f32 0.0, %v4342
        %v4344 = vpop.f32.mrf.mxu0
        %v4345 = vadd.f32 0.0, %v4344
        %4346 = vmatmul.bf16.gmra.mxu0 %v3822
        %v4347 = vpop.f32.mrf.mxu0
        %v4348 = vadd.f32 0.0, %v4347
        %v4349 = vpop.f32.mrf.mxu0
        %v4350 = vadd.f32 0.0, %v4349
        %4351 = vmatmul.bf16.gmra.mxu0 %v3824
        %v4352 = vpop.f32.mrf.mxu0
        %v4353 = vadd.f32 0.0, %v4352
        %v4354 = vpop.f32.mrf.mxu0
        %v4355 = vadd.f32 0.0, %v4354
        %4356 = vdwg.mxu0
        %4357 = vmatpush.bf16.msra.mxu0 %v4089
        %4358 = vmatpush.bf16.msra.mxu0 %v4085
        %4359 = vmatpush.bf16.msra.mxu0 %v4081
        %4360 = vmatpush.bf16.msra.mxu0 %v4077
        %4361 = vmatpush.bf16.msra.mxu0 %v4073
        %4362 = vmatpush.bf16.msra.mxu0 %v4069
        %4363 = vmatpush.bf16.msra.mxu0 %v4065
        %4364 = vmatpush.bf16.msra.mxu0 %v4061
        %4365 = vmatmul.bf16.gmra.mxu0 %v3819
        %v4366 = vpop.f32.mrf.mxu0
        %v4367 = vadd.f32 %v4338, %v4366
        %v4368 = vpop.f32.mrf.mxu0
        %v4369 = vadd.f32 %v4340, %v4368
        %4370 = vmatmul.bf16.gmra.mxu0 %v3821
        %v4371 = vpop.f32.mrf.mxu0
        %v4372 = vadd.f32 %v4343, %v4371
        %v4373 = vpop.f32.mrf.mxu0
        %v4374 = vadd.f32 %v4345, %v4373
        %4375 = vmatmul.bf16.gmra.mxu0 %v3823
        %v4376 = vpop.f32.mrf.mxu0
        %v4377 = vadd.f32 %v4348, %v4376
        %v4378 = vpop.f32.mrf.mxu0
        %v4379 = vadd.f32 %v4350, %v4378
        %4380 = vmatmul.bf16.gmra.mxu0 %v3825
        %v4381 = vpop.f32.mrf.mxu0
        %v4382 = vadd.f32 %v4353, %v4381
        %v4383 = vpop.f32.mrf.mxu0
        %v4384 = vadd.f32 %v4355, %v4383
        %4385 = vdwg.mxu0
        %v4386 = vadd.f32 %v3714, %v4193
        %v4387 = vadd.f32 %v3715, %v4251
        %v4388 = vadd.f32 %v3716, %v4309
        %v4389 = vadd.f32 %v3717, %v4367
        %v4390 = vadd.f32 %v3718, %v4195
        %v4391 = vadd.f32 %v3719, %v4253
        %v4392 = vadd.f32 %v3720, %v4311
        %v4393 = vadd.f32 %v3721, %v4369
        %v4394 = vadd.f32 %v3722, %v4198
        %v4395 = vadd.f32 %v3723, %v4256
        %v4396 = vadd.f32 %v3724, %v4314
        %v4397 = vadd.f32 %v3725, %v4372
        %v4398 = vadd.f32 %v3726, %v4200
        %v4399 = vadd.f32 %v3727, %v4258
        %v4400 = vadd.f32 %v3728, %v4316
        %v4401 = vadd.f32 %v3729, %v4374
        %v4402 = vadd.f32 %v3730, %v4203
        %v4403 = vadd.f32 %v3731, %v4261
        %v4404 = vadd.f32 %v3732, %v4319
        %v4405 = vadd.f32 %v3733, %v4377
        %v4406 = vadd.f32 %v3734, %v4205
        %v4407 = vadd.f32 %v3735, %v4263
        %v4408 = vadd.f32 %v3736, %v4321
        %v4409 = vadd.f32 %v3737, %v4379
        %v4410 = vadd.f32 %v3738, %v4208
        %v4411 = vadd.f32 %v3739, %v4266
        %v4412 = vadd.f32 %v3740, %v4324
        %v4413 = vadd.f32 %v3741, %v4382
        %v4414 = vadd.f32 %v3742, %v4210
        %v4415 = vadd.f32 %v3743, %v4268
        %v4416 = vadd.f32 %v3744, %v4326
        %v4417 = vadd.f32 %v3745, %v4384
        %s4418 = scalar_lea.vmem [#allocation2], 3072
        %v4419 = vld [vmem:[%s4418] sm:$0xff]
        %v4420 = vld [vmem:[%s4418 + $0x8] sm:$0xff]
        %v4421 = vld [vmem:[%s4418 + $0x10] sm:$0xff]
        %v4422 = vld [vmem:[%s4418 + $0x18] sm:$0xff]
        %v4423 = vld [vmem:[%s4418 + $0x20] sm:$0xff]
        %v4424 = vld [vmem:[%s4418 + $0x28] sm:$0xff]
        %v4425 = vld [vmem:[%s4418 + $0x30] sm:$0xff]
        %v4426 = vld [vmem:[%s4418 + $0x38] sm:$0xff]
        %v4427 = vld [vmem:[%s4418 + $0x40] sm:$0xff]
        %v4428 = vld [vmem:[%s4418 + $0x48] sm:$0xff]
        %v4429 = vld [vmem:[%s4418 + $0x50] sm:$0xff]
        %v4430 = vld [vmem:[%s4418 + $0x58] sm:$0xff]
        %v4431 = vld [vmem:[%s4418 + $0x60] sm:$0xff]
        %v4432 = vld [vmem:[%s4418 + $0x68] sm:$0xff]
        %v4433 = vld [vmem:[%s4418 + $0x70] sm:$0xff]
        %v4434 = vld [vmem:[%s4418 + $0x78] sm:$0xff]
        %v4435 = vld [vmem:[%s4418 + $0x80] sm:$0xff]
        %v4436 = vld [vmem:[%s4418 + $0x88] sm:$0xff]
        %v4437 = vld [vmem:[%s4418 + $0x90] sm:$0xff]
        %v4438 = vld [vmem:[%s4418 + $0x98] sm:$0xff]
        %v4439 = vld [vmem:[%s4418 + $0xa0] sm:$0xff]
        %v4440 = vld [vmem:[%s4418 + $0xa8] sm:$0xff]
        %v4441 = vld [vmem:[%s4418 + $0xb0] sm:$0xff]
        %v4442 = vld [vmem:[%s4418 + $0xb8] sm:$0xff]
        %v4443 = vld [vmem:[%s4418 + $0xc0] sm:$0xff]
        %v4444 = vld [vmem:[%s4418 + $0xc8] sm:$0xff]
        %v4445 = vld [vmem:[%s4418 + $0xd0] sm:$0xff]
        %v4446 = vld [vmem:[%s4418 + $0xd8] sm:$0xff]
        %v4447 = vld [vmem:[%s4418 + $0xe0] sm:$0xff]
        %v4448 = vld [vmem:[%s4418 + $0xe8] sm:$0xff]
        %v4449 = vld [vmem:[%s4418 + $0xf0] sm:$0xff]
        %v4450 = vld [vmem:[%s4418 + $0xf8] sm:$0xff]
        %v4451 = vld [vmem:[%s4418 + $0x100] sm:$0xff]
        %v4452 = vld [vmem:[%s4418 + $0x108] sm:$0xff]
        %v4453 = vld [vmem:[%s4418 + $0x110] sm:$0xff]
        %v4454 = vld [vmem:[%s4418 + $0x118] sm:$0xff]
        %v4455 = vld [vmem:[%s4418 + $0x120] sm:$0xff]
        %v4456 = vld [vmem:[%s4418 + $0x128] sm:$0xff]
        %v4457 = vld [vmem:[%s4418 + $0x130] sm:$0xff]
        %v4458 = vld [vmem:[%s4418 + $0x138] sm:$0xff]
        %v4459 = vld [vmem:[%s4418 + $0x140] sm:$0xff]
        %v4460 = vld [vmem:[%s4418 + $0x148] sm:$0xff]
        %v4461 = vld [vmem:[%s4418 + $0x150] sm:$0xff]
        %v4462 = vld [vmem:[%s4418 + $0x158] sm:$0xff]
        %v4463 = vld [vmem:[%s4418 + $0x160] sm:$0xff]
        %v4464 = vld [vmem:[%s4418 + $0x168] sm:$0xff]
        %v4465 = vld [vmem:[%s4418 + $0x170] sm:$0xff]
        %v4466 = vld [vmem:[%s4418 + $0x178] sm:$0xff]
        %v4467 = vld [vmem:[%s4418 + $0x180] sm:$0xff]
        %v4468 = vld [vmem:[%s4418 + $0x188] sm:$0xff]
        %v4469 = vld [vmem:[%s4418 + $0x190] sm:$0xff]
        %v4470 = vld [vmem:[%s4418 + $0x198] sm:$0xff]
        %v4471 = vld [vmem:[%s4418 + $0x1a0] sm:$0xff]
        %v4472 = vld [vmem:[%s4418 + $0x1a8] sm:$0xff]
        %v4473 = vld [vmem:[%s4418 + $0x1b0] sm:$0xff]
        %v4474 = vld [vmem:[%s4418 + $0x1b8] sm:$0xff]
        %v4475 = vld [vmem:[%s4418 + $0x1c0] sm:$0xff]
        %v4476 = vld [vmem:[%s4418 + $0x1c8] sm:$0xff]
        %v4477 = vld [vmem:[%s4418 + $0x1d0] sm:$0xff]
        %v4478 = vld [vmem:[%s4418 + $0x1d8] sm:$0xff]
        %v4479 = vld [vmem:[%s4418 + $0x1e0] sm:$0xff]
        %v4480 = vld [vmem:[%s4418 + $0x1e8] sm:$0xff]
        %v4481 = vld [vmem:[%s4418 + $0x1f0] sm:$0xff]
        %v4482 = vld [vmem:[%s4418 + $0x1f8] sm:$0xff]
        %v4484 = vunpack.c.l.b16 %v251
        %v4485 = vunpack.c.h.b16 %v251
        %v4486 = vpack.c.b16 %v4484, %v2463
        %v4487 = vpack.c.b16 %v4485, %v2464
        %v4554 = vunpack.c.l.b16 %v4419
        %v4555 = vunpack.c.h.b16 %v4419
        %v4556 = vunpack.c.l.b16 %v4420
        %v4557 = vunpack.c.h.b16 %v4420
        %v4558 = vunpack.c.l.b16 %v4421
        %v4559 = vunpack.c.h.b16 %v4421
        %v4560 = vunpack.c.l.b16 %v4422
        %v4561 = vunpack.c.h.b16 %v4422
        %v4562 = vunpack.c.l.b16 %v4423
        %v4563 = vunpack.c.h.b16 %v4423
        %v4564 = vunpack.c.l.b16 %v4424
        %v4565 = vunpack.c.h.b16 %v4424
        %v4566 = vunpack.c.l.b16 %v4425
        %v4567 = vunpack.c.h.b16 %v4425
        %v4568 = vunpack.c.l.b16 %v4426
        %v4569 = vunpack.c.h.b16 %v4426
        %v4570 = vunpack.c.l.b16 %v4427
        %v4571 = vunpack.c.h.b16 %v4427
        %v4572 = vunpack.c.l.b16 %v4428
        %v4573 = vunpack.c.h.b16 %v4428
        %v4574 = vunpack.c.l.b16 %v4429
        %v4575 = vunpack.c.h.b16 %v4429
        %v4576 = vunpack.c.l.b16 %v4430
        %v4577 = vunpack.c.h.b16 %v4430
        %v4578 = vunpack.c.l.b16 %v4431
        %v4579 = vunpack.c.h.b16 %v4431
        %v4580 = vunpack.c.l.b16 %v4432
        %v4581 = vunpack.c.h.b16 %v4432
        %v4582 = vunpack.c.l.b16 %v4433
        %v4583 = vunpack.c.h.b16 %v4433
        %v4584 = vunpack.c.l.b16 %v4434
        %v4585 = vunpack.c.h.b16 %v4434
        %v4586 = vunpack.c.l.b16 %v4435
        %v4587 = vunpack.c.h.b16 %v4435
        %v4588 = vunpack.c.l.b16 %v4436
        %v4589 = vunpack.c.h.b16 %v4436
        %v4590 = vunpack.c.l.b16 %v4437
        %v4591 = vunpack.c.h.b16 %v4437
        %v4592 = vunpack.c.l.b16 %v4438
        %v4593 = vunpack.c.h.b16 %v4438
        %v4594 = vunpack.c.l.b16 %v4439
        %v4595 = vunpack.c.h.b16 %v4439
        %v4596 = vunpack.c.l.b16 %v4440
        %v4597 = vunpack.c.h.b16 %v4440
        %v4598 = vunpack.c.l.b16 %v4441
        %v4599 = vunpack.c.h.b16 %v4441
        %v4600 = vunpack.c.l.b16 %v4442
        %v4601 = vunpack.c.h.b16 %v4442
        %v4602 = vunpack.c.l.b16 %v4443
        %v4603 = vunpack.c.h.b16 %v4443
        %v4604 = vunpack.c.l.b16 %v4444
        %v4605 = vunpack.c.h.b16 %v4444
        %v4606 = vunpack.c.l.b16 %v4445
        %v4607 = vunpack.c.h.b16 %v4445
        %v4608 = vunpack.c.l.b16 %v4446
        %v4609 = vunpack.c.h.b16 %v4446
        %v4610 = vunpack.c.l.b16 %v4447
        %v4611 = vunpack.c.h.b16 %v4447
        %v4612 = vunpack.c.l.b16 %v4448
        %v4613 = vunpack.c.h.b16 %v4448
        %v4614 = vunpack.c.l.b16 %v4449
        %v4615 = vunpack.c.h.b16 %v4449
        %v4616 = vunpack.c.l.b16 %v4450
        %v4617 = vunpack.c.h.b16 %v4450
        %v4618 = vunpack.c.l.b16 %v4451
        %v4619 = vunpack.c.h.b16 %v4451
        %v4620 = vunpack.c.l.b16 %v4452
        %v4621 = vunpack.c.h.b16 %v4452
        %v4622 = vunpack.c.l.b16 %v4453
        %v4623 = vunpack.c.h.b16 %v4453
        %v4624 = vunpack.c.l.b16 %v4454
        %v4625 = vunpack.c.h.b16 %v4454
        %v4626 = vunpack.c.l.b16 %v4455
        %v4627 = vunpack.c.h.b16 %v4455
        %v4628 = vunpack.c.l.b16 %v4456
        %v4629 = vunpack.c.h.b16 %v4456
        %v4630 = vunpack.c.l.b16 %v4457
        %v4631 = vunpack.c.h.b16 %v4457
        %v4632 = vunpack.c.l.b16 %v4458
        %v4633 = vunpack.c.h.b16 %v4458
        %v4634 = vunpack.c.l.b16 %v4459
        %v4635 = vunpack.c.h.b16 %v4459
        %v4636 = vunpack.c.l.b16 %v4460
        %v4637 = vunpack.c.h.b16 %v4460
        %v4638 = vunpack.c.l.b16 %v4461
        %v4639 = vunpack.c.h.b16 %v4461
        %v4640 = vunpack.c.l.b16 %v4462
        %v4641 = vunpack.c.h.b16 %v4462
        %v4642 = vunpack.c.l.b16 %v4463
        %v4643 = vunpack.c.h.b16 %v4463
        %v4644 = vunpack.c.l.b16 %v4464
        %v4645 = vunpack.c.h.b16 %v4464
        %v4646 = vunpack.c.l.b16 %v4465
        %v4647 = vunpack.c.h.b16 %v4465
        %v4648 = vunpack.c.l.b16 %v4466
        %v4649 = vunpack.c.h.b16 %v4466
        %v4650 = vunpack.c.l.b16 %v4467
        %v4651 = vunpack.c.h.b16 %v4467
        %v4652 = vunpack.c.l.b16 %v4468
        %v4653 = vunpack.c.h.b16 %v4468
        %v4654 = vunpack.c.l.b16 %v4469
        %v4655 = vunpack.c.h.b16 %v4469
        %v4656 = vunpack.c.l.b16 %v4470
        %v4657 = vunpack.c.h.b16 %v4470
        %v4658 = vunpack.c.l.b16 %v4471
        %v4659 = vunpack.c.h.b16 %v4471
        %v4660 = vunpack.c.l.b16 %v4472
        %v4661 = vunpack.c.h.b16 %v4472
        %v4662 = vunpack.c.l.b16 %v4473
        %v4663 = vunpack.c.h.b16 %v4473
        %v4664 = vunpack.c.l.b16 %v4474
        %v4665 = vunpack.c.h.b16 %v4474
        %v4666 = vunpack.c.l.b16 %v4475
        %v4667 = vunpack.c.h.b16 %v4475
        %v4668 = vunpack.c.l.b16 %v4476
        %v4669 = vunpack.c.h.b16 %v4476
        %v4670 = vunpack.c.l.b16 %v4477
        %v4671 = vunpack.c.h.b16 %v4477
        %v4672 = vunpack.c.l.b16 %v4478
        %v4673 = vunpack.c.h.b16 %v4478
        %v4674 = vunpack.c.l.b16 %v4479
        %v4675 = vunpack.c.h.b16 %v4479
        %v4676 = vunpack.c.l.b16 %v4480
        %v4677 = vunpack.c.h.b16 %v4480
        %v4678 = vunpack.c.l.b16 %v4481
        %v4679 = vunpack.c.h.b16 %v4481
        %v4680 = vunpack.c.l.b16 %v4482
        %v4681 = vunpack.c.h.b16 %v4482
        %v4682 = vpack.c.b16 %v4558, %v4554
        %v4683 = vpack.c.b16 %v4559, %v4555
        %v4684 = vpack.c.b16 %v4560, %v4556
        %v4685 = vpack.c.b16 %v4561, %v4557
        %v4686 = vpack.c.b16 %v4566, %v4562
        %v4687 = vpack.c.b16 %v4567, %v4563
        %v4688 = vpack.c.b16 %v4568, %v4564
        %v4689 = vpack.c.b16 %v4569, %v4565
        %v4690 = vpack.c.b16 %v4574, %v4570
        %v4691 = vpack.c.b16 %v4575, %v4571
        %v4692 = vpack.c.b16 %v4576, %v4572
        %v4693 = vpack.c.b16 %v4577, %v4573
        %v4694 = vpack.c.b16 %v4582, %v4578
        %v4695 = vpack.c.b16 %v4583, %v4579
        %v4696 = vpack.c.b16 %v4584, %v4580
        %v4697 = vpack.c.b16 %v4585, %v4581
        %v4698 = vpack.c.b16 %v4590, %v4586
        %v4699 = vpack.c.b16 %v4591, %v4587
        %v4700 = vpack.c.b16 %v4592, %v4588
        %v4701 = vpack.c.b16 %v4593, %v4589
        %v4702 = vpack.c.b16 %v4598, %v4594
        %v4703 = vpack.c.b16 %v4599, %v4595
        %v4704 = vpack.c.b16 %v4600, %v4596
        %v4705 = vpack.c.b16 %v4601, %v4597
        %v4706 = vpack.c.b16 %v4606, %v4602
        %v4707 = vpack.c.b16 %v4607, %v4603
        %v4708 = vpack.c.b16 %v4608, %v4604
        %v4709 = vpack.c.b16 %v4609, %v4605
        %v4710 = vpack.c.b16 %v4614, %v4610
        %v4711 = vpack.c.b16 %v4615, %v4611
        %v4712 = vpack.c.b16 %v4616, %v4612
        %v4713 = vpack.c.b16 %v4617, %v4613
        %v4714 = vpack.c.b16 %v4622, %v4618
        %v4715 = vpack.c.b16 %v4623, %v4619
        %v4716 = vpack.c.b16 %v4624, %v4620
        %v4717 = vpack.c.b16 %v4625, %v4621
        %v4718 = vpack.c.b16 %v4630, %v4626
        %v4719 = vpack.c.b16 %v4631, %v4627
        %v4720 = vpack.c.b16 %v4632, %v4628
        %v4721 = vpack.c.b16 %v4633, %v4629
        %v4722 = vpack.c.b16 %v4638, %v4634
        %v4723 = vpack.c.b16 %v4639, %v4635
        %v4724 = vpack.c.b16 %v4640, %v4636
        %v4725 = vpack.c.b16 %v4641, %v4637
        %v4726 = vpack.c.b16 %v4646, %v4642
        %v4727 = vpack.c.b16 %v4647, %v4643
        %v4728 = vpack.c.b16 %v4648, %v4644
        %v4729 = vpack.c.b16 %v4649, %v4645
        %v4730 = vpack.c.b16 %v4654, %v4650
        %v4731 = vpack.c.b16 %v4655, %v4651
        %v4732 = vpack.c.b16 %v4656, %v4652
        %v4733 = vpack.c.b16 %v4657, %v4653
        %v4734 = vpack.c.b16 %v4662, %v4658
        %v4735 = vpack.c.b16 %v4663, %v4659
        %v4736 = vpack.c.b16 %v4664, %v4660
        %v4737 = vpack.c.b16 %v4665, %v4661
        %v4738 = vpack.c.b16 %v4670, %v4666
        %v4739 = vpack.c.b16 %v4671, %v4667
        %v4740 = vpack.c.b16 %v4672, %v4668
        %v4741 = vpack.c.b16 %v4673, %v4669
        %v4742 = vpack.c.b16 %v4678, %v4674
        %v4743 = vpack.c.b16 %v4679, %v4675
        %v4744 = vpack.c.b16 %v4680, %v4676
        %v4745 = vpack.c.b16 %v4681, %v4677
        %4810 = vmatpush.bf16.msra.mxu0 %v4710
        %4811 = vmatpush.bf16.msra.mxu0 %v4706
        %4812 = vmatpush.bf16.msra.mxu0 %v4702
        %4813 = vmatpush.bf16.msra.mxu0 %v4698
        %4814 = vmatpush.bf16.msra.mxu0 %v4694
        %4815 = vmatpush.bf16.msra.mxu0 %v4690
        %4816 = vmatpush.bf16.msra.mxu0 %v4686
        %4817 = vmatpush.bf16.msra.mxu0 %v4682
        %4818 = vmatmul.bf16.gmra.mxu0 %v1107
        %v4819 = vpop.f32.mrf.mxu0
        %v4820 = vadd.f32 0.0, %v4819
        %v4821 = vpop.f32.mrf.mxu0
        %v4822 = vadd.f32 0.0, %v4821
        %4823 = vmatmul.bf16.gmra.mxu0 %v1109
        %v4824 = vpop.f32.mrf.mxu0
        %v4825 = vadd.f32 0.0, %v4824
        %v4826 = vpop.f32.mrf.mxu0
        %v4827 = vadd.f32 0.0, %v4826
        %4828 = vmatmul.bf16.gmra.mxu0 %v1111
        %v4829 = vpop.f32.mrf.mxu0
        %v4830 = vadd.f32 0.0, %v4829
        %v4831 = vpop.f32.mrf.mxu0
        %v4832 = vadd.f32 0.0, %v4831
        %4833 = vmatmul.bf16.gmra.mxu0 %v4486
        %v4834 = vpop.f32.mrf.mxu0
        %v4835 = vadd.f32 0.0, %v4834
        %v4836 = vpop.f32.mrf.mxu0
        %v4837 = vadd.f32 0.0, %v4836
        %4838 = vdwg.mxu0
        %4839 = vmatpush.bf16.msra.mxu0 %v4742
        %4840 = vmatpush.bf16.msra.mxu0 %v4738
        %4841 = vmatpush.bf16.msra.mxu0 %v4734
        %4842 = vmatpush.bf16.msra.mxu0 %v4730
        %4843 = vmatpush.bf16.msra.mxu0 %v4726
        %4844 = vmatpush.bf16.msra.mxu0 %v4722
        %4845 = vmatpush.bf16.msra.mxu0 %v4718
        %4846 = vmatpush.bf16.msra.mxu0 %v4714
        %4847 = vmatmul.bf16.gmra.mxu0 %v1108
        %v4848 = vpop.f32.mrf.mxu0
        %v4849 = vadd.f32 %v4820, %v4848
        %v4850 = vpop.f32.mrf.mxu0
        %v4851 = vadd.f32 %v4822, %v4850
        %4852 = vmatmul.bf16.gmra.mxu0 %v1110
        %v4853 = vpop.f32.mrf.mxu0
        %v4854 = vadd.f32 %v4825, %v4853
        %v4855 = vpop.f32.mrf.mxu0
        %v4856 = vadd.f32 %v4827, %v4855
        %4857 = vmatmul.bf16.gmra.mxu0 %v1112
        %v4858 = vpop.f32.mrf.mxu0
        %v4859 = vadd.f32 %v4830, %v4858
        %v4860 = vpop.f32.mrf.mxu0
        %v4861 = vadd.f32 %v4832, %v4860
        %4862 = vmatmul.bf16.gmra.mxu0 %v4487
        %v4863 = vpop.f32.mrf.mxu0
        %v4864 = vadd.f32 %v4835, %v4863
        %v4865 = vpop.f32.mrf.mxu0
        %v4866 = vadd.f32 %v4837, %v4865
        %4867 = vdwg.mxu0
        %4868 = vmatpush.bf16.msra.mxu0 %v4711
        %4869 = vmatpush.bf16.msra.mxu0 %v4707
        %4870 = vmatpush.bf16.msra.mxu0 %v4703
        %4871 = vmatpush.bf16.msra.mxu0 %v4699
        %4872 = vmatpush.bf16.msra.mxu0 %v4695
        %4873 = vmatpush.bf16.msra.mxu0 %v4691
        %4874 = vmatpush.bf16.msra.mxu0 %v4687
        %4875 = vmatpush.bf16.msra.mxu0 %v4683
        %4876 = vmatmul.bf16.gmra.mxu0 %v1107
        %v4877 = vpop.f32.mrf.mxu0
        %v4878 = vadd.f32 0.0, %v4877
        %v4879 = vpop.f32.mrf.mxu0
        %v4880 = vadd.f32 0.0, %v4879
        %4881 = vmatmul.bf16.gmra.mxu0 %v1109
        %v4882 = vpop.f32.mrf.mxu0
        %v4883 = vadd.f32 0.0, %v4882
        %v4884 = vpop.f32.mrf.mxu0
        %v4885 = vadd.f32 0.0, %v4884
        %4886 = vmatmul.bf16.gmra.mxu0 %v1111
        %v4887 = vpop.f32.mrf.mxu0
        %v4888 = vadd.f32 0.0, %v4887
        %v4889 = vpop.f32.mrf.mxu0
        %v4890 = vadd.f32 0.0, %v4889
        %4891 = vmatmul.bf16.gmra.mxu0 %v4486
        %v4892 = vpop.f32.mrf.mxu0
        %v4893 = vadd.f32 0.0, %v4892
        %v4894 = vpop.f32.mrf.mxu0
        %v4895 = vadd.f32 0.0, %v4894
        %4896 = vdwg.mxu0
        %4897 = vmatpush.bf16.msra.mxu0 %v4743
        %4898 = vmatpush.bf16.msra.mxu0 %v4739
        %4899 = vmatpush.bf16.msra.mxu0 %v4735
        %4900 = vmatpush.bf16.msra.mxu0 %v4731
        %4901 = vmatpush.bf16.msra.mxu0 %v4727
        %4902 = vmatpush.bf16.msra.mxu0 %v4723
        %4903 = vmatpush.bf16.msra.mxu0 %v4719
        %4904 = vmatpush.bf16.msra.mxu0 %v4715
        %4905 = vmatmul.bf16.gmra.mxu0 %v1108
        %v4906 = vpop.f32.mrf.mxu0
        %v4907 = vadd.f32 %v4878, %v4906
        %v4908 = vpop.f32.mrf.mxu0
        %v4909 = vadd.f32 %v4880, %v4908
        %4910 = vmatmul.bf16.gmra.mxu0 %v1110
        %v4911 = vpop.f32.mrf.mxu0
        %v4912 = vadd.f32 %v4883, %v4911
        %v4913 = vpop.f32.mrf.mxu0
        %v4914 = vadd.f32 %v4885, %v4913
        %4915 = vmatmul.bf16.gmra.mxu0 %v1112
        %v4916 = vpop.f32.mrf.mxu0
        %v4917 = vadd.f32 %v4888, %v4916
        %v4918 = vpop.f32.mrf.mxu0
        %v4919 = vadd.f32 %v4890, %v4918
        %4920 = vmatmul.bf16.gmra.mxu0 %v4487
        %v4921 = vpop.f32.mrf.mxu0
        %v4922 = vadd.f32 %v4893, %v4921
        %v4923 = vpop.f32.mrf.mxu0
        %v4924 = vadd.f32 %v4895, %v4923
        %4925 = vdwg.mxu0
        %4926 = vmatpush.bf16.msra.mxu0 %v4712
        %4927 = vmatpush.bf16.msra.mxu0 %v4708
        %4928 = vmatpush.bf16.msra.mxu0 %v4704
        %4929 = vmatpush.bf16.msra.mxu0 %v4700
        %4930 = vmatpush.bf16.msra.mxu0 %v4696
        %4931 = vmatpush.bf16.msra.mxu0 %v4692
        %4932 = vmatpush.bf16.msra.mxu0 %v4688
        %4933 = vmatpush.bf16.msra.mxu0 %v4684
        %4934 = vmatmul.bf16.gmra.mxu0 %v1107
        %v4935 = vpop.f32.mrf.mxu0
        %v4936 = vadd.f32 0.0, %v4935
        %v4937 = vpop.f32.mrf.mxu0
        %v4938 = vadd.f32 0.0, %v4937
        %4939 = vmatmul.bf16.gmra.mxu0 %v1109
        %v4940 = vpop.f32.mrf.mxu0
        %v4941 = vadd.f32 0.0, %v4940
        %v4942 = vpop.f32.mrf.mxu0
        %v4943 = vadd.f32 0.0, %v4942
        %4944 = vmatmul.bf16.gmra.mxu0 %v1111
        %v4945 = vpop.f32.mrf.mxu0
        %v4946 = vadd.f32 0.0, %v4945
        %v4947 = vpop.f32.mrf.mxu0
        %v4948 = vadd.f32 0.0, %v4947
        %4949 = vmatmul.bf16.gmra.mxu0 %v4486
        %v4950 = vpop.f32.mrf.mxu0
        %v4951 = vadd.f32 0.0, %v4950
        %v4952 = vpop.f32.mrf.mxu0
        %v4953 = vadd.f32 0.0, %v4952
        %4954 = vdwg.mxu0
        %4955 = vmatpush.bf16.msra.mxu0 %v4744
        %4956 = vmatpush.bf16.msra.mxu0 %v4740
        %4957 = vmatpush.bf16.msra.mxu0 %v4736
        %4958 = vmatpush.bf16.msra.mxu0 %v4732
        %4959 = vmatpush.bf16.msra.mxu0 %v4728
        %4960 = vmatpush.bf16.msra.mxu0 %v4724
        %4961 = vmatpush.bf16.msra.mxu0 %v4720
        %4962 = vmatpush.bf16.msra.mxu0 %v4716
        %4963 = vmatmul.bf16.gmra.mxu0 %v1108
        %v4964 = vpop.f32.mrf.mxu0
        %v4965 = vadd.f32 %v4936, %v4964
        %v4966 = vpop.f32.mrf.mxu0
        %v4967 = vadd.f32 %v4938, %v4966
        %4968 = vmatmul.bf16.gmra.mxu0 %v1110
        %v4969 = vpop.f32.mrf.mxu0
        %v4970 = vadd.f32 %v4941, %v4969
        %v4971 = vpop.f32.mrf.mxu0
        %v4972 = vadd.f32 %v4943, %v4971
        %4973 = vmatmul.bf16.gmra.mxu0 %v1112
        %v4974 = vpop.f32.mrf.mxu0
        %v4975 = vadd.f32 %v4946, %v4974
        %v4976 = vpop.f32.mrf.mxu0
        %v4977 = vadd.f32 %v4948, %v4976
        %4978 = vmatmul.bf16.gmra.mxu0 %v4487
        %v4979 = vpop.f32.mrf.mxu0
        %v4980 = vadd.f32 %v4951, %v4979
        %v4981 = vpop.f32.mrf.mxu0
        %v4982 = vadd.f32 %v4953, %v4981
        %4983 = vdwg.mxu0
        %4984 = vmatpush.bf16.msra.mxu0 %v4713
        %4985 = vmatpush.bf16.msra.mxu0 %v4709
        %4986 = vmatpush.bf16.msra.mxu0 %v4705
        %4987 = vmatpush.bf16.msra.mxu0 %v4701
        %4988 = vmatpush.bf16.msra.mxu0 %v4697
        %4989 = vmatpush.bf16.msra.mxu0 %v4693
        %4990 = vmatpush.bf16.msra.mxu0 %v4689
        %4991 = vmatpush.bf16.msra.mxu0 %v4685
        %4992 = vmatmul.bf16.gmra.mxu0 %v1107
        %v4993 = vpop.f32.mrf.mxu0
        %v4994 = vadd.f32 0.0, %v4993
        %v4995 = vpop.f32.mrf.mxu0
        %v4996 = vadd.f32 0.0, %v4995
        %4997 = vmatmul.bf16.gmra.mxu0 %v1109
        %v4998 = vpop.f32.mrf.mxu0
        %v4999 = vadd.f32 0.0, %v4998
        %v5000 = vpop.f32.mrf.mxu0
        %v5001 = vadd.f32 0.0, %v5000
        %5002 = vmatmul.bf16.gmra.mxu0 %v1111
        %v5003 = vpop.f32.mrf.mxu0
        %v5004 = vadd.f32 0.0, %v5003
        %v5005 = vpop.f32.mrf.mxu0
        %v5006 = vadd.f32 0.0, %v5005
        %5007 = vmatmul.bf16.gmra.mxu0 %v4486
        %v5008 = vpop.f32.mrf.mxu0
        %v5009 = vadd.f32 0.0, %v5008
        %v5010 = vpop.f32.mrf.mxu0
        %v5011 = vadd.f32 0.0, %v5010
        %5012 = vdwg.mxu0
        %5013 = vmatpush.bf16.msra.mxu0 %v4745
        %5014 = vmatpush.bf16.msra.mxu0 %v4741
        %5015 = vmatpush.bf16.msra.mxu0 %v4737
        %5016 = vmatpush.bf16.msra.mxu0 %v4733
        %5017 = vmatpush.bf16.msra.mxu0 %v4729
        %5018 = vmatpush.bf16.msra.mxu0 %v4725
        %5019 = vmatpush.bf16.msra.mxu0 %v4721
        %5020 = vmatpush.bf16.msra.mxu0 %v4717
        %5021 = vmatmul.bf16.gmra.mxu0 %v1108
        %v5022 = vpop.f32.mrf.mxu0
        %v5023 = vadd.f32 %v4994, %v5022
        %v5024 = vpop.f32.mrf.mxu0
        %v5025 = vadd.f32 %v4996, %v5024
        %5026 = vmatmul.bf16.gmra.mxu0 %v1110
        %v5027 = vpop.f32.mrf.mxu0
        %v5028 = vadd.f32 %v4999, %v5027
        %v5029 = vpop.f32.mrf.mxu0
        %v5030 = vadd.f32 %v5001, %v5029
        %5031 = vmatmul.bf16.gmra.mxu0 %v1112
        %v5032 = vpop.f32.mrf.mxu0
        %v5033 = vadd.f32 %v5004, %v5032
        %v5034 = vpop.f32.mrf.mxu0
        %v5035 = vadd.f32 %v5006, %v5034
        %5036 = vmatmul.bf16.gmra.mxu0 %v4487
        %v5037 = vpop.f32.mrf.mxu0
        %v5038 = vadd.f32 %v5009, %v5037
        %v5039 = vpop.f32.mrf.mxu0
        %v5040 = vadd.f32 %v5011, %v5039
        %5041 = vdwg.mxu0
        %v5042 = vadd.f32 %v4386, %v4849
        %v5043 = vadd.f32 %v4387, %v4907
        %v5044 = vadd.f32 %v4388, %v4965
        %v5045 = vadd.f32 %v4389, %v5023
        %v5046 = vadd.f32 %v4390, %v4851
        %v5047 = vadd.f32 %v4391, %v4909
        %v5048 = vadd.f32 %v4392, %v4967
        %v5049 = vadd.f32 %v4393, %v5025
        %v5050 = vadd.f32 %v4394, %v4854
        %v5051 = vadd.f32 %v4395, %v4912
        %v5052 = vadd.f32 %v4396, %v4970
        %v5053 = vadd.f32 %v4397, %v5028
        %v5054 = vadd.f32 %v4398, %v4856
        %v5055 = vadd.f32 %v4399, %v4914
        %v5056 = vadd.f32 %v4400, %v4972
        %v5057 = vadd.f32 %v4401, %v5030
        %v5058 = vadd.f32 %v4402, %v4859
        %v5059 = vadd.f32 %v4403, %v4917
        %v5060 = vadd.f32 %v4404, %v4975
        %v5061 = vadd.f32 %v4405, %v5033
        %v5062 = vadd.f32 %v4406, %v4861
        %v5063 = vadd.f32 %v4407, %v4919
        %v5064 = vadd.f32 %v4408, %v4977
        %v5065 = vadd.f32 %v4409, %v5035
        %v5066 = vadd.f32 %v4410, %v4864
        %v5067 = vadd.f32 %v4411, %v4922
        %v5068 = vadd.f32 %v4412, %v4980
        %v5069 = vadd.f32 %v4413, %v5038
        %v5070 = vadd.f32 %v4414, %v4866
        %v5071 = vadd.f32 %v4415, %v4924
        %v5072 = vadd.f32 %v4416, %v4982
        %v5073 = vadd.f32 %v4417, %v5040
        %v5075 = vshrl.u32 %v251, 16
        %v5077 = vrot.slane %v5075, 4
        %v5078 = vshll.u32 %v251, 16
        %v5080 = vrot.slane %v5078, 5
        %v5081 = vor.u32 %v5077, %v5080
        %v5082 = vrot.slane %v5081, 4
        %v5084 = vshll.u32 %v252, 16
        %v5086 = vrot.slane %v5084, 5
        %v5087 = vsel %vm319, %v5082, %v5086
        %s5088 = scalar_lea.vmem [#allocation2], 3584
        %v5089 = vld [vmem:[%s5088] sm:$0xff]
        %v5090 = vld [vmem:[%s5088 + $0x8] sm:$0xff]
        %v5091 = vld [vmem:[%s5088 + $0x10] sm:$0xff]
        %v5092 = vld [vmem:[%s5088 + $0x18] sm:$0xff]
        %v5093 = vld [vmem:[%s5088 + $0x20] sm:$0xff]
        %v5094 = vld [vmem:[%s5088 + $0x28] sm:$0xff]
        %v5095 = vld [vmem:[%s5088 + $0x30] sm:$0xff]
        %v5096 = vld [vmem:[%s5088 + $0x38] sm:$0xff]
        %v5097 = vld [vmem:[%s5088 + $0x40] sm:$0xff]
        %v5098 = vld [vmem:[%s5088 + $0x48] sm:$0xff]
        %v5099 = vld [vmem:[%s5088 + $0x50] sm:$0xff]
        %v5100 = vld [vmem:[%s5088 + $0x58] sm:$0xff]
        %v5101 = vld [vmem:[%s5088 + $0x60] sm:$0xff]
        %v5102 = vld [vmem:[%s5088 + $0x68] sm:$0xff]
        %v5103 = vld [vmem:[%s5088 + $0x70] sm:$0xff]
        %v5104 = vld [vmem:[%s5088 + $0x78] sm:$0xff]
        %v5105 = vld [vmem:[%s5088 + $0x80] sm:$0xff]
        %v5106 = vld [vmem:[%s5088 + $0x88] sm:$0xff]
        %v5107 = vld [vmem:[%s5088 + $0x90] sm:$0xff]
        %v5108 = vld [vmem:[%s5088 + $0x98] sm:$0xff]
        %v5109 = vld [vmem:[%s5088 + $0xa0] sm:$0xff]
        %v5110 = vld [vmem:[%s5088 + $0xa8] sm:$0xff]
        %v5111 = vld [vmem:[%s5088 + $0xb0] sm:$0xff]
        %v5112 = vld [vmem:[%s5088 + $0xb8] sm:$0xff]
        %v5113 = vld [vmem:[%s5088 + $0xc0] sm:$0xff]
        %v5114 = vld [vmem:[%s5088 + $0xc8] sm:$0xff]
        %v5115 = vld [vmem:[%s5088 + $0xd0] sm:$0xff]
        %v5116 = vld [vmem:[%s5088 + $0xd8] sm:$0xff]
        %v5117 = vld [vmem:[%s5088 + $0xe0] sm:$0xff]
        %v5118 = vld [vmem:[%s5088 + $0xe8] sm:$0xff]
        %v5119 = vld [vmem:[%s5088 + $0xf0] sm:$0xff]
        %v5120 = vld [vmem:[%s5088 + $0xf8] sm:$0xff]
        %v5121 = vld [vmem:[%s5088 + $0x100] sm:$0xff]
        %v5122 = vld [vmem:[%s5088 + $0x108] sm:$0xff]
        %v5123 = vld [vmem:[%s5088 + $0x110] sm:$0xff]
        %v5124 = vld [vmem:[%s5088 + $0x118] sm:$0xff]
        %v5125 = vld [vmem:[%s5088 + $0x120] sm:$0xff]
        %v5126 = vld [vmem:[%s5088 + $0x128] sm:$0xff]
        %v5127 = vld [vmem:[%s5088 + $0x130] sm:$0xff]
        %v5128 = vld [vmem:[%s5088 + $0x138] sm:$0xff]
        %v5129 = vld [vmem:[%s5088 + $0x140] sm:$0xff]
        %v5130 = vld [vmem:[%s5088 + $0x148] sm:$0xff]
        %v5131 = vld [vmem:[%s5088 + $0x150] sm:$0xff]
        %v5132 = vld [vmem:[%s5088 + $0x158] sm:$0xff]
        %v5133 = vld [vmem:[%s5088 + $0x160] sm:$0xff]
        %v5134 = vld [vmem:[%s5088 + $0x168] sm:$0xff]
        %v5135 = vld [vmem:[%s5088 + $0x170] sm:$0xff]
        %v5136 = vld [vmem:[%s5088 + $0x178] sm:$0xff]
        %v5137 = vld [vmem:[%s5088 + $0x180] sm:$0xff]
        %v5138 = vld [vmem:[%s5088 + $0x188] sm:$0xff]
        %v5139 = vld [vmem:[%s5088 + $0x190] sm:$0xff]
        %v5140 = vld [vmem:[%s5088 + $0x198] sm:$0xff]
        %v5141 = vld [vmem:[%s5088 + $0x1a0] sm:$0xff]
        %v5142 = vld [vmem:[%s5088 + $0x1a8] sm:$0xff]
        %v5143 = vld [vmem:[%s5088 + $0x1b0] sm:$0xff]
        %v5144 = vld [vmem:[%s5088 + $0x1b8] sm:$0xff]
        %v5145 = vld [vmem:[%s5088 + $0x1c0] sm:$0xff]
        %v5146 = vld [vmem:[%s5088 + $0x1c8] sm:$0xff]
        %v5147 = vld [vmem:[%s5088 + $0x1d0] sm:$0xff]
        %v5148 = vld [vmem:[%s5088 + $0x1d8] sm:$0xff]
        %v5149 = vld [vmem:[%s5088 + $0x1e0] sm:$0xff]
        %v5150 = vld [vmem:[%s5088 + $0x1e8] sm:$0xff]
        %v5151 = vld [vmem:[%s5088 + $0x1f0] sm:$0xff]
        %v5152 = vld [vmem:[%s5088 + $0x1f8] sm:$0xff]
        %v5153 = vunpack.c.l.b16 %v5087
        %v5154 = vunpack.c.h.b16 %v5087
        %v5155 = vpack.c.b16 %v5153, %v3144
        %v5156 = vpack.c.b16 %v5154, %v3145
        %v5223 = vunpack.c.l.b16 %v5089
        %v5224 = vunpack.c.h.b16 %v5089
        %v5225 = vunpack.c.l.b16 %v5090
        %v5226 = vunpack.c.h.b16 %v5090
        %v5227 = vunpack.c.l.b16 %v5091
        %v5228 = vunpack.c.h.b16 %v5091
        %v5229 = vunpack.c.l.b16 %v5092
        %v5230 = vunpack.c.h.b16 %v5092
        %v5231 = vunpack.c.l.b16 %v5093
        %v5232 = vunpack.c.h.b16 %v5093
        %v5233 = vunpack.c.l.b16 %v5094
        %v5234 = vunpack.c.h.b16 %v5094
        %v5235 = vunpack.c.l.b16 %v5095
        %v5236 = vunpack.c.h.b16 %v5095
        %v5237 = vunpack.c.l.b16 %v5096
        %v5238 = vunpack.c.h.b16 %v5096
        %v5239 = vunpack.c.l.b16 %v5097
        %v5240 = vunpack.c.h.b16 %v5097
        %v5241 = vunpack.c.l.b16 %v5098
        %v5242 = vunpack.c.h.b16 %v5098
        %v5243 = vunpack.c.l.b16 %v5099
        %v5244 = vunpack.c.h.b16 %v5099
        %v5245 = vunpack.c.l.b16 %v5100
        %v5246 = vunpack.c.h.b16 %v5100
        %v5247 = vunpack.c.l.b16 %v5101
        %v5248 = vunpack.c.h.b16 %v5101
        %v5249 = vunpack.c.l.b16 %v5102
        %v5250 = vunpack.c.h.b16 %v5102
        %v5251 = vunpack.c.l.b16 %v5103
        %v5252 = vunpack.c.h.b16 %v5103
        %v5253 = vunpack.c.l.b16 %v5104
        %v5254 = vunpack.c.h.b16 %v5104
        %v5255 = vunpack.c.l.b16 %v5105
        %v5256 = vunpack.c.h.b16 %v5105
        %v5257 = vunpack.c.l.b16 %v5106
        %v5258 = vunpack.c.h.b16 %v5106
        %v5259 = vunpack.c.l.b16 %v5107
        %v5260 = vunpack.c.h.b16 %v5107
        %v5261 = vunpack.c.l.b16 %v5108
        %v5262 = vunpack.c.h.b16 %v5108
        %v5263 = vunpack.c.l.b16 %v5109
        %v5264 = vunpack.c.h.b16 %v5109
        %v5265 = vunpack.c.l.b16 %v5110
        %v5266 = vunpack.c.h.b16 %v5110
        %v5267 = vunpack.c.l.b16 %v5111
        %v5268 = vunpack.c.h.b16 %v5111
        %v5269 = vunpack.c.l.b16 %v5112
        %v5270 = vunpack.c.h.b16 %v5112
        %v5271 = vunpack.c.l.b16 %v5113
        %v5272 = vunpack.c.h.b16 %v5113
        %v5273 = vunpack.c.l.b16 %v5114
        %v5274 = vunpack.c.h.b16 %v5114
        %v5275 = vunpack.c.l.b16 %v5115
        %v5276 = vunpack.c.h.b16 %v5115
        %v5277 = vunpack.c.l.b16 %v5116
        %v5278 = vunpack.c.h.b16 %v5116
        %v5279 = vunpack.c.l.b16 %v5117
        %v5280 = vunpack.c.h.b16 %v5117
        %v5281 = vunpack.c.l.b16 %v5118
        %v5282 = vunpack.c.h.b16 %v5118
        %v5283 = vunpack.c.l.b16 %v5119
        %v5284 = vunpack.c.h.b16 %v5119
        %v5285 = vunpack.c.l.b16 %v5120
        %v5286 = vunpack.c.h.b16 %v5120
        %v5287 = vunpack.c.l.b16 %v5121
        %v5288 = vunpack.c.h.b16 %v5121
        %v5289 = vunpack.c.l.b16 %v5122
        %v5290 = vunpack.c.h.b16 %v5122
        %v5291 = vunpack.c.l.b16 %v5123
        %v5292 = vunpack.c.h.b16 %v5123
        %v5293 = vunpack.c.l.b16 %v5124
        %v5294 = vunpack.c.h.b16 %v5124
        %v5295 = vunpack.c.l.b16 %v5125
        %v5296 = vunpack.c.h.b16 %v5125
        %v5297 = vunpack.c.l.b16 %v5126
        %v5298 = vunpack.c.h.b16 %v5126
        %v5299 = vunpack.c.l.b16 %v5127
        %v5300 = vunpack.c.h.b16 %v5127
        %v5301 = vunpack.c.l.b16 %v5128
        %v5302 = vunpack.c.h.b16 %v5128
        %v5303 = vunpack.c.l.b16 %v5129
        %v5304 = vunpack.c.h.b16 %v5129
        %v5305 = vunpack.c.l.b16 %v5130
        %v5306 = vunpack.c.h.b16 %v5130
        %v5307 = vunpack.c.l.b16 %v5131
        %v5308 = vunpack.c.h.b16 %v5131
        %v5309 = vunpack.c.l.b16 %v5132
        %v5310 = vunpack.c.h.b16 %v5132
        %v5311 = vunpack.c.l.b16 %v5133
        %v5312 = vunpack.c.h.b16 %v5133
        %v5313 = vunpack.c.l.b16 %v5134
        %v5314 = vunpack.c.h.b16 %v5134
        %v5315 = vunpack.c.l.b16 %v5135
        %v5316 = vunpack.c.h.b16 %v5135
        %v5317 = vunpack.c.l.b16 %v5136
        %v5318 = vunpack.c.h.b16 %v5136
        %v5319 = vunpack.c.l.b16 %v5137
        %v5320 = vunpack.c.h.b16 %v5137
        %v5321 = vunpack.c.l.b16 %v5138
        %v5322 = vunpack.c.h.b16 %v5138
        %v5323 = vunpack.c.l.b16 %v5139
        %v5324 = vunpack.c.h.b16 %v5139
        %v5325 = vunpack.c.l.b16 %v5140
        %v5326 = vunpack.c.h.b16 %v5140
        %v5327 = vunpack.c.l.b16 %v5141
        %v5328 = vunpack.c.h.b16 %v5141
        %v5329 = vunpack.c.l.b16 %v5142
        %v5330 = vunpack.c.h.b16 %v5142
        %v5331 = vunpack.c.l.b16 %v5143
        %v5332 = vunpack.c.h.b16 %v5143
        %v5333 = vunpack.c.l.b16 %v5144
        %v5334 = vunpack.c.h.b16 %v5144
        %v5335 = vunpack.c.l.b16 %v5145
        %v5336 = vunpack.c.h.b16 %v5145
        %v5337 = vunpack.c.l.b16 %v5146
        %v5338 = vunpack.c.h.b16 %v5146
        %v5339 = vunpack.c.l.b16 %v5147
        %v5340 = vunpack.c.h.b16 %v5147
        %v5341 = vunpack.c.l.b16 %v5148
        %v5342 = vunpack.c.h.b16 %v5148
        %v5343 = vunpack.c.l.b16 %v5149
        %v5344 = vunpack.c.h.b16 %v5149
        %v5345 = vunpack.c.l.b16 %v5150
        %v5346 = vunpack.c.h.b16 %v5150
        %v5347 = vunpack.c.l.b16 %v5151
        %v5348 = vunpack.c.h.b16 %v5151
        %v5349 = vunpack.c.l.b16 %v5152
        %v5350 = vunpack.c.h.b16 %v5152
        %v5351 = vpack.c.b16 %v5227, %v5223
        %v5352 = vpack.c.b16 %v5228, %v5224
        %v5353 = vpack.c.b16 %v5229, %v5225
        %v5354 = vpack.c.b16 %v5230, %v5226
        %v5355 = vpack.c.b16 %v5235, %v5231
        %v5356 = vpack.c.b16 %v5236, %v5232
        %v5357 = vpack.c.b16 %v5237, %v5233
        %v5358 = vpack.c.b16 %v5238, %v5234
        %v5359 = vpack.c.b16 %v5243, %v5239
        %v5360 = vpack.c.b16 %v5244, %v5240
        %v5361 = vpack.c.b16 %v5245, %v5241
        %v5362 = vpack.c.b16 %v5246, %v5242
        %v5363 = vpack.c.b16 %v5251, %v5247
        %v5364 = vpack.c.b16 %v5252, %v5248
        %v5365 = vpack.c.b16 %v5253, %v5249
        %v5366 = vpack.c.b16 %v5254, %v5250
        %v5367 = vpack.c.b16 %v5259, %v5255
        %v5368 = vpack.c.b16 %v5260, %v5256
        %v5369 = vpack.c.b16 %v5261, %v5257
        %v5370 = vpack.c.b16 %v5262, %v5258
        %v5371 = vpack.c.b16 %v5267, %v5263
        %v5372 = vpack.c.b16 %v5268, %v5264
        %v5373 = vpack.c.b16 %v5269, %v5265
        %v5374 = vpack.c.b16 %v5270, %v5266
        %v5375 = vpack.c.b16 %v5275, %v5271
        %v5376 = vpack.c.b16 %v5276, %v5272
        %v5377 = vpack.c.b16 %v5277, %v5273
        %v5378 = vpack.c.b16 %v5278, %v5274
        %v5379 = vpack.c.b16 %v5283, %v5279
        %v5380 = vpack.c.b16 %v5284, %v5280
        %v5381 = vpack.c.b16 %v5285, %v5281
        %v5382 = vpack.c.b16 %v5286, %v5282
        %v5383 = vpack.c.b16 %v5291, %v5287
        %v5384 = vpack.c.b16 %v5292, %v5288
        %v5385 = vpack.c.b16 %v5293, %v5289
        %v5386 = vpack.c.b16 %v5294, %v5290
        %v5387 = vpack.c.b16 %v5299, %v5295
        %v5388 = vpack.c.b16 %v5300, %v5296
        %v5389 = vpack.c.b16 %v5301, %v5297
        %v5390 = vpack.c.b16 %v5302, %v5298
        %v5391 = vpack.c.b16 %v5307, %v5303
        %v5392 = vpack.c.b16 %v5308, %v5304
        %v5393 = vpack.c.b16 %v5309, %v5305
        %v5394 = vpack.c.b16 %v5310, %v5306
        %v5395 = vpack.c.b16 %v5315, %v5311
        %v5396 = vpack.c.b16 %v5316, %v5312
        %v5397 = vpack.c.b16 %v5317, %v5313
        %v5398 = vpack.c.b16 %v5318, %v5314
        %v5399 = vpack.c.b16 %v5323, %v5319
        %v5400 = vpack.c.b16 %v5324, %v5320
        %v5401 = vpack.c.b16 %v5325, %v5321
        %v5402 = vpack.c.b16 %v5326, %v5322
        %v5403 = vpack.c.b16 %v5331, %v5327
        %v5404 = vpack.c.b16 %v5332, %v5328
        %v5405 = vpack.c.b16 %v5333, %v5329
        %v5406 = vpack.c.b16 %v5334, %v5330
        %v5407 = vpack.c.b16 %v5339, %v5335
        %v5408 = vpack.c.b16 %v5340, %v5336
        %v5409 = vpack.c.b16 %v5341, %v5337
        %v5410 = vpack.c.b16 %v5342, %v5338
        %v5411 = vpack.c.b16 %v5347, %v5343
        %v5412 = vpack.c.b16 %v5348, %v5344
        %v5413 = vpack.c.b16 %v5349, %v5345
        %v5414 = vpack.c.b16 %v5350, %v5346
        %5479 = vmatpush.bf16.msra.mxu0 %v5379
        %5480 = vmatpush.bf16.msra.mxu0 %v5375
        %5481 = vmatpush.bf16.msra.mxu0 %v5371
        %5482 = vmatpush.bf16.msra.mxu0 %v5367
        %5483 = vmatpush.bf16.msra.mxu0 %v5363
        %5484 = vmatpush.bf16.msra.mxu0 %v5359
        %5485 = vmatpush.bf16.msra.mxu0 %v5355
        %5486 = vmatpush.bf16.msra.mxu0 %v5351
        %5487 = vmatmul.bf16.gmra.mxu0 %v515
        %v5488 = vpop.f32.mrf.mxu0
        %v5489 = vadd.f32 0.0, %v5488
        %v5490 = vpop.f32.mrf.mxu0
        %v5491 = vadd.f32 0.0, %v5490
        %5492 = vmatmul.bf16.gmra.mxu0 %v517
        %v5493 = vpop.f32.mrf.mxu0
        %v5494 = vadd.f32 0.0, %v5493
        %v5495 = vpop.f32.mrf.mxu0
        %v5496 = vadd.f32 0.0, %v5495
        %5497 = vmatmul.bf16.gmra.mxu0 %v519
        %v5498 = vpop.f32.mrf.mxu0
        %v5499 = vadd.f32 0.0, %v5498
        %v5500 = vpop.f32.mrf.mxu0
        %v5501 = vadd.f32 0.0, %v5500
        %5502 = vmatmul.bf16.gmra.mxu0 %v5155
        %v5503 = vpop.f32.mrf.mxu0
        %v5504 = vadd.f32 0.0, %v5503
        %v5505 = vpop.f32.mrf.mxu0
        %v5506 = vadd.f32 0.0, %v5505
        %5507 = vdwg.mxu0
        %5508 = vmatpush.bf16.msra.mxu0 %v5411
        %5509 = vmatpush.bf16.msra.mxu0 %v5407
        %5510 = vmatpush.bf16.msra.mxu0 %v5403
        %5511 = vmatpush.bf16.msra.mxu0 %v5399
        %5512 = vmatpush.bf16.msra.mxu0 %v5395
        %5513 = vmatpush.bf16.msra.mxu0 %v5391
        %5514 = vmatpush.bf16.msra.mxu0 %v5387
        %5515 = vmatpush.bf16.msra.mxu0 %v5383
        %5516 = vmatmul.bf16.gmra.mxu0 %v516
        %v5517 = vpop.f32.mrf.mxu0
        %v5518 = vadd.f32 %v5489, %v5517
        %v5519 = vpop.f32.mrf.mxu0
        %v5520 = vadd.f32 %v5491, %v5519
        %5521 = vmatmul.bf16.gmra.mxu0 %v518
        %v5522 = vpop.f32.mrf.mxu0
        %v5523 = vadd.f32 %v5494, %v5522
        %v5524 = vpop.f32.mrf.mxu0
        %v5525 = vadd.f32 %v5496, %v5524
        %5526 = vmatmul.bf16.gmra.mxu0 %v520
        %v5527 = vpop.f32.mrf.mxu0
        %v5528 = vadd.f32 %v5499, %v5527
        %v5529 = vpop.f32.mrf.mxu0
        %v5530 = vadd.f32 %v5501, %v5529
        %5531 = vmatmul.bf16.gmra.mxu0 %v5156
        %v5532 = vpop.f32.mrf.mxu0
        %v5533 = vadd.f32 %v5504, %v5532
        %v5534 = vpop.f32.mrf.mxu0
        %v5535 = vadd.f32 %v5506, %v5534
        %5536 = vdwg.mxu0
        %5537 = vmatpush.bf16.msra.mxu0 %v5380
        %5538 = vmatpush.bf16.msra.mxu0 %v5376
        %5539 = vmatpush.bf16.msra.mxu0 %v5372
        %5540 = vmatpush.bf16.msra.mxu0 %v5368
        %5541 = vmatpush.bf16.msra.mxu0 %v5364
        %5542 = vmatpush.bf16.msra.mxu0 %v5360
        %5543 = vmatpush.bf16.msra.mxu0 %v5356
        %5544 = vmatpush.bf16.msra.mxu0 %v5352
        %5545 = vmatmul.bf16.gmra.mxu0 %v515
        %v5546 = vpop.f32.mrf.mxu0
        %v5547 = vadd.f32 0.0, %v5546
        %v5548 = vpop.f32.mrf.mxu0
        %v5549 = vadd.f32 0.0, %v5548
        %5550 = vmatmul.bf16.gmra.mxu0 %v517
        %v5551 = vpop.f32.mrf.mxu0
        %v5552 = vadd.f32 0.0, %v5551
        %v5553 = vpop.f32.mrf.mxu0
        %v5554 = vadd.f32 0.0, %v5553
        %5555 = vmatmul.bf16.gmra.mxu0 %v519
        %v5556 = vpop.f32.mrf.mxu0
        %v5557 = vadd.f32 0.0, %v5556
        %v5558 = vpop.f32.mrf.mxu0
        %v5559 = vadd.f32 0.0, %v5558
        %5560 = vmatmul.bf16.gmra.mxu0 %v5155
        %v5561 = vpop.f32.mrf.mxu0
        %v5562 = vadd.f32 0.0, %v5561
        %v5563 = vpop.f32.mrf.mxu0
        %v5564 = vadd.f32 0.0, %v5563
        %5565 = vdwg.mxu0
        %5566 = vmatpush.bf16.msra.mxu0 %v5412
        %5567 = vmatpush.bf16.msra.mxu0 %v5408
        %5568 = vmatpush.bf16.msra.mxu0 %v5404
        %5569 = vmatpush.bf16.msra.mxu0 %v5400
        %5570 = vmatpush.bf16.msra.mxu0 %v5396
        %5571 = vmatpush.bf16.msra.mxu0 %v5392
        %5572 = vmatpush.bf16.msra.mxu0 %v5388
        %5573 = vmatpush.bf16.msra.mxu0 %v5384
        %5574 = vmatmul.bf16.gmra.mxu0 %v516
        %v5575 = vpop.f32.mrf.mxu0
        %v5576 = vadd.f32 %v5547, %v5575
        %v5577 = vpop.f32.mrf.mxu0
        %v5578 = vadd.f32 %v5549, %v5577
        %5579 = vmatmul.bf16.gmra.mxu0 %v518
        %v5580 = vpop.f32.mrf.mxu0
        %v5581 = vadd.f32 %v5552, %v5580
        %v5582 = vpop.f32.mrf.mxu0
        %v5583 = vadd.f32 %v5554, %v5582
        %5584 = vmatmul.bf16.gmra.mxu0 %v520
        %v5585 = vpop.f32.mrf.mxu0
        %v5586 = vadd.f32 %v5557, %v5585
        %v5587 = vpop.f32.mrf.mxu0
        %v5588 = vadd.f32 %v5559, %v5587
        %5589 = vmatmul.bf16.gmra.mxu0 %v5156
        %v5590 = vpop.f32.mrf.mxu0
        %v5591 = vadd.f32 %v5562, %v5590
        %v5592 = vpop.f32.mrf.mxu0
        %v5593 = vadd.f32 %v5564, %v5592
        %5594 = vdwg.mxu0
        %5595 = vmatpush.bf16.msra.mxu0 %v5381
        %5596 = vmatpush.bf16.msra.mxu0 %v5377
        %5597 = vmatpush.bf16.msra.mxu0 %v5373
        %5598 = vmatpush.bf16.msra.mxu0 %v5369
        %5599 = vmatpush.bf16.msra.mxu0 %v5365
        %5600 = vmatpush.bf16.msra.mxu0 %v5361
        %5601 = vmatpush.bf16.msra.mxu0 %v5357
        %5602 = vmatpush.bf16.msra.mxu0 %v5353
        %5603 = vmatmul.bf16.gmra.mxu0 %v515
        %v5604 = vpop.f32.mrf.mxu0
        %v5605 = vadd.f32 0.0, %v5604
        %v5606 = vpop.f32.mrf.mxu0
        %v5607 = vadd.f32 0.0, %v5606
        %5608 = vmatmul.bf16.gmra.mxu0 %v517
        %v5609 = vpop.f32.mrf.mxu0
        %v5610 = vadd.f32 0.0, %v5609
        %v5611 = vpop.f32.mrf.mxu0
        %v5612 = vadd.f32 0.0, %v5611
        %5613 = vmatmul.bf16.gmra.mxu0 %v519
        %v5614 = vpop.f32.mrf.mxu0
        %v5615 = vadd.f32 0.0, %v5614
        %v5616 = vpop.f32.mrf.mxu0
        %v5617 = vadd.f32 0.0, %v5616
        %5618 = vmatmul.bf16.gmra.mxu0 %v5155
        %v5619 = vpop.f32.mrf.mxu0
        %v5620 = vadd.f32 0.0, %v5619
        %v5621 = vpop.f32.mrf.mxu0
        %v5622 = vadd.f32 0.0, %v5621
        %5623 = vdwg.mxu0
        %5624 = vmatpush.bf16.msra.mxu0 %v5413
        %5625 = vmatpush.bf16.msra.mxu0 %v5409
        %5626 = vmatpush.bf16.msra.mxu0 %v5405
        %5627 = vmatpush.bf16.msra.mxu0 %v5401
        %5628 = vmatpush.bf16.msra.mxu0 %v5397
        %5629 = vmatpush.bf16.msra.mxu0 %v5393
        %5630 = vmatpush.bf16.msra.mxu0 %v5389
        %5631 = vmatpush.bf16.msra.mxu0 %v5385
        %5632 = vmatmul.bf16.gmra.mxu0 %v516
        %v5633 = vpop.f32.mrf.mxu0
        %v5634 = vadd.f32 %v5605, %v5633
        %v5635 = vpop.f32.mrf.mxu0
        %v5636 = vadd.f32 %v5607, %v5635
        %5637 = vmatmul.bf16.gmra.mxu0 %v518
        %v5638 = vpop.f32.mrf.mxu0
        %v5639 = vadd.f32 %v5610, %v5638
        %v5640 = vpop.f32.mrf.mxu0
        %v5641 = vadd.f32 %v5612, %v5640
        %5642 = vmatmul.bf16.gmra.mxu0 %v520
        %v5643 = vpop.f32.mrf.mxu0
        %v5644 = vadd.f32 %v5615, %v5643
        %v5645 = vpop.f32.mrf.mxu0
        %v5646 = vadd.f32 %v5617, %v5645
        %5647 = vmatmul.bf16.gmra.mxu0 %v5156
        %v5648 = vpop.f32.mrf.mxu0
        %v5649 = vadd.f32 %v5620, %v5648
        %v5650 = vpop.f32.mrf.mxu0
        %v5651 = vadd.f32 %v5622, %v5650
        %5652 = vdwg.mxu0
        %5653 = vmatpush.bf16.msra.mxu0 %v5382
        %5654 = vmatpush.bf16.msra.mxu0 %v5378
        %5655 = vmatpush.bf16.msra.mxu0 %v5374
        %5656 = vmatpush.bf16.msra.mxu0 %v5370
        %5657 = vmatpush.bf16.msra.mxu0 %v5366
        %5658 = vmatpush.bf16.msra.mxu0 %v5362
        %5659 = vmatpush.bf16.msra.mxu0 %v5358
        %5660 = vmatpush.bf16.msra.mxu0 %v5354
        %5661 = vmatmul.bf16.gmra.mxu0 %v515
        %v5662 = vpop.f32.mrf.mxu0
        %v5663 = vadd.f32 0.0, %v5662
        %v5664 = vpop.f32.mrf.mxu0
        %v5665 = vadd.f32 0.0, %v5664
        %5666 = vmatmul.bf16.gmra.mxu0 %v517
        %v5667 = vpop.f32.mrf.mxu0
        %v5668 = vadd.f32 0.0, %v5667
        %v5669 = vpop.f32.mrf.mxu0
        %v5670 = vadd.f32 0.0, %v5669
        %5671 = vmatmul.bf16.gmra.mxu0 %v519
        %v5672 = vpop.f32.mrf.mxu0
        %v5673 = vadd.f32 0.0, %v5672
        %v5674 = vpop.f32.mrf.mxu0
        %v5675 = vadd.f32 0.0, %v5674
        %5676 = vmatmul.bf16.gmra.mxu0 %v5155
        %v5677 = vpop.f32.mrf.mxu0
        %v5678 = vadd.f32 0.0, %v5677
        %v5679 = vpop.f32.mrf.mxu0
        %v5680 = vadd.f32 0.0, %v5679
        %5681 = vdwg.mxu0
        %5682 = vmatpush.bf16.msra.mxu0 %v5414
        %5683 = vmatpush.bf16.msra.mxu0 %v5410
        %5684 = vmatpush.bf16.msra.mxu0 %v5406
        %5685 = vmatpush.bf16.msra.mxu0 %v5402
        %5686 = vmatpush.bf16.msra.mxu0 %v5398
        %5687 = vmatpush.bf16.msra.mxu0 %v5394
        %5688 = vmatpush.bf16.msra.mxu0 %v5390
        %5689 = vmatpush.bf16.msra.mxu0 %v5386
        %5690 = vmatmul.bf16.gmra.mxu0 %v516
        %v5691 = vpop.f32.mrf.mxu0
        %v5692 = vadd.f32 %v5663, %v5691
        %v5693 = vpop.f32.mrf.mxu0
        %v5694 = vadd.f32 %v5665, %v5693
        %5695 = vmatmul.bf16.gmra.mxu0 %v518
        %v5696 = vpop.f32.mrf.mxu0
        %v5697 = vadd.f32 %v5668, %v5696
        %v5698 = vpop.f32.mrf.mxu0
        %v5699 = vadd.f32 %v5670, %v5698
        %5700 = vmatmul.bf16.gmra.mxu0 %v520
        %v5701 = vpop.f32.mrf.mxu0
        %v5702 = vadd.f32 %v5673, %v5701
        %v5703 = vpop.f32.mrf.mxu0
        %v5704 = vadd.f32 %v5675, %v5703
        %5705 = vmatmul.bf16.gmra.mxu0 %v5156
        %v5706 = vpop.f32.mrf.mxu0
        %v5707 = vadd.f32 %v5678, %v5706
        %v5708 = vpop.f32.mrf.mxu0
        %v5709 = vadd.f32 %v5680, %v5708
        %5710 = vdwg.mxu0
        %v5711 = vadd.f32 %v5042, %v5518
        %v5712 = vadd.f32 %v5043, %v5576
        %v5713 = vadd.f32 %v5044, %v5634
        %v5714 = vadd.f32 %v5045, %v5692
        %v5715 = vadd.f32 %v5046, %v5520
        %v5716 = vadd.f32 %v5047, %v5578
        %v5717 = vadd.f32 %v5048, %v5636
        %v5718 = vadd.f32 %v5049, %v5694
        %v5719 = vadd.f32 %v5050, %v5523
        %v5720 = vadd.f32 %v5051, %v5581
        %v5721 = vadd.f32 %v5052, %v5639
        %v5722 = vadd.f32 %v5053, %v5697
        %v5723 = vadd.f32 %v5054, %v5525
        %v5724 = vadd.f32 %v5055, %v5583
        %v5725 = vadd.f32 %v5056, %v5641
        %v5726 = vadd.f32 %v5057, %v5699
        %v5727 = vadd.f32 %v5058, %v5528
        %v5728 = vadd.f32 %v5059, %v5586
        %v5729 = vadd.f32 %v5060, %v5644
        %v5730 = vadd.f32 %v5061, %v5702
        %v5731 = vadd.f32 %v5062, %v5530
        %v5732 = vadd.f32 %v5063, %v5588
        %v5733 = vadd.f32 %v5064, %v5646
        %v5734 = vadd.f32 %v5065, %v5704
        %v5735 = vadd.f32 %v5066, %v5533
        %v5736 = vadd.f32 %v5067, %v5591
        %v5737 = vadd.f32 %v5068, %v5649
        %v5738 = vadd.f32 %v5069, %v5707
        %v5739 = vadd.f32 %v5070, %v5535
        %v5740 = vadd.f32 %v5071, %v5593
        %v5741 = vadd.f32 %v5072, %v5651
        %v5742 = vadd.f32 %v5073, %v5709
        %v5744 = vrot.slane %v251, 5
        %v5745 = vrot.slane %v5744, 4
        %v5746 = vrot.slane %v252, 5
        %v5747 = vsel %vm1683, %v5745, %v5746
        %s5748 = scalar_lea.vmem [#allocation2], 4096
        %v5749 = vld [vmem:[%s5748] sm:$0xff]
        %v5750 = vld [vmem:[%s5748 + $0x8] sm:$0xff]
        %v5751 = vld [vmem:[%s5748 + $0x10] sm:$0xff]
        %v5752 = vld [vmem:[%s5748 + $0x18] sm:$0xff]
        %v5753 = vld [vmem:[%s5748 + $0x20] sm:$0xff]
        %v5754 = vld [vmem:[%s5748 + $0x28] sm:$0xff]
        %v5755 = vld [vmem:[%s5748 + $0x30] sm:$0xff]
        %v5756 = vld [vmem:[%s5748 + $0x38] sm:$0xff]
        %v5757 = vld [vmem:[%s5748 + $0x40] sm:$0xff]
        %v5758 = vld [vmem:[%s5748 + $0x48] sm:$0xff]
        %v5759 = vld [vmem:[%s5748 + $0x50] sm:$0xff]
        %v5760 = vld [vmem:[%s5748 + $0x58] sm:$0xff]
        %v5761 = vld [vmem:[%s5748 + $0x60] sm:$0xff]
        %v5762 = vld [vmem:[%s5748 + $0x68] sm:$0xff]
        %v5763 = vld [vmem:[%s5748 + $0x70] sm:$0xff]
        %v5764 = vld [vmem:[%s5748 + $0x78] sm:$0xff]
        %v5765 = vld [vmem:[%s5748 + $0x80] sm:$0xff]
        %v5766 = vld [vmem:[%s5748 + $0x88] sm:$0xff]
        %v5767 = vld [vmem:[%s5748 + $0x90] sm:$0xff]
        %v5768 = vld [vmem:[%s5748 + $0x98] sm:$0xff]
        %v5769 = vld [vmem:[%s5748 + $0xa0] sm:$0xff]
        %v5770 = vld [vmem:[%s5748 + $0xa8] sm:$0xff]
        %v5771 = vld [vmem:[%s5748 + $0xb0] sm:$0xff]
        %v5772 = vld [vmem:[%s5748 + $0xb8] sm:$0xff]
        %v5773 = vld [vmem:[%s5748 + $0xc0] sm:$0xff]
        %v5774 = vld [vmem:[%s5748 + $0xc8] sm:$0xff]
        %v5775 = vld [vmem:[%s5748 + $0xd0] sm:$0xff]
        %v5776 = vld [vmem:[%s5748 + $0xd8] sm:$0xff]
        %v5777 = vld [vmem:[%s5748 + $0xe0] sm:$0xff]
        %v5778 = vld [vmem:[%s5748 + $0xe8] sm:$0xff]
        %v5779 = vld [vmem:[%s5748 + $0xf0] sm:$0xff]
        %v5780 = vld [vmem:[%s5748 + $0xf8] sm:$0xff]
        %v5781 = vld [vmem:[%s5748 + $0x100] sm:$0xff]
        %v5782 = vld [vmem:[%s5748 + $0x108] sm:$0xff]
        %v5783 = vld [vmem:[%s5748 + $0x110] sm:$0xff]
        %v5784 = vld [vmem:[%s5748 + $0x118] sm:$0xff]
        %v5785 = vld [vmem:[%s5748 + $0x120] sm:$0xff]
        %v5786 = vld [vmem:[%s5748 + $0x128] sm:$0xff]
        %v5787 = vld [vmem:[%s5748 + $0x130] sm:$0xff]
        %v5788 = vld [vmem:[%s5748 + $0x138] sm:$0xff]
        %v5789 = vld [vmem:[%s5748 + $0x140] sm:$0xff]
        %v5790 = vld [vmem:[%s5748 + $0x148] sm:$0xff]
        %v5791 = vld [vmem:[%s5748 + $0x150] sm:$0xff]
        %v5792 = vld [vmem:[%s5748 + $0x158] sm:$0xff]
        %v5793 = vld [vmem:[%s5748 + $0x160] sm:$0xff]
        %v5794 = vld [vmem:[%s5748 + $0x168] sm:$0xff]
        %v5795 = vld [vmem:[%s5748 + $0x170] sm:$0xff]
        %v5796 = vld [vmem:[%s5748 + $0x178] sm:$0xff]
        %v5797 = vld [vmem:[%s5748 + $0x180] sm:$0xff]
        %v5798 = vld [vmem:[%s5748 + $0x188] sm:$0xff]
        %v5799 = vld [vmem:[%s5748 + $0x190] sm:$0xff]
        %v5800 = vld [vmem:[%s5748 + $0x198] sm:$0xff]
        %v5801 = vld [vmem:[%s5748 + $0x1a0] sm:$0xff]
        %v5802 = vld [vmem:[%s5748 + $0x1a8] sm:$0xff]
        %v5803 = vld [vmem:[%s5748 + $0x1b0] sm:$0xff]
        %v5804 = vld [vmem:[%s5748 + $0x1b8] sm:$0xff]
        %v5805 = vld [vmem:[%s5748 + $0x1c0] sm:$0xff]
        %v5806 = vld [vmem:[%s5748 + $0x1c8] sm:$0xff]
        %v5807 = vld [vmem:[%s5748 + $0x1d0] sm:$0xff]
        %v5808 = vld [vmem:[%s5748 + $0x1d8] sm:$0xff]
        %v5809 = vld [vmem:[%s5748 + $0x1e0] sm:$0xff]
        %v5810 = vld [vmem:[%s5748 + $0x1e8] sm:$0xff]
        %v5811 = vld [vmem:[%s5748 + $0x1f0] sm:$0xff]
        %v5812 = vld [vmem:[%s5748 + $0x1f8] sm:$0xff]
        %v5813 = vunpack.c.l.b16 %v5747
        %v5814 = vunpack.c.h.b16 %v5747
        %v5815 = vpack.c.b16 %v5813, %v3816
        %v5816 = vpack.c.b16 %v5814, %v3817
        %v5883 = vunpack.c.l.b16 %v5749
        %v5884 = vunpack.c.h.b16 %v5749
        %v5885 = vunpack.c.l.b16 %v5750
        %v5886 = vunpack.c.h.b16 %v5750
        %v5887 = vunpack.c.l.b16 %v5751
        %v5888 = vunpack.c.h.b16 %v5751
        %v5889 = vunpack.c.l.b16 %v5752
        %v5890 = vunpack.c.h.b16 %v5752
        %v5891 = vunpack.c.l.b16 %v5753
        %v5892 = vunpack.c.h.b16 %v5753
        %v5893 = vunpack.c.l.b16 %v5754
        %v5894 = vunpack.c.h.b16 %v5754
        %v5895 = vunpack.c.l.b16 %v5755
        %v5896 = vunpack.c.h.b16 %v5755
        %v5897 = vunpack.c.l.b16 %v5756
        %v5898 = vunpack.c.h.b16 %v5756
        %v5899 = vunpack.c.l.b16 %v5757
        %v5900 = vunpack.c.h.b16 %v5757
        %v5901 = vunpack.c.l.b16 %v5758
        %v5902 = vunpack.c.h.b16 %v5758
        %v5903 = vunpack.c.l.b16 %v5759
        %v5904 = vunpack.c.h.b16 %v5759
        %v5905 = vunpack.c.l.b16 %v5760
        %v5906 = vunpack.c.h.b16 %v5760
        %v5907 = vunpack.c.l.b16 %v5761
        %v5908 = vunpack.c.h.b16 %v5761
        %v5909 = vunpack.c.l.b16 %v5762
        %v5910 = vunpack.c.h.b16 %v5762
        %v5911 = vunpack.c.l.b16 %v5763
        %v5912 = vunpack.c.h.b16 %v5763
        %v5913 = vunpack.c.l.b16 %v5764
        %v5914 = vunpack.c.h.b16 %v5764
        %v5915 = vunpack.c.l.b16 %v5765
        %v5916 = vunpack.c.h.b16 %v5765
        %v5917 = vunpack.c.l.b16 %v5766
        %v5918 = vunpack.c.h.b16 %v5766
        %v5919 = vunpack.c.l.b16 %v5767
        %v5920 = vunpack.c.h.b16 %v5767
        %v5921 = vunpack.c.l.b16 %v5768
        %v5922 = vunpack.c.h.b16 %v5768
        %v5923 = vunpack.c.l.b16 %v5769
        %v5924 = vunpack.c.h.b16 %v5769
        %v5925 = vunpack.c.l.b16 %v5770
        %v5926 = vunpack.c.h.b16 %v5770
        %v5927 = vunpack.c.l.b16 %v5771
        %v5928 = vunpack.c.h.b16 %v5771
        %v5929 = vunpack.c.l.b16 %v5772
        %v5930 = vunpack.c.h.b16 %v5772
        %v5931 = vunpack.c.l.b16 %v5773
        %v5932 = vunpack.c.h.b16 %v5773
        %v5933 = vunpack.c.l.b16 %v5774
        %v5934 = vunpack.c.h.b16 %v5774
        %v5935 = vunpack.c.l.b16 %v5775
        %v5936 = vunpack.c.h.b16 %v5775
        %v5937 = vunpack.c.l.b16 %v5776
        %v5938 = vunpack.c.h.b16 %v5776
        %v5939 = vunpack.c.l.b16 %v5777
        %v5940 = vunpack.c.h.b16 %v5777
        %v5941 = vunpack.c.l.b16 %v5778
        %v5942 = vunpack.c.h.b16 %v5778
        %v5943 = vunpack.c.l.b16 %v5779
        %v5944 = vunpack.c.h.b16 %v5779
        %v5945 = vunpack.c.l.b16 %v5780
        %v5946 = vunpack.c.h.b16 %v5780
        %v5947 = vunpack.c.l.b16 %v5781
        %v5948 = vunpack.c.h.b16 %v5781
        %v5949 = vunpack.c.l.b16 %v5782
        %v5950 = vunpack.c.h.b16 %v5782
        %v5951 = vunpack.c.l.b16 %v5783
        %v5952 = vunpack.c.h.b16 %v5783
        %v5953 = vunpack.c.l.b16 %v5784
        %v5954 = vunpack.c.h.b16 %v5784
        %v5955 = vunpack.c.l.b16 %v5785
        %v5956 = vunpack.c.h.b16 %v5785
        %v5957 = vunpack.c.l.b16 %v5786
        %v5958 = vunpack.c.h.b16 %v5786
        %v5959 = vunpack.c.l.b16 %v5787
        %v5960 = vunpack.c.h.b16 %v5787
        %v5961 = vunpack.c.l.b16 %v5788
        %v5962 = vunpack.c.h.b16 %v5788
        %v5963 = vunpack.c.l.b16 %v5789
        %v5964 = vunpack.c.h.b16 %v5789
        %v5965 = vunpack.c.l.b16 %v5790
        %v5966 = vunpack.c.h.b16 %v5790
        %v5967 = vunpack.c.l.b16 %v5791
        %v5968 = vunpack.c.h.b16 %v5791
        %v5969 = vunpack.c.l.b16 %v5792
        %v5970 = vunpack.c.h.b16 %v5792
        %v5971 = vunpack.c.l.b16 %v5793
        %v5972 = vunpack.c.h.b16 %v5793
        %v5973 = vunpack.c.l.b16 %v5794
        %v5974 = vunpack.c.h.b16 %v5794
        %v5975 = vunpack.c.l.b16 %v5795
        %v5976 = vunpack.c.h.b16 %v5795
        %v5977 = vunpack.c.l.b16 %v5796
        %v5978 = vunpack.c.h.b16 %v5796
        %v5979 = vunpack.c.l.b16 %v5797
        %v5980 = vunpack.c.h.b16 %v5797
        %v5981 = vunpack.c.l.b16 %v5798
        %v5982 = vunpack.c.h.b16 %v5798
        %v5983 = vunpack.c.l.b16 %v5799
        %v5984 = vunpack.c.h.b16 %v5799
        %v5985 = vunpack.c.l.b16 %v5800
        %v5986 = vunpack.c.h.b16 %v5800
        %v5987 = vunpack.c.l.b16 %v5801
        %v5988 = vunpack.c.h.b16 %v5801
        %v5989 = vunpack.c.l.b16 %v5802
        %v5990 = vunpack.c.h.b16 %v5802
        %v5991 = vunpack.c.l.b16 %v5803
        %v5992 = vunpack.c.h.b16 %v5803
        %v5993 = vunpack.c.l.b16 %v5804
        %v5994 = vunpack.c.h.b16 %v5804
        %v5995 = vunpack.c.l.b16 %v5805
        %v5996 = vunpack.c.h.b16 %v5805
        %v5997 = vunpack.c.l.b16 %v5806
        %v5998 = vunpack.c.h.b16 %v5806
        %v5999 = vunpack.c.l.b16 %v5807
        %v6000 = vunpack.c.h.b16 %v5807
        %v6001 = vunpack.c.l.b16 %v5808
        %v6002 = vunpack.c.h.b16 %v5808
        %v6003 = vunpack.c.l.b16 %v5809
        %v6004 = vunpack.c.h.b16 %v5809
        %v6005 = vunpack.c.l.b16 %v5810
        %v6006 = vunpack.c.h.b16 %v5810
        %v6007 = vunpack.c.l.b16 %v5811
        %v6008 = vunpack.c.h.b16 %v5811
        %v6009 = vunpack.c.l.b16 %v5812
        %v6010 = vunpack.c.h.b16 %v5812
        %v6011 = vpack.c.b16 %v5887, %v5883
        %v6012 = vpack.c.b16 %v5888, %v5884
        %v6013 = vpack.c.b16 %v5889, %v5885
        %v6014 = vpack.c.b16 %v5890, %v5886
        %v6015 = vpack.c.b16 %v5895, %v5891
        %v6016 = vpack.c.b16 %v5896, %v5892
        %v6017 = vpack.c.b16 %v5897, %v5893
        %v6018 = vpack.c.b16 %v5898, %v5894
        %v6019 = vpack.c.b16 %v5903, %v5899
        %v6020 = vpack.c.b16 %v5904, %v5900
        %v6021 = vpack.c.b16 %v5905, %v5901
        %v6022 = vpack.c.b16 %v5906, %v5902
        %v6023 = vpack.c.b16 %v5911, %v5907
        %v6024 = vpack.c.b16 %v5912, %v5908
        %v6025 = vpack.c.b16 %v5913, %v5909
        %v6026 = vpack.c.b16 %v5914, %v5910
        %v6027 = vpack.c.b16 %v5919, %v5915
        %v6028 = vpack.c.b16 %v5920, %v5916
        %v6029 = vpack.c.b16 %v5921, %v5917
        %v6030 = vpack.c.b16 %v5922, %v5918
        %v6031 = vpack.c.b16 %v5927, %v5923
        %v6032 = vpack.c.b16 %v5928, %v5924
        %v6033 = vpack.c.b16 %v5929, %v5925
        %v6034 = vpack.c.b16 %v5930, %v5926
        %v6035 = vpack.c.b16 %v5935, %v5931
        %v6036 = vpack.c.b16 %v5936, %v5932
        %v6037 = vpack.c.b16 %v5937, %v5933
        %v6038 = vpack.c.b16 %v5938, %v5934
        %v6039 = vpack.c.b16 %v5943, %v5939
        %v6040 = vpack.c.b16 %v5944, %v5940
        %v6041 = vpack.c.b16 %v5945, %v5941
        %v6042 = vpack.c.b16 %v5946, %v5942
        %v6043 = vpack.c.b16 %v5951, %v5947
        %v6044 = vpack.c.b16 %v5952, %v5948
        %v6045 = vpack.c.b16 %v5953, %v5949
        %v6046 = vpack.c.b16 %v5954, %v5950
        %v6047 = vpack.c.b16 %v5959, %v5955
        %v6048 = vpack.c.b16 %v5960, %v5956
        %v6049 = vpack.c.b16 %v5961, %v5957
        %v6050 = vpack.c.b16 %v5962, %v5958
        %v6051 = vpack.c.b16 %v5967, %v5963
        %v6052 = vpack.c.b16 %v5968, %v5964
        %v6053 = vpack.c.b16 %v5969, %v5965
        %v6054 = vpack.c.b16 %v5970, %v5966
        %v6055 = vpack.c.b16 %v5975, %v5971
        %v6056 = vpack.c.b16 %v5976, %v5972
        %v6057 = vpack.c.b16 %v5977, %v5973
        %v6058 = vpack.c.b16 %v5978, %v5974
        %v6059 = vpack.c.b16 %v5983, %v5979
        %v6060 = vpack.c.b16 %v5984, %v5980
        %v6061 = vpack.c.b16 %v5985, %v5981
        %v6062 = vpack.c.b16 %v5986, %v5982
        %v6063 = vpack.c.b16 %v5991, %v5987
        %v6064 = vpack.c.b16 %v5992, %v5988
        %v6065 = vpack.c.b16 %v5993, %v5989
        %v6066 = vpack.c.b16 %v5994, %v5990
        %v6067 = vpack.c.b16 %v5999, %v5995
        %v6068 = vpack.c.b16 %v6000, %v5996
        %v6069 = vpack.c.b16 %v6001, %v5997
        %v6070 = vpack.c.b16 %v6002, %v5998
        %v6071 = vpack.c.b16 %v6007, %v6003
        %v6072 = vpack.c.b16 %v6008, %v6004
        %v6073 = vpack.c.b16 %v6009, %v6005
        %v6074 = vpack.c.b16 %v6010, %v6006
        %6139 = vmatpush.bf16.msra.mxu0 %v6039
        %6140 = vmatpush.bf16.msra.mxu0 %v6035
        %6141 = vmatpush.bf16.msra.mxu0 %v6031
        %6142 = vmatpush.bf16.msra.mxu0 %v6027
        %6143 = vmatpush.bf16.msra.mxu0 %v6023
        %6144 = vmatpush.bf16.msra.mxu0 %v6019
        %6145 = vmatpush.bf16.msra.mxu0 %v6015
        %6146 = vmatpush.bf16.msra.mxu0 %v6011
        %6147 = vmatmul.bf16.gmra.mxu0 %v1799
        %v6148 = vpop.f32.mrf.mxu0
        %v6149 = vadd.f32 0.0, %v6148
        %v6150 = vpop.f32.mrf.mxu0
        %v6151 = vadd.f32 0.0, %v6150
        %6152 = vmatmul.bf16.gmra.mxu0 %v1801
        %v6153 = vpop.f32.mrf.mxu0
        %v6154 = vadd.f32 0.0, %v6153
        %v6155 = vpop.f32.mrf.mxu0
        %v6156 = vadd.f32 0.0, %v6155
        %6157 = vmatmul.bf16.gmra.mxu0 %v1803
        %v6158 = vpop.f32.mrf.mxu0
        %v6159 = vadd.f32 0.0, %v6158
        %v6160 = vpop.f32.mrf.mxu0
        %v6161 = vadd.f32 0.0, %v6160
        %6162 = vmatmul.bf16.gmra.mxu0 %v5815
        %v6163 = vpop.f32.mrf.mxu0
        %v6164 = vadd.f32 0.0, %v6163
        %v6165 = vpop.f32.mrf.mxu0
        %v6166 = vadd.f32 0.0, %v6165
        %6167 = vdwg.mxu0
        %6168 = vmatpush.bf16.msra.mxu0 %v6071
        %6169 = vmatpush.bf16.msra.mxu0 %v6067
        %6170 = vmatpush.bf16.msra.mxu0 %v6063
        %6171 = vmatpush.bf16.msra.mxu0 %v6059
        %6172 = vmatpush.bf16.msra.mxu0 %v6055
        %6173 = vmatpush.bf16.msra.mxu0 %v6051
        %6174 = vmatpush.bf16.msra.mxu0 %v6047
        %6175 = vmatpush.bf16.msra.mxu0 %v6043
        %6176 = vmatmul.bf16.gmra.mxu0 %v1800
        %v6177 = vpop.f32.mrf.mxu0
        %v6178 = vadd.f32 %v6149, %v6177
        %v6179 = vpop.f32.mrf.mxu0
        %v6180 = vadd.f32 %v6151, %v6179
        %6181 = vmatmul.bf16.gmra.mxu0 %v1802
        %v6182 = vpop.f32.mrf.mxu0
        %v6183 = vadd.f32 %v6154, %v6182
        %v6184 = vpop.f32.mrf.mxu0
        %v6185 = vadd.f32 %v6156, %v6184
        %6186 = vmatmul.bf16.gmra.mxu0 %v1804
        %v6187 = vpop.f32.mrf.mxu0
        %v6188 = vadd.f32 %v6159, %v6187
        %v6189 = vpop.f32.mrf.mxu0
        %v6190 = vadd.f32 %v6161, %v6189
        %6191 = vmatmul.bf16.gmra.mxu0 %v5816
        %v6192 = vpop.f32.mrf.mxu0
        %v6193 = vadd.f32 %v6164, %v6192
        %v6194 = vpop.f32.mrf.mxu0
        %v6195 = vadd.f32 %v6166, %v6194
        %6196 = vdwg.mxu0
        %6197 = vmatpush.bf16.msra.mxu0 %v6040
        %6198 = vmatpush.bf16.msra.mxu0 %v6036
        %6199 = vmatpush.bf16.msra.mxu0 %v6032
        %6200 = vmatpush.bf16.msra.mxu0 %v6028
        %6201 = vmatpush.bf16.msra.mxu0 %v6024
        %6202 = vmatpush.bf16.msra.mxu0 %v6020
        %6203 = vmatpush.bf16.msra.mxu0 %v6016
        %6204 = vmatpush.bf16.msra.mxu0 %v6012
        %6205 = vmatmul.bf16.gmra.mxu0 %v1799
        %v6206 = vpop.f32.mrf.mxu0
        %v6207 = vadd.f32 0.0, %v6206
        %v6208 = vpop.f32.mrf.mxu0
        %v6209 = vadd.f32 0.0, %v6208
        %6210 = vmatmul.bf16.gmra.mxu0 %v1801
        %v6211 = vpop.f32.mrf.mxu0
        %v6212 = vadd.f32 0.0, %v6211
        %v6213 = vpop.f32.mrf.mxu0
        %v6214 = vadd.f32 0.0, %v6213
        %6215 = vmatmul.bf16.gmra.mxu0 %v1803
        %v6216 = vpop.f32.mrf.mxu0
        %v6217 = vadd.f32 0.0, %v6216
        %v6218 = vpop.f32.mrf.mxu0
        %v6219 = vadd.f32 0.0, %v6218
        %6220 = vmatmul.bf16.gmra.mxu0 %v5815
        %v6221 = vpop.f32.mrf.mxu0
        %v6222 = vadd.f32 0.0, %v6221
        %v6223 = vpop.f32.mrf.mxu0
        %v6224 = vadd.f32 0.0, %v6223
        %6225 = vdwg.mxu0
        %6226 = vmatpush.bf16.msra.mxu0 %v6072
        %6227 = vmatpush.bf16.msra.mxu0 %v6068
        %6228 = vmatpush.bf16.msra.mxu0 %v6064
        %6229 = vmatpush.bf16.msra.mxu0 %v6060
        %6230 = vmatpush.bf16.msra.mxu0 %v6056
        %6231 = vmatpush.bf16.msra.mxu0 %v6052
        %6232 = vmatpush.bf16.msra.mxu0 %v6048
        %6233 = vmatpush.bf16.msra.mxu0 %v6044
        %6234 = vmatmul.bf16.gmra.mxu0 %v1800
        %v6235 = vpop.f32.mrf.mxu0
        %v6236 = vadd.f32 %v6207, %v6235
        %v6237 = vpop.f32.mrf.mxu0
        %v6238 = vadd.f32 %v6209, %v6237
        %6239 = vmatmul.bf16.gmra.mxu0 %v1802
        %v6240 = vpop.f32.mrf.mxu0
        %v6241 = vadd.f32 %v6212, %v6240
        %v6242 = vpop.f32.mrf.mxu0
        %v6243 = vadd.f32 %v6214, %v6242
        %6244 = vmatmul.bf16.gmra.mxu0 %v1804
        %v6245 = vpop.f32.mrf.mxu0
        %v6246 = vadd.f32 %v6217, %v6245
        %v6247 = vpop.f32.mrf.mxu0
        %v6248 = vadd.f32 %v6219, %v6247
        %6249 = vmatmul.bf16.gmra.mxu0 %v5816
        %v6250 = vpop.f32.mrf.mxu0
        %v6251 = vadd.f32 %v6222, %v6250
        %v6252 = vpop.f32.mrf.mxu0
        %v6253 = vadd.f32 %v6224, %v6252
        %6254 = vdwg.mxu0
        %6255 = vmatpush.bf16.msra.mxu0 %v6041
        %6256 = vmatpush.bf16.msra.mxu0 %v6037
        %6257 = vmatpush.bf16.msra.mxu0 %v6033
        %6258 = vmatpush.bf16.msra.mxu0 %v6029
        %6259 = vmatpush.bf16.msra.mxu0 %v6025
        %6260 = vmatpush.bf16.msra.mxu0 %v6021
        %6261 = vmatpush.bf16.msra.mxu0 %v6017
        %6262 = vmatpush.bf16.msra.mxu0 %v6013
        %6263 = vmatmul.bf16.gmra.mxu0 %v1799
        %v6264 = vpop.f32.mrf.mxu0
        %v6265 = vadd.f32 0.0, %v6264
        %v6266 = vpop.f32.mrf.mxu0
        %v6267 = vadd.f32 0.0, %v6266
        %6268 = vmatmul.bf16.gmra.mxu0 %v1801
        %v6269 = vpop.f32.mrf.mxu0
        %v6270 = vadd.f32 0.0, %v6269
        %v6271 = vpop.f32.mrf.mxu0
        %v6272 = vadd.f32 0.0, %v6271
        %6273 = vmatmul.bf16.gmra.mxu0 %v1803
        %v6274 = vpop.f32.mrf.mxu0
        %v6275 = vadd.f32 0.0, %v6274
        %v6276 = vpop.f32.mrf.mxu0
        %v6277 = vadd.f32 0.0, %v6276
        %6278 = vmatmul.bf16.gmra.mxu0 %v5815
        %v6279 = vpop.f32.mrf.mxu0
        %v6280 = vadd.f32 0.0, %v6279
        %v6281 = vpop.f32.mrf.mxu0
        %v6282 = vadd.f32 0.0, %v6281
        %6283 = vdwg.mxu0
        %6284 = vmatpush.bf16.msra.mxu0 %v6073
        %6285 = vmatpush.bf16.msra.mxu0 %v6069
        %6286 = vmatpush.bf16.msra.mxu0 %v6065
        %6287 = vmatpush.bf16.msra.mxu0 %v6061
        %6288 = vmatpush.bf16.msra.mxu0 %v6057
        %6289 = vmatpush.bf16.msra.mxu0 %v6053
        %6290 = vmatpush.bf16.msra.mxu0 %v6049
        %6291 = vmatpush.bf16.msra.mxu0 %v6045
        %6292 = vmatmul.bf16.gmra.mxu0 %v1800
        %v6293 = vpop.f32.mrf.mxu0
        %v6294 = vadd.f32 %v6265, %v6293
        %v6295 = vpop.f32.mrf.mxu0
        %v6296 = vadd.f32 %v6267, %v6295
        %6297 = vmatmul.bf16.gmra.mxu0 %v1802
        %v6298 = vpop.f32.mrf.mxu0
        %v6299 = vadd.f32 %v6270, %v6298
        %v6300 = vpop.f32.mrf.mxu0
        %v6301 = vadd.f32 %v6272, %v6300
        %6302 = vmatmul.bf16.gmra.mxu0 %v1804
        %v6303 = vpop.f32.mrf.mxu0
        %v6304 = vadd.f32 %v6275, %v6303
        %v6305 = vpop.f32.mrf.mxu0
        %v6306 = vadd.f32 %v6277, %v6305
        %6307 = vmatmul.bf16.gmra.mxu0 %v5816
        %v6308 = vpop.f32.mrf.mxu0
        %v6309 = vadd.f32 %v6280, %v6308
        %v6310 = vpop.f32.mrf.mxu0
        %v6311 = vadd.f32 %v6282, %v6310
        %6312 = vdwg.mxu0
        %6313 = vmatpush.bf16.msra.mxu0 %v6042
        %6314 = vmatpush.bf16.msra.mxu0 %v6038
        %6315 = vmatpush.bf16.msra.mxu0 %v6034
        %6316 = vmatpush.bf16.msra.mxu0 %v6030
        %6317 = vmatpush.bf16.msra.mxu0 %v6026
        %6318 = vmatpush.bf16.msra.mxu0 %v6022
        %6319 = vmatpush.bf16.msra.mxu0 %v6018
        %6320 = vmatpush.bf16.msra.mxu0 %v6014
        %6321 = vmatmul.bf16.gmra.mxu0 %v1799
        %v6322 = vpop.f32.mrf.mxu0
        %v6323 = vadd.f32 0.0, %v6322
        %v6324 = vpop.f32.mrf.mxu0
        %v6325 = vadd.f32 0.0, %v6324
        %6326 = vmatmul.bf16.gmra.mxu0 %v1801
        %v6327 = vpop.f32.mrf.mxu0
        %v6328 = vadd.f32 0.0, %v6327
        %v6329 = vpop.f32.mrf.mxu0
        %v6330 = vadd.f32 0.0, %v6329
        %6331 = vmatmul.bf16.gmra.mxu0 %v1803
        %v6332 = vpop.f32.mrf.mxu0
        %v6333 = vadd.f32 0.0, %v6332
        %v6334 = vpop.f32.mrf.mxu0
        %v6335 = vadd.f32 0.0, %v6334
        %6336 = vmatmul.bf16.gmra.mxu0 %v5815
        %v6337 = vpop.f32.mrf.mxu0
        %v6338 = vadd.f32 0.0, %v6337
        %v6339 = vpop.f32.mrf.mxu0
        %v6340 = vadd.f32 0.0, %v6339
        %6341 = vdwg.mxu0
        %6342 = vmatpush.bf16.msra.mxu0 %v6074
        %6343 = vmatpush.bf16.msra.mxu0 %v6070
        %6344 = vmatpush.bf16.msra.mxu0 %v6066
        %6345 = vmatpush.bf16.msra.mxu0 %v6062
        %6346 = vmatpush.bf16.msra.mxu0 %v6058
        %6347 = vmatpush.bf16.msra.mxu0 %v6054
        %6348 = vmatpush.bf16.msra.mxu0 %v6050
        %6349 = vmatpush.bf16.msra.mxu0 %v6046
        %6350 = vmatmul.bf16.gmra.mxu0 %v1800
        %v6351 = vpop.f32.mrf.mxu0
        %v6352 = vadd.f32 %v6323, %v6351
        %v6353 = vpop.f32.mrf.mxu0
        %v6354 = vadd.f32 %v6325, %v6353
        %6355 = vmatmul.bf16.gmra.mxu0 %v1802
        %v6356 = vpop.f32.mrf.mxu0
        %v6357 = vadd.f32 %v6328, %v6356
        %v6358 = vpop.f32.mrf.mxu0
        %v6359 = vadd.f32 %v6330, %v6358
        %6360 = vmatmul.bf16.gmra.mxu0 %v1804
        %v6361 = vpop.f32.mrf.mxu0
        %v6362 = vadd.f32 %v6333, %v6361
        %v6363 = vpop.f32.mrf.mxu0
        %v6364 = vadd.f32 %v6335, %v6363
        %6365 = vmatmul.bf16.gmra.mxu0 %v5816
        %v6366 = vpop.f32.mrf.mxu0
        %v6367 = vadd.f32 %v6338, %v6366
        %v6368 = vpop.f32.mrf.mxu0
        %v6369 = vadd.f32 %v6340, %v6368
        %6370 = vdwg.mxu0
        %v6371 = vadd.f32 %v5711, %v6178
        %v6372 = vadd.f32 %v5712, %v6236
        %v6373 = vadd.f32 %v5713, %v6294
        %v6374 = vadd.f32 %v5714, %v6352
        %v6375 = vadd.f32 %v5715, %v6180
        %v6376 = vadd.f32 %v5716, %v6238
        %v6377 = vadd.f32 %v5717, %v6296
        %v6378 = vadd.f32 %v5718, %v6354
        %v6379 = vadd.f32 %v5719, %v6183
        %v6380 = vadd.f32 %v5720, %v6241
        %v6381 = vadd.f32 %v5721, %v6299
        %v6382 = vadd.f32 %v5722, %v6357
        %v6383 = vadd.f32 %v5723, %v6185
        %v6384 = vadd.f32 %v5724, %v6243
        %v6385 = vadd.f32 %v5725, %v6301
        %v6386 = vadd.f32 %v5726, %v6359
        %v6387 = vadd.f32 %v5727, %v6188
        %v6388 = vadd.f32 %v5728, %v6246
        %v6389 = vadd.f32 %v5729, %v6304
        %v6390 = vadd.f32 %v5730, %v6362
        %v6391 = vadd.f32 %v5731, %v6190
        %v6392 = vadd.f32 %v5732, %v6248
        %v6393 = vadd.f32 %v5733, %v6306
        %v6394 = vadd.f32 %v5734, %v6364
        %v6395 = vadd.f32 %v5735, %v6193
        %v6396 = vadd.f32 %v5736, %v6251
        %v6397 = vadd.f32 %v5737, %v6309
        %v6398 = vadd.f32 %v5738, %v6367
        %v6399 = vadd.f32 %v5739, %v6195
        %v6400 = vadd.f32 %v5740, %v6253
        %v6401 = vadd.f32 %v5741, %v6311
        %v6402 = vadd.f32 %v5742, %v6369
        %v6403 = vld [vmem:[%s3] sm:$0xf]
        %v6405 = vperm.slane %v6403, 0
        %v6406 = vperm.slane %v6403, 1
        %v6407 = vperm.slane %v6403, 2
        %v6408 = vperm.slane %v6403, 3
        %v6413 = vadd.f32 %v6371, %v6405
        %v6414 = vadd.f32 %v6372, %v6406
        %v6415 = vadd.f32 %v6373, %v6407
        %v6416 = vadd.f32 %v6374, %v6408
        %v6417 = vadd.f32 %v6375, %v6405
        %v6418 = vadd.f32 %v6376, %v6406
        %v6419 = vadd.f32 %v6377, %v6407
        %v6420 = vadd.f32 %v6378, %v6408
        %v6421 = vadd.f32 %v6379, %v6405
        %v6422 = vadd.f32 %v6380, %v6406
        %v6423 = vadd.f32 %v6381, %v6407
        %v6424 = vadd.f32 %v6382, %v6408
        %v6425 = vadd.f32 %v6383, %v6405
        %v6426 = vadd.f32 %v6384, %v6406
        %v6427 = vadd.f32 %v6385, %v6407
        %v6428 = vadd.f32 %v6386, %v6408
        %v6429 = vadd.f32 %v6387, %v6405
        %v6430 = vadd.f32 %v6388, %v6406
        %v6431 = vadd.f32 %v6389, %v6407
        %v6432 = vadd.f32 %v6390, %v6408
        %v6433 = vadd.f32 %v6391, %v6405
        %v6434 = vadd.f32 %v6392, %v6406
        %v6435 = vadd.f32 %v6393, %v6407
        %v6436 = vadd.f32 %v6394, %v6408
        %v6437 = vadd.f32 %v6395, %v6405
        %v6438 = vadd.f32 %v6396, %v6406
        %v6439 = vadd.f32 %v6397, %v6407
        %v6440 = vadd.f32 %v6398, %v6408
        %v6441 = vadd.f32 %v6399, %v6405
        %v6442 = vadd.f32 %v6400, %v6406
        %v6443 = vadd.f32 %v6401, %v6407
        %v6444 = vadd.f32 %v6402, %v6408
        %v6445 = vmax.f32 %v6413, 0.0
        %v6446 = vmax.f32 %v6414, 0.0
        %v6447 = vmax.f32 %v6415, 0.0
        %v6448 = vmax.f32 %v6416, 0.0
        %v6449 = vmax.f32 %v6417, 0.0
        %v6450 = vmax.f32 %v6418, 0.0
        %v6451 = vmax.f32 %v6419, 0.0
        %v6452 = vmax.f32 %v6420, 0.0
        %v6453 = vmax.f32 %v6421, 0.0
        %v6454 = vmax.f32 %v6422, 0.0
        %v6455 = vmax.f32 %v6423, 0.0
        %v6456 = vmax.f32 %v6424, 0.0
        %v6457 = vmax.f32 %v6425, 0.0
        %v6458 = vmax.f32 %v6426, 0.0
        %v6459 = vmax.f32 %v6427, 0.0
        %v6460 = vmax.f32 %v6428, 0.0
        %v6461 = vmax.f32 %v6429, 0.0
        %v6462 = vmax.f32 %v6430, 0.0
        %v6463 = vmax.f32 %v6431, 0.0
        %v6464 = vmax.f32 %v6432, 0.0
        %v6465 = vmax.f32 %v6433, 0.0
        %v6466 = vmax.f32 %v6434, 0.0
        %v6467 = vmax.f32 %v6435, 0.0
        %v6468 = vmax.f32 %v6436, 0.0
        %v6469 = vmax.f32 %v6437, 0.0
        %v6470 = vmax.f32 %v6438, 0.0
        %v6471 = vmax.f32 %v6439, 0.0
        %v6472 = vmax.f32 %v6440, 0.0
        %v6473 = vmax.f32 %v6441, 0.0
        %v6474 = vmax.f32 %v6442, 0.0
        %v6475 = vmax.f32 %v6443, 0.0
        %v6476 = vmax.f32 %v6444, 0.0
        %v6477 = vadd.f32 %v6445, %v6446
        %v6478 = vadd.f32 %v6477, %v6447
        %v6479 = vadd.f32 %v6478, %v6448
        %6480 = vadd.xlane.f32.xlu0 %v6479
        %v6481 = vpop.xlane.xlu0 %6480
        %v6482 = vadd.f32 %v6449, %v6450
        %v6483 = vadd.f32 %v6482, %v6451
        %v6484 = vadd.f32 %v6483, %v6452
        %6485 = vadd.xlane.f32.xlu0 %v6484
        %v6486 = vpop.xlane.xlu0 %6485
        %v6487 = vadd.f32 %v6453, %v6454
        %v6488 = vadd.f32 %v6487, %v6455
        %v6489 = vadd.f32 %v6488, %v6456
        %6490 = vadd.xlane.f32.xlu0 %v6489
        %v6491 = vpop.xlane.xlu0 %6490
        %v6492 = vadd.f32 %v6457, %v6458
        %v6493 = vadd.f32 %v6492, %v6459
        %v6494 = vadd.f32 %v6493, %v6460
        %6495 = vadd.xlane.f32.xlu0 %v6494
        %v6496 = vpop.xlane.xlu0 %6495
        %v6497 = vadd.f32 %v6461, %v6462
        %v6498 = vadd.f32 %v6497, %v6463
        %v6499 = vadd.f32 %v6498, %v6464
        %6500 = vadd.xlane.f32.xlu0 %v6499
        %v6501 = vpop.xlane.xlu0 %6500
        %v6502 = vadd.f32 %v6465, %v6466
        %v6503 = vadd.f32 %v6502, %v6467
        %v6504 = vadd.f32 %v6503, %v6468
        %6505 = vadd.xlane.f32.xlu0 %v6504
        %v6506 = vpop.xlane.xlu0 %6505
        %v6507 = vadd.f32 %v6469, %v6470
        %v6508 = vadd.f32 %v6507, %v6471
        %v6509 = vadd.f32 %v6508, %v6472
        %6510 = vadd.xlane.f32.xlu0 %v6509
        %v6511 = vpop.xlane.xlu0 %6510
        %v6512 = vadd.f32 %v6473, %v6474
        %v6513 = vadd.f32 %v6512, %v6475
        %v6514 = vadd.f32 %v6513, %v6476
        %6515 = vadd.xlane.f32.xlu0 %v6514
        %v6516 = vpop.xlane.xlu0 %6515
        %v6517 = vld [vmem:[%s223] sm:$0xff]
        %v6518 = vld [vmem:[%s223 + $0x8] sm:$0xff]
        %v6519 = vld [vmem:[%s223 + $0x10] sm:$0xff]
        %v6520 = vld [vmem:[%s223 + $0x18] sm:$0xff]
        %v6521 = vld [vmem:[%s223 + $0x20] sm:$0xff]
        %v6522 = vld [vmem:[%s223 + $0x28] sm:$0xff]
        %v6523 = vld [vmem:[%s223 + $0x30] sm:$0xff]
        %v6524 = vld [vmem:[%s223 + $0x38] sm:$0xff]
        %v6525 = vld [vmem:[%s223 + $0x40] sm:$0xff]
        %v6526 = vld [vmem:[%s223 + $0x48] sm:$0xff]
        %v6527 = vld [vmem:[%s223 + $0x50] sm:$0xff]
        %v6528 = vld [vmem:[%s223 + $0x58] sm:$0xff]
        %v6529 = vld [vmem:[%s223 + $0x60] sm:$0xff]
        %v6530 = vld [vmem:[%s223 + $0x68] sm:$0xff]
        %v6531 = vld [vmem:[%s223 + $0x70] sm:$0xff]
        %v6532 = vld [vmem:[%s223 + $0x78] sm:$0xff]
        %v6533 = vunpack.c.l.bf16 %v6517
        %v6534 = vunpack.c.h.bf16 %v6517
        %v6535 = vunpack.c.l.bf16 %v6518
        %v6536 = vunpack.c.h.bf16 %v6518
        %v6537 = vunpack.c.l.bf16 %v6519
        %v6538 = vunpack.c.h.bf16 %v6519
        %v6539 = vunpack.c.l.bf16 %v6520
        %v6540 = vunpack.c.h.bf16 %v6520
        %v6541 = vunpack.c.l.bf16 %v6521
        %v6542 = vunpack.c.h.bf16 %v6521
        %v6543 = vunpack.c.l.bf16 %v6522
        %v6544 = vunpack.c.h.bf16 %v6522
        %v6545 = vunpack.c.l.bf16 %v6523
        %v6546 = vunpack.c.h.bf16 %v6523
        %v6547 = vunpack.c.l.bf16 %v6524
        %v6548 = vunpack.c.h.bf16 %v6524
        %v6549 = vunpack.c.l.bf16 %v6525
        %v6550 = vunpack.c.h.bf16 %v6525
        %v6551 = vunpack.c.l.bf16 %v6526
        %v6552 = vunpack.c.h.bf16 %v6526
        %v6553 = vunpack.c.l.bf16 %v6527
        %v6554 = vunpack.c.h.bf16 %v6527
        %v6555 = vunpack.c.l.bf16 %v6528
        %v6556 = vunpack.c.h.bf16 %v6528
        %v6557 = vunpack.c.l.bf16 %v6529
        %v6558 = vunpack.c.h.bf16 %v6529
        %v6559 = vunpack.c.l.bf16 %v6530
        %v6560 = vunpack.c.h.bf16 %v6530
        %v6561 = vunpack.c.l.bf16 %v6531
        %v6562 = vunpack.c.h.bf16 %v6531
        %v6563 = vunpack.c.l.bf16 %v6532
        %v6564 = vunpack.c.h.bf16 %v6532
        %v6565 = vmul.f32 %v6533, %v6481
        %v6566 = vmul.f32 %v6534, %v6481
        %v6567 = vmul.f32 %v6535, %v6481
        %v6568 = vmul.f32 %v6536, %v6481
        %v6569 = vmul.f32 %v6537, %v6486
        %v6570 = vmul.f32 %v6538, %v6486
        %v6571 = vmul.f32 %v6539, %v6486
        %v6572 = vmul.f32 %v6540, %v6486
        %v6573 = vmul.f32 %v6541, %v6491
        %v6574 = vmul.f32 %v6542, %v6491
        %v6575 = vmul.f32 %v6543, %v6491
        %v6576 = vmul.f32 %v6544, %v6491
        %v6577 = vmul.f32 %v6545, %v6496
        %v6578 = vmul.f32 %v6546, %v6496
        %v6579 = vmul.f32 %v6547, %v6496
        %v6580 = vmul.f32 %v6548, %v6496
        %v6581 = vmul.f32 %v6549, %v6501
        %v6582 = vmul.f32 %v6550, %v6501
        %v6583 = vmul.f32 %v6551, %v6501
        %v6584 = vmul.f32 %v6552, %v6501
        %v6585 = vmul.f32 %v6553, %v6506
        %v6586 = vmul.f32 %v6554, %v6506
        %v6587 = vmul.f32 %v6555, %v6506
        %v6588 = vmul.f32 %v6556, %v6506
        %v6589 = vmul.f32 %v6557, %v6511
        %v6590 = vmul.f32 %v6558, %v6511
        %v6591 = vmul.f32 %v6559, %v6511
        %v6592 = vmul.f32 %v6560, %v6511
        %v6593 = vmul.f32 %v6561, %v6516
        %v6594 = vmul.f32 %v6562, %v6516
        %v6595 = vmul.f32 %v6563, %v6516
        %v6596 = vmul.f32 %v6564, %v6516
        %v6597 = vadd.f32 %v6565, %v6569
        %v6598 = vadd.f32 %v6597, %v6573
        %v6599 = vadd.f32 %v6598, %v6577
        %v6600 = vadd.f32 %v6599, %v6581
        %v6601 = vadd.f32 %v6600, %v6585
        %v6602 = vadd.f32 %v6601, %v6589
        %v6603 = vadd.f32 %v6602, %v6593
        %v6604 = vrot.slane %v6603, 4
        %v6605 = vadd.f32 %v6603, %v6604
        %v6606 = vrot.slane %v6605, 2
        %v6607 = vadd.f32 %v6605, %v6606
        %v6608 = vrot.slane %v6607, 1
        %v6609 = vadd.f32 %v6607, %v6608
        %v6610 = vadd.f32 %v6566, %v6570
        %v6611 = vadd.f32 %v6610, %v6574
        %v6612 = vadd.f32 %v6611, %v6578
        %v6613 = vadd.f32 %v6612, %v6582
        %v6614 = vadd.f32 %v6613, %v6586
        %v6615 = vadd.f32 %v6614, %v6590
        %v6616 = vadd.f32 %v6615, %v6594
        %v6617 = vrot.slane %v6616, 4
        %v6618 = vadd.f32 %v6616, %v6617
        %v6619 = vrot.slane %v6618, 2
        %v6620 = vadd.f32 %v6618, %v6619
        %v6621 = vrot.slane %v6620, 1
        %v6622 = vadd.f32 %v6620, %v6621
        %v6623 = vadd.f32 %v6567, %v6571
        %v6624 = vadd.f32 %v6623, %v6575
        %v6625 = vadd.f32 %v6624, %v6579
        %v6626 = vadd.f32 %v6625, %v6583
        %v6627 = vadd.f32 %v6626, %v6587
        %v6628 = vadd.f32 %v6627, %v6591
        %v6629 = vadd.f32 %v6628, %v6595
        %v6630 = vrot.slane %v6629, 4
        %v6631 = vadd.f32 %v6629, %v6630
        %v6632 = vrot.slane %v6631, 2
        %v6633 = vadd.f32 %v6631, %v6632
        %v6634 = vrot.slane %v6633, 1
        %v6635 = vadd.f32 %v6633, %v6634
        %v6636 = vadd.f32 %v6568, %v6572
        %v6637 = vadd.f32 %v6636, %v6576
        %v6638 = vadd.f32 %v6637, %v6580
        %v6639 = vadd.f32 %v6638, %v6584
        %v6640 = vadd.f32 %v6639, %v6588
        %v6641 = vadd.f32 %v6640, %v6592
        %v6642 = vadd.f32 %v6641, %v6596
        %v6643 = vrot.slane %v6642, 4
        %v6644 = vadd.f32 %v6642, %v6643
        %v6645 = vrot.slane %v6644, 2
        %v6646 = vadd.f32 %v6644, %v6645
        %v6647 = vrot.slane %v6646, 1
        %v6648 = vadd.f32 %v6646, %v6647
        %v6649 = vmul.f32 %v6609, 0.015625
        %v6650 = vmul.f32 %v6622, 0.015625
        %v6651 = vmul.f32 %v6635, 0.015625
        %v6652 = vmul.f32 %v6648, 0.015625
        %v6657 = vrot.slane %v6650, 7
        %v6658 = vrot.slane %v6651, 6
        %v6659 = vrot.slane %v6652, 5
        %vm6660 = vcmask 1040384
        %v6661 = vsel %vm6660, %v6649, %v6657
        %vm6662 = vcmask 1042434
        %v6663 = vsel %vm6662, %v6658, %v6659
        %vm6664 = vcmask 1041408
        %v6665 = vsel %vm6664, %v6661, %v6663
        %v6667 = vlaneseq
        %vm6668 = vcmp.ge.s32.totalorder %v6667, 0
        %vm6669 = vcmp.lt.s32.totalorder %v6667, 512
        %vm6670 = vmand %vm6668, %vm6669
        %6671 = vst.msk [vmem:[%s232] sm:$0xf] %vm6670, %v6665
        %p6672 = scmp.lt.s32.totalorder %s16, 1
        %s6673 = scalar_select %p6672, %s16, 1
        %s6674 = smul.addr %s6673, 4
        %s6675 = scalar_lea.vmem %s4, %s6674
        // Predicated region
        $region41: #{_lambda_.4} parent=35 // pred_check
          %p6676 = pneg %p128
        $region42: #{_lambda_.4} parent=35 // pred_check_branch
          %6678 = sbr.rel (%p6676) target = $region44
        $region43: #{_lambda_.4} parent=35 // pred_region
          _
        $region44: #{_lambda_.4} parent=35 // pred_fallthru
          _
      $region36: #{_lambda_.4} parent=5 // pred_fallthru
        _
      %p6679 = scmp.le.s32.totalorder 2, %s11
      // Predicated region
      $region45: #{_lambda_.4} parent=5 // pred_check
        %p6680 = pneg %p6679
      $region46: #{_lambda_.4} parent=5 // pred_check_branch
        %6682 = sbr.rel (%p6680) target = $region48
      $region47: #{_lambda_.4} parent=5 // pred_region
        %s6683 = ssub.s32 %s11, 2
        // Predicated region
        $region49: #{_lambda_.4} parent=47 // pred_check
          %p6684 = pneg %p134
        $region50: #{_lambda_.4} parent=47 // pred_check_branch
          %6686 = sbr.rel (%p6684) target = $region52
        $region51: #{_lambda_.4} parent=47 // pred_region
          %p6687 = scmp.lt.s32.totalorder %s17, 1
          %s6688 = scalar_select %p6687, %s17, 1
          %s6689 = smul.addr %s6688, 4
          %s6690 = scalar_lea.vmem %s4, %s6689
        $region52: #{_lambda_.4} parent=47 // pred_fallthru
          _
      $region48: #{_lambda_.4} parent=5 // pred_fallthru
        _
    $region6: #{_lambda_.4} parent=1 // loop_footer
      %s15 = sadd.s32 1, %s11
    $region7: #{_lambda_.4} parent=1 // loop_footer_branch
      %10 = sbr.rel target = $region3
    $region8: #{_lambda_.4} parent=1 // loop_exit
      _
    %6691 = vsyncpa [#allocation3], 1
    %s6692 = scalar_lea.sflag [#allocation3], 1
    %6693 = vsyncpa %s6692, 1

</llo_original>
